<compile_context>
chip_gen: v6e
topology: v6e:2x2x1
jax: 0.10.0
libtpu: 0.0.40
codegen_flags: <defaults>
</compile_context>

<pallas_src>
import math
import jax
import jax.numpy as jnp
from jax import lax
from jax.experimental import pallas as pl
from jax.experimental.pallas import tpu as pltpu

# Scaled-down but structurally identical hyper-parameters.
VOCAB_SIZE = 2           # vocab = {'unk': 1, '<pad>': 0}
EMBED_DIM = 32           # d_model          (300 in the original)
HIDDEN_DIM = 32          # dim_feedforward  (300 in the original)
NUM_LAYERS = 2
NUM_HEADS = 4
HEAD_DIM = EMBED_DIM // NUM_HEADS
MAX_LENGTH = 64
LN_EPS = 1e-5

EP = 128                           # lane-dense padded feature width
W_PER_LAYER = 8                    # q, kv, out (self) | q, kv, out (cross) | ff1, ff2
V_PER_LAYER = 14                   # 8 biases + 6 LayerNorm vectors
FIN_W_IDX = W_PER_LAYER * NUM_LAYERS
FIN_B_IDX = V_PER_LAYER * NUM_LAYERS


# ---------------------------------------------------------------------------
# Kernel: BT batch elements per grid step.  All matmuls are lane-dense
# (K = N = 128, bf16 operands, f32 accumulate); activations keep zero padding
# in lanes E..128 throughout.
# ---------------------------------------------------------------------------
def _transformer_lm_kernel(x_ref, pad_ref, w_ref, v_ref, out_ref):
    BT, S, _ = x_ref.shape
    R = BT * S
    E = EMBED_DIM
    D = HEAD_DIM

    vec = v_ref[...]                                 # (32, EP) packed biases / LN params
    h = x_ref[...].reshape(R, EP)                    # positional encoding already folded in
    mem = h                                          # decoder memory == pos-encoded input
    pad = pad_ref[...]                               # (BT, S) float: 1.0 where key is padding

    # ---- constants hoisted out of the layer loop --------------------------------
    lane2 = lax.broadcasted_iota(jnp.int32, (1, EP), 1)
    lnmask = (lane2 < E).astype(jnp.float32)         # real-lane mask for LayerNorm

    lane3 = lax.broadcasted_iota(jnp.int32, (1, 1, EP), 2)

    def _lmask(lo, hi):
        return ((lane3 >= lo) & (lane3 < hi)).astype(jnp.bfloat16)

    q_masks = [_lmask(hh * D, (hh + 1) * D) for hh in range(NUM_HEADS)]       # Q_h lanes
    v_masks = [_lmask(E + hh * D, E + (hh + 1) * D) for hh in range(NUM_HEADS)]  # V_h lanes

    # causal + float key_padding_mask bias, built in-kernel (no (BT,S,S) DMA)
    qi = lax.broadcasted_iota(jnp.int32, (S, S), 0)
    ki = lax.broadcasted_iota(jnp.int32, (S, S), 1)
    causal = jnp.where(ki > qi, jnp.float32(-1e30), jnp.float32(0.0))
    self_bias = causal[None, :, :] + pad[:, None, :]                          # (BT, S, S)

    inv_e = 1.0 / E
    scale = 1.0 / math.sqrt(D)

    def linear(a, wi, bi):
        y = jnp.dot(a.astype(jnp.bfloat16), w_ref[wi],
                    preferred_element_type=jnp.float32)
        return y + vec[bi][None, :]

    def layernorm(a, gi, bi):
        mu = jnp.sum(a, axis=-1, keepdims=True) * inv_e
        xc = (a - mu) * lnmask
        var = jnp.sum(xc * xc, axis=-1, keepdims=True) * inv_e
        return xc * lax.rsqrt(var + LN_EPS) * vec[gi][None, :] + vec[bi][None, :]

    def attention(q_src, kv_src, wq, bq, wkv, bkv, wo, bo, attn_bias):
        # Q at lanes 0..E; K at lanes 0..E and V at lanes E..2E of the KV projection.
        q3 = (linear(q_src, wq, bq) * scale).reshape(BT, S, EP).astype(jnp.bfloat16)
        kv3 = linear(kv_src, wkv, bkv).reshape(BT, S, EP).astype(jnp.bfloat16)
        o = None
        for hh in range(NUM_HEADS):
            # full-width (K=128) lane-aligned contraction; per-head lane mask on Q
            s = jnp.einsum('bqe,bke->bqk', q3 * q_masks[hh], kv3,
                           preferred_element_type=jnp.float32)                # (BT, S, S)
            if attn_bias is not None:
                s = s + attn_bias
            s = s - jnp.max(s, axis=-1, keepdims=True)
            p = jnp.exp(s)
            p = p * pl.reciprocal(jnp.sum(p, axis=-1, keepdims=True), approx=True)
            # per-head PV lands at lanes E+hh*D .. E+(hh+1)*D of the full-width slab
            pv = jnp.einsum('bqk,bke->bqe', p.astype(jnp.bfloat16), kv3 * v_masks[hh],
                            preferred_element_type=jnp.float32)
            o = pv if o is None else o + pv
        # single output projection (K=128); weight rows pre-shifted by E in the pack
        out = jnp.dot(o.reshape(R, EP).astype(jnp.bfloat16), w_ref[wo],
                      preferred_element_type=jnp.float32)
        return out + vec[bo][None, :]

    for l in range(NUM_LAYERS):
        wb, vb = W_PER_LAYER * l, V_PER_LAYER * l
        sa = attention(h, h, wb + 0, vb + 0, wb + 1, vb + 1, wb + 2, vb + 2, self_bias)
        h = layernorm(h + sa, vb + 8, vb + 9)
        ca = attention(h, mem, wb + 3, vb + 3, wb + 4, vb + 4, wb + 5, vb + 5, None)
        h = layernorm(h + ca, vb + 10, vb + 11)
        ff = jnp.maximum(linear(h, wb + 6, vb + 6), 0.0)
        ff = linear(ff, wb + 7, vb + 7)
        h = layernorm(h + ff, vb + 12, vb + 13)
        # TODO(synk): dropout (p=0.25) is identity in eval mode and is omitted.

    out_ref[...] = linear(h, FIN_W_IDX, FIN_B_IDX).reshape(BT, S, EP)


# ---------------------------------------------------------------------------
# Parameter packing (torch layouts -> one bf16 weight pack + one f32 vector pack)
# ---------------------------------------------------------------------------
def _pad_lanes(v, width=EP):
    return jnp.pad(v, [(0, 0)] * (v.ndim - 1) + [(0, width - v.shape[-1])])


def _block(pieces):
    """pieces: list of (torch (out,in) weight, row_offset, col_offset) -> (EP,EP)."""
    b = jnp.zeros((EP, EP), jnp.float32)
    for w, r, c in pieces:
        w = w.astype(jnp.float32)
        b = b.at[r:r + w.shape[1], c:c + w.shape[0]].set(w.T)
    return b


def _vrow(pieces):
    v = jnp.zeros((EP,), jnp.float32)
    for bb, c in pieces:
        bb = bb.astype(jnp.float32).reshape(-1)
        v = v.at[c:c + bb.shape[0]].set(bb)
    return v


def pack_params(params):
    E = EMBED_DIM
    w_blocks, v_rows = [], []
    for l in range(NUM_LAYERS):
        sa_w, sa_b = params["sa_in_w"][l], params["sa_in_b"][l, 0]
        ca_w, ca_b = params["ca_in_w"][l], params["ca_in_b"][l, 0]
        w_blocks += [
            _block([(sa_w[:E], 0, 0)]),                            # self-attn Q proj
            _block([(sa_w[E:2 * E], 0, 0), (sa_w[2 * E:], 0, E)]),  # self-attn K|V proj
            _block([(params["sa_out_w"][l], E, 0)]),               # out proj (rows shifted by E)
            _block([(ca_w[:E], 0, 0)]),                            # cross-attn Q proj
            _block([(ca_w[E:2 * E], 0, 0), (ca_w[2 * E:], 0, E)]),  # cross-attn K|V proj
            _block([(params["ca_out_w"][l], E, 0)]),
            _block([(params["ff1_w"][l], 0, 0)]),
            _block([(params["ff2_w"][l], 0, 0)]),
        ]
        v_rows += [
            _vrow([(sa_b[:E], 0)]),
            _vrow([(sa_b[E:2 * E], 0), (sa_b[2 * E:], E)]),
            _vrow([(params["sa_out_b"][l], 0)]),
            _vrow([(ca_b[:E], 0)]),
            _vrow([(ca_b[E:2 * E], 0), (ca_b[2 * E:], E)]),
            _vrow([(params["ca_out_b"][l], 0)]),
            _vrow([(params["ff1_b"][l], 0)]),
            _vrow([(params["ff2_b"][l], 0)]),
        ]
        for name in ("ln1_g", "ln1_b", "ln2_g", "ln2_b", "ln3_g", "ln3_b"):
            v_rows.append(_vrow([(params[name][l], 0)]))
    w_blocks.append(_block([(params["fin_w"], 0, 0)]))
    v_rows.append(_vrow([(params["fin_b"], 0)]))
    v_rows += [jnp.zeros((EP,), jnp.float32)] * ((-len(v_rows)) % 8)
    # weights go to bf16 (native MXU rate, half the DMA); biases/LN stay f32
    return jnp.stack(w_blocks).astype(jnp.bfloat16), jnp.stack(v_rows)


# ---------------------------------------------------------------------------
# Wrapper
# ---------------------------------------------------------------------------
@jax.jit
def transformer_lm_forward(x, params):
    B, S, E = x.shape
    assert E == EMBED_DIM and S <= MAX_LENGTH

    # key_padding_mask from RAW x (before positional encoding), as in the module
    pad = jnp.all(x == 0.0, axis=-1).astype(jnp.float32)                 # (B, S)
    # fold the positional encoding into x on the host (one fewer replicated DMA)
    x_pe = _pad_lanes((x + params["pe"][None, :S, :]).astype(jnp.float32))   # (B, S, EP)
    w_pack, v_pack = pack_params(params)

    # Batch tiling: one grid step when the batch fits (1-TC v5e/v6e: grid is a serial
    # loop, splitting only hurts).  For B > 32 we get multiple "parallel" steps, which
    # also feeds both v7x TensorCores.  Per-step VMEM stays far below every limit.
    BT = min(B, 32)
    n_blk = -(-B // BT)
    Bp = n_blk * BT
    if Bp != B:
        x_pe = jnp.pad(x_pe, ((0, Bp - B), (0, 0), (0, 0)))
        pad = jnp.pad(pad, ((0, Bp - B), (0, 0)))

    out = pl.pallas_call(
        _transformer_lm_kernel,
        out_shape=jax.ShapeDtypeStruct((Bp, S, EP), jnp.float32),
        grid=(n_blk,),
        in_specs=[
            pl.BlockSpec((BT, S, EP), lambda b: (b, 0, 0)),      # x + PE      (per batch block)
            pl.BlockSpec((BT, S), lambda b: (b, 0)),             # pad mask    (per batch block)
            pl.BlockSpec(w_pack.shape, lambda b: (0, 0, 0)),     # packed weights (replicated)
            pl.BlockSpec(v_pack.shape, lambda b: (0, 0)),        # packed biases  (replicated)
        ],
        out_specs=pl.BlockSpec((BT, S, EP), lambda b: (b, 0, 0)),
        compiler_params=pltpu.CompilerParams(dimension_semantics=("parallel",)),
    )(x_pe, pad, w_pack, v_pack)

    # lane-dense slab -> real logits (slab writeback is negligible at this size)
    return out[:B, :, :VOCAB_SIZE]


# ---------------------------------------------------------------------------
# Deterministic parameter construction (synthetic; no checkpoint loading)
# ---------------------------------------------------------------------------
def init_params(key):
    L, E, H, V = NUM_LAYERS, EMBED_DIM, HIDDEN_DIM, VOCAB_SIZE
    keys = jax.random.split(key, 16)

    def nrm(k, shape, scale=0.05):
        return (scale * jax.random.normal(k, shape)).astype(jnp.float32)

    params = {
        "sa_in_w": nrm(keys[0], (L, 3 * E, E)),
        "sa_in_b": nrm(keys[1], (L, 1, 3 * E)),
        "sa_out_w": nrm(keys[2], (L, E, E)),
        "sa_out_b": nrm(keys[3], (L, 1, E)),
        "ca_in_w": nrm(keys[4], (L, 3 * E, E)),
        "ca_in_b": nrm(keys[5], (L, 1, 3 * E)),
        "ca_out_w": nrm(keys[6], (L, E, E)),
        "ca_out_b": nrm(keys[7], (L, 1, E)),
        "ff1_w": nrm(keys[8], (L, H, E)),
        "ff1_b": nrm(keys[9], (L, 1, H)),
        "ff2_w": nrm(keys[10], (L, E, H)),
        "ff2_b": nrm(keys[11], (L, 1, E)),
        "ln1_g": jnp.ones((L, 1, E), jnp.float32),
        "ln1_b": jnp.zeros((L, 1, E), jnp.float32),
        "ln2_g": jnp.ones((L, 1, E), jnp.float32),
        "ln2_b": jnp.zeros((L, 1, E), jnp.float32),
        "ln3_g": jnp.ones((L, 1, E), jnp.float32),
        "ln3_b": jnp.zeros((L, 1, E), jnp.float32),
        "fin_w": nrm(keys[12], (V, E)),
        "fin_b": nrm(keys[13], (1, V)),
    }
    # Sinusoidal positional encoding — same formula as create_positional_encoding.
    pos = jnp.arange(MAX_LENGTH, dtype=jnp.float32)[:, None]
    div = jnp.exp(jnp.arange(0, E, 2, dtype=jnp.float32) * (-math.log(10000.0) / E))
    pe = jnp.zeros((MAX_LENGTH, E), jnp.float32)
    pe = pe.at[:, 0::2].set(jnp.sin(pos * div))
    pe = pe.at[:, 1::2].set(jnp.cos(pos * div))
    params["pe"] = pe
    return params


# ---------------------------------------------------------------------------
# Pure-JAX reference (same math) for a correctness sanity check
# ---------------------------------------------------------------------------
def ref_forward(x, params):
    E = EMBED_DIM

    def ln(v, g, b):
        mu = v.mean(-1, keepdims=True)
        var = ((v - mu) ** 2).mean(-1, keepdims=True)
        return (v - mu) / jnp.sqrt(var + LN_EPS) * g + b

    def mha(q_in, kv_in, in_w, in_b, out_w, out_b, bias):
        q = q_in @ in_w[:E].T + in_b[0, :E]
        k = kv_in @ in_w[E:2 * E].T + in_b[0, E:2 * E]
        v = kv_in @ in_w[2 * E:].T + in_b[0, 2 * E:]
        S = q.shape[0]
        qh = q.reshape(S, NUM_HEADS, HEAD_DIM)
        kh = k.reshape(S, NUM_HEADS, HEAD_DIM)
        vh = v.reshape(S, NUM_HEADS, HEAD_DIM)
        s = jnp.einsum("qhd,khd->hqk", qh, kh) / math.sqrt(HEAD_DIM)
        if bias is not None:
            s = s + bias[None]
        p = jax.nn.softmax(s, axis=-1)
        o = jnp.einsum("hqk,khd->qhd", p, vh).reshape(S, E)
        return o @ out_w.T + out_b[0]

    def single(xb):
        S = xb.shape[0]
        pad = jnp.all(xb == 0.0, axis=-1).astype(jnp.float32)
        h = xb + params["pe"][:S]
        mem = h
        idx = jnp.arange(S)
        causal = jnp.where(idx[None, :] > idx[:, None], -jnp.inf, 0.0)
        bias = causal + pad[None, :]
        for l in range(NUM_LAYERS):
            h = ln(h + mha(h, h, params["sa_in_w"][l], params["sa_in_b"][l],
                           params["sa_out_w"][l], params["sa_out_b"][l], bias),
                   params["ln1_g"][l], params["ln1_b"][l])
            h = ln(h + mha(h, mem, params["ca_in_w"][l], params["ca_in_b"][l],
                           params["ca_out_w"][l], params["ca_out_b"][l], None),
                   params["ln2_g"][l], params["ln2_b"][l])
            ff = jnp.maximum(h @ params["ff1_w"][l].T + params["ff1_b"][l, 0], 0.0)
            ff = ff @ params["ff2_w"][l].T + params["ff2_b"][l, 0]
            h = ln(h + ff, params["ln3_g"][l], params["ln3_b"][l])
        return h @ params["fin_w"].T + params["fin_b"][0]

    return jax.vmap(single)(x)


if __name__ == "__main__":
    key = jax.random.PRNGKey(0)
    pkey, xkey = jax.random.split(key)
    params = init_params(pkey)

    B, S = 2, 8
    x = 0.1 * jax.random.normal(xkey, (B, S, EMBED_DIM), dtype=jnp.float32)
    # make the last two positions of batch 0 all-zero embeddings so the
    # key-padding-mask path is exercised
    x = x.at[0, S - 2:, :].set(0.0)

    out = transformer_lm_forward(x, params)
    out = jax.block_until_ready(out)

    ref = ref_forward(x, params)
    assert out.shape == (B, S, VOCAB_SIZE)
    assert bool(jnp.all(jnp.isfinite(out)))
    max_err = float(jnp.max(jnp.abs(out - ref)))
    assert max_err < 2e-2, f"mismatch vs reference: {max_err}"
    print("KERNEL_OK")
</pallas_src>

<mosaic_0001>
module attributes {stable_mosaic.version = 11 : i64} {
  func.func @_transformer_lm_kernel(%arg0: i32, %arg1: memref<2x8x128xf32, #tpu.memory_space<vmem>>, %arg2: memref<2x8xf32, #tpu.memory_space<vmem>>, %arg3: memref<17x128x128xbf16, #tpu.memory_space<vmem>>, %arg4: memref<32x128xf32, #tpu.memory_space<vmem>>, %arg5: memref<2x8x128xf32, #tpu.memory_space<vmem>>) attributes {dimension_semantics = [#tpu.dimension_semantics<parallel>], iteration_bounds = array<i64: 1>, scalar_prefetch = 0 : i64, scratch_operands = 0 : i64, tpu.core_type = #tpu.core_type<tc>, window_params = [{transform_indices = @transform_0, window_bounds = array<i64: 2, 8, 128>}, {transform_indices = @transform_1, window_bounds = array<i64: 2, 8>}, {pipeline_mode = #tpu.pipeline_mode<synchronous>, transform_indices = @transform_2, window_bounds = array<i64: 17, 128, 128>}, {pipeline_mode = #tpu.pipeline_mode<synchronous>, transform_indices = @transform_3, window_bounds = array<i64: 32, 128>}, {transform_indices = @transform_4, window_bounds = array<i64: 2, 8, 128>}]} {
    %c0 = arith.constant 0 : index
    %c0_0 = arith.constant 0 : index
    %0 = vector.load %arg4[%c0, %c0_0] : memref<32x128xf32, #tpu.memory_space<vmem>>, vector<32x128xf32>
    %c0_1 = arith.constant 0 : index
    %c0_2 = arith.constant 0 : index
    %c0_3 = arith.constant 0 : index
    %1 = vector.load %arg1[%c0_1, %c0_2, %c0_3] : memref<2x8x128xf32, #tpu.memory_space<vmem>>, vector<2x8x128xf32>
    %2 = vector.shape_cast %1 : vector<2x8x128xf32> to vector<16x128xf32>
    %c0_4 = arith.constant 0 : index
    %c0_5 = arith.constant 0 : index
    %3 = vector.load %arg2[%c0_4, %c0_5] : memref<2x8xf32, #tpu.memory_space<vmem>>, vector<2x8xf32>
    %4 = tpu.iota {dimensions = array<i32: 1>} : vector<1x128xi32>
    %c32_i32 = arith.constant 32 : i32
    %5 = vector.broadcast %c32_i32 : i32 to vector<1x128xi32>
    %6 = arith.cmpi slt, %4, %5 : vector<1x128xi32>
    %7 = arith.extui %6 : vector<1x128xi1> to vector<1x128xi32>
    %8 = arith.sitofp %7 : vector<1x128xi32> to vector<1x128xf32>
    %9 = tpu.iota {dimensions = array<i32: 2>} : vector<1x1x128xi32>
    %c0_i32 = arith.constant 0 : i32
    %10 = vector.broadcast %c0_i32 : i32 to vector<1x1x128xi32>
    %11 = arith.cmpi sge, %9, %10 : vector<1x1x128xi32>
    %c8_i32 = arith.constant 8 : i32
    %12 = vector.broadcast %c8_i32 : i32 to vector<1x1x128xi32>
    %13 = arith.cmpi slt, %9, %12 : vector<1x1x128xi32>
    %14 = arith.andi %11, %13 : vector<1x1x128xi1>
    %15 = arith.extui %14 : vector<1x1x128xi1> to vector<1x1x128xi32>
    %16 = arith.sitofp %15 : vector<1x1x128xi32> to vector<1x1x128xf32>
    %17 = arith.truncf %16 : vector<1x1x128xf32> to vector<1x1x128xbf16>
    %c8_i32_6 = arith.constant 8 : i32
    %18 = vector.broadcast %c8_i32_6 : i32 to vector<1x1x128xi32>
    %19 = arith.cmpi sge, %9, %18 : vector<1x1x128xi32>
    %c16_i32 = arith.constant 16 : i32
    %20 = vector.broadcast %c16_i32 : i32 to vector<1x1x128xi32>
    %21 = arith.cmpi slt, %9, %20 : vector<1x1x128xi32>
    %22 = arith.andi %19, %21 : vector<1x1x128xi1>
    %23 = arith.extui %22 : vector<1x1x128xi1> to vector<1x1x128xi32>
    %24 = arith.sitofp %23 : vector<1x1x128xi32> to vector<1x1x128xf32>
    %25 = arith.truncf %24 : vector<1x1x128xf32> to vector<1x1x128xbf16>
    %c16_i32_7 = arith.constant 16 : i32
    %26 = vector.broadcast %c16_i32_7 : i32 to vector<1x1x128xi32>
    %27 = arith.cmpi sge, %9, %26 : vector<1x1x128xi32>
    %c24_i32 = arith.constant 24 : i32
    %28 = vector.broadcast %c24_i32 : i32 to vector<1x1x128xi32>
    %29 = arith.cmpi slt, %9, %28 : vector<1x1x128xi32>
    %30 = arith.andi %27, %29 : vector<1x1x128xi1>
    %31 = arith.extui %30 : vector<1x1x128xi1> to vector<1x1x128xi32>
    %32 = arith.sitofp %31 : vector<1x1x128xi32> to vector<1x1x128xf32>
    %33 = arith.truncf %32 : vector<1x1x128xf32> to vector<1x1x128xbf16>
    %c24_i32_8 = arith.constant 24 : i32
    %34 = vector.broadcast %c24_i32_8 : i32 to vector<1x1x128xi32>
    %35 = arith.cmpi sge, %9, %34 : vector<1x1x128xi32>
    %c32_i32_9 = arith.constant 32 : i32
    %36 = vector.broadcast %c32_i32_9 : i32 to vector<1x1x128xi32>
    %37 = arith.cmpi slt, %9, %36 : vector<1x1x128xi32>
    %38 = arith.andi %35, %37 : vector<1x1x128xi1>
    %39 = arith.extui %38 : vector<1x1x128xi1> to vector<1x1x128xi32>
    %40 = arith.sitofp %39 : vector<1x1x128xi32> to vector<1x1x128xf32>
    %41 = arith.truncf %40 : vector<1x1x128xf32> to vector<1x1x128xbf16>
    %c32_i32_10 = arith.constant 32 : i32
    %42 = vector.broadcast %c32_i32_10 : i32 to vector<1x1x128xi32>
    %43 = arith.cmpi sge, %9, %42 : vector<1x1x128xi32>
    %c40_i32 = arith.constant 40 : i32
    %44 = vector.broadcast %c40_i32 : i32 to vector<1x1x128xi32>
    %45 = arith.cmpi slt, %9, %44 : vector<1x1x128xi32>
    %46 = arith.andi %43, %45 : vector<1x1x128xi1>
    %47 = arith.extui %46 : vector<1x1x128xi1> to vector<1x1x128xi32>
    %48 = arith.sitofp %47 : vector<1x1x128xi32> to vector<1x1x128xf32>
    %49 = arith.truncf %48 : vector<1x1x128xf32> to vector<1x1x128xbf16>
    %c40_i32_11 = arith.constant 40 : i32
    %50 = vector.broadcast %c40_i32_11 : i32 to vector<1x1x128xi32>
    %51 = arith.cmpi sge, %9, %50 : vector<1x1x128xi32>
    %c48_i32 = arith.constant 48 : i32
    %52 = vector.broadcast %c48_i32 : i32 to vector<1x1x128xi32>
    %53 = arith.cmpi slt, %9, %52 : vector<1x1x128xi32>
    %54 = arith.andi %51, %53 : vector<1x1x128xi1>
    %55 = arith.extui %54 : vector<1x1x128xi1> to vector<1x1x128xi32>
    %56 = arith.sitofp %55 : vector<1x1x128xi32> to vector<1x1x128xf32>
    %57 = arith.truncf %56 : vector<1x1x128xf32> to vector<1x1x128xbf16>
    %c48_i32_12 = arith.constant 48 : i32
    %58 = vector.broadcast %c48_i32_12 : i32 to vector<1x1x128xi32>
    %59 = arith.cmpi sge, %9, %58 : vector<1x1x128xi32>
    %c56_i32 = arith.constant 56 : i32
    %60 = vector.broadcast %c56_i32 : i32 to vector<1x1x128xi32>
    %61 = arith.cmpi slt, %9, %60 : vector<1x1x128xi32>
    %62 = arith.andi %59, %61 : vector<1x1x128xi1>
    %63 = arith.extui %62 : vector<1x1x128xi1> to vector<1x1x128xi32>
    %64 = arith.sitofp %63 : vector<1x1x128xi32> to vector<1x1x128xf32>
    %65 = arith.truncf %64 : vector<1x1x128xf32> to vector<1x1x128xbf16>
    %c56_i32_13 = arith.constant 56 : i32
    %66 = vector.broadcast %c56_i32_13 : i32 to vector<1x1x128xi32>
    %67 = arith.cmpi sge, %9, %66 : vector<1x1x128xi32>
    %c64_i32 = arith.constant 64 : i32
    %68 = vector.broadcast %c64_i32 : i32 to vector<1x1x128xi32>
    %69 = arith.cmpi slt, %9, %68 : vector<1x1x128xi32>
    %70 = arith.andi %67, %69 : vector<1x1x128xi1>
    %71 = arith.extui %70 : vector<1x1x128xi1> to vector<1x1x128xi32>
    %72 = arith.sitofp %71 : vector<1x1x128xi32> to vector<1x1x128xf32>
    %73 = arith.truncf %72 : vector<1x1x128xf32> to vector<1x1x128xbf16>
    %74 = tpu.iota {dimensions = array<i32: 0>} : vector<8x8xi32>
    %75 = tpu.iota {dimensions = array<i32: 1>} : vector<8x8xi32>
    %76 = arith.cmpi sgt, %75, %74 : vector<8x8xi32>
    %cst = arith.constant -1.000000e+30 : f32
    %cst_14 = arith.constant 0.000000e+00 : f32
    %77 = vector.broadcast %cst : f32 to vector<8x8xf32>
    %78 = vector.broadcast %cst_14 : f32 to vector<8x8xf32>
    %79 = arith.select %76, %77, %78 : vector<8x8xi1>, vector<8x8xf32>
    %80 = vector.shape_cast %79 : vector<8x8xf32> to vector<1x8x8xf32>
    %81 = vector.shape_cast %3 : vector<2x8xf32> to vector<2x1x8xf32>
    %82 = vector.broadcast %80 : vector<1x8x8xf32> to vector<2x8x8xf32>
    %83 = vector.broadcast %81 : vector<2x1x8xf32> to vector<2x8x8xf32>
    %84 = arith.addf %82, %83 : vector<2x8x8xf32>
    %85 = arith.truncf %2 : vector<16x128xf32> to vector<16x128xbf16>
    %c0_15 = arith.constant 0 : index
    %c0_16 = arith.constant 0 : index
    %c0_17 = arith.constant 0 : index
    %86 = vector.load %arg3[%c0_15, %c0_16, %c0_17] : memref<17x128x128xbf16, #tpu.memory_space<vmem>>, vector<1x128x128xbf16>
    %87 = vector.shape_cast %86 : vector<1x128x128xbf16> to vector<128x128xbf16>
    %cst_18 = arith.constant dense<0.000000e+00> : vector<16x128xf32>
    %88 = tpu.matmul %85, %87, %cst_18 {dimension_numbers = #tpu.dot_dimension_numbers<[1], [0], [0], [1], [0, 0, 1, 1], [], []>} : vector<16x128xbf16>, vector<128x128xbf16>, vector<16x128xf32> -> vector<16x128xf32>
    %89 = vector.extract_strided_slice %0 {offsets = [0, 0], sizes = [1, 128], strides = [1, 1]} : vector<32x128xf32> to vector<1x128xf32>
    %90 = vector.shape_cast %89 : vector<1x128xf32> to vector<128xf32>
    %91 = vector.shape_cast %90 : vector<128xf32> to vector<1x128xf32>
    %92 = vector.broadcast %91 : vector<1x128xf32> to vector<16x128xf32>
    %93 = arith.addf %88, %92 : vector<16x128xf32>
    %cst_19 = arith.constant 0.353553385 : f32
    %94 = vector.broadcast %cst_19 : f32 to vector<16x128xf32>
    %95 = arith.mulf %93, %94 : vector<16x128xf32>
    %96 = vector.shape_cast %95 : vector<16x128xf32> to vector<2x8x128xf32>
    %97 = arith.truncf %96 : vector<2x8x128xf32> to vector<2x8x128xbf16>
    %98 = arith.truncf %2 : vector<16x128xf32> to vector<16x128xbf16>
    %c1 = arith.constant 1 : index
    %c0_20 = arith.constant 0 : index
    %c0_21 = arith.constant 0 : index
    %99 = vector.load %arg3[%c1, %c0_20, %c0_21] : memref<17x128x128xbf16, #tpu.memory_space<vmem>>, vector<1x128x128xbf16>
    %100 = vector.shape_cast %99 : vector<1x128x128xbf16> to vector<128x128xbf16>
    %cst_22 = arith.constant dense<0.000000e+00> : vector<16x128xf32>
    %101 = tpu.matmul %98, %100, %cst_22 {dimension_numbers = #tpu.dot_dimension_numbers<[1], [0], [0], [1], [0, 0, 1, 1], [], []>} : vector<16x128xbf16>, vector<128x128xbf16>, vector<16x128xf32> -> vector<16x128xf32>
    %102 = vector.extract_strided_slice %0 {offsets = [1, 0], sizes = [1, 128], strides = [1, 1]} : vector<32x128xf32> to vector<1x128xf32>
    %103 = vector.shape_cast %102 : vector<1x128xf32> to vector<128xf32>
    %104 = vector.shape_cast %103 : vector<128xf32> to vector<1x128xf32>
    %105 = vector.broadcast %104 : vector<1x128xf32> to vector<16x128xf32>
    %106 = arith.addf %101, %105 : vector<16x128xf32>
    %107 = vector.shape_cast %106 : vector<16x128xf32> to vector<2x8x128xf32>
    %108 = arith.truncf %107 : vector<2x8x128xf32> to vector<2x8x128xbf16>
    %109 = vector.broadcast %17 : vector<1x1x128xbf16> to vector<2x8x128xbf16>
    %110 = arith.mulf %97, %109 : vector<2x8x128xbf16>
    "tpu.trace_start"() <{level = 10 : i32, message = "bqe,bke->bqk"}> : () -> ()
    %cst_23 = arith.constant dense<0.000000e+00> : vector<2x8x8xf32>
    %111 = tpu.matmul %110, %108, %cst_23 {dimension_numbers = #tpu.dot_dimension_numbers<[2], [2], [1], [1], [0, 0, 0, 1, 1, 1], [0], [0]>} : vector<2x8x128xbf16>, vector<2x8x128xbf16>, vector<2x8x8xf32> -> vector<2x8x8xf32>
    "tpu.trace_stop"() : () -> ()
    %112 = arith.addf %111, %84 : vector<2x8x8xf32>
    %cst_24 = arith.constant dense<0xFF800000> : vector<2x8xf32>
    %113 = vector.multi_reduction <maximumf>, %112, %cst_24 [2] : vector<2x8x8xf32> to vector<2x8xf32>
    %114 = vector.shape_cast %113 : vector<2x8xf32> to vector<2x8x1xf32>
    %115 = vector.broadcast %114 : vector<2x8x1xf32> to vector<2x8x8xf32>
    %116 = arith.subf %112, %115 : vector<2x8x8xf32>
    %117 = math.exp %116 : vector<2x8x8xf32>
    %cst_25 = arith.constant dense<0.000000e+00> : vector<2x8xf32>
    %118 = vector.multi_reduction <add>, %117, %cst_25 [2] : vector<2x8x8xf32> to vector<2x8xf32>
    %119 = vector.shape_cast %118 : vector<2x8xf32> to vector<2x8x1xf32>
    %120 = tpu.reciprocal %119 {approx = true} : vector<2x8x1xf32> -> vector<2x8x1xf32>
    %121 = vector.broadcast %120 : vector<2x8x1xf32> to vector<2x8x8xf32>
    %122 = arith.mulf %117, %121 : vector<2x8x8xf32>
    %123 = arith.truncf %122 : vector<2x8x8xf32> to vector<2x8x8xbf16>
    %124 = vector.broadcast %49 : vector<1x1x128xbf16> to vector<2x8x128xbf16>
    %125 = arith.mulf %108, %124 : vector<2x8x128xbf16>
    "tpu.trace_start"() <{level = 10 : i32, message = "bqk,bke->bqe"}> : () -> ()
    %cst_26 = arith.constant dense<0.000000e+00> : vector<2x8x128xf32>
    %126 = tpu.matmul %123, %125, %cst_26 {dimension_numbers = #tpu.dot_dimension_numbers<[2], [1], [1], [2], [0, 0, 0, 1, 1, 2], [0], [0]>} : vector<2x8x8xbf16>, vector<2x8x128xbf16>, vector<2x8x128xf32> -> vector<2x8x128xf32>
    "tpu.trace_stop"() : () -> ()
    %127 = vector.broadcast %25 : vector<1x1x128xbf16> to vector<2x8x128xbf16>
    %128 = arith.mulf %97, %127 : vector<2x8x128xbf16>
    "tpu.trace_start"() <{level = 10 : i32, message = "bqe,bke->bqk"}> : () -> ()
    %cst_27 = arith.constant dense<0.000000e+00> : vector<2x8x8xf32>
    %129 = tpu.matmul %128, %108, %cst_27 {dimension_numbers = #tpu.dot_dimension_numbers<[2], [2], [1], [1], [0, 0, 0, 1, 1, 1], [0], [0]>} : vector<2x8x128xbf16>, vector<2x8x128xbf16>, vector<2x8x8xf32> -> vector<2x8x8xf32>
    "tpu.trace_stop"() : () -> ()
    %130 = arith.addf %129, %84 : vector<2x8x8xf32>
    %cst_28 = arith.constant dense<0xFF800000> : vector<2x8xf32>
    %131 = vector.multi_reduction <maximumf>, %130, %cst_28 [2] : vector<2x8x8xf32> to vector<2x8xf32>
    %132 = vector.shape_cast %131 : vector<2x8xf32> to vector<2x8x1xf32>
    %133 = vector.broadcast %132 : vector<2x8x1xf32> to vector<2x8x8xf32>
    %134 = arith.subf %130, %133 : vector<2x8x8xf32>
    %135 = math.exp %134 : vector<2x8x8xf32>
    %cst_29 = arith.constant dense<0.000000e+00> : vector<2x8xf32>
    %136 = vector.multi_reduction <add>, %135, %cst_29 [2] : vector<2x8x8xf32> to vector<2x8xf32>
    %137 = vector.shape_cast %136 : vector<2x8xf32> to vector<2x8x1xf32>
    %138 = tpu.reciprocal %137 {approx = true} : vector<2x8x1xf32> -> vector<2x8x1xf32>
    %139 = vector.broadcast %138 : vector<2x8x1xf32> to vector<2x8x8xf32>
    %140 = arith.mulf %135, %139 : vector<2x8x8xf32>
    %141 = arith.truncf %140 : vector<2x8x8xf32> to vector<2x8x8xbf16>
    %142 = vector.broadcast %57 : vector<1x1x128xbf16> to vector<2x8x128xbf16>
    %143 = arith.mulf %108, %142 : vector<2x8x128xbf16>
    "tpu.trace_start"() <{level = 10 : i32, message = "bqk,bke->bqe"}> : () -> ()
    %cst_30 = arith.constant dense<0.000000e+00> : vector<2x8x128xf32>
    %144 = tpu.matmul %141, %143, %cst_30 {dimension_numbers = #tpu.dot_dimension_numbers<[2], [1], [1], [2], [0, 0, 0, 1, 1, 2], [0], [0]>} : vector<2x8x8xbf16>, vector<2x8x128xbf16>, vector<2x8x128xf32> -> vector<2x8x128xf32>
    "tpu.trace_stop"() : () -> ()
    %145 = arith.addf %126, %144 : vector<2x8x128xf32>
    %146 = vector.broadcast %33 : vector<1x1x128xbf16> to vector<2x8x128xbf16>
    %147 = arith.mulf %97, %146 : vector<2x8x128xbf16>
    "tpu.trace_start"() <{level = 10 : i32, message = "bqe,bke->bqk"}> : () -> ()
    %cst_31 = arith.constant dense<0.000000e+00> : vector<2x8x8xf32>
    %148 = tpu.matmul %147, %108, %cst_31 {dimension_numbers = #tpu.dot_dimension_numbers<[2], [2], [1], [1], [0, 0, 0, 1, 1, 1], [0], [0]>} : vector<2x8x128xbf16>, vector<2x8x128xbf16>, vector<2x8x8xf32> -> vector<2x8x8xf32>
    "tpu.trace_stop"() : () -> ()
    %149 = arith.addf %148, %84 : vector<2x8x8xf32>
    %cst_32 = arith.constant dense<0xFF800000> : vector<2x8xf32>
    %150 = vector.multi_reduction <maximumf>, %149, %cst_32 [2] : vector<2x8x8xf32> to vector<2x8xf32>
    %151 = vector.shape_cast %150 : vector<2x8xf32> to vector<2x8x1xf32>
    %152 = vector.broadcast %151 : vector<2x8x1xf32> to vector<2x8x8xf32>
    %153 = arith.subf %149, %152 : vector<2x8x8xf32>
    %154 = math.exp %153 : vector<2x8x8xf32>
    %cst_33 = arith.constant dense<0.000000e+00> : vector<2x8xf32>
    %155 = vector.multi_reduction <add>, %154, %cst_33 [2] : vector<2x8x8xf32> to vector<2x8xf32>
    %156 = vector.shape_cast %155 : vector<2x8xf32> to vector<2x8x1xf32>
    %157 = tpu.reciprocal %156 {approx = true} : vector<2x8x1xf32> -> vector<2x8x1xf32>
    %158 = vector.broadcast %157 : vector<2x8x1xf32> to vector<2x8x8xf32>
    %159 = arith.mulf %154, %158 : vector<2x8x8xf32>
    %160 = arith.truncf %159 : vector<2x8x8xf32> to vector<2x8x8xbf16>
    %161 = vector.broadcast %65 : vector<1x1x128xbf16> to vector<2x8x128xbf16>
    %162 = arith.mulf %108, %161 : vector<2x8x128xbf16>
    "tpu.trace_start"() <{level = 10 : i32, message = "bqk,bke->bqe"}> : () -> ()
    %cst_34 = arith.constant dense<0.000000e+00> : vector<2x8x128xf32>
    %163 = tpu.matmul %160, %162, %cst_34 {dimension_numbers = #tpu.dot_dimension_numbers<[2], [1], [1], [2], [0, 0, 0, 1, 1, 2], [0], [0]>} : vector<2x8x8xbf16>, vector<2x8x128xbf16>, vector<2x8x128xf32> -> vector<2x8x128xf32>
    "tpu.trace_stop"() : () -> ()
    %164 = arith.addf %145, %163 : vector<2x8x128xf32>
    %165 = vector.broadcast %41 : vector<1x1x128xbf16> to vector<2x8x128xbf16>
    %166 = arith.mulf %97, %165 : vector<2x8x128xbf16>
    "tpu.trace_start"() <{level = 10 : i32, message = "bqe,bke->bqk"}> : () -> ()
    %cst_35 = arith.constant dense<0.000000e+00> : vector<2x8x8xf32>
    %167 = tpu.matmul %166, %108, %cst_35 {dimension_numbers = #tpu.dot_dimension_numbers<[2], [2], [1], [1], [0, 0, 0, 1, 1, 1], [0], [0]>} : vector<2x8x128xbf16>, vector<2x8x128xbf16>, vector<2x8x8xf32> -> vector<2x8x8xf32>
    "tpu.trace_stop"() : () -> ()
    %168 = arith.addf %167, %84 : vector<2x8x8xf32>
    %cst_36 = arith.constant dense<0xFF800000> : vector<2x8xf32>
    %169 = vector.multi_reduction <maximumf>, %168, %cst_36 [2] : vector<2x8x8xf32> to vector<2x8xf32>
    %170 = vector.shape_cast %169 : vector<2x8xf32> to vector<2x8x1xf32>
    %171 = vector.broadcast %170 : vector<2x8x1xf32> to vector<2x8x8xf32>
    %172 = arith.subf %168, %171 : vector<2x8x8xf32>
    %173 = math.exp %172 : vector<2x8x8xf32>
    %cst_37 = arith.constant dense<0.000000e+00> : vector<2x8xf32>
    %174 = vector.multi_reduction <add>, %173, %cst_37 [2] : vector<2x8x8xf32> to vector<2x8xf32>
    %175 = vector.shape_cast %174 : vector<2x8xf32> to vector<2x8x1xf32>
    %176 = tpu.reciprocal %175 {approx = true} : vector<2x8x1xf32> -> vector<2x8x1xf32>
    %177 = vector.broadcast %176 : vector<2x8x1xf32> to vector<2x8x8xf32>
    %178 = arith.mulf %173, %177 : vector<2x8x8xf32>
    %179 = arith.truncf %178 : vector<2x8x8xf32> to vector<2x8x8xbf16>
    %180 = vector.broadcast %73 : vector<1x1x128xbf16> to vector<2x8x128xbf16>
    %181 = arith.mulf %108, %180 : vector<2x8x128xbf16>
    "tpu.trace_start"() <{level = 10 : i32, message = "bqk,bke->bqe"}> : () -> ()
    %cst_38 = arith.constant dense<0.000000e+00> : vector<2x8x128xf32>
    %182 = tpu.matmul %179, %181, %cst_38 {dimension_numbers = #tpu.dot_dimension_numbers<[2], [1], [1], [2], [0, 0, 0, 1, 1, 2], [0], [0]>} : vector<2x8x8xbf16>, vector<2x8x128xbf16>, vector<2x8x128xf32> -> vector<2x8x128xf32>
    "tpu.trace_stop"() : () -> ()
    %183 = arith.addf %164, %182 : vector<2x8x128xf32>
    %184 = vector.shape_cast %183 : vector<2x8x128xf32> to vector<16x128xf32>
    %185 = arith.truncf %184 : vector<16x128xf32> to vector<16x128xbf16>
    %c2 = arith.constant 2 : index
    %c0_39 = arith.constant 0 : index
    %c0_40 = arith.constant 0 : index
    %186 = vector.load %arg3[%c2, %c0_39, %c0_40] : memref<17x128x128xbf16, #tpu.memory_space<vmem>>, vector<1x128x128xbf16>
    %187 = vector.shape_cast %186 : vector<1x128x128xbf16> to vector<128x128xbf16>
    %cst_41 = arith.constant dense<0.000000e+00> : vector<16x128xf32>
    %188 = tpu.matmul %185, %187, %cst_41 {dimension_numbers = #tpu.dot_dimension_numbers<[1], [0], [0], [1], [0, 0, 1, 1], [], []>} : vector<16x128xbf16>, vector<128x128xbf16>, vector<16x128xf32> -> vector<16x128xf32>
    %189 = vector.extract_strided_slice %0 {offsets = [2, 0], sizes = [1, 128], strides = [1, 1]} : vector<32x128xf32> to vector<1x128xf32>
    %190 = vector.shape_cast %189 : vector<1x128xf32> to vector<128xf32>
    %191 = vector.shape_cast %190 : vector<128xf32> to vector<1x128xf32>
    %192 = vector.broadcast %191 : vector<1x128xf32> to vector<16x128xf32>
    %193 = arith.addf %188, %192 : vector<16x128xf32>
    %194 = arith.addf %2, %193 : vector<16x128xf32>
    %cst_42 = arith.constant dense<0.000000e+00> : vector<16xf32>
    %195 = vector.multi_reduction <add>, %194, %cst_42 [1] : vector<16x128xf32> to vector<16xf32>
    %196 = vector.shape_cast %195 : vector<16xf32> to vector<16x1xf32>
    %cst_43 = arith.constant 3.125000e-02 : f32
    %197 = vector.broadcast %cst_43 : f32 to vector<16x1xf32>
    %198 = arith.mulf %196, %197 : vector<16x1xf32>
    %199 = vector.broadcast %198 : vector<16x1xf32> to vector<16x128xf32>
    %200 = arith.subf %194, %199 : vector<16x128xf32>
    %201 = vector.broadcast %8 : vector<1x128xf32> to vector<16x128xf32>
    %202 = arith.mulf %200, %201 : vector<16x128xf32>
    %203 = arith.mulf %202, %202 : vector<16x128xf32>
    %cst_44 = arith.constant dense<0.000000e+00> : vector<16xf32>
    %204 = vector.multi_reduction <add>, %203, %cst_44 [1] : vector<16x128xf32> to vector<16xf32>
    %205 = vector.shape_cast %204 : vector<16xf32> to vector<16x1xf32>
    %cst_45 = arith.constant 3.125000e-02 : f32
    %206 = vector.broadcast %cst_45 : f32 to vector<16x1xf32>
    %207 = arith.mulf %205, %206 : vector<16x1xf32>
    %cst_46 = arith.constant 9.99999974E-6 : f32
    %208 = vector.broadcast %cst_46 : f32 to vector<16x1xf32>
    %209 = arith.addf %207, %208 : vector<16x1xf32>
    %210 = math.rsqrt %209 : vector<16x1xf32>
    %211 = vector.broadcast %210 : vector<16x1xf32> to vector<16x128xf32>
    %212 = arith.mulf %202, %211 : vector<16x128xf32>
    %213 = vector.extract_strided_slice %0 {offsets = [8, 0], sizes = [1, 128], strides = [1, 1]} : vector<32x128xf32> to vector<1x128xf32>
    %214 = vector.shape_cast %213 : vector<1x128xf32> to vector<128xf32>
    %215 = vector.shape_cast %214 : vector<128xf32> to vector<1x128xf32>
    %216 = vector.broadcast %215 : vector<1x128xf32> to vector<16x128xf32>
    %217 = arith.mulf %212, %216 : vector<16x128xf32>
    %218 = vector.extract_strided_slice %0 {offsets = [9, 0], sizes = [1, 128], strides = [1, 1]} : vector<32x128xf32> to vector<1x128xf32>
    %219 = vector.shape_cast %218 : vector<1x128xf32> to vector<128xf32>
    %220 = vector.shape_cast %219 : vector<128xf32> to vector<1x128xf32>
    %221 = vector.broadcast %220 : vector<1x128xf32> to vector<16x128xf32>
    %222 = arith.addf %217, %221 : vector<16x128xf32>
    %223 = arith.truncf %222 : vector<16x128xf32> to vector<16x128xbf16>
    %c3 = arith.constant 3 : index
    %c0_47 = arith.constant 0 : index
    %c0_48 = arith.constant 0 : index
    %224 = vector.load %arg3[%c3, %c0_47, %c0_48] : memref<17x128x128xbf16, #tpu.memory_space<vmem>>, vector<1x128x128xbf16>
    %225 = vector.shape_cast %224 : vector<1x128x128xbf16> to vector<128x128xbf16>
    %cst_49 = arith.constant dense<0.000000e+00> : vector<16x128xf32>
    %226 = tpu.matmul %223, %225, %cst_49 {dimension_numbers = #tpu.dot_dimension_numbers<[1], [0], [0], [1], [0, 0, 1, 1], [], []>} : vector<16x128xbf16>, vector<128x128xbf16>, vector<16x128xf32> -> vector<16x128xf32>
    %227 = vector.extract_strided_slice %0 {offsets = [3, 0], sizes = [1, 128], strides = [1, 1]} : vector<32x128xf32> to vector<1x128xf32>
    %228 = vector.shape_cast %227 : vector<1x128xf32> to vector<128xf32>
    %229 = vector.shape_cast %228 : vector<128xf32> to vector<1x128xf32>
    %230 = vector.broadcast %229 : vector<1x128xf32> to vector<16x128xf32>
    %231 = arith.addf %226, %230 : vector<16x128xf32>
    %cst_50 = arith.constant 0.353553385 : f32
    %232 = vector.broadcast %cst_50 : f32 to vector<16x128xf32>
    %233 = arith.mulf %231, %232 : vector<16x128xf32>
    %234 = vector.shape_cast %233 : vector<16x128xf32> to vector<2x8x128xf32>
    %235 = arith.truncf %234 : vector<2x8x128xf32> to vector<2x8x128xbf16>
    %236 = arith.truncf %2 : vector<16x128xf32> to vector<16x128xbf16>
    %c4 = arith.constant 4 : index
    %c0_51 = arith.constant 0 : index
    %c0_52 = arith.constant 0 : index
    %237 = vector.load %arg3[%c4, %c0_51, %c0_52] : memref<17x128x128xbf16, #tpu.memory_space<vmem>>, vector<1x128x128xbf16>
    %238 = vector.shape_cast %237 : vector<1x128x128xbf16> to vector<128x128xbf16>
    %cst_53 = arith.constant dense<0.000000e+00> : vector<16x128xf32>
    %239 = tpu.matmul %236, %238, %cst_53 {dimension_numbers = #tpu.dot_dimension_numbers<[1], [0], [0], [1], [0, 0, 1, 1], [], []>} : vector<16x128xbf16>, vector<128x128xbf16>, vector<16x128xf32> -> vector<16x128xf32>
    %240 = vector.extract_strided_slice %0 {offsets = [4, 0], sizes = [1, 128], strides = [1, 1]} : vector<32x128xf32> to vector<1x128xf32>
    %241 = vector.shape_cast %240 : vector<1x128xf32> to vector<128xf32>
    %242 = vector.shape_cast %241 : vector<128xf32> to vector<1x128xf32>
    %243 = vector.broadcast %242 : vector<1x128xf32> to vector<16x128xf32>
    %244 = arith.addf %239, %243 : vector<16x128xf32>
    %245 = vector.shape_cast %244 : vector<16x128xf32> to vector<2x8x128xf32>
    %246 = arith.truncf %245 : vector<2x8x128xf32> to vector<2x8x128xbf16>
    %247 = vector.broadcast %17 : vector<1x1x128xbf16> to vector<2x8x128xbf16>
    %248 = arith.mulf %235, %247 : vector<2x8x128xbf16>
    "tpu.trace_start"() <{level = 10 : i32, message = "bqe,bke->bqk"}> : () -> ()
    %cst_54 = arith.constant dense<0.000000e+00> : vector<2x8x8xf32>
    %249 = tpu.matmul %248, %246, %cst_54 {dimension_numbers = #tpu.dot_dimension_numbers<[2], [2], [1], [1], [0, 0, 0, 1, 1, 1], [0], [0]>} : vector<2x8x128xbf16>, vector<2x8x128xbf16>, vector<2x8x8xf32> -> vector<2x8x8xf32>
    "tpu.trace_stop"() : () -> ()
    %cst_55 = arith.constant dense<0xFF800000> : vector<2x8xf32>
    %250 = vector.multi_reduction <maximumf>, %249, %cst_55 [2] : vector<2x8x8xf32> to vector<2x8xf32>
    %251 = vector.shape_cast %250 : vector<2x8xf32> to vector<2x8x1xf32>
    %252 = vector.broadcast %251 : vector<2x8x1xf32> to vector<2x8x8xf32>
    %253 = arith.subf %249, %252 : vector<2x8x8xf32>
    %254 = math.exp %253 : vector<2x8x8xf32>
    %cst_56 = arith.constant dense<0.000000e+00> : vector<2x8xf32>
    %255 = vector.multi_reduction <add>, %254, %cst_56 [2] : vector<2x8x8xf32> to vector<2x8xf32>
    %256 = vector.shape_cast %255 : vector<2x8xf32> to vector<2x8x1xf32>
    %257 = tpu.reciprocal %256 {approx = true} : vector<2x8x1xf32> -> vector<2x8x1xf32>
    %258 = vector.broadcast %257 : vector<2x8x1xf32> to vector<2x8x8xf32>
    %259 = arith.mulf %254, %258 : vector<2x8x8xf32>
    %260 = arith.truncf %259 : vector<2x8x8xf32> to vector<2x8x8xbf16>
    %261 = vector.broadcast %49 : vector<1x1x128xbf16> to vector<2x8x128xbf16>
    %262 = arith.mulf %246, %261 : vector<2x8x128xbf16>
    "tpu.trace_start"() <{level = 10 : i32, message = "bqk,bke->bqe"}> : () -> ()
    %cst_57 = arith.constant dense<0.000000e+00> : vector<2x8x128xf32>
    %263 = tpu.matmul %260, %262, %cst_57 {dimension_numbers = #tpu.dot_dimension_numbers<[2], [1], [1], [2], [0, 0, 0, 1, 1, 2], [0], [0]>} : vector<2x8x8xbf16>, vector<2x8x128xbf16>, vector<2x8x128xf32> -> vector<2x8x128xf32>
    "tpu.trace_stop"() : () -> ()
    %264 = vector.broadcast %25 : vector<1x1x128xbf16> to vector<2x8x128xbf16>
    %265 = arith.mulf %235, %264 : vector<2x8x128xbf16>
    "tpu.trace_start"() <{level = 10 : i32, message = "bqe,bke->bqk"}> : () -> ()
    %cst_58 = arith.constant dense<0.000000e+00> : vector<2x8x8xf32>
    %266 = tpu.matmul %265, %246, %cst_58 {dimension_numbers = #tpu.dot_dimension_numbers<[2], [2], [1], [1], [0, 0, 0, 1, 1, 1], [0], [0]>} : vector<2x8x128xbf16>, vector<2x8x128xbf16>, vector<2x8x8xf32> -> vector<2x8x8xf32>
    "tpu.trace_stop"() : () -> ()
    %cst_59 = arith.constant dense<0xFF800000> : vector<2x8xf32>
    %267 = vector.multi_reduction <maximumf>, %266, %cst_59 [2] : vector<2x8x8xf32> to vector<2x8xf32>
    %268 = vector.shape_cast %267 : vector<2x8xf32> to vector<2x8x1xf32>
    %269 = vector.broadcast %268 : vector<2x8x1xf32> to vector<2x8x8xf32>
    %270 = arith.subf %266, %269 : vector<2x8x8xf32>
    %271 = math.exp %270 : vector<2x8x8xf32>
    %cst_60 = arith.constant dense<0.000000e+00> : vector<2x8xf32>
    %272 = vector.multi_reduction <add>, %271, %cst_60 [2] : vector<2x8x8xf32> to vector<2x8xf32>
    %273 = vector.shape_cast %272 : vector<2x8xf32> to vector<2x8x1xf32>
    %274 = tpu.reciprocal %273 {approx = true} : vector<2x8x1xf32> -> vector<2x8x1xf32>
    %275 = vector.broadcast %274 : vector<2x8x1xf32> to vector<2x8x8xf32>
    %276 = arith.mulf %271, %275 : vector<2x8x8xf32>
    %277 = arith.truncf %276 : vector<2x8x8xf32> to vector<2x8x8xbf16>
    %278 = vector.broadcast %57 : vector<1x1x128xbf16> to vector<2x8x128xbf16>
    %279 = arith.mulf %246, %278 : vector<2x8x128xbf16>
    "tpu.trace_start"() <{level = 10 : i32, message = "bqk,bke->bqe"}> : () -> ()
    %cst_61 = arith.constant dense<0.000000e+00> : vector<2x8x128xf32>
    %280 = tpu.matmul %277, %279, %cst_61 {dimension_numbers = #tpu.dot_dimension_numbers<[2], [1], [1], [2], [0, 0, 0, 1, 1, 2], [0], [0]>} : vector<2x8x8xbf16>, vector<2x8x128xbf16>, vector<2x8x128xf32> -> vector<2x8x128xf32>
    "tpu.trace_stop"() : () -> ()
    %281 = arith.addf %263, %280 : vector<2x8x128xf32>
    %282 = vector.broadcast %33 : vector<1x1x128xbf16> to vector<2x8x128xbf16>
    %283 = arith.mulf %235, %282 : vector<2x8x128xbf16>
    "tpu.trace_start"() <{level = 10 : i32, message = "bqe,bke->bqk"}> : () -> ()
    %cst_62 = arith.constant dense<0.000000e+00> : vector<2x8x8xf32>
    %284 = tpu.matmul %283, %246, %cst_62 {dimension_numbers = #tpu.dot_dimension_numbers<[2], [2], [1], [1], [0, 0, 0, 1, 1, 1], [0], [0]>} : vector<2x8x128xbf16>, vector<2x8x128xbf16>, vector<2x8x8xf32> -> vector<2x8x8xf32>
    "tpu.trace_stop"() : () -> ()
    %cst_63 = arith.constant dense<0xFF800000> : vector<2x8xf32>
    %285 = vector.multi_reduction <maximumf>, %284, %cst_63 [2] : vector<2x8x8xf32> to vector<2x8xf32>
    %286 = vector.shape_cast %285 : vector<2x8xf32> to vector<2x8x1xf32>
    %287 = vector.broadcast %286 : vector<2x8x1xf32> to vector<2x8x8xf32>
    %288 = arith.subf %284, %287 : vector<2x8x8xf32>
    %289 = math.exp %288 : vector<2x8x8xf32>
    %cst_64 = arith.constant dense<0.000000e+00> : vector<2x8xf32>
    %290 = vector.multi_reduction <add>, %289, %cst_64 [2] : vector<2x8x8xf32> to vector<2x8xf32>
    %291 = vector.shape_cast %290 : vector<2x8xf32> to vector<2x8x1xf32>
    %292 = tpu.reciprocal %291 {approx = true} : vector<2x8x1xf32> -> vector<2x8x1xf32>
    %293 = vector.broadcast %292 : vector<2x8x1xf32> to vector<2x8x8xf32>
    %294 = arith.mulf %289, %293 : vector<2x8x8xf32>
    %295 = arith.truncf %294 : vector<2x8x8xf32> to vector<2x8x8xbf16>
    %296 = vector.broadcast %65 : vector<1x1x128xbf16> to vector<2x8x128xbf16>
    %297 = arith.mulf %246, %296 : vector<2x8x128xbf16>
    "tpu.trace_start"() <{level = 10 : i32, message = "bqk,bke->bqe"}> : () -> ()
    %cst_65 = arith.constant dense<0.000000e+00> : vector<2x8x128xf32>
    %298 = tpu.matmul %295, %297, %cst_65 {dimension_numbers = #tpu.dot_dimension_numbers<[2], [1], [1], [2], [0, 0, 0, 1, 1, 2], [0], [0]>} : vector<2x8x8xbf16>, vector<2x8x128xbf16>, vector<2x8x128xf32> -> vector<2x8x128xf32>
    "tpu.trace_stop"() : () -> ()
    %299 = arith.addf %281, %298 : vector<2x8x128xf32>
    %300 = vector.broadcast %41 : vector<1x1x128xbf16> to vector<2x8x128xbf16>
    %301 = arith.mulf %235, %300 : vector<2x8x128xbf16>
    "tpu.trace_start"() <{level = 10 : i32, message = "bqe,bke->bqk"}> : () -> ()
    %cst_66 = arith.constant dense<0.000000e+00> : vector<2x8x8xf32>
    %302 = tpu.matmul %301, %246, %cst_66 {dimension_numbers = #tpu.dot_dimension_numbers<[2], [2], [1], [1], [0, 0, 0, 1, 1, 1], [0], [0]>} : vector<2x8x128xbf16>, vector<2x8x128xbf16>, vector<2x8x8xf32> -> vector<2x8x8xf32>
    "tpu.trace_stop"() : () -> ()
    %cst_67 = arith.constant dense<0xFF800000> : vector<2x8xf32>
    %303 = vector.multi_reduction <maximumf>, %302, %cst_67 [2] : vector<2x8x8xf32> to vector<2x8xf32>
    %304 = vector.shape_cast %303 : vector<2x8xf32> to vector<2x8x1xf32>
    %305 = vector.broadcast %304 : vector<2x8x1xf32> to vector<2x8x8xf32>
    %306 = arith.subf %302, %305 : vector<2x8x8xf32>
    %307 = math.exp %306 : vector<2x8x8xf32>
    %cst_68 = arith.constant dense<0.000000e+00> : vector<2x8xf32>
    %308 = vector.multi_reduction <add>, %307, %cst_68 [2] : vector<2x8x8xf32> to vector<2x8xf32>
    %309 = vector.shape_cast %308 : vector<2x8xf32> to vector<2x8x1xf32>
    %310 = tpu.reciprocal %309 {approx = true} : vector<2x8x1xf32> -> vector<2x8x1xf32>
    %311 = vector.broadcast %310 : vector<2x8x1xf32> to vector<2x8x8xf32>
    %312 = arith.mulf %307, %311 : vector<2x8x8xf32>
    %313 = arith.truncf %312 : vector<2x8x8xf32> to vector<2x8x8xbf16>
    %314 = vector.broadcast %73 : vector<1x1x128xbf16> to vector<2x8x128xbf16>
    %315 = arith.mulf %246, %314 : vector<2x8x128xbf16>
    "tpu.trace_start"() <{level = 10 : i32, message = "bqk,bke->bqe"}> : () -> ()
    %cst_69 = arith.constant dense<0.000000e+00> : vector<2x8x128xf32>
    %316 = tpu.matmul %313, %315, %cst_69 {dimension_numbers = #tpu.dot_dimension_numbers<[2], [1], [1], [2], [0, 0, 0, 1, 1, 2], [0], [0]>} : vector<2x8x8xbf16>, vector<2x8x128xbf16>, vector<2x8x128xf32> -> vector<2x8x128xf32>
    "tpu.trace_stop"() : () -> ()
    %317 = arith.addf %299, %316 : vector<2x8x128xf32>
    %318 = vector.shape_cast %317 : vector<2x8x128xf32> to vector<16x128xf32>
    %319 = arith.truncf %318 : vector<16x128xf32> to vector<16x128xbf16>
    %c5 = arith.constant 5 : index
    %c0_70 = arith.constant 0 : index
    %c0_71 = arith.constant 0 : index
    %320 = vector.load %arg3[%c5, %c0_70, %c0_71] : memref<17x128x128xbf16, #tpu.memory_space<vmem>>, vector<1x128x128xbf16>
    %321 = vector.shape_cast %320 : vector<1x128x128xbf16> to vector<128x128xbf16>
    %cst_72 = arith.constant dense<0.000000e+00> : vector<16x128xf32>
    %322 = tpu.matmul %319, %321, %cst_72 {dimension_numbers = #tpu.dot_dimension_numbers<[1], [0], [0], [1], [0, 0, 1, 1], [], []>} : vector<16x128xbf16>, vector<128x128xbf16>, vector<16x128xf32> -> vector<16x128xf32>
    %323 = vector.extract_strided_slice %0 {offsets = [5, 0], sizes = [1, 128], strides = [1, 1]} : vector<32x128xf32> to vector<1x128xf32>
    %324 = vector.shape_cast %323 : vector<1x128xf32> to vector<128xf32>
    %325 = vector.shape_cast %324 : vector<128xf32> to vector<1x128xf32>
    %326 = vector.broadcast %325 : vector<1x128xf32> to vector<16x128xf32>
    %327 = arith.addf %322, %326 : vector<16x128xf32>
    %328 = arith.addf %222, %327 : vector<16x128xf32>
    %cst_73 = arith.constant dense<0.000000e+00> : vector<16xf32>
    %329 = vector.multi_reduction <add>, %328, %cst_73 [1] : vector<16x128xf32> to vector<16xf32>
    %330 = vector.shape_cast %329 : vector<16xf32> to vector<16x1xf32>
    %cst_74 = arith.constant 3.125000e-02 : f32
    %331 = vector.broadcast %cst_74 : f32 to vector<16x1xf32>
    %332 = arith.mulf %330, %331 : vector<16x1xf32>
    %333 = vector.broadcast %332 : vector<16x1xf32> to vector<16x128xf32>
    %334 = arith.subf %328, %333 : vector<16x128xf32>
    %335 = vector.broadcast %8 : vector<1x128xf32> to vector<16x128xf32>
    %336 = arith.mulf %334, %335 : vector<16x128xf32>
    %337 = arith.mulf %336, %336 : vector<16x128xf32>
    %cst_75 = arith.constant dense<0.000000e+00> : vector<16xf32>
    %338 = vector.multi_reduction <add>, %337, %cst_75 [1] : vector<16x128xf32> to vector<16xf32>
    %339 = vector.shape_cast %338 : vector<16xf32> to vector<16x1xf32>
    %cst_76 = arith.constant 3.125000e-02 : f32
    %340 = vector.broadcast %cst_76 : f32 to vector<16x1xf32>
    %341 = arith.mulf %339, %340 : vector<16x1xf32>
    %cst_77 = arith.constant 9.99999974E-6 : f32
    %342 = vector.broadcast %cst_77 : f32 to vector<16x1xf32>
    %343 = arith.addf %341, %342 : vector<16x1xf32>
    %344 = math.rsqrt %343 : vector<16x1xf32>
    %345 = vector.broadcast %344 : vector<16x1xf32> to vector<16x128xf32>
    %346 = arith.mulf %336, %345 : vector<16x128xf32>
    %347 = vector.extract_strided_slice %0 {offsets = [10, 0], sizes = [1, 128], strides = [1, 1]} : vector<32x128xf32> to vector<1x128xf32>
    %348 = vector.shape_cast %347 : vector<1x128xf32> to vector<128xf32>
    %349 = vector.shape_cast %348 : vector<128xf32> to vector<1x128xf32>
    %350 = vector.broadcast %349 : vector<1x128xf32> to vector<16x128xf32>
    %351 = arith.mulf %346, %350 : vector<16x128xf32>
    %352 = vector.extract_strided_slice %0 {offsets = [11, 0], sizes = [1, 128], strides = [1, 1]} : vector<32x128xf32> to vector<1x128xf32>
    %353 = vector.shape_cast %352 : vector<1x128xf32> to vector<128xf32>
    %354 = vector.shape_cast %353 : vector<128xf32> to vector<1x128xf32>
    %355 = vector.broadcast %354 : vector<1x128xf32> to vector<16x128xf32>
    %356 = arith.addf %351, %355 : vector<16x128xf32>
    %357 = arith.truncf %356 : vector<16x128xf32> to vector<16x128xbf16>
    %c6 = arith.constant 6 : index
    %c0_78 = arith.constant 0 : index
    %c0_79 = arith.constant 0 : index
    %358 = vector.load %arg3[%c6, %c0_78, %c0_79] : memref<17x128x128xbf16, #tpu.memory_space<vmem>>, vector<1x128x128xbf16>
    %359 = vector.shape_cast %358 : vector<1x128x128xbf16> to vector<128x128xbf16>
    %cst_80 = arith.constant dense<0.000000e+00> : vector<16x128xf32>
    %360 = tpu.matmul %357, %359, %cst_80 {dimension_numbers = #tpu.dot_dimension_numbers<[1], [0], [0], [1], [0, 0, 1, 1], [], []>} : vector<16x128xbf16>, vector<128x128xbf16>, vector<16x128xf32> -> vector<16x128xf32>
    %361 = vector.extract_strided_slice %0 {offsets = [6, 0], sizes = [1, 128], strides = [1, 1]} : vector<32x128xf32> to vector<1x128xf32>
    %362 = vector.shape_cast %361 : vector<1x128xf32> to vector<128xf32>
    %363 = vector.shape_cast %362 : vector<128xf32> to vector<1x128xf32>
    %364 = vector.broadcast %363 : vector<1x128xf32> to vector<16x128xf32>
    %365 = arith.addf %360, %364 : vector<16x128xf32>
    %cst_81 = arith.constant 0.000000e+00 : f32
    %366 = vector.broadcast %cst_81 : f32 to vector<16x128xf32>
    %367 = arith.maximumf %365, %366 : vector<16x128xf32>
    %368 = arith.truncf %367 : vector<16x128xf32> to vector<16x128xbf16>
    %c7 = arith.constant 7 : index
    %c0_82 = arith.constant 0 : index
    %c0_83 = arith.constant 0 : index
    %369 = vector.load %arg3[%c7, %c0_82, %c0_83] : memref<17x128x128xbf16, #tpu.memory_space<vmem>>, vector<1x128x128xbf16>
    %370 = vector.shape_cast %369 : vector<1x128x128xbf16> to vector<128x128xbf16>
    %cst_84 = arith.constant dense<0.000000e+00> : vector<16x128xf32>
    %371 = tpu.matmul %368, %370, %cst_84 {dimension_numbers = #tpu.dot_dimension_numbers<[1], [0], [0], [1], [0, 0, 1, 1], [], []>} : vector<16x128xbf16>, vector<128x128xbf16>, vector<16x128xf32> -> vector<16x128xf32>
    %372 = vector.extract_strided_slice %0 {offsets = [7, 0], sizes = [1, 128], strides = [1, 1]} : vector<32x128xf32> to vector<1x128xf32>
    %373 = vector.shape_cast %372 : vector<1x128xf32> to vector<128xf32>
    %374 = vector.shape_cast %373 : vector<128xf32> to vector<1x128xf32>
    %375 = vector.broadcast %374 : vector<1x128xf32> to vector<16x128xf32>
    %376 = arith.addf %371, %375 : vector<16x128xf32>
    %377 = arith.addf %356, %376 : vector<16x128xf32>
    %cst_85 = arith.constant dense<0.000000e+00> : vector<16xf32>
    %378 = vector.multi_reduction <add>, %377, %cst_85 [1] : vector<16x128xf32> to vector<16xf32>
    %379 = vector.shape_cast %378 : vector<16xf32> to vector<16x1xf32>
    %cst_86 = arith.constant 3.125000e-02 : f32
    %380 = vector.broadcast %cst_86 : f32 to vector<16x1xf32>
    %381 = arith.mulf %379, %380 : vector<16x1xf32>
    %382 = vector.broadcast %381 : vector<16x1xf32> to vector<16x128xf32>
    %383 = arith.subf %377, %382 : vector<16x128xf32>
    %384 = vector.broadcast %8 : vector<1x128xf32> to vector<16x128xf32>
    %385 = arith.mulf %383, %384 : vector<16x128xf32>
    %386 = arith.mulf %385, %385 : vector<16x128xf32>
    %cst_87 = arith.constant dense<0.000000e+00> : vector<16xf32>
    %387 = vector.multi_reduction <add>, %386, %cst_87 [1] : vector<16x128xf32> to vector<16xf32>
    %388 = vector.shape_cast %387 : vector<16xf32> to vector<16x1xf32>
    %cst_88 = arith.constant 3.125000e-02 : f32
    %389 = vector.broadcast %cst_88 : f32 to vector<16x1xf32>
    %390 = arith.mulf %388, %389 : vector<16x1xf32>
    %cst_89 = arith.constant 9.99999974E-6 : f32
    %391 = vector.broadcast %cst_89 : f32 to vector<16x1xf32>
    %392 = arith.addf %390, %391 : vector<16x1xf32>
    %393 = math.rsqrt %392 : vector<16x1xf32>
    %394 = vector.broadcast %393 : vector<16x1xf32> to vector<16x128xf32>
    %395 = arith.mulf %385, %394 : vector<16x128xf32>
    %396 = vector.extract_strided_slice %0 {offsets = [12, 0], sizes = [1, 128], strides = [1, 1]} : vector<32x128xf32> to vector<1x128xf32>
    %397 = vector.shape_cast %396 : vector<1x128xf32> to vector<128xf32>
    %398 = vector.shape_cast %397 : vector<128xf32> to vector<1x128xf32>
    %399 = vector.broadcast %398 : vector<1x128xf32> to vector<16x128xf32>
    %400 = arith.mulf %395, %399 : vector<16x128xf32>
    %401 = vector.extract_strided_slice %0 {offsets = [13, 0], sizes = [1, 128], strides = [1, 1]} : vector<32x128xf32> to vector<1x128xf32>
    %402 = vector.shape_cast %401 : vector<1x128xf32> to vector<128xf32>
    %403 = vector.shape_cast %402 : vector<128xf32> to vector<1x128xf32>
    %404 = vector.broadcast %403 : vector<1x128xf32> to vector<16x128xf32>
    %405 = arith.addf %400, %404 : vector<16x128xf32>
    %406 = arith.truncf %405 : vector<16x128xf32> to vector<16x128xbf16>
    %c8 = arith.constant 8 : index
    %c0_90 = arith.constant 0 : index
    %c0_91 = arith.constant 0 : index
    %407 = vector.load %arg3[%c8, %c0_90, %c0_91] : memref<17x128x128xbf16, #tpu.memory_space<vmem>>, vector<1x128x128xbf16>
    %408 = vector.shape_cast %407 : vector<1x128x128xbf16> to vector<128x128xbf16>
    %cst_92 = arith.constant dense<0.000000e+00> : vector<16x128xf32>
    %409 = tpu.matmul %406, %408, %cst_92 {dimension_numbers = #tpu.dot_dimension_numbers<[1], [0], [0], [1], [0, 0, 1, 1], [], []>} : vector<16x128xbf16>, vector<128x128xbf16>, vector<16x128xf32> -> vector<16x128xf32>
    %410 = vector.extract_strided_slice %0 {offsets = [14, 0], sizes = [1, 128], strides = [1, 1]} : vector<32x128xf32> to vector<1x128xf32>
    %411 = vector.shape_cast %410 : vector<1x128xf32> to vector<128xf32>
    %412 = vector.shape_cast %411 : vector<128xf32> to vector<1x128xf32>
    %413 = vector.broadcast %412 : vector<1x128xf32> to vector<16x128xf32>
    %414 = arith.addf %409, %413 : vector<16x128xf32>
    %cst_93 = arith.constant 0.353553385 : f32
    %415 = vector.broadcast %cst_93 : f32 to vector<16x128xf32>
    %416 = arith.mulf %414, %415 : vector<16x128xf32>
    %417 = vector.shape_cast %416 : vector<16x128xf32> to vector<2x8x128xf32>
    %418 = arith.truncf %417 : vector<2x8x128xf32> to vector<2x8x128xbf16>
    %419 = arith.truncf %405 : vector<16x128xf32> to vector<16x128xbf16>
    %c9 = arith.constant 9 : index
    %c0_94 = arith.constant 0 : index
    %c0_95 = arith.constant 0 : index
    %420 = vector.load %arg3[%c9, %c0_94, %c0_95] : memref<17x128x128xbf16, #tpu.memory_space<vmem>>, vector<1x128x128xbf16>
    %421 = vector.shape_cast %420 : vector<1x128x128xbf16> to vector<128x128xbf16>
    %cst_96 = arith.constant dense<0.000000e+00> : vector<16x128xf32>
    %422 = tpu.matmul %419, %421, %cst_96 {dimension_numbers = #tpu.dot_dimension_numbers<[1], [0], [0], [1], [0, 0, 1, 1], [], []>} : vector<16x128xbf16>, vector<128x128xbf16>, vector<16x128xf32> -> vector<16x128xf32>
    %423 = vector.extract_strided_slice %0 {offsets = [15, 0], sizes = [1, 128], strides = [1, 1]} : vector<32x128xf32> to vector<1x128xf32>
    %424 = vector.shape_cast %423 : vector<1x128xf32> to vector<128xf32>
    %425 = vector.shape_cast %424 : vector<128xf32> to vector<1x128xf32>
    %426 = vector.broadcast %425 : vector<1x128xf32> to vector<16x128xf32>
    %427 = arith.addf %422, %426 : vector<16x128xf32>
    %428 = vector.shape_cast %427 : vector<16x128xf32> to vector<2x8x128xf32>
    %429 = arith.truncf %428 : vector<2x8x128xf32> to vector<2x8x128xbf16>
    %430 = vector.broadcast %17 : vector<1x1x128xbf16> to vector<2x8x128xbf16>
    %431 = arith.mulf %418, %430 : vector<2x8x128xbf16>
    "tpu.trace_start"() <{level = 10 : i32, message = "bqe,bke->bqk"}> : () -> ()
    %cst_97 = arith.constant dense<0.000000e+00> : vector<2x8x8xf32>
    %432 = tpu.matmul %431, %429, %cst_97 {dimension_numbers = #tpu.dot_dimension_numbers<[2], [2], [1], [1], [0, 0, 0, 1, 1, 1], [0], [0]>} : vector<2x8x128xbf16>, vector<2x8x128xbf16>, vector<2x8x8xf32> -> vector<2x8x8xf32>
    "tpu.trace_stop"() : () -> ()
    %433 = arith.addf %432, %84 : vector<2x8x8xf32>
    %cst_98 = arith.constant dense<0xFF800000> : vector<2x8xf32>
    %434 = vector.multi_reduction <maximumf>, %433, %cst_98 [2] : vector<2x8x8xf32> to vector<2x8xf32>
    %435 = vector.shape_cast %434 : vector<2x8xf32> to vector<2x8x1xf32>
    %436 = vector.broadcast %435 : vector<2x8x1xf32> to vector<2x8x8xf32>
    %437 = arith.subf %433, %436 : vector<2x8x8xf32>
    %438 = math.exp %437 : vector<2x8x8xf32>
    %cst_99 = arith.constant dense<0.000000e+00> : vector<2x8xf32>
    %439 = vector.multi_reduction <add>, %438, %cst_99 [2] : vector<2x8x8xf32> to vector<2x8xf32>
    %440 = vector.shape_cast %439 : vector<2x8xf32> to vector<2x8x1xf32>
    %441 = tpu.reciprocal %440 {approx = true} : vector<2x8x1xf32> -> vector<2x8x1xf32>
    %442 = vector.broadcast %441 : vector<2x8x1xf32> to vector<2x8x8xf32>
    %443 = arith.mulf %438, %442 : vector<2x8x8xf32>
    %444 = arith.truncf %443 : vector<2x8x8xf32> to vector<2x8x8xbf16>
    %445 = vector.broadcast %49 : vector<1x1x128xbf16> to vector<2x8x128xbf16>
    %446 = arith.mulf %429, %445 : vector<2x8x128xbf16>
    "tpu.trace_start"() <{level = 10 : i32, message = "bqk,bke->bqe"}> : () -> ()
    %cst_100 = arith.constant dense<0.000000e+00> : vector<2x8x128xf32>
    %447 = tpu.matmul %444, %446, %cst_100 {dimension_numbers = #tpu.dot_dimension_numbers<[2], [1], [1], [2], [0, 0, 0, 1, 1, 2], [0], [0]>} : vector<2x8x8xbf16>, vector<2x8x128xbf16>, vector<2x8x128xf32> -> vector<2x8x128xf32>
    "tpu.trace_stop"() : () -> ()
    %448 = vector.broadcast %25 : vector<1x1x128xbf16> to vector<2x8x128xbf16>
    %449 = arith.mulf %418, %448 : vector<2x8x128xbf16>
    "tpu.trace_start"() <{level = 10 : i32, message = "bqe,bke->bqk"}> : () -> ()
    %cst_101 = arith.constant dense<0.000000e+00> : vector<2x8x8xf32>
    %450 = tpu.matmul %449, %429, %cst_101 {dimension_numbers = #tpu.dot_dimension_numbers<[2], [2], [1], [1], [0, 0, 0, 1, 1, 1], [0], [0]>} : vector<2x8x128xbf16>, vector<2x8x128xbf16>, vector<2x8x8xf32> -> vector<2x8x8xf32>
    "tpu.trace_stop"() : () -> ()
    %451 = arith.addf %450, %84 : vector<2x8x8xf32>
    %cst_102 = arith.constant dense<0xFF800000> : vector<2x8xf32>
    %452 = vector.multi_reduction <maximumf>, %451, %cst_102 [2] : vector<2x8x8xf32> to vector<2x8xf32>
    %453 = vector.shape_cast %452 : vector<2x8xf32> to vector<2x8x1xf32>
    %454 = vector.broadcast %453 : vector<2x8x1xf32> to vector<2x8x8xf32>
    %455 = arith.subf %451, %454 : vector<2x8x8xf32>
    %456 = math.exp %455 : vector<2x8x8xf32>
    %cst_103 = arith.constant dense<0.000000e+00> : vector<2x8xf32>
    %457 = vector.multi_reduction <add>, %456, %cst_103 [2] : vector<2x8x8xf32> to vector<2x8xf32>
    %458 = vector.shape_cast %457 : vector<2x8xf32> to vector<2x8x1xf32>
    %459 = tpu.reciprocal %458 {approx = true} : vector<2x8x1xf32> -> vector<2x8x1xf32>
    %460 = vector.broadcast %459 : vector<2x8x1xf32> to vector<2x8x8xf32>
    %461 = arith.mulf %456, %460 : vector<2x8x8xf32>
    %462 = arith.truncf %461 : vector<2x8x8xf32> to vector<2x8x8xbf16>
    %463 = vector.broadcast %57 : vector<1x1x128xbf16> to vector<2x8x128xbf16>
    %464 = arith.mulf %429, %463 : vector<2x8x128xbf16>
    "tpu.trace_start"() <{level = 10 : i32, message = "bqk,bke->bqe"}> : () -> ()
    %cst_104 = arith.constant dense<0.000000e+00> : vector<2x8x128xf32>
    %465 = tpu.matmul %462, %464, %cst_104 {dimension_numbers = #tpu.dot_dimension_numbers<[2], [1], [1], [2], [0, 0, 0, 1, 1, 2], [0], [0]>} : vector<2x8x8xbf16>, vector<2x8x128xbf16>, vector<2x8x128xf32> -> vector<2x8x128xf32>
    "tpu.trace_stop"() : () -> ()
    %466 = arith.addf %447, %465 : vector<2x8x128xf32>
    %467 = vector.broadcast %33 : vector<1x1x128xbf16> to vector<2x8x128xbf16>
    %468 = arith.mulf %418, %467 : vector<2x8x128xbf16>
    "tpu.trace_start"() <{level = 10 : i32, message = "bqe,bke->bqk"}> : () -> ()
    %cst_105 = arith.constant dense<0.000000e+00> : vector<2x8x8xf32>
    %469 = tpu.matmul %468, %429, %cst_105 {dimension_numbers = #tpu.dot_dimension_numbers<[2], [2], [1], [1], [0, 0, 0, 1, 1, 1], [0], [0]>} : vector<2x8x128xbf16>, vector<2x8x128xbf16>, vector<2x8x8xf32> -> vector<2x8x8xf32>
    "tpu.trace_stop"() : () -> ()
    %470 = arith.addf %469, %84 : vector<2x8x8xf32>
    %cst_106 = arith.constant dense<0xFF800000> : vector<2x8xf32>
    %471 = vector.multi_reduction <maximumf>, %470, %cst_106 [2] : vector<2x8x8xf32> to vector<2x8xf32>
    %472 = vector.shape_cast %471 : vector<2x8xf32> to vector<2x8x1xf32>
    %473 = vector.broadcast %472 : vector<2x8x1xf32> to vector<2x8x8xf32>
    %474 = arith.subf %470, %473 : vector<2x8x8xf32>
    %475 = math.exp %474 : vector<2x8x8xf32>
    %cst_107 = arith.constant dense<0.000000e+00> : vector<2x8xf32>
    %476 = vector.multi_reduction <add>, %475, %cst_107 [2] : vector<2x8x8xf32> to vector<2x8xf32>
    %477 = vector.shape_cast %476 : vector<2x8xf32> to vector<2x8x1xf32>
    %478 = tpu.reciprocal %477 {approx = true} : vector<2x8x1xf32> -> vector<2x8x1xf32>
    %479 = vector.broadcast %478 : vector<2x8x1xf32> to vector<2x8x8xf32>
    %480 = arith.mulf %475, %479 : vector<2x8x8xf32>
    %481 = arith.truncf %480 : vector<2x8x8xf32> to vector<2x8x8xbf16>
    %482 = vector.broadcast %65 : vector<1x1x128xbf16> to vector<2x8x128xbf16>
    %483 = arith.mulf %429, %482 : vector<2x8x128xbf16>
    "tpu.trace_start"() <{level = 10 : i32, message = "bqk,bke->bqe"}> : () -> ()
    %cst_108 = arith.constant dense<0.000000e+00> : vector<2x8x128xf32>
    %484 = tpu.matmul %481, %483, %cst_108 {dimension_numbers = #tpu.dot_dimension_numbers<[2], [1], [1], [2], [0, 0, 0, 1, 1, 2], [0], [0]>} : vector<2x8x8xbf16>, vector<2x8x128xbf16>, vector<2x8x128xf32> -> vector<2x8x128xf32>
    "tpu.trace_stop"() : () -> ()
    %485 = arith.addf %466, %484 : vector<2x8x128xf32>
    %486 = vector.broadcast %41 : vector<1x1x128xbf16> to vector<2x8x128xbf16>
    %487 = arith.mulf %418, %486 : vector<2x8x128xbf16>
    "tpu.trace_start"() <{level = 10 : i32, message = "bqe,bke->bqk"}> : () -> ()
    %cst_109 = arith.constant dense<0.000000e+00> : vector<2x8x8xf32>
    %488 = tpu.matmul %487, %429, %cst_109 {dimension_numbers = #tpu.dot_dimension_numbers<[2], [2], [1], [1], [0, 0, 0, 1, 1, 1], [0], [0]>} : vector<2x8x128xbf16>, vector<2x8x128xbf16>, vector<2x8x8xf32> -> vector<2x8x8xf32>
    "tpu.trace_stop"() : () -> ()
    %489 = arith.addf %488, %84 : vector<2x8x8xf32>
    %cst_110 = arith.constant dense<0xFF800000> : vector<2x8xf32>
    %490 = vector.multi_reduction <maximumf>, %489, %cst_110 [2] : vector<2x8x8xf32> to vector<2x8xf32>
    %491 = vector.shape_cast %490 : vector<2x8xf32> to vector<2x8x1xf32>
    %492 = vector.broadcast %491 : vector<2x8x1xf32> to vector<2x8x8xf32>
    %493 = arith.subf %489, %492 : vector<2x8x8xf32>
    %494 = math.exp %493 : vector<2x8x8xf32>
    %cst_111 = arith.constant dense<0.000000e+00> : vector<2x8xf32>
    %495 = vector.multi_reduction <add>, %494, %cst_111 [2] : vector<2x8x8xf32> to vector<2x8xf32>
    %496 = vector.shape_cast %495 : vector<2x8xf32> to vector<2x8x1xf32>
    %497 = tpu.reciprocal %496 {approx = true} : vector<2x8x1xf32> -> vector<2x8x1xf32>
    %498 = vector.broadcast %497 : vector<2x8x1xf32> to vector<2x8x8xf32>
    %499 = arith.mulf %494, %498 : vector<2x8x8xf32>
    %500 = arith.truncf %499 : vector<2x8x8xf32> to vector<2x8x8xbf16>
    %501 = vector.broadcast %73 : vector<1x1x128xbf16> to vector<2x8x128xbf16>
    %502 = arith.mulf %429, %501 : vector<2x8x128xbf16>
    "tpu.trace_start"() <{level = 10 : i32, message = "bqk,bke->bqe"}> : () -> ()
    %cst_112 = arith.constant dense<0.000000e+00> : vector<2x8x128xf32>
    %503 = tpu.matmul %500, %502, %cst_112 {dimension_numbers = #tpu.dot_dimension_numbers<[2], [1], [1], [2], [0, 0, 0, 1, 1, 2], [0], [0]>} : vector<2x8x8xbf16>, vector<2x8x128xbf16>, vector<2x8x128xf32> -> vector<2x8x128xf32>
    "tpu.trace_stop"() : () -> ()
    %504 = arith.addf %485, %503 : vector<2x8x128xf32>
    %505 = vector.shape_cast %504 : vector<2x8x128xf32> to vector<16x128xf32>
    %506 = arith.truncf %505 : vector<16x128xf32> to vector<16x128xbf16>
    %c10 = arith.constant 10 : index
    %c0_113 = arith.constant 0 : index
    %c0_114 = arith.constant 0 : index
    %507 = vector.load %arg3[%c10, %c0_113, %c0_114] : memref<17x128x128xbf16, #tpu.memory_space<vmem>>, vector<1x128x128xbf16>
    %508 = vector.shape_cast %507 : vector<1x128x128xbf16> to vector<128x128xbf16>
    %cst_115 = arith.constant dense<0.000000e+00> : vector<16x128xf32>
    %509 = tpu.matmul %506, %508, %cst_115 {dimension_numbers = #tpu.dot_dimension_numbers<[1], [0], [0], [1], [0, 0, 1, 1], [], []>} : vector<16x128xbf16>, vector<128x128xbf16>, vector<16x128xf32> -> vector<16x128xf32>
    %510 = vector.extract_strided_slice %0 {offsets = [16, 0], sizes = [1, 128], strides = [1, 1]} : vector<32x128xf32> to vector<1x128xf32>
    %511 = vector.shape_cast %510 : vector<1x128xf32> to vector<128xf32>
    %512 = vector.shape_cast %511 : vector<128xf32> to vector<1x128xf32>
    %513 = vector.broadcast %512 : vector<1x128xf32> to vector<16x128xf32>
    %514 = arith.addf %509, %513 : vector<16x128xf32>
    %515 = arith.addf %405, %514 : vector<16x128xf32>
    %cst_116 = arith.constant dense<0.000000e+00> : vector<16xf32>
    %516 = vector.multi_reduction <add>, %515, %cst_116 [1] : vector<16x128xf32> to vector<16xf32>
    %517 = vector.shape_cast %516 : vector<16xf32> to vector<16x1xf32>
    %cst_117 = arith.constant 3.125000e-02 : f32
    %518 = vector.broadcast %cst_117 : f32 to vector<16x1xf32>
    %519 = arith.mulf %517, %518 : vector<16x1xf32>
    %520 = vector.broadcast %519 : vector<16x1xf32> to vector<16x128xf32>
    %521 = arith.subf %515, %520 : vector<16x128xf32>
    %522 = vector.broadcast %8 : vector<1x128xf32> to vector<16x128xf32>
    %523 = arith.mulf %521, %522 : vector<16x128xf32>
    %524 = arith.mulf %523, %523 : vector<16x128xf32>
    %cst_118 = arith.constant dense<0.000000e+00> : vector<16xf32>
    %525 = vector.multi_reduction <add>, %524, %cst_118 [1] : vector<16x128xf32> to vector<16xf32>
    %526 = vector.shape_cast %525 : vector<16xf32> to vector<16x1xf32>
    %cst_119 = arith.constant 3.125000e-02 : f32
    %527 = vector.broadcast %cst_119 : f32 to vector<16x1xf32>
    %528 = arith.mulf %526, %527 : vector<16x1xf32>
    %cst_120 = arith.constant 9.99999974E-6 : f32
    %529 = vector.broadcast %cst_120 : f32 to vector<16x1xf32>
    %530 = arith.addf %528, %529 : vector<16x1xf32>
    %531 = math.rsqrt %530 : vector<16x1xf32>
    %532 = vector.broadcast %531 : vector<16x1xf32> to vector<16x128xf32>
    %533 = arith.mulf %523, %532 : vector<16x128xf32>
    %534 = vector.extract_strided_slice %0 {offsets = [22, 0], sizes = [1, 128], strides = [1, 1]} : vector<32x128xf32> to vector<1x128xf32>
    %535 = vector.shape_cast %534 : vector<1x128xf32> to vector<128xf32>
    %536 = vector.shape_cast %535 : vector<128xf32> to vector<1x128xf32>
    %537 = vector.broadcast %536 : vector<1x128xf32> to vector<16x128xf32>
    %538 = arith.mulf %533, %537 : vector<16x128xf32>
    %539 = vector.extract_strided_slice %0 {offsets = [23, 0], sizes = [1, 128], strides = [1, 1]} : vector<32x128xf32> to vector<1x128xf32>
    %540 = vector.shape_cast %539 : vector<1x128xf32> to vector<128xf32>
    %541 = vector.shape_cast %540 : vector<128xf32> to vector<1x128xf32>
    %542 = vector.broadcast %541 : vector<1x128xf32> to vector<16x128xf32>
    %543 = arith.addf %538, %542 : vector<16x128xf32>
    %544 = arith.truncf %543 : vector<16x128xf32> to vector<16x128xbf16>
    %c11 = arith.constant 11 : index
    %c0_121 = arith.constant 0 : index
    %c0_122 = arith.constant 0 : index
    %545 = vector.load %arg3[%c11, %c0_121, %c0_122] : memref<17x128x128xbf16, #tpu.memory_space<vmem>>, vector<1x128x128xbf16>
    %546 = vector.shape_cast %545 : vector<1x128x128xbf16> to vector<128x128xbf16>
    %cst_123 = arith.constant dense<0.000000e+00> : vector<16x128xf32>
    %547 = tpu.matmul %544, %546, %cst_123 {dimension_numbers = #tpu.dot_dimension_numbers<[1], [0], [0], [1], [0, 0, 1, 1], [], []>} : vector<16x128xbf16>, vector<128x128xbf16>, vector<16x128xf32> -> vector<16x128xf32>
    %548 = vector.extract_strided_slice %0 {offsets = [17, 0], sizes = [1, 128], strides = [1, 1]} : vector<32x128xf32> to vector<1x128xf32>
    %549 = vector.shape_cast %548 : vector<1x128xf32> to vector<128xf32>
    %550 = vector.shape_cast %549 : vector<128xf32> to vector<1x128xf32>
    %551 = vector.broadcast %550 : vector<1x128xf32> to vector<16x128xf32>
    %552 = arith.addf %547, %551 : vector<16x128xf32>
    %cst_124 = arith.constant 0.353553385 : f32
    %553 = vector.broadcast %cst_124 : f32 to vector<16x128xf32>
    %554 = arith.mulf %552, %553 : vector<16x128xf32>
    %555 = vector.shape_cast %554 : vector<16x128xf32> to vector<2x8x128xf32>
    %556 = arith.truncf %555 : vector<2x8x128xf32> to vector<2x8x128xbf16>
    %557 = arith.truncf %2 : vector<16x128xf32> to vector<16x128xbf16>
    %c12 = arith.constant 12 : index
    %c0_125 = arith.constant 0 : index
    %c0_126 = arith.constant 0 : index
    %558 = vector.load %arg3[%c12, %c0_125, %c0_126] : memref<17x128x128xbf16, #tpu.memory_space<vmem>>, vector<1x128x128xbf16>
    %559 = vector.shape_cast %558 : vector<1x128x128xbf16> to vector<128x128xbf16>
    %cst_127 = arith.constant dense<0.000000e+00> : vector<16x128xf32>
    %560 = tpu.matmul %557, %559, %cst_127 {dimension_numbers = #tpu.dot_dimension_numbers<[1], [0], [0], [1], [0, 0, 1, 1], [], []>} : vector<16x128xbf16>, vector<128x128xbf16>, vector<16x128xf32> -> vector<16x128xf32>
    %561 = vector.extract_strided_slice %0 {offsets = [18, 0], sizes = [1, 128], strides = [1, 1]} : vector<32x128xf32> to vector<1x128xf32>
    %562 = vector.shape_cast %561 : vector<1x128xf32> to vector<128xf32>
    %563 = vector.shape_cast %562 : vector<128xf32> to vector<1x128xf32>
    %564 = vector.broadcast %563 : vector<1x128xf32> to vector<16x128xf32>
    %565 = arith.addf %560, %564 : vector<16x128xf32>
    %566 = vector.shape_cast %565 : vector<16x128xf32> to vector<2x8x128xf32>
    %567 = arith.truncf %566 : vector<2x8x128xf32> to vector<2x8x128xbf16>
    %568 = vector.broadcast %17 : vector<1x1x128xbf16> to vector<2x8x128xbf16>
    %569 = arith.mulf %556, %568 : vector<2x8x128xbf16>
    "tpu.trace_start"() <{level = 10 : i32, message = "bqe,bke->bqk"}> : () -> ()
    %cst_128 = arith.constant dense<0.000000e+00> : vector<2x8x8xf32>
    %570 = tpu.matmul %569, %567, %cst_128 {dimension_numbers = #tpu.dot_dimension_numbers<[2], [2], [1], [1], [0, 0, 0, 1, 1, 1], [0], [0]>} : vector<2x8x128xbf16>, vector<2x8x128xbf16>, vector<2x8x8xf32> -> vector<2x8x8xf32>
    "tpu.trace_stop"() : () -> ()
    %cst_129 = arith.constant dense<0xFF800000> : vector<2x8xf32>
    %571 = vector.multi_reduction <maximumf>, %570, %cst_129 [2] : vector<2x8x8xf32> to vector<2x8xf32>
    %572 = vector.shape_cast %571 : vector<2x8xf32> to vector<2x8x1xf32>
    %573 = vector.broadcast %572 : vector<2x8x1xf32> to vector<2x8x8xf32>
    %574 = arith.subf %570, %573 : vector<2x8x8xf32>
    %575 = math.exp %574 : vector<2x8x8xf32>
    %cst_130 = arith.constant dense<0.000000e+00> : vector<2x8xf32>
    %576 = vector.multi_reduction <add>, %575, %cst_130 [2] : vector<2x8x8xf32> to vector<2x8xf32>
    %577 = vector.shape_cast %576 : vector<2x8xf32> to vector<2x8x1xf32>
    %578 = tpu.reciprocal %577 {approx = true} : vector<2x8x1xf32> -> vector<2x8x1xf32>
    %579 = vector.broadcast %578 : vector<2x8x1xf32> to vector<2x8x8xf32>
    %580 = arith.mulf %575, %579 : vector<2x8x8xf32>
    %581 = arith.truncf %580 : vector<2x8x8xf32> to vector<2x8x8xbf16>
    %582 = vector.broadcast %49 : vector<1x1x128xbf16> to vector<2x8x128xbf16>
    %583 = arith.mulf %567, %582 : vector<2x8x128xbf16>
    "tpu.trace_start"() <{level = 10 : i32, message = "bqk,bke->bqe"}> : () -> ()
    %cst_131 = arith.constant dense<0.000000e+00> : vector<2x8x128xf32>
    %584 = tpu.matmul %581, %583, %cst_131 {dimension_numbers = #tpu.dot_dimension_numbers<[2], [1], [1], [2], [0, 0, 0, 1, 1, 2], [0], [0]>} : vector<2x8x8xbf16>, vector<2x8x128xbf16>, vector<2x8x128xf32> -> vector<2x8x128xf32>
    "tpu.trace_stop"() : () -> ()
    %585 = vector.broadcast %25 : vector<1x1x128xbf16> to vector<2x8x128xbf16>
    %586 = arith.mulf %556, %585 : vector<2x8x128xbf16>
    "tpu.trace_start"() <{level = 10 : i32, message = "bqe,bke->bqk"}> : () -> ()
    %cst_132 = arith.constant dense<0.000000e+00> : vector<2x8x8xf32>
    %587 = tpu.matmul %586, %567, %cst_132 {dimension_numbers = #tpu.dot_dimension_numbers<[2], [2], [1], [1], [0, 0, 0, 1, 1, 1], [0], [0]>} : vector<2x8x128xbf16>, vector<2x8x128xbf16>, vector<2x8x8xf32> -> vector<2x8x8xf32>
    "tpu.trace_stop"() : () -> ()
    %cst_133 = arith.constant dense<0xFF800000> : vector<2x8xf32>
    %588 = vector.multi_reduction <maximumf>, %587, %cst_133 [2] : vector<2x8x8xf32> to vector<2x8xf32>
    %589 = vector.shape_cast %588 : vector<2x8xf32> to vector<2x8x1xf32>
    %590 = vector.broadcast %589 : vector<2x8x1xf32> to vector<2x8x8xf32>
    %591 = arith.subf %587, %590 : vector<2x8x8xf32>
    %592 = math.exp %591 : vector<2x8x8xf32>
    %cst_134 = arith.constant dense<0.000000e+00> : vector<2x8xf32>
    %593 = vector.multi_reduction <add>, %592, %cst_134 [2] : vector<2x8x8xf32> to vector<2x8xf32>
    %594 = vector.shape_cast %593 : vector<2x8xf32> to vector<2x8x1xf32>
    %595 = tpu.reciprocal %594 {approx = true} : vector<2x8x1xf32> -> vector<2x8x1xf32>
    %596 = vector.broadcast %595 : vector<2x8x1xf32> to vector<2x8x8xf32>
    %597 = arith.mulf %592, %596 : vector<2x8x8xf32>
    %598 = arith.truncf %597 : vector<2x8x8xf32> to vector<2x8x8xbf16>
    %599 = vector.broadcast %57 : vector<1x1x128xbf16> to vector<2x8x128xbf16>
    %600 = arith.mulf %567, %599 : vector<2x8x128xbf16>
    "tpu.trace_start"() <{level = 10 : i32, message = "bqk,bke->bqe"}> : () -> ()
    %cst_135 = arith.constant dense<0.000000e+00> : vector<2x8x128xf32>
    %601 = tpu.matmul %598, %600, %cst_135 {dimension_numbers = #tpu.dot_dimension_numbers<[2], [1], [1], [2], [0, 0, 0, 1, 1, 2], [0], [0]>} : vector<2x8x8xbf16>, vector<2x8x128xbf16>, vector<2x8x128xf32> -> vector<2x8x128xf32>
    "tpu.trace_stop"() : () -> ()
    %602 = arith.addf %584, %601 : vector<2x8x128xf32>
    %603 = vector.broadcast %33 : vector<1x1x128xbf16> to vector<2x8x128xbf16>
    %604 = arith.mulf %556, %603 : vector<2x8x128xbf16>
    "tpu.trace_start"() <{level = 10 : i32, message = "bqe,bke->bqk"}> : () -> ()
    %cst_136 = arith.constant dense<0.000000e+00> : vector<2x8x8xf32>
    %605 = tpu.matmul %604, %567, %cst_136 {dimension_numbers = #tpu.dot_dimension_numbers<[2], [2], [1], [1], [0, 0, 0, 1, 1, 1], [0], [0]>} : vector<2x8x128xbf16>, vector<2x8x128xbf16>, vector<2x8x8xf32> -> vector<2x8x8xf32>
    "tpu.trace_stop"() : () -> ()
    %cst_137 = arith.constant dense<0xFF800000> : vector<2x8xf32>
    %606 = vector.multi_reduction <maximumf>, %605, %cst_137 [2] : vector<2x8x8xf32> to vector<2x8xf32>
    %607 = vector.shape_cast %606 : vector<2x8xf32> to vector<2x8x1xf32>
    %608 = vector.broadcast %607 : vector<2x8x1xf32> to vector<2x8x8xf32>
    %609 = arith.subf %605, %608 : vector<2x8x8xf32>
    %610 = math.exp %609 : vector<2x8x8xf32>
    %cst_138 = arith.constant dense<0.000000e+00> : vector<2x8xf32>
    %611 = vector.multi_reduction <add>, %610, %cst_138 [2] : vector<2x8x8xf32> to vector<2x8xf32>
    %612 = vector.shape_cast %611 : vector<2x8xf32> to vector<2x8x1xf32>
    %613 = tpu.reciprocal %612 {approx = true} : vector<2x8x1xf32> -> vector<2x8x1xf32>
    %614 = vector.broadcast %613 : vector<2x8x1xf32> to vector<2x8x8xf32>
    %615 = arith.mulf %610, %614 : vector<2x8x8xf32>
    %616 = arith.truncf %615 : vector<2x8x8xf32> to vector<2x8x8xbf16>
    %617 = vector.broadcast %65 : vector<1x1x128xbf16> to vector<2x8x128xbf16>
    %618 = arith.mulf %567, %617 : vector<2x8x128xbf16>
    "tpu.trace_start"() <{level = 10 : i32, message = "bqk,bke->bqe"}> : () -> ()
    %cst_139 = arith.constant dense<0.000000e+00> : vector<2x8x128xf32>
    %619 = tpu.matmul %616, %618, %cst_139 {dimension_numbers = #tpu.dot_dimension_numbers<[2], [1], [1], [2], [0, 0, 0, 1, 1, 2], [0], [0]>} : vector<2x8x8xbf16>, vector<2x8x128xbf16>, vector<2x8x128xf32> -> vector<2x8x128xf32>
    "tpu.trace_stop"() : () -> ()
    %620 = arith.addf %602, %619 : vector<2x8x128xf32>
    %621 = vector.broadcast %41 : vector<1x1x128xbf16> to vector<2x8x128xbf16>
    %622 = arith.mulf %556, %621 : vector<2x8x128xbf16>
    "tpu.trace_start"() <{level = 10 : i32, message = "bqe,bke->bqk"}> : () -> ()
    %cst_140 = arith.constant dense<0.000000e+00> : vector<2x8x8xf32>
    %623 = tpu.matmul %622, %567, %cst_140 {dimension_numbers = #tpu.dot_dimension_numbers<[2], [2], [1], [1], [0, 0, 0, 1, 1, 1], [0], [0]>} : vector<2x8x128xbf16>, vector<2x8x128xbf16>, vector<2x8x8xf32> -> vector<2x8x8xf32>
    "tpu.trace_stop"() : () -> ()
    %cst_141 = arith.constant dense<0xFF800000> : vector<2x8xf32>
    %624 = vector.multi_reduction <maximumf>, %623, %cst_141 [2] : vector<2x8x8xf32> to vector<2x8xf32>
    %625 = vector.shape_cast %624 : vector<2x8xf32> to vector<2x8x1xf32>
    %626 = vector.broadcast %625 : vector<2x8x1xf32> to vector<2x8x8xf32>
    %627 = arith.subf %623, %626 : vector<2x8x8xf32>
    %628 = math.exp %627 : vector<2x8x8xf32>
    %cst_142 = arith.constant dense<0.000000e+00> : vector<2x8xf32>
    %629 = vector.multi_reduction <add>, %628, %cst_142 [2] : vector<2x8x8xf32> to vector<2x8xf32>
    %630 = vector.shape_cast %629 : vector<2x8xf32> to vector<2x8x1xf32>
    %631 = tpu.reciprocal %630 {approx = true} : vector<2x8x1xf32> -> vector<2x8x1xf32>
    %632 = vector.broadcast %631 : vector<2x8x1xf32> to vector<2x8x8xf32>
    %633 = arith.mulf %628, %632 : vector<2x8x8xf32>
    %634 = arith.truncf %633 : vector<2x8x8xf32> to vector<2x8x8xbf16>
    %635 = vector.broadcast %73 : vector<1x1x128xbf16> to vector<2x8x128xbf16>
    %636 = arith.mulf %567, %635 : vector<2x8x128xbf16>
    "tpu.trace_start"() <{level = 10 : i32, message = "bqk,bke->bqe"}> : () -> ()
    %cst_143 = arith.constant dense<0.000000e+00> : vector<2x8x128xf32>
    %637 = tpu.matmul %634, %636, %cst_143 {dimension_numbers = #tpu.dot_dimension_numbers<[2], [1], [1], [2], [0, 0, 0, 1, 1, 2], [0], [0]>} : vector<2x8x8xbf16>, vector<2x8x128xbf16>, vector<2x8x128xf32> -> vector<2x8x128xf32>
    "tpu.trace_stop"() : () -> ()
    %638 = arith.addf %620, %637 : vector<2x8x128xf32>
    %639 = vector.shape_cast %638 : vector<2x8x128xf32> to vector<16x128xf32>
    %640 = arith.truncf %639 : vector<16x128xf32> to vector<16x128xbf16>
    %c13 = arith.constant 13 : index
    %c0_144 = arith.constant 0 : index
    %c0_145 = arith.constant 0 : index
    %641 = vector.load %arg3[%c13, %c0_144, %c0_145] : memref<17x128x128xbf16, #tpu.memory_space<vmem>>, vector<1x128x128xbf16>
    %642 = vector.shape_cast %641 : vector<1x128x128xbf16> to vector<128x128xbf16>
    %cst_146 = arith.constant dense<0.000000e+00> : vector<16x128xf32>
    %643 = tpu.matmul %640, %642, %cst_146 {dimension_numbers = #tpu.dot_dimension_numbers<[1], [0], [0], [1], [0, 0, 1, 1], [], []>} : vector<16x128xbf16>, vector<128x128xbf16>, vector<16x128xf32> -> vector<16x128xf32>
    %644 = vector.extract_strided_slice %0 {offsets = [19, 0], sizes = [1, 128], strides = [1, 1]} : vector<32x128xf32> to vector<1x128xf32>
    %645 = vector.shape_cast %644 : vector<1x128xf32> to vector<128xf32>
    %646 = vector.shape_cast %645 : vector<128xf32> to vector<1x128xf32>
    %647 = vector.broadcast %646 : vector<1x128xf32> to vector<16x128xf32>
    %648 = arith.addf %643, %647 : vector<16x128xf32>
    %649 = arith.addf %543, %648 : vector<16x128xf32>
    %cst_147 = arith.constant dense<0.000000e+00> : vector<16xf32>
    %650 = vector.multi_reduction <add>, %649, %cst_147 [1] : vector<16x128xf32> to vector<16xf32>
    %651 = vector.shape_cast %650 : vector<16xf32> to vector<16x1xf32>
    %cst_148 = arith.constant 3.125000e-02 : f32
    %652 = vector.broadcast %cst_148 : f32 to vector<16x1xf32>
    %653 = arith.mulf %651, %652 : vector<16x1xf32>
    %654 = vector.broadcast %653 : vector<16x1xf32> to vector<16x128xf32>
    %655 = arith.subf %649, %654 : vector<16x128xf32>
    %656 = vector.broadcast %8 : vector<1x128xf32> to vector<16x128xf32>
    %657 = arith.mulf %655, %656 : vector<16x128xf32>
    %658 = arith.mulf %657, %657 : vector<16x128xf32>
    %cst_149 = arith.constant dense<0.000000e+00> : vector<16xf32>
    %659 = vector.multi_reduction <add>, %658, %cst_149 [1] : vector<16x128xf32> to vector<16xf32>
    %660 = vector.shape_cast %659 : vector<16xf32> to vector<16x1xf32>
    %cst_150 = arith.constant 3.125000e-02 : f32
    %661 = vector.broadcast %cst_150 : f32 to vector<16x1xf32>
    %662 = arith.mulf %660, %661 : vector<16x1xf32>
    %cst_151 = arith.constant 9.99999974E-6 : f32
    %663 = vector.broadcast %cst_151 : f32 to vector<16x1xf32>
    %664 = arith.addf %662, %663 : vector<16x1xf32>
    %665 = math.rsqrt %664 : vector<16x1xf32>
    %666 = vector.broadcast %665 : vector<16x1xf32> to vector<16x128xf32>
    %667 = arith.mulf %657, %666 : vector<16x128xf32>
    %668 = vector.extract_strided_slice %0 {offsets = [24, 0], sizes = [1, 128], strides = [1, 1]} : vector<32x128xf32> to vector<1x128xf32>
    %669 = vector.shape_cast %668 : vector<1x128xf32> to vector<128xf32>
    %670 = vector.shape_cast %669 : vector<128xf32> to vector<1x128xf32>
    %671 = vector.broadcast %670 : vector<1x128xf32> to vector<16x128xf32>
    %672 = arith.mulf %667, %671 : vector<16x128xf32>
    %673 = vector.extract_strided_slice %0 {offsets = [25, 0], sizes = [1, 128], strides = [1, 1]} : vector<32x128xf32> to vector<1x128xf32>
    %674 = vector.shape_cast %673 : vector<1x128xf32> to vector<128xf32>
    %675 = vector.shape_cast %674 : vector<128xf32> to vector<1x128xf32>
    %676 = vector.broadcast %675 : vector<1x128xf32> to vector<16x128xf32>
    %677 = arith.addf %672, %676 : vector<16x128xf32>
    %678 = arith.truncf %677 : vector<16x128xf32> to vector<16x128xbf16>
    %c14 = arith.constant 14 : index
    %c0_152 = arith.constant 0 : index
    %c0_153 = arith.constant 0 : index
    %679 = vector.load %arg3[%c14, %c0_152, %c0_153] : memref<17x128x128xbf16, #tpu.memory_space<vmem>>, vector<1x128x128xbf16>
    %680 = vector.shape_cast %679 : vector<1x128x128xbf16> to vector<128x128xbf16>
    %cst_154 = arith.constant dense<0.000000e+00> : vector<16x128xf32>
    %681 = tpu.matmul %678, %680, %cst_154 {dimension_numbers = #tpu.dot_dimension_numbers<[1], [0], [0], [1], [0, 0, 1, 1], [], []>} : vector<16x128xbf16>, vector<128x128xbf16>, vector<16x128xf32> -> vector<16x128xf32>
    %682 = vector.extract_strided_slice %0 {offsets = [20, 0], sizes = [1, 128], strides = [1, 1]} : vector<32x128xf32> to vector<1x128xf32>
    %683 = vector.shape_cast %682 : vector<1x128xf32> to vector<128xf32>
    %684 = vector.shape_cast %683 : vector<128xf32> to vector<1x128xf32>
    %685 = vector.broadcast %684 : vector<1x128xf32> to vector<16x128xf32>
    %686 = arith.addf %681, %685 : vector<16x128xf32>
    %cst_155 = arith.constant 0.000000e+00 : f32
    %687 = vector.broadcast %cst_155 : f32 to vector<16x128xf32>
    %688 = arith.maximumf %686, %687 : vector<16x128xf32>
    %689 = arith.truncf %688 : vector<16x128xf32> to vector<16x128xbf16>
    %c15 = arith.constant 15 : index
    %c0_156 = arith.constant 0 : index
    %c0_157 = arith.constant 0 : index
    %690 = vector.load %arg3[%c15, %c0_156, %c0_157] : memref<17x128x128xbf16, #tpu.memory_space<vmem>>, vector<1x128x128xbf16>
    %691 = vector.shape_cast %690 : vector<1x128x128xbf16> to vector<128x128xbf16>
    %cst_158 = arith.constant dense<0.000000e+00> : vector<16x128xf32>
    %692 = tpu.matmul %689, %691, %cst_158 {dimension_numbers = #tpu.dot_dimension_numbers<[1], [0], [0], [1], [0, 0, 1, 1], [], []>} : vector<16x128xbf16>, vector<128x128xbf16>, vector<16x128xf32> -> vector<16x128xf32>
    %693 = vector.extract_strided_slice %0 {offsets = [21, 0], sizes = [1, 128], strides = [1, 1]} : vector<32x128xf32> to vector<1x128xf32>
    %694 = vector.shape_cast %693 : vector<1x128xf32> to vector<128xf32>
    %695 = vector.shape_cast %694 : vector<128xf32> to vector<1x128xf32>
    %696 = vector.broadcast %695 : vector<1x128xf32> to vector<16x128xf32>
    %697 = arith.addf %692, %696 : vector<16x128xf32>
    %698 = arith.addf %677, %697 : vector<16x128xf32>
    %cst_159 = arith.constant dense<0.000000e+00> : vector<16xf32>
    %699 = vector.multi_reduction <add>, %698, %cst_159 [1] : vector<16x128xf32> to vector<16xf32>
    %700 = vector.shape_cast %699 : vector<16xf32> to vector<16x1xf32>
    %cst_160 = arith.constant 3.125000e-02 : f32
    %701 = vector.broadcast %cst_160 : f32 to vector<16x1xf32>
    %702 = arith.mulf %700, %701 : vector<16x1xf32>
    %703 = vector.broadcast %702 : vector<16x1xf32> to vector<16x128xf32>
    %704 = arith.subf %698, %703 : vector<16x128xf32>
    %705 = vector.broadcast %8 : vector<1x128xf32> to vector<16x128xf32>
    %706 = arith.mulf %704, %705 : vector<16x128xf32>
    %707 = arith.mulf %706, %706 : vector<16x128xf32>
    %cst_161 = arith.constant dense<0.000000e+00> : vector<16xf32>
    %708 = vector.multi_reduction <add>, %707, %cst_161 [1] : vector<16x128xf32> to vector<16xf32>
    %709 = vector.shape_cast %708 : vector<16xf32> to vector<16x1xf32>
    %cst_162 = arith.constant 3.125000e-02 : f32
    %710 = vector.broadcast %cst_162 : f32 to vector<16x1xf32>
    %711 = arith.mulf %709, %710 : vector<16x1xf32>
    %cst_163 = arith.constant 9.99999974E-6 : f32
    %712 = vector.broadcast %cst_163 : f32 to vector<16x1xf32>
    %713 = arith.addf %711, %712 : vector<16x1xf32>
    %714 = math.rsqrt %713 : vector<16x1xf32>
    %715 = vector.broadcast %714 : vector<16x1xf32> to vector<16x128xf32>
    %716 = arith.mulf %706, %715 : vector<16x128xf32>
    %717 = vector.extract_strided_slice %0 {offsets = [26, 0], sizes = [1, 128], strides = [1, 1]} : vector<32x128xf32> to vector<1x128xf32>
    %718 = vector.shape_cast %717 : vector<1x128xf32> to vector<128xf32>
    %719 = vector.shape_cast %718 : vector<128xf32> to vector<1x128xf32>
    %720 = vector.broadcast %719 : vector<1x128xf32> to vector<16x128xf32>
    %721 = arith.mulf %716, %720 : vector<16x128xf32>
    %722 = vector.extract_strided_slice %0 {offsets = [27, 0], sizes = [1, 128], strides = [1, 1]} : vector<32x128xf32> to vector<1x128xf32>
    %723 = vector.shape_cast %722 : vector<1x128xf32> to vector<128xf32>
    %724 = vector.shape_cast %723 : vector<128xf32> to vector<1x128xf32>
    %725 = vector.broadcast %724 : vector<1x128xf32> to vector<16x128xf32>
    %726 = arith.addf %721, %725 : vector<16x128xf32>
    %727 = arith.truncf %726 : vector<16x128xf32> to vector<16x128xbf16>
    %c16 = arith.constant 16 : index
    %c0_164 = arith.constant 0 : index
    %c0_165 = arith.constant 0 : index
    %728 = vector.load %arg3[%c16, %c0_164, %c0_165] : memref<17x128x128xbf16, #tpu.memory_space<vmem>>, vector<1x128x128xbf16>
    %729 = vector.shape_cast %728 : vector<1x128x128xbf16> to vector<128x128xbf16>
    %cst_166 = arith.constant dense<0.000000e+00> : vector<16x128xf32>
    %730 = tpu.matmul %727, %729, %cst_166 {dimension_numbers = #tpu.dot_dimension_numbers<[1], [0], [0], [1], [0, 0, 1, 1], [], []>} : vector<16x128xbf16>, vector<128x128xbf16>, vector<16x128xf32> -> vector<16x128xf32>
    %731 = vector.extract_strided_slice %0 {offsets = [28, 0], sizes = [1, 128], strides = [1, 1]} : vector<32x128xf32> to vector<1x128xf32>
    %732 = vector.shape_cast %731 : vector<1x128xf32> to vector<128xf32>
    %733 = vector.shape_cast %732 : vector<128xf32> to vector<1x128xf32>
    %734 = vector.broadcast %733 : vector<1x128xf32> to vector<16x128xf32>
    %735 = arith.addf %730, %734 : vector<16x128xf32>
    %736 = vector.shape_cast %735 : vector<16x128xf32> to vector<2x8x128xf32>
    %c0_167 = arith.constant 0 : index
    %c0_168 = arith.constant 0 : index
    %c0_169 = arith.constant 0 : index
    %737 = vector.load %arg5[%c0_167, %c0_168, %c0_169] : memref<2x8x128xf32, #tpu.memory_space<vmem>>, vector<2x8x128xf32>
    tpu.vector_store %arg5[%c0_167, %c0_168, %c0_169], %736 {strides = array<i32>} : memref<2x8x128xf32, #tpu.memory_space<vmem>>, vector<2x8x128xf32>,
    return
  }
  func.func @transform_0(%arg0: i32) -> (i32, i32, i32) {
    %c0_i32 = arith.constant 0 : i32
    %c0_i32_0 = arith.constant 0 : i32
    %c0_i32_1 = arith.constant 0 : i32
    return %arg0, %c0_i32, %c0_i32_0 : i32, i32, i32
  }
  func.func @transform_1(%arg0: i32) -> (i32, i32) {
    %c0_i32 = arith.constant 0 : i32
    %c0_i32_0 = arith.constant 0 : i32
    return %arg0, %c0_i32 : i32, i32
  }
  func.func @transform_2(%arg0: i32) -> (i32, i32, i32) {
    %c0_i32 = arith.constant 0 : i32
    %c0_i32_0 = arith.constant 0 : i32
    %c0_i32_1 = arith.constant 0 : i32
    %c0_i32_2 = arith.constant 0 : i32
    return %c0_i32, %c0_i32_0, %c0_i32_1 : i32, i32, i32
  }
  func.func @transform_3(%arg0: i32) -> (i32, i32) {
    %c0_i32 = arith.constant 0 : i32
    %c0_i32_0 = arith.constant 0 : i32
    %c0_i32_1 = arith.constant 0 : i32
    return %c0_i32, %c0_i32_0 : i32, i32
  }
  func.func @transform_4(%arg0: i32) -> (i32, i32, i32) {
    %c0_i32 = arith.constant 0 : i32
    %c0_i32_0 = arith.constant 0 : i32
    %c0_i32_1 = arith.constant 0 : i32
    return %arg0, %c0_i32, %c0_i32_0 : i32, i32, i32
  }
}

</mosaic_0001>

<llo_original>
// kernel: transformer_lm_forward.1
$region0: #{transformer_lm_forward.1}
  #allocation0 [shape = 'u32[]', space=smem, size = 0x4, offset = 0x4, fixed_abs, tag = 'smem constant byte address 0x4 - core index']
  #allocation1 [shape = 'u32[144,128]{1,0:T(1,128)}', space=vmem, size = 0x12000, scoped, tag = 'internal scratch']
  %s0 = inlined_call_operand.vmem [shape: f32[2,8,128], index: 0, kind: input, shape index: {}]
  %s1 = inlined_call_operand.vmem [shape: f32[2,8], index: 1, kind: input, shape index: {}]
  %s2 = inlined_call_operand.vmem [shape: bf16[17,128,128], index: 2, kind: input, shape index: {}]
  %s3 = inlined_call_operand.vmem [shape: f32[32,128], index: 3, kind: input, shape index: {}]
  %s4 = inlined_call_operand.vmem [shape: f32[2,8,128], index: 4, kind: output, shape index: {}]
  %s5 = sld [smem:[#allocation0]]
  $region26: #{transformer_lm_forward.1} parent=0
    _
  %s7 = ssub.s32 1, %s5
  %s8 = scalar_select 0, %s7, %s5
  // Predicated region
  $region2: #{transformer_lm_forward.1} parent=0 // pred_check
    _
  $region3: #{transformer_lm_forward.1} parent=0 // pred_check_branch
    %10 = sbr.rel (0) target = $region5
  $region4: #{transformer_lm_forward.1} parent=0 // pred_region
    _
  $region5: #{transformer_lm_forward.1} parent=0 // pred_fallthru
    _
  // Predicated region
  $region6: #{transformer_lm_forward.1} parent=0 // pred_check
    _
  $region7: #{transformer_lm_forward.1} parent=0 // pred_check_branch
    %12 = sbr.rel (0) target = $region9
  $region8: #{transformer_lm_forward.1} parent=0 // pred_region
    _
  $region9: #{transformer_lm_forward.1} parent=0 // pred_fallthru
    _
  // Predicated region
  $region10: #{transformer_lm_forward.1} parent=0 // pred_check
    _
  $region11: #{transformer_lm_forward.1} parent=0 // pred_check_branch
    %14 = sbr.rel (0) target = $region13
  $region12: #{transformer_lm_forward.1} parent=0 // pred_region
    _
  $region13: #{transformer_lm_forward.1} parent=0 // pred_fallthru
    _
  // Predicated region
  $region14: #{transformer_lm_forward.1} parent=0 // pred_check
    _
  $region15: #{transformer_lm_forward.1} parent=0 // pred_check_branch
    %16 = sbr.rel (0) target = $region17
  $region16: #{transformer_lm_forward.1} parent=0 // pred_region
    _
  $region17: #{transformer_lm_forward.1} parent=0 // pred_fallthru
    _
  %v18 = vld [vmem:[%s3] sm:$0xff]
  %v19 = vld [vmem:[%s3 + $0x8] sm:$0xff]
  %v20 = vld [vmem:[%s3 + $0x10] sm:$0xff]
  %v21 = vld [vmem:[%s3 + $0x18] sm:$0xff]
  %v22 = vld [vmem:[%s0] sm:$0xff]
  %v23 = vld [vmem:[%s0 + $0x8] sm:$0xff]
  %v24 = vld [vmem:[%s1] sm:$0x3]
  %v25 = vlaneseq
  %v26 = vand.u32 %v25, 127
  %vm27 = vcmp.lt.s32.totalorder %v26, 32
  %v28 = vsel %vm27, 1, 0
  %v29 = vcvt.s32.f32 %v28
  %vm30 = vcmp.ge.s32.totalorder %v26, 0
  %vm31 = vcmp.lt.s32.totalorder %v26, 8
  %vm32 = vmand %vm30, %vm31
  %v33 = vsel %vm32, 1, 0
  %v34 = vcvt.s32.f32 %v33
  %v35 = vpack.c.bf16 %v34, %v34
  %vm36 = vcmp.ge.s32.totalorder %v26, 8
  %vm37 = vcmp.lt.s32.totalorder %v26, 16
  %vm38 = vmand %vm36, %vm37
  %v39 = vsel %vm38, 1, 0
  %v40 = vcvt.s32.f32 %v39
  %v41 = vpack.c.bf16 %v40, %v40
  %vm42 = vcmp.ge.s32.totalorder %v26, 16
  %vm43 = vcmp.lt.s32.totalorder %v26, 24
  %vm44 = vmand %vm42, %vm43
  %v45 = vsel %vm44, 1, 0
  %v46 = vcvt.s32.f32 %v45
  %v47 = vpack.c.bf16 %v46, %v46
  %vm48 = vcmp.ge.s32.totalorder %v26, 24
  %vm49 = vmand %vm48, %vm27
  %v50 = vsel %vm49, 1, 0
  %v51 = vcvt.s32.f32 %v50
  %v52 = vpack.c.bf16 %v51, %v51
  %vm53 = vcmp.ge.s32.totalorder %v26, 32
  %vm54 = vcmp.lt.s32.totalorder %v26, 40
  %vm55 = vmand %vm53, %vm54
  %v56 = vsel %vm55, 1, 0
  %v57 = vcvt.s32.f32 %v56
  %v58 = vpack.c.bf16 %v57, %v57
  %vm59 = vcmp.ge.s32.totalorder %v26, 40
  %vm60 = vcmp.lt.s32.totalorder %v26, 48
  %vm61 = vmand %vm59, %vm60
  %v62 = vsel %vm61, 1, 0
  %v63 = vcvt.s32.f32 %v62
  %v64 = vpack.c.bf16 %v63, %v63
  %vm65 = vcmp.ge.s32.totalorder %v26, 48
  %vm66 = vcmp.lt.s32.totalorder %v26, 56
  %vm67 = vmand %vm65, %vm66
  %v68 = vsel %vm67, 1, 0
  %v69 = vcvt.s32.f32 %v68
  %v70 = vpack.c.bf16 %v69, %v69
  %vm71 = vcmp.ge.s32.totalorder %v26, 56
  %vm72 = vcmp.lt.s32.totalorder %v26, 64
  %vm73 = vmand %vm71, %vm72
  %v74 = vsel %vm73, 1, 0
  %v75 = vcvt.s32.f32 %v74
  %v76 = vpack.c.bf16 %v75, %v75
  %v77 = vlaneseq
  %v78 = vshrl.u32 %v77, 7
  %vm79 = vcmp.gt.s32.totalorder %v26, %v78
  %v80 = vsel %vm79, -1e+30, 0.0
  %v83 = vunpack.c.l.s4 1966171168
  %v84 = vunpack.c.0.s8 %v83
  %v85 = vlaneseq
  %v86 = vshrl.u32 %v85, 7
  %v87 = vsub.s32 %v84, %v86
  %v88 = vrot.slane %v24, %v87
  %v89 = vcombine.high %v88, %v88
  %v91 = vunpack.c.l.s4 1966171168
  %v92 = vunpack.c.0.s8 %v91
  %v93 = vlaneseq
  %v94 = vshrl.u32 %v93, 7
  %v95 = vsub.s32 %v92, %v94
  %v96 = vrot.slane %v88, %v95
  %v98 = vunpack.c.l.s4 1966171168
  %v99 = vunpack.c.0.s8 %v98
  %v100 = vlaneseq
  %v101 = vshrl.u32 %v100, 7
  %v102 = vsub.s32 %v99, %v101
  %v103 = vrot.slane %v89, %v102
  %v104 = vlaneseq
  %v105 = vshrl.u32 %v104, 7
  %v106 = vsub.s32 0, %v105
  %v107 = vrot.slane %v96, %v106
  %v108 = vlaneseq
  %v109 = vshrl.u32 %v108, 7
  %v110 = vsub.s32 0, %v109
  %v111 = vrot.slane %v103, %v110
  %v114 = vadd.f32 %v80, %v107
  %v115 = vadd.f32 %v80, %v111
  %v116 = vpack.c.bf16 %v23, %v22
  %v117 = vld [vmem:[%s2] sm:$0xf]
  %v118 = vld [vmem:[%s2 + $0x4] sm:$0xf]
  %v119 = vld [vmem:[%s2 + $0x8] sm:$0xf]
  %v120 = vld [vmem:[%s2 + $0xc] sm:$0xf]
  %v121 = vld [vmem:[%s2 + $0x10] sm:$0xf]
  %v122 = vld [vmem:[%s2 + $0x14] sm:$0xf]
  %v123 = vld [vmem:[%s2 + $0x18] sm:$0xf]
  %v124 = vld [vmem:[%s2 + $0x1c] sm:$0xf]
  %v125 = vld [vmem:[%s2 + $0x20] sm:$0xf]
  %v126 = vld [vmem:[%s2 + $0x24] sm:$0xf]
  %v127 = vld [vmem:[%s2 + $0x28] sm:$0xf]
  %v128 = vld [vmem:[%s2 + $0x2c] sm:$0xf]
  %v129 = vld [vmem:[%s2 + $0x30] sm:$0xf]
  %v130 = vld [vmem:[%s2 + $0x34] sm:$0xf]
  %v131 = vld [vmem:[%s2 + $0x38] sm:$0xf]
  %v132 = vld [vmem:[%s2 + $0x3c] sm:$0xf]
  %v133 = vlaneseq
  %v134 = vshrl.u32 %v133, 7
  %v135 = vsub.s32 0, %v134
  %v136 = vrot.slane %v18, %v135
  %v153 = vunpack.c.l.b16 %v117
  %v154 = vunpack.c.l.b16 %v118
  %v155 = vunpack.c.l.b16 %v119
  %v156 = vunpack.c.l.b16 %v120
  %v157 = vunpack.c.l.b16 %v121
  %v158 = vunpack.c.l.b16 %v122
  %v159 = vunpack.c.l.b16 %v123
  %v160 = vunpack.c.l.b16 %v124
  %v161 = vunpack.c.l.b16 %v125
  %v162 = vunpack.c.l.b16 %v126
  %v163 = vunpack.c.l.b16 %v127
  %v164 = vunpack.c.l.b16 %v128
  %v165 = vunpack.c.l.b16 %v129
  %v166 = vunpack.c.l.b16 %v130
  %v167 = vunpack.c.l.b16 %v131
  %v168 = vunpack.c.l.b16 %v132
  %v169 = vpack.c.b16 %v154, %v153
  %v170 = vpack.c.b16 %v156, %v155
  %v171 = vpack.c.b16 %v158, %v157
  %v172 = vpack.c.b16 %v160, %v159
  %v173 = vpack.c.b16 %v162, %v161
  %v174 = vpack.c.b16 %v164, %v163
  %v175 = vpack.c.b16 %v166, %v165
  %v176 = vpack.c.b16 %v168, %v167
  %185 = vmatprep.subr.bf16.mxu0 0
  %186 = vmatpush1.bf16.msra.mxu0 %v176
  %187 = vmatprep.subr.bf16.mxu0 0
  %188 = vmatpush1.bf16.msra.mxu0 %v175
  %189 = vmatprep.subr.bf16.mxu0 0
  %190 = vmatpush1.bf16.msra.mxu0 %v174
  %191 = vmatprep.subr.bf16.mxu0 0
  %192 = vmatpush1.bf16.msra.mxu0 %v173
  %193 = vmatprep.subr.bf16.mxu0 0
  %194 = vmatpush1.bf16.msra.mxu0 %v172
  %195 = vmatprep.subr.bf16.mxu0 0
  %196 = vmatpush1.bf16.msra.mxu0 %v171
  %197 = vmatprep.subr.bf16.mxu0 0
  %198 = vmatpush1.bf16.msra.mxu0 %v170
  %199 = vmatprep.subr.bf16.mxu0 0
  %200 = vmatpush1.bf16.msra.mxu0 %v169
  %201 = vmatprep.subr.bf16.mxu0 0
  %202 = vmatpush2.bf16.msra.mxu0 0
  %203 = vmatprep.subr.bf16.mxu0 0
  %204 = vmatpush2.bf16.msra.mxu0 0
  %205 = vmatprep.subr.bf16.mxu0 0
  %206 = vmatpush2.bf16.msra.mxu0 0
  %207 = vmatprep.subr.bf16.mxu0 0
  %208 = vmatpush2.bf16.msra.mxu0 0
  %209 = vmatprep.subr.bf16.mxu0 0
  %210 = vmatpush2.bf16.msra.mxu0 0
  %211 = vmatprep.subr.bf16.mxu0 0
  %212 = vmatpush2.bf16.msra.mxu0 0
  %213 = vmatprep.subr.bf16.mxu0 0
  %214 = vmatpush2.bf16.msra.mxu0 0
  %215 = vmatprep.subr.bf16.mxu0 0
  %216 = vmatpush2.bf16.msra.mxu0 0
  %217 = vmatprep.mubr.bf16.mxu0 0
  %218 = vmatmul.mubr.bf16.gmra.mxu0 %v116
  %v219 = vpop.f32.mrf.mxu0
  %v220 = vadd.f32 %v136, %v219
  %v221 = vpop.f32.mrf.mxu0
  %v222 = vpop.f32.mrf.mxu0
  %v223 = vadd.f32 %v136, %v222
  %v224 = vpop.f32.mrf.mxu0
  %225 = vdwg.mxu0
  %v226 = vmul.f32 %v220, 0.35355338
  %v227 = vmul.f32 %v223, 0.35355338
  %v228 = vpack.c.bf16 %v226, %v226
  %v229 = vpack.c.bf16 %v227, %v227
  %s230 = scalar_lea.vmem %s2, 64
  %v231 = vld [vmem:[%s230] sm:$0xf]
  %v232 = vld [vmem:[%s230 + $0x4] sm:$0xf]
  %v233 = vld [vmem:[%s230 + $0x8] sm:$0xf]
  %v234 = vld [vmem:[%s230 + $0xc] sm:$0xf]
  %v235 = vld [vmem:[%s230 + $0x10] sm:$0xf]
  %v236 = vld [vmem:[%s230 + $0x14] sm:$0xf]
  %v237 = vld [vmem:[%s230 + $0x18] sm:$0xf]
  %v238 = vld [vmem:[%s230 + $0x1c] sm:$0xf]
  %v239 = vld [vmem:[%s230 + $0x20] sm:$0xf]
  %v240 = vld [vmem:[%s230 + $0x24] sm:$0xf]
  %v241 = vld [vmem:[%s230 + $0x28] sm:$0xf]
  %v242 = vld [vmem:[%s230 + $0x2c] sm:$0xf]
  %v243 = vld [vmem:[%s230 + $0x30] sm:$0xf]
  %v244 = vld [vmem:[%s230 + $0x34] sm:$0xf]
  %v245 = vld [vmem:[%s230 + $0x38] sm:$0xf]
  %v246 = vld [vmem:[%s230 + $0x3c] sm:$0xf]
  %v247 = vlaneseq
  %v248 = vshrl.u32 %v247, 7
  %v249 = vsub.s32 1, %v248
  %v250 = vrot.slane %v18, %v249
  %v267 = vunpack.c.l.b16 %v231
  %v268 = vunpack.c.l.b16 %v232
  %v269 = vunpack.c.l.b16 %v233
  %v270 = vunpack.c.l.b16 %v234
  %v271 = vunpack.c.l.b16 %v235
  %v272 = vunpack.c.l.b16 %v236
  %v273 = vunpack.c.l.b16 %v237
  %v274 = vunpack.c.l.b16 %v238
  %v275 = vunpack.c.l.b16 %v239
  %v276 = vunpack.c.l.b16 %v240
  %v277 = vunpack.c.l.b16 %v241
  %v278 = vunpack.c.l.b16 %v242
  %v279 = vunpack.c.l.b16 %v243
  %v280 = vunpack.c.l.b16 %v244
  %v281 = vunpack.c.l.b16 %v245
  %v282 = vunpack.c.l.b16 %v246
  %v283 = vpack.c.b16 %v268, %v267
  %v284 = vpack.c.b16 %v270, %v269
  %v285 = vpack.c.b16 %v272, %v271
  %v286 = vpack.c.b16 %v274, %v273
  %v287 = vpack.c.b16 %v276, %v275
  %v288 = vpack.c.b16 %v278, %v277
  %v289 = vpack.c.b16 %v280, %v279
  %v290 = vpack.c.b16 %v282, %v281
  %299 = vmatprep.subr.bf16.mxu0 0
  %300 = vmatpush1.bf16.msra.mxu0 %v290
  %301 = vmatprep.subr.bf16.mxu0 0
  %302 = vmatpush1.bf16.msra.mxu0 %v289
  %303 = vmatprep.subr.bf16.mxu0 0
  %304 = vmatpush1.bf16.msra.mxu0 %v288
  %305 = vmatprep.subr.bf16.mxu0 0
  %306 = vmatpush1.bf16.msra.mxu0 %v287
  %307 = vmatprep.subr.bf16.mxu0 0
  %308 = vmatpush1.bf16.msra.mxu0 %v286
  %309 = vmatprep.subr.bf16.mxu0 0
  %310 = vmatpush1.bf16.msra.mxu0 %v285
  %311 = vmatprep.subr.bf16.mxu0 0
  %312 = vmatpush1.bf16.msra.mxu0 %v284
  %313 = vmatprep.subr.bf16.mxu0 0
  %314 = vmatpush1.bf16.msra.mxu0 %v283
  %315 = vmatprep.subr.bf16.mxu0 0
  %316 = vmatpush2.bf16.msra.mxu0 0
  %317 = vmatprep.subr.bf16.mxu0 0
  %318 = vmatpush2.bf16.msra.mxu0 0
  %319 = vmatprep.subr.bf16.mxu0 0
  %320 = vmatpush2.bf16.msra.mxu0 0
  %321 = vmatprep.subr.bf16.mxu0 0
  %322 = vmatpush2.bf16.msra.mxu0 0
  %323 = vmatprep.subr.bf16.mxu0 0
  %324 = vmatpush2.bf16.msra.mxu0 0
  %325 = vmatprep.subr.bf16.mxu0 0
  %326 = vmatpush2.bf16.msra.mxu0 0
  %327 = vmatprep.subr.bf16.mxu0 0
  %328 = vmatpush2.bf16.msra.mxu0 0
  %329 = vmatprep.subr.bf16.mxu0 0
  %330 = vmatpush2.bf16.msra.mxu0 0
  %331 = vmatprep.mubr.bf16.mxu0 0
  %332 = vmatmul.mubr.bf16.gmra.mxu0 %v116
  %v333 = vpop.f32.mrf.mxu0
  %v334 = vadd.f32 %v250, %v333
  %v335 = vpop.f32.mrf.mxu0
  %v336 = vpop.f32.mrf.mxu0
  %v337 = vadd.f32 %v250, %v336
  %v338 = vpop.f32.mrf.mxu0
  %339 = vdwg.mxu0
  %v340 = vpack.c.bf16 %v334, %v334
  %v341 = vpack.c.bf16 %v337, %v337
  %v342 = vmul.bf16 %v228, %v35
  %v343 = vmul.bf16 %v229, %v35
  %344 = vmatprep.subr.bf16.mxu0 0
  %345 = vmatpush1.bf16.xpose.msra.mxu0 0
  %346 = vmatprep.subr.bf16.mxu0 0
  %347 = vmatpush1.bf16.xpose.msra.mxu0 0
  %348 = vmatprep.subr.bf16.mxu0 0
  %349 = vmatpush1.bf16.xpose.msra.mxu0 0
  %350 = vmatprep.subr.bf16.mxu0 0
  %351 = vmatpush1.bf16.xpose.msra.mxu0 0
  %352 = vmatprep.subr.bf16.mxu0 0
  %353 = vmatpush1.bf16.xpose.msra.mxu0 0
  %354 = vmatprep.subr.bf16.mxu0 0
  %355 = vmatpush1.bf16.xpose.msra.mxu0 0
  %356 = vmatprep.subr.bf16.mxu0 0
  %357 = vmatpush1.bf16.xpose.msra.mxu0 0
  %358 = vmatprep.subr.bf16.mxu0 0
  %359 = vmatpush1.bf16.xpose.msra.mxu0 %v340
  %360 = vmatprep.subr.bf16.mxu0 0
  %361 = vmatpush2.bf16.xpose.msra.mxu0 0
  %362 = vmatprep.subr.bf16.mxu0 0
  %363 = vmatpush2.bf16.xpose.msra.mxu0 0
  %364 = vmatprep.subr.bf16.mxu0 0
  %365 = vmatpush2.bf16.xpose.msra.mxu0 0
  %366 = vmatprep.subr.bf16.mxu0 0
  %367 = vmatpush2.bf16.xpose.msra.mxu0 0
  %368 = vmatprep.subr.bf16.mxu0 0
  %369 = vmatpush2.bf16.xpose.msra.mxu0 0
  %370 = vmatprep.subr.bf16.mxu0 0
  %371 = vmatpush2.bf16.xpose.msra.mxu0 0
  %372 = vmatprep.subr.bf16.mxu0 0
  %373 = vmatpush2.bf16.xpose.msra.mxu0 0
  %374 = vmatprep.subr.bf16.mxu0 0
  %375 = vmatpush2.bf16.xpose.msra.mxu0 0
  %376 = vmatprep.mubr.bf16.mxu0 0
  %377 = vmatmul.mubr.bf16.gmra.mxu0 %v342
  %v378 = vpop.f32.mrf.mxu0
  %v379 = vadd.f32 %v114, %v378
  %v380 = vpop.f32.mrf.mxu0
  %v381 = vpop.f32.mrf.mxu0
  %v382 = vpop.f32.mrf.mxu0
  %383 = vdwg.mxu0
  %384 = vmatprep.subr.bf16.mxu0 0
  %385 = vmatpush1.bf16.xpose.msra.mxu0 0
  %386 = vmatprep.subr.bf16.mxu0 0
  %387 = vmatpush1.bf16.xpose.msra.mxu0 0
  %388 = vmatprep.subr.bf16.mxu0 0
  %389 = vmatpush1.bf16.xpose.msra.mxu0 0
  %390 = vmatprep.subr.bf16.mxu0 0
  %391 = vmatpush1.bf16.xpose.msra.mxu0 0
  %392 = vmatprep.subr.bf16.mxu0 0
  %393 = vmatpush1.bf16.xpose.msra.mxu0 0
  %394 = vmatprep.subr.bf16.mxu0 0
  %395 = vmatpush1.bf16.xpose.msra.mxu0 0
  %396 = vmatprep.subr.bf16.mxu0 0
  %397 = vmatpush1.bf16.xpose.msra.mxu0 0
  %398 = vmatprep.subr.bf16.mxu0 0
  %399 = vmatpush1.bf16.xpose.msra.mxu0 %v341
  %400 = vmatprep.subr.bf16.mxu0 0
  %401 = vmatpush2.bf16.xpose.msra.mxu0 0
  %402 = vmatprep.subr.bf16.mxu0 0
  %403 = vmatpush2.bf16.xpose.msra.mxu0 0
  %404 = vmatprep.subr.bf16.mxu0 0
  %405 = vmatpush2.bf16.xpose.msra.mxu0 0
  %406 = vmatprep.subr.bf16.mxu0 0
  %407 = vmatpush2.bf16.xpose.msra.mxu0 0
  %408 = vmatprep.subr.bf16.mxu0 0
  %409 = vmatpush2.bf16.xpose.msra.mxu0 0
  %410 = vmatprep.subr.bf16.mxu0 0
  %411 = vmatpush2.bf16.xpose.msra.mxu0 0
  %412 = vmatprep.subr.bf16.mxu0 0
  %413 = vmatpush2.bf16.xpose.msra.mxu0 0
  %414 = vmatprep.subr.bf16.mxu0 0
  %415 = vmatpush2.bf16.xpose.msra.mxu0 0
  %416 = vmatprep.mubr.bf16.mxu0 0
  %417 = vmatmul.mubr.bf16.gmra.mxu0 %v343
  %v418 = vpop.f32.mrf.mxu0
  %v419 = vadd.f32 %v115, %v418
  %v420 = vpop.f32.mrf.mxu0
  %v421 = vpop.f32.mrf.mxu0
  %v422 = vpop.f32.mrf.mxu0
  %423 = vdwg.mxu0
  %vm424 = vcmask 64512
  %v425 = vsel %vm424, %v379, -inf
  %426 = vmax.xlane.f32.xlu0 %v425
  %v427 = vpop.xlane.xlu0 %426
  %v428 = vsel %vm424, %v419, -inf
  %429 = vmax.xlane.f32.xlu0 %v428
  %v430 = vpop.xlane.xlu0 %429
  %v431 = vsub.f32 %v379, %v427
  %v432 = vsub.f32 %v419, %v430
  %v433 = vmul.f32 %v431, 1.442695
  %v434 = vpow.pop %v433
  %v435 = vmul.f32 %v432, 1.442695
  %v436 = vpow.pop %v435
  %v437 = vsel %vm424, %v434, 0.0
  %438 = vadd.xlane.f32.xlu0 %v437
  %v439 = vpop.xlane.xlu0 %438
  %v440 = vsel %vm424, %v436, 0.0
  %441 = vadd.xlane.f32.xlu0 %v440
  %v442 = vpop.xlane.xlu0 %441
  %v443 = vrcp.pop %v439
  %v444 = vrcp.pop %v442
  %v445 = vmul.f32 %v434, %v443
  %v446 = vmul.f32 %v436, %v444
  %v447 = vpack.c.bf16 %v445, %v445
  %v448 = vpack.c.bf16 %v446, %v446
  %v449 = vmul.bf16 %v340, %v58
  %v450 = vmul.bf16 %v341, %v58
  %v451 = vmul.bf16 %v228, %v41
  %v452 = vmul.bf16 %v229, %v41
  %453 = vmatprep.subr.bf16.mxu0 0
  %454 = vmatpush1.bf16.xpose.msra.mxu0 0
  %455 = vmatprep.subr.bf16.mxu0 0
  %456 = vmatpush1.bf16.xpose.msra.mxu0 0
  %457 = vmatprep.subr.bf16.mxu0 0
  %458 = vmatpush1.bf16.xpose.msra.mxu0 0
  %459 = vmatprep.subr.bf16.mxu0 0
  %460 = vmatpush1.bf16.xpose.msra.mxu0 0
  %461 = vmatprep.subr.bf16.mxu0 0
  %462 = vmatpush1.bf16.xpose.msra.mxu0 0
  %463 = vmatprep.subr.bf16.mxu0 0
  %464 = vmatpush1.bf16.xpose.msra.mxu0 0
  %465 = vmatprep.subr.bf16.mxu0 0
  %466 = vmatpush1.bf16.xpose.msra.mxu0 0
  %467 = vmatprep.subr.bf16.mxu0 0
  %468 = vmatpush1.bf16.xpose.msra.mxu0 %v340
  %469 = vmatprep.subr.bf16.mxu0 0
  %470 = vmatpush2.bf16.xpose.msra.mxu0 0
  %471 = vmatprep.subr.bf16.mxu0 0
  %472 = vmatpush2.bf16.xpose.msra.mxu0 0
  %473 = vmatprep.subr.bf16.mxu0 0
  %474 = vmatpush2.bf16.xpose.msra.mxu0 0
  %475 = vmatprep.subr.bf16.mxu0 0
  %476 = vmatpush2.bf16.xpose.msra.mxu0 0
  %477 = vmatprep.subr.bf16.mxu0 0
  %478 = vmatpush2.bf16.xpose.msra.mxu0 0
  %479 = vmatprep.subr.bf16.mxu0 0
  %480 = vmatpush2.bf16.xpose.msra.mxu0 0
  %481 = vmatprep.subr.bf16.mxu0 0
  %482 = vmatpush2.bf16.xpose.msra.mxu0 0
  %483 = vmatprep.subr.bf16.mxu0 0
  %484 = vmatpush2.bf16.xpose.msra.mxu0 0
  %485 = vmatprep.mubr.bf16.mxu0 0
  %486 = vmatmul.mubr.bf16.gmra.mxu0 %v451
  %v487 = vpop.f32.mrf.mxu0
  %v488 = vadd.f32 %v114, %v487
  %v489 = vpop.f32.mrf.mxu0
  %v490 = vpop.f32.mrf.mxu0
  %v491 = vpop.f32.mrf.mxu0
  %492 = vdwg.mxu0
  %493 = vmatprep.subr.bf16.mxu0 0
  %494 = vmatpush1.bf16.xpose.msra.mxu0 0
  %495 = vmatprep.subr.bf16.mxu0 0
  %496 = vmatpush1.bf16.xpose.msra.mxu0 0
  %497 = vmatprep.subr.bf16.mxu0 0
  %498 = vmatpush1.bf16.xpose.msra.mxu0 0
  %499 = vmatprep.subr.bf16.mxu0 0
  %500 = vmatpush1.bf16.xpose.msra.mxu0 0
  %501 = vmatprep.subr.bf16.mxu0 0
  %502 = vmatpush1.bf16.xpose.msra.mxu0 0
  %503 = vmatprep.subr.bf16.mxu0 0
  %504 = vmatpush1.bf16.xpose.msra.mxu0 0
  %505 = vmatprep.subr.bf16.mxu0 0
  %506 = vmatpush1.bf16.xpose.msra.mxu0 0
  %507 = vmatprep.subr.bf16.mxu0 0
  %508 = vmatpush1.bf16.xpose.msra.mxu0 %v341
  %509 = vmatprep.subr.bf16.mxu0 0
  %510 = vmatpush2.bf16.xpose.msra.mxu0 0
  %511 = vmatprep.subr.bf16.mxu0 0
  %512 = vmatpush2.bf16.xpose.msra.mxu0 0
  %513 = vmatprep.subr.bf16.mxu0 0
  %514 = vmatpush2.bf16.xpose.msra.mxu0 0
  %515 = vmatprep.subr.bf16.mxu0 0
  %516 = vmatpush2.bf16.xpose.msra.mxu0 0
  %517 = vmatprep.subr.bf16.mxu0 0
  %518 = vmatpush2.bf16.xpose.msra.mxu0 0
  %519 = vmatprep.subr.bf16.mxu0 0
  %520 = vmatpush2.bf16.xpose.msra.mxu0 0
  %521 = vmatprep.subr.bf16.mxu0 0
  %522 = vmatpush2.bf16.xpose.msra.mxu0 0
  %523 = vmatprep.subr.bf16.mxu0 0
  %524 = vmatpush2.bf16.xpose.msra.mxu0 0
  %525 = vmatprep.mubr.bf16.mxu0 0
  %526 = vmatmul.mubr.bf16.gmra.mxu0 %v452
  %v527 = vpop.f32.mrf.mxu0
  %v528 = vadd.f32 %v115, %v527
  %v529 = vpop.f32.mrf.mxu0
  %v530 = vpop.f32.mrf.mxu0
  %v531 = vpop.f32.mrf.mxu0
  %532 = vdwg.mxu0
  %v533 = vsel %vm424, %v488, -inf
  %534 = vmax.xlane.f32.xlu0 %v533
  %v535 = vpop.xlane.xlu0 %534
  %v536 = vsel %vm424, %v528, -inf
  %537 = vmax.xlane.f32.xlu0 %v536
  %v538 = vpop.xlane.xlu0 %537
  %v539 = vsub.f32 %v488, %v535
  %v540 = vsub.f32 %v528, %v538
  %v541 = vmul.f32 %v539, 1.442695
  %v542 = vpow.pop %v541
  %v543 = vmul.f32 %v540, 1.442695
  %v544 = vpow.pop %v543
  %v545 = vsel %vm424, %v542, 0.0
  %546 = vadd.xlane.f32.xlu0 %v545
  %v547 = vpop.xlane.xlu0 %546
  %v548 = vsel %vm424, %v544, 0.0
  %549 = vadd.xlane.f32.xlu0 %v548
  %v550 = vpop.xlane.xlu0 %549
  %v551 = vrcp.pop %v547
  %v552 = vrcp.pop %v550
  %v553 = vmul.f32 %v542, %v551
  %v554 = vmul.f32 %v544, %v552
  %v555 = vpack.c.bf16 %v553, %v553
  %v556 = vpack.c.bf16 %v554, %v554
  %v557 = vmul.bf16 %v340, %v64
  %v558 = vmul.bf16 %v341, %v64
  %v560 = vsel %vm424, %v555, 0
  %vm562 = vcmask 1043456
  %v564 = vsel %vm562, %v557, 0
  %566 = vmatprep.subr.bf16.mxu0 0
  %567 = vmatpush1.bf16.msra.mxu0 0
  %568 = vmatprep.subr.bf16.mxu0 0
  %569 = vmatpush1.bf16.msra.mxu0 0
  %570 = vmatprep.subr.bf16.mxu0 0
  %571 = vmatpush1.bf16.msra.mxu0 0
  %572 = vmatprep.subr.bf16.mxu0 0
  %573 = vmatpush1.bf16.msra.mxu0 0
  %574 = vmatprep.subr.bf16.mxu0 0
  %575 = vmatpush1.bf16.msra.mxu0 0
  %576 = vmatprep.subr.bf16.mxu0 0
  %577 = vmatpush1.bf16.msra.mxu0 0
  %578 = vmatprep.subr.bf16.mxu0 0
  %579 = vmatpush1.bf16.msra.mxu0 0
  %580 = vmatprep.subr.bf16.mxu0 0
  %581 = vmatpush1.bf16.msra.mxu0 %v564
  %582 = vmatprep.subr.bf16.mxu0 0
  %583 = vmatpush2.bf16.msra.mxu0 0
  %584 = vmatprep.subr.bf16.mxu0 0
  %585 = vmatpush2.bf16.msra.mxu0 0
  %586 = vmatprep.subr.bf16.mxu0 0
  %587 = vmatpush2.bf16.msra.mxu0 0
  %588 = vmatprep.subr.bf16.mxu0 0
  %589 = vmatpush2.bf16.msra.mxu0 0
  %590 = vmatprep.subr.bf16.mxu0 0
  %591 = vmatpush2.bf16.msra.mxu0 0
  %592 = vmatprep.subr.bf16.mxu0 0
  %593 = vmatpush2.bf16.msra.mxu0 0
  %594 = vmatprep.subr.bf16.mxu0 0
  %595 = vmatpush2.bf16.msra.mxu0 0
  %596 = vmatprep.subr.bf16.mxu0 0
  %597 = vmatpush2.bf16.msra.mxu0 0
  %598 = vmatprep.mubr.bf16.mxu0 0
  %599 = vmatmul.mubr.bf16.gmra.mxu0 %v560
  %v600 = vpop.f32.mrf.mxu0
  %v601 = vadd.f32 0.0, %v600
  %v602 = vpop.f32.mrf.mxu0
  %v603 = vpop.f32.mrf.mxu0
  %v604 = vpop.f32.mrf.mxu0
  %605 = vdwg.mxu0
  %v607 = vsel %vm424, %v556, 0
  %v610 = vsel %vm562, %v558, 0
  %612 = vmatprep.subr.bf16.mxu0 0
  %613 = vmatpush1.bf16.msra.mxu0 0
  %614 = vmatprep.subr.bf16.mxu0 0
  %615 = vmatpush1.bf16.msra.mxu0 0
  %616 = vmatprep.subr.bf16.mxu0 0
  %617 = vmatpush1.bf16.msra.mxu0 0
  %618 = vmatprep.subr.bf16.mxu0 0
  %619 = vmatpush1.bf16.msra.mxu0 0
  %620 = vmatprep.subr.bf16.mxu0 0
  %621 = vmatpush1.bf16.msra.mxu0 0
  %622 = vmatprep.subr.bf16.mxu0 0
  %623 = vmatpush1.bf16.msra.mxu0 0
  %624 = vmatprep.subr.bf16.mxu0 0
  %625 = vmatpush1.bf16.msra.mxu0 0
  %626 = vmatprep.subr.bf16.mxu0 0
  %627 = vmatpush1.bf16.msra.mxu0 %v610
  %628 = vmatprep.subr.bf16.mxu0 0
  %629 = vmatpush2.bf16.msra.mxu0 0
  %630 = vmatprep.subr.bf16.mxu0 0
  %631 = vmatpush2.bf16.msra.mxu0 0
  %632 = vmatprep.subr.bf16.mxu0 0
  %633 = vmatpush2.bf16.msra.mxu0 0
  %634 = vmatprep.subr.bf16.mxu0 0
  %635 = vmatpush2.bf16.msra.mxu0 0
  %636 = vmatprep.subr.bf16.mxu0 0
  %637 = vmatpush2.bf16.msra.mxu0 0
  %638 = vmatprep.subr.bf16.mxu0 0
  %639 = vmatpush2.bf16.msra.mxu0 0
  %640 = vmatprep.subr.bf16.mxu0 0
  %641 = vmatpush2.bf16.msra.mxu0 0
  %642 = vmatprep.subr.bf16.mxu0 0
  %643 = vmatpush2.bf16.msra.mxu0 0
  %644 = vmatprep.mubr.bf16.mxu0 0
  %645 = vmatmul.mubr.bf16.gmra.mxu0 %v607
  %v646 = vpop.f32.mrf.mxu0
  %v647 = vadd.f32 0.0, %v646
  %v648 = vpop.f32.mrf.mxu0
  %v649 = vpop.f32.mrf.mxu0
  %v650 = vpop.f32.mrf.mxu0
  %651 = vdwg.mxu0
  %v653 = vsel %vm424, %v447, 0
  %v656 = vsel %vm562, %v449, 0
  %658 = vmatprep.subr.bf16.mxu0 0
  %659 = vmatpush1.bf16.msra.mxu0 0
  %660 = vmatprep.subr.bf16.mxu0 0
  %661 = vmatpush1.bf16.msra.mxu0 0
  %662 = vmatprep.subr.bf16.mxu0 0
  %663 = vmatpush1.bf16.msra.mxu0 0
  %664 = vmatprep.subr.bf16.mxu0 0
  %665 = vmatpush1.bf16.msra.mxu0 0
  %666 = vmatprep.subr.bf16.mxu0 0
  %667 = vmatpush1.bf16.msra.mxu0 0
  %668 = vmatprep.subr.bf16.mxu0 0
  %669 = vmatpush1.bf16.msra.mxu0 0
  %670 = vmatprep.subr.bf16.mxu0 0
  %671 = vmatpush1.bf16.msra.mxu0 0
  %672 = vmatprep.subr.bf16.mxu0 0
  %673 = vmatpush1.bf16.msra.mxu0 %v656
  %674 = vmatprep.subr.bf16.mxu0 0
  %675 = vmatpush2.bf16.msra.mxu0 0
  %676 = vmatprep.subr.bf16.mxu0 0
  %677 = vmatpush2.bf16.msra.mxu0 0
  %678 = vmatprep.subr.bf16.mxu0 0
  %679 = vmatpush2.bf16.msra.mxu0 0
  %680 = vmatprep.subr.bf16.mxu0 0
  %681 = vmatpush2.bf16.msra.mxu0 0
  %682 = vmatprep.subr.bf16.mxu0 0
  %683 = vmatpush2.bf16.msra.mxu0 0
  %684 = vmatprep.subr.bf16.mxu0 0
  %685 = vmatpush2.bf16.msra.mxu0 0
  %686 = vmatprep.subr.bf16.mxu0 0
  %687 = vmatpush2.bf16.msra.mxu0 0
  %688 = vmatprep.subr.bf16.mxu0 0
  %689 = vmatpush2.bf16.msra.mxu0 0
  %690 = vmatprep.mubr.bf16.mxu0 0
  %691 = vmatmul.mubr.bf16.gmra.mxu0 %v653
  %v692 = vpop.f32.mrf.mxu0
  %v693 = vadd.f32 %v601, %v692
  %v694 = vpop.f32.mrf.mxu0
  %v695 = vpop.f32.mrf.mxu0
  %v696 = vpop.f32.mrf.mxu0
  %697 = vdwg.mxu0
  %v699 = vsel %vm424, %v448, 0
  %v702 = vsel %vm562, %v450, 0
  %704 = vmatprep.subr.bf16.mxu0 0
  %705 = vmatpush1.bf16.msra.mxu0 0
  %706 = vmatprep.subr.bf16.mxu0 0
  %707 = vmatpush1.bf16.msra.mxu0 0
  %708 = vmatprep.subr.bf16.mxu0 0
  %709 = vmatpush1.bf16.msra.mxu0 0
  %710 = vmatprep.subr.bf16.mxu0 0
  %711 = vmatpush1.bf16.msra.mxu0 0
  %712 = vmatprep.subr.bf16.mxu0 0
  %713 = vmatpush1.bf16.msra.mxu0 0
  %714 = vmatprep.subr.bf16.mxu0 0
  %715 = vmatpush1.bf16.msra.mxu0 0
  %716 = vmatprep.subr.bf16.mxu0 0
  %717 = vmatpush1.bf16.msra.mxu0 0
  %718 = vmatprep.subr.bf16.mxu0 0
  %719 = vmatpush1.bf16.msra.mxu0 %v702
  %720 = vmatprep.subr.bf16.mxu0 0
  %721 = vmatpush2.bf16.msra.mxu0 0
  %722 = vmatprep.subr.bf16.mxu0 0
  %723 = vmatpush2.bf16.msra.mxu0 0
  %724 = vmatprep.subr.bf16.mxu0 0
  %725 = vmatpush2.bf16.msra.mxu0 0
  %726 = vmatprep.subr.bf16.mxu0 0
  %727 = vmatpush2.bf16.msra.mxu0 0
  %728 = vmatprep.subr.bf16.mxu0 0
  %729 = vmatpush2.bf16.msra.mxu0 0
  %730 = vmatprep.subr.bf16.mxu0 0
  %731 = vmatpush2.bf16.msra.mxu0 0
  %732 = vmatprep.subr.bf16.mxu0 0
  %733 = vmatpush2.bf16.msra.mxu0 0
  %734 = vmatprep.subr.bf16.mxu0 0
  %735 = vmatpush2.bf16.msra.mxu0 0
  %736 = vmatprep.mubr.bf16.mxu0 0
  %737 = vmatmul.mubr.bf16.gmra.mxu0 %v699
  %v738 = vpop.f32.mrf.mxu0
  %v739 = vadd.f32 %v647, %v738
  %v740 = vpop.f32.mrf.mxu0
  %v741 = vpop.f32.mrf.mxu0
  %v742 = vpop.f32.mrf.mxu0
  %743 = vdwg.mxu0
  %v744 = vmul.bf16 %v228, %v47
  %v745 = vmul.bf16 %v229, %v47
  %746 = vmatprep.subr.bf16.mxu0 0
  %747 = vmatpush1.bf16.xpose.msra.mxu0 0
  %748 = vmatprep.subr.bf16.mxu0 0
  %749 = vmatpush1.bf16.xpose.msra.mxu0 0
  %750 = vmatprep.subr.bf16.mxu0 0
  %751 = vmatpush1.bf16.xpose.msra.mxu0 0
  %752 = vmatprep.subr.bf16.mxu0 0
  %753 = vmatpush1.bf16.xpose.msra.mxu0 0
  %754 = vmatprep.subr.bf16.mxu0 0
  %755 = vmatpush1.bf16.xpose.msra.mxu0 0
  %756 = vmatprep.subr.bf16.mxu0 0
  %757 = vmatpush1.bf16.xpose.msra.mxu0 0
  %758 = vmatprep.subr.bf16.mxu0 0
  %759 = vmatpush1.bf16.xpose.msra.mxu0 0
  %760 = vmatprep.subr.bf16.mxu0 0
  %761 = vmatpush1.bf16.xpose.msra.mxu0 %v340
  %762 = vmatprep.subr.bf16.mxu0 0
  %763 = vmatpush2.bf16.xpose.msra.mxu0 0
  %764 = vmatprep.subr.bf16.mxu0 0
  %765 = vmatpush2.bf16.xpose.msra.mxu0 0
  %766 = vmatprep.subr.bf16.mxu0 0
  %767 = vmatpush2.bf16.xpose.msra.mxu0 0
  %768 = vmatprep.subr.bf16.mxu0 0
  %769 = vmatpush2.bf16.xpose.msra.mxu0 0
  %770 = vmatprep.subr.bf16.mxu0 0
  %771 = vmatpush2.bf16.xpose.msra.mxu0 0
  %772 = vmatprep.subr.bf16.mxu0 0
  %773 = vmatpush2.bf16.xpose.msra.mxu0 0
  %774 = vmatprep.subr.bf16.mxu0 0
  %775 = vmatpush2.bf16.xpose.msra.mxu0 0
  %776 = vmatprep.subr.bf16.mxu0 0
  %777 = vmatpush2.bf16.xpose.msra.mxu0 0
  %778 = vmatprep.mubr.bf16.mxu0 0
  %779 = vmatmul.mubr.bf16.gmra.mxu0 %v744
  %v780 = vpop.f32.mrf.mxu0
  %v781 = vadd.f32 %v114, %v780
  %v782 = vpop.f32.mrf.mxu0
  %v783 = vpop.f32.mrf.mxu0
  %v784 = vpop.f32.mrf.mxu0
  %785 = vdwg.mxu0
  %786 = vmatprep.subr.bf16.mxu0 0
  %787 = vmatpush1.bf16.xpose.msra.mxu0 0
  %788 = vmatprep.subr.bf16.mxu0 0
  %789 = vmatpush1.bf16.xpose.msra.mxu0 0
  %790 = vmatprep.subr.bf16.mxu0 0
  %791 = vmatpush1.bf16.xpose.msra.mxu0 0
  %792 = vmatprep.subr.bf16.mxu0 0
  %793 = vmatpush1.bf16.xpose.msra.mxu0 0
  %794 = vmatprep.subr.bf16.mxu0 0
  %795 = vmatpush1.bf16.xpose.msra.mxu0 0
  %796 = vmatprep.subr.bf16.mxu0 0
  %797 = vmatpush1.bf16.xpose.msra.mxu0 0
  %798 = vmatprep.subr.bf16.mxu0 0
  %799 = vmatpush1.bf16.xpose.msra.mxu0 0
  %800 = vmatprep.subr.bf16.mxu0 0
  %801 = vmatpush1.bf16.xpose.msra.mxu0 %v341
  %802 = vmatprep.subr.bf16.mxu0 0
  %803 = vmatpush2.bf16.xpose.msra.mxu0 0
  %804 = vmatprep.subr.bf16.mxu0 0
  %805 = vmatpush2.bf16.xpose.msra.mxu0 0
  %806 = vmatprep.subr.bf16.mxu0 0
  %807 = vmatpush2.bf16.xpose.msra.mxu0 0
  %808 = vmatprep.subr.bf16.mxu0 0
  %809 = vmatpush2.bf16.xpose.msra.mxu0 0
  %810 = vmatprep.subr.bf16.mxu0 0
  %811 = vmatpush2.bf16.xpose.msra.mxu0 0
  %812 = vmatprep.subr.bf16.mxu0 0
  %813 = vmatpush2.bf16.xpose.msra.mxu0 0
  %814 = vmatprep.subr.bf16.mxu0 0
  %815 = vmatpush2.bf16.xpose.msra.mxu0 0
  %816 = vmatprep.subr.bf16.mxu0 0
  %817 = vmatpush2.bf16.xpose.msra.mxu0 0
  %818 = vmatprep.mubr.bf16.mxu0 0
  %819 = vmatmul.mubr.bf16.gmra.mxu0 %v745
  %v820 = vpop.f32.mrf.mxu0
  %v821 = vadd.f32 %v115, %v820
  %v822 = vpop.f32.mrf.mxu0
  %v823 = vpop.f32.mrf.mxu0
  %v824 = vpop.f32.mrf.mxu0
  %825 = vdwg.mxu0
  %v826 = vsel %vm424, %v781, -inf
  %827 = vmax.xlane.f32.xlu0 %v826
  %v828 = vpop.xlane.xlu0 %827
  %v829 = vsel %vm424, %v821, -inf
  %830 = vmax.xlane.f32.xlu0 %v829
  %v831 = vpop.xlane.xlu0 %830
  %v832 = vsub.f32 %v781, %v828
  %v833 = vsub.f32 %v821, %v831
  %v834 = vmul.f32 %v832, 1.442695
  %v835 = vpow.pop %v834
  %v836 = vmul.f32 %v833, 1.442695
  %v837 = vpow.pop %v836
  %v838 = vsel %vm424, %v835, 0.0
  %839 = vadd.xlane.f32.xlu0 %v838
  %v840 = vpop.xlane.xlu0 %839
  %v841 = vsel %vm424, %v837, 0.0
  %842 = vadd.xlane.f32.xlu0 %v841
  %v843 = vpop.xlane.xlu0 %842
  %v844 = vrcp.pop %v840
  %v845 = vrcp.pop %v843
  %v846 = vmul.f32 %v835, %v844
  %v847 = vmul.f32 %v837, %v845
  %v848 = vpack.c.bf16 %v846, %v846
  %v849 = vpack.c.bf16 %v847, %v847
  %v850 = vmul.bf16 %v340, %v70
  %v851 = vmul.bf16 %v341, %v70
  %v853 = vsel %vm424, %v848, 0
  %v856 = vsel %vm562, %v850, 0
  %858 = vmatprep.subr.bf16.mxu0 0
  %859 = vmatpush1.bf16.msra.mxu0 0
  %860 = vmatprep.subr.bf16.mxu0 0
  %861 = vmatpush1.bf16.msra.mxu0 0
  %862 = vmatprep.subr.bf16.mxu0 0
  %863 = vmatpush1.bf16.msra.mxu0 0
  %864 = vmatprep.subr.bf16.mxu0 0
  %865 = vmatpush1.bf16.msra.mxu0 0
  %866 = vmatprep.subr.bf16.mxu0 0
  %867 = vmatpush1.bf16.msra.mxu0 0
  %868 = vmatprep.subr.bf16.mxu0 0
  %869 = vmatpush1.bf16.msra.mxu0 0
  %870 = vmatprep.subr.bf16.mxu0 0
  %871 = vmatpush1.bf16.msra.mxu0 0
  %872 = vmatprep.subr.bf16.mxu0 0
  %873 = vmatpush1.bf16.msra.mxu0 %v856
  %874 = vmatprep.subr.bf16.mxu0 0
  %875 = vmatpush2.bf16.msra.mxu0 0
  %876 = vmatprep.subr.bf16.mxu0 0
  %877 = vmatpush2.bf16.msra.mxu0 0
  %878 = vmatprep.subr.bf16.mxu0 0
  %879 = vmatpush2.bf16.msra.mxu0 0
  %880 = vmatprep.subr.bf16.mxu0 0
  %881 = vmatpush2.bf16.msra.mxu0 0
  %882 = vmatprep.subr.bf16.mxu0 0
  %883 = vmatpush2.bf16.msra.mxu0 0
  %884 = vmatprep.subr.bf16.mxu0 0
  %885 = vmatpush2.bf16.msra.mxu0 0
  %886 = vmatprep.subr.bf16.mxu0 0
  %887 = vmatpush2.bf16.msra.mxu0 0
  %888 = vmatprep.subr.bf16.mxu0 0
  %889 = vmatpush2.bf16.msra.mxu0 0
  %890 = vmatprep.mubr.bf16.mxu0 0
  %891 = vmatmul.mubr.bf16.gmra.mxu0 %v853
  %v892 = vpop.f32.mrf.mxu0
  %v893 = vadd.f32 0.0, %v892
  %v894 = vpop.f32.mrf.mxu0
  %v895 = vpop.f32.mrf.mxu0
  %v896 = vpop.f32.mrf.mxu0
  %897 = vdwg.mxu0
  %v899 = vsel %vm424, %v849, 0
  %v902 = vsel %vm562, %v851, 0
  %904 = vmatprep.subr.bf16.mxu0 0
  %905 = vmatpush1.bf16.msra.mxu0 0
  %906 = vmatprep.subr.bf16.mxu0 0
  %907 = vmatpush1.bf16.msra.mxu0 0
  %908 = vmatprep.subr.bf16.mxu0 0
  %909 = vmatpush1.bf16.msra.mxu0 0
  %910 = vmatprep.subr.bf16.mxu0 0
  %911 = vmatpush1.bf16.msra.mxu0 0
  %912 = vmatprep.subr.bf16.mxu0 0
  %913 = vmatpush1.bf16.msra.mxu0 0
  %914 = vmatprep.subr.bf16.mxu0 0
  %915 = vmatpush1.bf16.msra.mxu0 0
  %916 = vmatprep.subr.bf16.mxu0 0
  %917 = vmatpush1.bf16.msra.mxu0 0
  %918 = vmatprep.subr.bf16.mxu0 0
  %919 = vmatpush1.bf16.msra.mxu0 %v902
  %920 = vmatprep.subr.bf16.mxu0 0
  %921 = vmatpush2.bf16.msra.mxu0 0
  %922 = vmatprep.subr.bf16.mxu0 0
  %923 = vmatpush2.bf16.msra.mxu0 0
  %924 = vmatprep.subr.bf16.mxu0 0
  %925 = vmatpush2.bf16.msra.mxu0 0
  %926 = vmatprep.subr.bf16.mxu0 0
  %927 = vmatpush2.bf16.msra.mxu0 0
  %928 = vmatprep.subr.bf16.mxu0 0
  %929 = vmatpush2.bf16.msra.mxu0 0
  %930 = vmatprep.subr.bf16.mxu0 0
  %931 = vmatpush2.bf16.msra.mxu0 0
  %932 = vmatprep.subr.bf16.mxu0 0
  %933 = vmatpush2.bf16.msra.mxu0 0
  %934 = vmatprep.subr.bf16.mxu0 0
  %935 = vmatpush2.bf16.msra.mxu0 0
  %936 = vmatprep.mubr.bf16.mxu0 0
  %937 = vmatmul.mubr.bf16.gmra.mxu0 %v899
  %v938 = vpop.f32.mrf.mxu0
  %v939 = vadd.f32 0.0, %v938
  %v940 = vpop.f32.mrf.mxu0
  %v941 = vpop.f32.mrf.mxu0
  %v942 = vpop.f32.mrf.mxu0
  %943 = vdwg.mxu0
  %v944 = vadd.f32 %v693, %v893
  %v945 = vadd.f32 %v739, %v939
  %v946 = vmul.bf16 %v228, %v52
  %v947 = vmul.bf16 %v229, %v52
  %948 = vmatprep.subr.bf16.mxu0 0
  %949 = vmatpush1.bf16.xpose.msra.mxu0 0
  %950 = vmatprep.subr.bf16.mxu0 0
  %951 = vmatpush1.bf16.xpose.msra.mxu0 0
  %952 = vmatprep.subr.bf16.mxu0 0
  %953 = vmatpush1.bf16.xpose.msra.mxu0 0
  %954 = vmatprep.subr.bf16.mxu0 0
  %955 = vmatpush1.bf16.xpose.msra.mxu0 0
  %956 = vmatprep.subr.bf16.mxu0 0
  %957 = vmatpush1.bf16.xpose.msra.mxu0 0
  %958 = vmatprep.subr.bf16.mxu0 0
  %959 = vmatpush1.bf16.xpose.msra.mxu0 0
  %960 = vmatprep.subr.bf16.mxu0 0
  %961 = vmatpush1.bf16.xpose.msra.mxu0 0
  %962 = vmatprep.subr.bf16.mxu0 0
  %963 = vmatpush1.bf16.xpose.msra.mxu0 %v340
  %964 = vmatprep.subr.bf16.mxu0 0
  %965 = vmatpush2.bf16.xpose.msra.mxu0 0
  %966 = vmatprep.subr.bf16.mxu0 0
  %967 = vmatpush2.bf16.xpose.msra.mxu0 0
  %968 = vmatprep.subr.bf16.mxu0 0
  %969 = vmatpush2.bf16.xpose.msra.mxu0 0
  %970 = vmatprep.subr.bf16.mxu0 0
  %971 = vmatpush2.bf16.xpose.msra.mxu0 0
  %972 = vmatprep.subr.bf16.mxu0 0
  %973 = vmatpush2.bf16.xpose.msra.mxu0 0
  %974 = vmatprep.subr.bf16.mxu0 0
  %975 = vmatpush2.bf16.xpose.msra.mxu0 0
  %976 = vmatprep.subr.bf16.mxu0 0
  %977 = vmatpush2.bf16.xpose.msra.mxu0 0
  %978 = vmatprep.subr.bf16.mxu0 0
  %979 = vmatpush2.bf16.xpose.msra.mxu0 0
  %980 = vmatprep.mubr.bf16.mxu0 0
  %981 = vmatmul.mubr.bf16.gmra.mxu0 %v946
  %v982 = vpop.f32.mrf.mxu0
  %v983 = vadd.f32 %v114, %v982
  %v984 = vpop.f32.mrf.mxu0
  %v985 = vpop.f32.mrf.mxu0
  %v986 = vpop.f32.mrf.mxu0
  %987 = vdwg.mxu0
  %988 = vmatprep.subr.bf16.mxu0 0
  %989 = vmatpush1.bf16.xpose.msra.mxu0 0
  %990 = vmatprep.subr.bf16.mxu0 0
  %991 = vmatpush1.bf16.xpose.msra.mxu0 0
  %992 = vmatprep.subr.bf16.mxu0 0
  %993 = vmatpush1.bf16.xpose.msra.mxu0 0
  %994 = vmatprep.subr.bf16.mxu0 0
  %995 = vmatpush1.bf16.xpose.msra.mxu0 0
  %996 = vmatprep.subr.bf16.mxu0 0
  %997 = vmatpush1.bf16.xpose.msra.mxu0 0
  %998 = vmatprep.subr.bf16.mxu0 0
  %999 = vmatpush1.bf16.xpose.msra.mxu0 0
  %1000 = vmatprep.subr.bf16.mxu0 0
  %1001 = vmatpush1.bf16.xpose.msra.mxu0 0
  %1002 = vmatprep.subr.bf16.mxu0 0
  %1003 = vmatpush1.bf16.xpose.msra.mxu0 %v341
  %1004 = vmatprep.subr.bf16.mxu0 0
  %1005 = vmatpush2.bf16.xpose.msra.mxu0 0
  %1006 = vmatprep.subr.bf16.mxu0 0
  %1007 = vmatpush2.bf16.xpose.msra.mxu0 0
  %1008 = vmatprep.subr.bf16.mxu0 0
  %1009 = vmatpush2.bf16.xpose.msra.mxu0 0
  %1010 = vmatprep.subr.bf16.mxu0 0
  %1011 = vmatpush2.bf16.xpose.msra.mxu0 0
  %1012 = vmatprep.subr.bf16.mxu0 0
  %1013 = vmatpush2.bf16.xpose.msra.mxu0 0
  %1014 = vmatprep.subr.bf16.mxu0 0
  %1015 = vmatpush2.bf16.xpose.msra.mxu0 0
  %1016 = vmatprep.subr.bf16.mxu0 0
  %1017 = vmatpush2.bf16.xpose.msra.mxu0 0
  %1018 = vmatprep.subr.bf16.mxu0 0
  %1019 = vmatpush2.bf16.xpose.msra.mxu0 0
  %1020 = vmatprep.mubr.bf16.mxu0 0
  %1021 = vmatmul.mubr.bf16.gmra.mxu0 %v947
  %v1022 = vpop.f32.mrf.mxu0
  %v1023 = vadd.f32 %v115, %v1022
  %v1024 = vpop.f32.mrf.mxu0
  %v1025 = vpop.f32.mrf.mxu0
  %v1026 = vpop.f32.mrf.mxu0
  %1027 = vdwg.mxu0
  %v1028 = vsel %vm424, %v983, -inf
  %1029 = vmax.xlane.f32.xlu0 %v1028
  %v1030 = vpop.xlane.xlu0 %1029
  %v1031 = vsel %vm424, %v1023, -inf
  %1032 = vmax.xlane.f32.xlu0 %v1031
  %v1033 = vpop.xlane.xlu0 %1032
  %v1034 = vsub.f32 %v983, %v1030
  %v1035 = vsub.f32 %v1023, %v1033
  %v1036 = vmul.f32 %v1034, 1.442695
  %v1037 = vpow.pop %v1036
  %v1038 = vmul.f32 %v1035, 1.442695
  %v1039 = vpow.pop %v1038
  %v1040 = vsel %vm424, %v1037, 0.0
  %1041 = vadd.xlane.f32.xlu0 %v1040
  %v1042 = vpop.xlane.xlu0 %1041
  %v1043 = vsel %vm424, %v1039, 0.0
  %1044 = vadd.xlane.f32.xlu0 %v1043
  %v1045 = vpop.xlane.xlu0 %1044
  %v1046 = vrcp.pop %v1042
  %v1047 = vrcp.pop %v1045
  %v1048 = vmul.f32 %v1037, %v1046
  %v1049 = vmul.f32 %v1039, %v1047
  %v1050 = vpack.c.bf16 %v1048, %v1048
  %v1051 = vpack.c.bf16 %v1049, %v1049
  %v1052 = vmul.bf16 %v340, %v76
  %v1053 = vmul.bf16 %v341, %v76
  %v1055 = vsel %vm424, %v1050, 0
  %v1058 = vsel %vm562, %v1052, 0
  %1060 = vmatprep.subr.bf16.mxu0 0
  %1061 = vmatpush1.bf16.msra.mxu0 0
  %1062 = vmatprep.subr.bf16.mxu0 0
  %1063 = vmatpush1.bf16.msra.mxu0 0
  %1064 = vmatprep.subr.bf16.mxu0 0
  %1065 = vmatpush1.bf16.msra.mxu0 0
  %1066 = vmatprep.subr.bf16.mxu0 0
  %1067 = vmatpush1.bf16.msra.mxu0 0
  %1068 = vmatprep.subr.bf16.mxu0 0
  %1069 = vmatpush1.bf16.msra.mxu0 0
  %1070 = vmatprep.subr.bf16.mxu0 0
  %1071 = vmatpush1.bf16.msra.mxu0 0
  %1072 = vmatprep.subr.bf16.mxu0 0
  %1073 = vmatpush1.bf16.msra.mxu0 0
  %1074 = vmatprep.subr.bf16.mxu0 0
  %1075 = vmatpush1.bf16.msra.mxu0 %v1058
  %1076 = vmatprep.subr.bf16.mxu0 0
  %1077 = vmatpush2.bf16.msra.mxu0 0
  %1078 = vmatprep.subr.bf16.mxu0 0
  %1079 = vmatpush2.bf16.msra.mxu0 0
  %1080 = vmatprep.subr.bf16.mxu0 0
  %1081 = vmatpush2.bf16.msra.mxu0 0
  %1082 = vmatprep.subr.bf16.mxu0 0
  %1083 = vmatpush2.bf16.msra.mxu0 0
  %1084 = vmatprep.subr.bf16.mxu0 0
  %1085 = vmatpush2.bf16.msra.mxu0 0
  %1086 = vmatprep.subr.bf16.mxu0 0
  %1087 = vmatpush2.bf16.msra.mxu0 0
  %1088 = vmatprep.subr.bf16.mxu0 0
  %1089 = vmatpush2.bf16.msra.mxu0 0
  %1090 = vmatprep.subr.bf16.mxu0 0
  %1091 = vmatpush2.bf16.msra.mxu0 0
  %1092 = vmatprep.mubr.bf16.mxu0 0
  %1093 = vmatmul.mubr.bf16.gmra.mxu0 %v1055
  %v1094 = vpop.f32.mrf.mxu0
  %v1095 = vadd.f32 0.0, %v1094
  %v1096 = vpop.f32.mrf.mxu0
  %v1097 = vpop.f32.mrf.mxu0
  %v1098 = vpop.f32.mrf.mxu0
  %1099 = vdwg.mxu0
  %v1101 = vsel %vm424, %v1051, 0
  %v1104 = vsel %vm562, %v1053, 0
  %1106 = vmatprep.subr.bf16.mxu0 0
  %1107 = vmatpush1.bf16.msra.mxu0 0
  %1108 = vmatprep.subr.bf16.mxu0 0
  %1109 = vmatpush1.bf16.msra.mxu0 0
  %1110 = vmatprep.subr.bf16.mxu0 0
  %1111 = vmatpush1.bf16.msra.mxu0 0
  %1112 = vmatprep.subr.bf16.mxu0 0
  %1113 = vmatpush1.bf16.msra.mxu0 0
  %1114 = vmatprep.subr.bf16.mxu0 0
  %1115 = vmatpush1.bf16.msra.mxu0 0
  %1116 = vmatprep.subr.bf16.mxu0 0
  %1117 = vmatpush1.bf16.msra.mxu0 0
  %1118 = vmatprep.subr.bf16.mxu0 0
  %1119 = vmatpush1.bf16.msra.mxu0 0
  %1120 = vmatprep.subr.bf16.mxu0 0
  %1121 = vmatpush1.bf16.msra.mxu0 %v1104
  %1122 = vmatprep.subr.bf16.mxu0 0
  %1123 = vmatpush2.bf16.msra.mxu0 0
  %1124 = vmatprep.subr.bf16.mxu0 0
  %1125 = vmatpush2.bf16.msra.mxu0 0
  %1126 = vmatprep.subr.bf16.mxu0 0
  %1127 = vmatpush2.bf16.msra.mxu0 0
  %1128 = vmatprep.subr.bf16.mxu0 0
  %1129 = vmatpush2.bf16.msra.mxu0 0
  %1130 = vmatprep.subr.bf16.mxu0 0
  %1131 = vmatpush2.bf16.msra.mxu0 0
  %1132 = vmatprep.subr.bf16.mxu0 0
  %1133 = vmatpush2.bf16.msra.mxu0 0
  %1134 = vmatprep.subr.bf16.mxu0 0
  %1135 = vmatpush2.bf16.msra.mxu0 0
  %1136 = vmatprep.subr.bf16.mxu0 0
  %1137 = vmatpush2.bf16.msra.mxu0 0
  %1138 = vmatprep.mubr.bf16.mxu0 0
  %1139 = vmatmul.mubr.bf16.gmra.mxu0 %v1101
  %v1140 = vpop.f32.mrf.mxu0
  %v1141 = vadd.f32 0.0, %v1140
  %v1142 = vpop.f32.mrf.mxu0
  %v1143 = vpop.f32.mrf.mxu0
  %v1144 = vpop.f32.mrf.mxu0
  %1145 = vdwg.mxu0
  %v1146 = vadd.f32 %v944, %v1095
  %v1147 = vadd.f32 %v945, %v1141
  %v1148 = vpack.c.bf16 %v1147, %v1146
  %s1149 = scalar_lea.vmem %s2, 128
  %v1150 = vld [vmem:[%s1149] sm:$0xf]
  %v1151 = vld [vmem:[%s1149 + $0x4] sm:$0xf]
  %v1152 = vld [vmem:[%s1149 + $0x8] sm:$0xf]
  %v1153 = vld [vmem:[%s1149 + $0xc] sm:$0xf]
  %v1154 = vld [vmem:[%s1149 + $0x10] sm:$0xf]
  %v1155 = vld [vmem:[%s1149 + $0x14] sm:$0xf]
  %v1156 = vld [vmem:[%s1149 + $0x18] sm:$0xf]
  %v1157 = vld [vmem:[%s1149 + $0x1c] sm:$0xf]
  %v1158 = vld [vmem:[%s1149 + $0x20] sm:$0xf]
  %v1159 = vld [vmem:[%s1149 + $0x24] sm:$0xf]
  %v1160 = vld [vmem:[%s1149 + $0x28] sm:$0xf]
  %v1161 = vld [vmem:[%s1149 + $0x2c] sm:$0xf]
  %v1162 = vld [vmem:[%s1149 + $0x30] sm:$0xf]
  %v1163 = vld [vmem:[%s1149 + $0x34] sm:$0xf]
  %v1164 = vld [vmem:[%s1149 + $0x38] sm:$0xf]
  %v1165 = vld [vmem:[%s1149 + $0x3c] sm:$0xf]
  %v1166 = vlaneseq
  %v1167 = vshrl.u32 %v1166, 7
  %v1168 = vsub.s32 2, %v1167
  %v1169 = vrot.slane %v18, %v1168
  %v1186 = vunpack.c.l.b16 %v1150
  %v1187 = vunpack.c.l.b16 %v1151
  %v1188 = vunpack.c.l.b16 %v1152
  %v1189 = vunpack.c.l.b16 %v1153
  %v1190 = vunpack.c.l.b16 %v1154
  %v1191 = vunpack.c.l.b16 %v1155
  %v1192 = vunpack.c.l.b16 %v1156
  %v1193 = vunpack.c.l.b16 %v1157
  %v1194 = vunpack.c.l.b16 %v1158
  %v1195 = vunpack.c.l.b16 %v1159
  %v1196 = vunpack.c.l.b16 %v1160
  %v1197 = vunpack.c.l.b16 %v1161
  %v1198 = vunpack.c.l.b16 %v1162
  %v1199 = vunpack.c.l.b16 %v1163
  %v1200 = vunpack.c.l.b16 %v1164
  %v1201 = vunpack.c.l.b16 %v1165
  %v1202 = vpack.c.b16 %v1187, %v1186
  %v1203 = vpack.c.b16 %v1189, %v1188
  %v1204 = vpack.c.b16 %v1191, %v1190
  %v1205 = vpack.c.b16 %v1193, %v1192
  %v1206 = vpack.c.b16 %v1195, %v1194
  %v1207 = vpack.c.b16 %v1197, %v1196
  %v1208 = vpack.c.b16 %v1199, %v1198
  %v1209 = vpack.c.b16 %v1201, %v1200
  %1218 = vmatprep.subr.bf16.mxu0 0
  %1219 = vmatpush1.bf16.msra.mxu0 %v1209
  %1220 = vmatprep.subr.bf16.mxu0 0
  %1221 = vmatpush1.bf16.msra.mxu0 %v1208
  %1222 = vmatprep.subr.bf16.mxu0 0
  %1223 = vmatpush1.bf16.msra.mxu0 %v1207
  %1224 = vmatprep.subr.bf16.mxu0 0
  %1225 = vmatpush1.bf16.msra.mxu0 %v1206
  %1226 = vmatprep.subr.bf16.mxu0 0
  %1227 = vmatpush1.bf16.msra.mxu0 %v1205
  %1228 = vmatprep.subr.bf16.mxu0 0
  %1229 = vmatpush1.bf16.msra.mxu0 %v1204
  %1230 = vmatprep.subr.bf16.mxu0 0
  %1231 = vmatpush1.bf16.msra.mxu0 %v1203
  %1232 = vmatprep.subr.bf16.mxu0 0
  %1233 = vmatpush1.bf16.msra.mxu0 %v1202
  %1234 = vmatprep.subr.bf16.mxu0 0
  %1235 = vmatpush2.bf16.msra.mxu0 0
  %1236 = vmatprep.subr.bf16.mxu0 0
  %1237 = vmatpush2.bf16.msra.mxu0 0
  %1238 = vmatprep.subr.bf16.mxu0 0
  %1239 = vmatpush2.bf16.msra.mxu0 0
  %1240 = vmatprep.subr.bf16.mxu0 0
  %1241 = vmatpush2.bf16.msra.mxu0 0
  %1242 = vmatprep.subr.bf16.mxu0 0
  %1243 = vmatpush2.bf16.msra.mxu0 0
  %1244 = vmatprep.subr.bf16.mxu0 0
  %1245 = vmatpush2.bf16.msra.mxu0 0
  %1246 = vmatprep.subr.bf16.mxu0 0
  %1247 = vmatpush2.bf16.msra.mxu0 0
  %1248 = vmatprep.subr.bf16.mxu0 0
  %1249 = vmatpush2.bf16.msra.mxu0 0
  %1250 = vmatprep.mubr.bf16.mxu0 0
  %1251 = vmatmul.mubr.bf16.gmra.mxu0 %v1148
  %v1252 = vpop.f32.mrf.mxu0
  %v1253 = vadd.f32 %v1169, %v1252
  %v1254 = vpop.f32.mrf.mxu0
  %v1255 = vpop.f32.mrf.mxu0
  %v1256 = vadd.f32 %v1169, %v1255
  %v1257 = vpop.f32.mrf.mxu0
  %1258 = vdwg.mxu0
  %v1259 = vadd.f32 %v22, %v1253
  %v1260 = vadd.f32 %v23, %v1256
  %1261 = vadd.xlane.f32.xlu0 %v1259
  %v1262 = vpop.xlane.xlu0 %1261
  %1263 = vadd.xlane.f32.xlu0 %v1260
  %v1264 = vpop.xlane.xlu0 %1263
  %v1265 = vmul.f32 %v1262, 0.03125
  %v1266 = vmul.f32 %v1264, 0.03125
  %v1267 = vsub.f32 %v1259, %v1265
  %v1268 = vsub.f32 %v1260, %v1266
  %v1269 = vmul.f32 %v1267, %v29
  %v1270 = vmul.f32 %v1268, %v29
  %v1271 = vmul.f32 %v1269, %v1269
  %v1272 = vmul.f32 %v1270, %v1270
  %1273 = vadd.xlane.f32.xlu0 %v1271
  %v1274 = vpop.xlane.xlu0 %1273
  %1275 = vadd.xlane.f32.xlu0 %v1272
  %v1276 = vpop.xlane.xlu0 %1275
  %v1277 = vmul.f32 %v1274, 0.03125
  %v1278 = vmul.f32 %v1276, 0.03125
  %v1279 = vadd.f32 %v1277, 1e-05
  %v1280 = vadd.f32 %v1278, 1e-05
  %v1281 = vrsqrt.pop %v1279
  %v1282 = vrsqrt.pop %v1280
  %v1283 = vmul.f32 %v1269, %v1281
  %v1284 = vmul.f32 %v1270, %v1282
  %v1285 = vlaneseq
  %v1286 = vshrl.u32 %v1285, 7
  %v1287 = vsub.s32 0, %v1286
  %v1288 = vrot.slane %v19, %v1287
  %v1289 = vmul.f32 %v1283, %v1288
  %v1290 = vmul.f32 %v1284, %v1288
  %v1291 = vlaneseq
  %v1292 = vshrl.u32 %v1291, 7
  %v1293 = vsub.s32 1, %v1292
  %v1294 = vrot.slane %v19, %v1293
  %v1295 = vadd.f32 %v1289, %v1294
  %v1296 = vadd.f32 %v1290, %v1294
  %v1297 = vpack.c.bf16 %v1296, %v1295
  %s1298 = scalar_lea.vmem %s2, 192
  %v1299 = vld [vmem:[%s1298] sm:$0xf]
  %v1300 = vld [vmem:[%s1298 + $0x4] sm:$0xf]
  %v1301 = vld [vmem:[%s1298 + $0x8] sm:$0xf]
  %v1302 = vld [vmem:[%s1298 + $0xc] sm:$0xf]
  %v1303 = vld [vmem:[%s1298 + $0x10] sm:$0xf]
  %v1304 = vld [vmem:[%s1298 + $0x14] sm:$0xf]
  %v1305 = vld [vmem:[%s1298 + $0x18] sm:$0xf]
  %v1306 = vld [vmem:[%s1298 + $0x1c] sm:$0xf]
  %v1307 = vld [vmem:[%s1298 + $0x20] sm:$0xf]
  %v1308 = vld [vmem:[%s1298 + $0x24] sm:$0xf]
  %v1309 = vld [vmem:[%s1298 + $0x28] sm:$0xf]
  %v1310 = vld [vmem:[%s1298 + $0x2c] sm:$0xf]
  %v1311 = vld [vmem:[%s1298 + $0x30] sm:$0xf]
  %v1312 = vld [vmem:[%s1298 + $0x34] sm:$0xf]
  %v1313 = vld [vmem:[%s1298 + $0x38] sm:$0xf]
  %v1314 = vld [vmem:[%s1298 + $0x3c] sm:$0xf]
  %v1315 = vlaneseq
  %v1316 = vshrl.u32 %v1315, 7
  %v1317 = vsub.s32 3, %v1316
  %v1318 = vrot.slane %v18, %v1317
  %v1335 = vunpack.c.l.b16 %v1299
  %v1336 = vunpack.c.l.b16 %v1300
  %v1337 = vunpack.c.l.b16 %v1301
  %v1338 = vunpack.c.l.b16 %v1302
  %v1339 = vunpack.c.l.b16 %v1303
  %v1340 = vunpack.c.l.b16 %v1304
  %v1341 = vunpack.c.l.b16 %v1305
  %v1342 = vunpack.c.l.b16 %v1306
  %v1343 = vunpack.c.l.b16 %v1307
  %v1344 = vunpack.c.l.b16 %v1308
  %v1345 = vunpack.c.l.b16 %v1309
  %v1346 = vunpack.c.l.b16 %v1310
  %v1347 = vunpack.c.l.b16 %v1311
  %v1348 = vunpack.c.l.b16 %v1312
  %v1349 = vunpack.c.l.b16 %v1313
  %v1350 = vunpack.c.l.b16 %v1314
  %v1351 = vpack.c.b16 %v1336, %v1335
  %v1352 = vpack.c.b16 %v1338, %v1337
  %v1353 = vpack.c.b16 %v1340, %v1339
  %v1354 = vpack.c.b16 %v1342, %v1341
  %v1355 = vpack.c.b16 %v1344, %v1343
  %v1356 = vpack.c.b16 %v1346, %v1345
  %v1357 = vpack.c.b16 %v1348, %v1347
  %v1358 = vpack.c.b16 %v1350, %v1349
  %1367 = vmatprep.subr.bf16.mxu0 0
  %1368 = vmatpush1.bf16.msra.mxu0 %v1358
  %1369 = vmatprep.subr.bf16.mxu0 0
  %1370 = vmatpush1.bf16.msra.mxu0 %v1357
  %1371 = vmatprep.subr.bf16.mxu0 0
  %1372 = vmatpush1.bf16.msra.mxu0 %v1356
  %1373 = vmatprep.subr.bf16.mxu0 0
  %1374 = vmatpush1.bf16.msra.mxu0 %v1355
  %1375 = vmatprep.subr.bf16.mxu0 0
  %1376 = vmatpush1.bf16.msra.mxu0 %v1354
  %1377 = vmatprep.subr.bf16.mxu0 0
  %1378 = vmatpush1.bf16.msra.mxu0 %v1353
  %1379 = vmatprep.subr.bf16.mxu0 0
  %1380 = vmatpush1.bf16.msra.mxu0 %v1352
  %1381 = vmatprep.subr.bf16.mxu0 0
  %1382 = vmatpush1.bf16.msra.mxu0 %v1351
  %1383 = vmatprep.subr.bf16.mxu0 0
  %1384 = vmatpush2.bf16.msra.mxu0 0
  %1385 = vmatprep.subr.bf16.mxu0 0
  %1386 = vmatpush2.bf16.msra.mxu0 0
  %1387 = vmatprep.subr.bf16.mxu0 0
  %1388 = vmatpush2.bf16.msra.mxu0 0
  %1389 = vmatprep.subr.bf16.mxu0 0
  %1390 = vmatpush2.bf16.msra.mxu0 0
  %1391 = vmatprep.subr.bf16.mxu0 0
  %1392 = vmatpush2.bf16.msra.mxu0 0
  %1393 = vmatprep.subr.bf16.mxu0 0
  %1394 = vmatpush2.bf16.msra.mxu0 0
  %1395 = vmatprep.subr.bf16.mxu0 0
  %1396 = vmatpush2.bf16.msra.mxu0 0
  %1397 = vmatprep.subr.bf16.mxu0 0
  %1398 = vmatpush2.bf16.msra.mxu0 0
  %1399 = vmatprep.mubr.bf16.mxu0 0
  %1400 = vmatmul.mubr.bf16.gmra.mxu0 %v1297
  %v1401 = vpop.f32.mrf.mxu0
  %v1402 = vadd.f32 %v1318, %v1401
  %v1403 = vpop.f32.mrf.mxu0
  %v1404 = vpop.f32.mrf.mxu0
  %v1405 = vadd.f32 %v1318, %v1404
  %v1406 = vpop.f32.mrf.mxu0
  %1407 = vdwg.mxu0
  %v1408 = vmul.f32 %v1402, 0.35355338
  %v1409 = vmul.f32 %v1405, 0.35355338
  %v1410 = vpack.c.bf16 %v1408, %v1408
  %v1411 = vpack.c.bf16 %v1409, %v1409
  %s1412 = scalar_lea.vmem %s2, 256
  %v1413 = vld [vmem:[%s1412] sm:$0xf]
  %v1414 = vld [vmem:[%s1412 + $0x4] sm:$0xf]
  %v1415 = vld [vmem:[%s1412 + $0x8] sm:$0xf]
  %v1416 = vld [vmem:[%s1412 + $0xc] sm:$0xf]
  %v1417 = vld [vmem:[%s1412 + $0x10] sm:$0xf]
  %v1418 = vld [vmem:[%s1412 + $0x14] sm:$0xf]
  %v1419 = vld [vmem:[%s1412 + $0x18] sm:$0xf]
  %v1420 = vld [vmem:[%s1412 + $0x1c] sm:$0xf]
  %v1421 = vld [vmem:[%s1412 + $0x20] sm:$0xf]
  %v1422 = vld [vmem:[%s1412 + $0x24] sm:$0xf]
  %v1423 = vld [vmem:[%s1412 + $0x28] sm:$0xf]
  %v1424 = vld [vmem:[%s1412 + $0x2c] sm:$0xf]
  %v1425 = vld [vmem:[%s1412 + $0x30] sm:$0xf]
  %v1426 = vld [vmem:[%s1412 + $0x34] sm:$0xf]
  %v1427 = vld [vmem:[%s1412 + $0x38] sm:$0xf]
  %v1428 = vld [vmem:[%s1412 + $0x3c] sm:$0xf]
  %v1429 = vlaneseq
  %v1430 = vshrl.u32 %v1429, 7
  %v1431 = vsub.s32 4, %v1430
  %v1432 = vrot.slane %v18, %v1431
  %v1449 = vunpack.c.l.b16 %v1413
  %v1450 = vunpack.c.l.b16 %v1414
  %v1451 = vunpack.c.l.b16 %v1415
  %v1452 = vunpack.c.l.b16 %v1416
  %v1453 = vunpack.c.l.b16 %v1417
  %v1454 = vunpack.c.l.b16 %v1418
  %v1455 = vunpack.c.l.b16 %v1419
  %v1456 = vunpack.c.l.b16 %v1420
  %v1457 = vunpack.c.l.b16 %v1421
  %v1458 = vunpack.c.l.b16 %v1422
  %v1459 = vunpack.c.l.b16 %v1423
  %v1460 = vunpack.c.l.b16 %v1424
  %v1461 = vunpack.c.l.b16 %v1425
  %v1462 = vunpack.c.l.b16 %v1426
  %v1463 = vunpack.c.l.b16 %v1427
  %v1464 = vunpack.c.l.b16 %v1428
  %v1465 = vpack.c.b16 %v1450, %v1449
  %v1466 = vpack.c.b16 %v1452, %v1451
  %v1467 = vpack.c.b16 %v1454, %v1453
  %v1468 = vpack.c.b16 %v1456, %v1455
  %v1469 = vpack.c.b16 %v1458, %v1457
  %v1470 = vpack.c.b16 %v1460, %v1459
  %v1471 = vpack.c.b16 %v1462, %v1461
  %v1472 = vpack.c.b16 %v1464, %v1463
  %1481 = vmatprep.subr.bf16.mxu0 0
  %1482 = vmatpush1.bf16.msra.mxu0 %v1472
  %1483 = vmatprep.subr.bf16.mxu0 0
  %1484 = vmatpush1.bf16.msra.mxu0 %v1471
  %1485 = vmatprep.subr.bf16.mxu0 0
  %1486 = vmatpush1.bf16.msra.mxu0 %v1470
  %1487 = vmatprep.subr.bf16.mxu0 0
  %1488 = vmatpush1.bf16.msra.mxu0 %v1469
  %1489 = vmatprep.subr.bf16.mxu0 0
  %1490 = vmatpush1.bf16.msra.mxu0 %v1468
  %1491 = vmatprep.subr.bf16.mxu0 0
  %1492 = vmatpush1.bf16.msra.mxu0 %v1467
  %1493 = vmatprep.subr.bf16.mxu0 0
  %1494 = vmatpush1.bf16.msra.mxu0 %v1466
  %1495 = vmatprep.subr.bf16.mxu0 0
  %1496 = vmatpush1.bf16.msra.mxu0 %v1465
  %1497 = vmatprep.subr.bf16.mxu0 0
  %1498 = vmatpush2.bf16.msra.mxu0 0
  %1499 = vmatprep.subr.bf16.mxu0 0
  %1500 = vmatpush2.bf16.msra.mxu0 0
  %1501 = vmatprep.subr.bf16.mxu0 0
  %1502 = vmatpush2.bf16.msra.mxu0 0
  %1503 = vmatprep.subr.bf16.mxu0 0
  %1504 = vmatpush2.bf16.msra.mxu0 0
  %1505 = vmatprep.subr.bf16.mxu0 0
  %1506 = vmatpush2.bf16.msra.mxu0 0
  %1507 = vmatprep.subr.bf16.mxu0 0
  %1508 = vmatpush2.bf16.msra.mxu0 0
  %1509 = vmatprep.subr.bf16.mxu0 0
  %1510 = vmatpush2.bf16.msra.mxu0 0
  %1511 = vmatprep.subr.bf16.mxu0 0
  %1512 = vmatpush2.bf16.msra.mxu0 0
  %1513 = vmatprep.mubr.bf16.mxu0 0
  %1514 = vmatmul.mubr.bf16.gmra.mxu0 %v116
  %v1515 = vpop.f32.mrf.mxu0
  %v1516 = vadd.f32 %v1432, %v1515
  %v1517 = vpop.f32.mrf.mxu0
  %v1518 = vpop.f32.mrf.mxu0
  %v1519 = vadd.f32 %v1432, %v1518
  %v1520 = vpop.f32.mrf.mxu0
  %1521 = vdwg.mxu0
  %v1522 = vpack.c.bf16 %v1516, %v1516
  %v1523 = vpack.c.bf16 %v1519, %v1519
  %v1524 = vmul.bf16 %v1410, %v35
  %v1525 = vmul.bf16 %v1411, %v35
  %1526 = vmatprep.subr.bf16.mxu0 0
  %1527 = vmatpush1.bf16.xpose.msra.mxu0 0
  %1528 = vmatprep.subr.bf16.mxu0 0
  %1529 = vmatpush1.bf16.xpose.msra.mxu0 0
  %1530 = vmatprep.subr.bf16.mxu0 0
  %1531 = vmatpush1.bf16.xpose.msra.mxu0 0
  %1532 = vmatprep.subr.bf16.mxu0 0
  %1533 = vmatpush1.bf16.xpose.msra.mxu0 0
  %1534 = vmatprep.subr.bf16.mxu0 0
  %1535 = vmatpush1.bf16.xpose.msra.mxu0 0
  %1536 = vmatprep.subr.bf16.mxu0 0
  %1537 = vmatpush1.bf16.xpose.msra.mxu0 0
  %1538 = vmatprep.subr.bf16.mxu0 0
  %1539 = vmatpush1.bf16.xpose.msra.mxu0 0
  %1540 = vmatprep.subr.bf16.mxu0 0
  %1541 = vmatpush1.bf16.xpose.msra.mxu0 %v1522
  %1542 = vmatprep.subr.bf16.mxu0 0
  %1543 = vmatpush2.bf16.xpose.msra.mxu0 0
  %1544 = vmatprep.subr.bf16.mxu0 0
  %1545 = vmatpush2.bf16.xpose.msra.mxu0 0
  %1546 = vmatprep.subr.bf16.mxu0 0
  %1547 = vmatpush2.bf16.xpose.msra.mxu0 0
  %1548 = vmatprep.subr.bf16.mxu0 0
  %1549 = vmatpush2.bf16.xpose.msra.mxu0 0
  %1550 = vmatprep.subr.bf16.mxu0 0
  %1551 = vmatpush2.bf16.xpose.msra.mxu0 0
  %1552 = vmatprep.subr.bf16.mxu0 0
  %1553 = vmatpush2.bf16.xpose.msra.mxu0 0
  %1554 = vmatprep.subr.bf16.mxu0 0
  %1555 = vmatpush2.bf16.xpose.msra.mxu0 0
  %1556 = vmatprep.subr.bf16.mxu0 0
  %1557 = vmatpush2.bf16.xpose.msra.mxu0 0
  %1558 = vmatprep.mubr.bf16.mxu0 0
  %1559 = vmatmul.mubr.bf16.gmra.mxu0 %v1524
  %v1560 = vpop.f32.mrf.mxu0
  %v1561 = vadd.f32 0.0, %v1560
  %v1562 = vpop.f32.mrf.mxu0
  %v1563 = vpop.f32.mrf.mxu0
  %v1564 = vpop.f32.mrf.mxu0
  %1565 = vdwg.mxu0
  %1566 = vmatprep.subr.bf16.mxu0 0
  %1567 = vmatpush1.bf16.xpose.msra.mxu0 0
  %1568 = vmatprep.subr.bf16.mxu0 0
  %1569 = vmatpush1.bf16.xpose.msra.mxu0 0
  %1570 = vmatprep.subr.bf16.mxu0 0
  %1571 = vmatpush1.bf16.xpose.msra.mxu0 0
  %1572 = vmatprep.subr.bf16.mxu0 0
  %1573 = vmatpush1.bf16.xpose.msra.mxu0 0
  %1574 = vmatprep.subr.bf16.mxu0 0
  %1575 = vmatpush1.bf16.xpose.msra.mxu0 0
  %1576 = vmatprep.subr.bf16.mxu0 0
  %1577 = vmatpush1.bf16.xpose.msra.mxu0 0
  %1578 = vmatprep.subr.bf16.mxu0 0
  %1579 = vmatpush1.bf16.xpose.msra.mxu0 0
  %1580 = vmatprep.subr.bf16.mxu0 0
  %1581 = vmatpush1.bf16.xpose.msra.mxu0 %v1523
  %1582 = vmatprep.subr.bf16.mxu0 0
  %1583 = vmatpush2.bf16.xpose.msra.mxu0 0
  %1584 = vmatprep.subr.bf16.mxu0 0
  %1585 = vmatpush2.bf16.xpose.msra.mxu0 0
  %1586 = vmatprep.subr.bf16.mxu0 0
  %1587 = vmatpush2.bf16.xpose.msra.mxu0 0
  %1588 = vmatprep.subr.bf16.mxu0 0
  %1589 = vmatpush2.bf16.xpose.msra.mxu0 0
  %1590 = vmatprep.subr.bf16.mxu0 0
  %1591 = vmatpush2.bf16.xpose.msra.mxu0 0
  %1592 = vmatprep.subr.bf16.mxu0 0
  %1593 = vmatpush2.bf16.xpose.msra.mxu0 0
  %1594 = vmatprep.subr.bf16.mxu0 0
  %1595 = vmatpush2.bf16.xpose.msra.mxu0 0
  %1596 = vmatprep.subr.bf16.mxu0 0
  %1597 = vmatpush2.bf16.xpose.msra.mxu0 0
  %1598 = vmatprep.mubr.bf16.mxu0 0
  %1599 = vmatmul.mubr.bf16.gmra.mxu0 %v1525
  %v1600 = vpop.f32.mrf.mxu0
  %v1601 = vadd.f32 0.0, %v1600
  %v1602 = vpop.f32.mrf.mxu0
  %v1603 = vpop.f32.mrf.mxu0
  %v1604 = vpop.f32.mrf.mxu0
  %1605 = vdwg.mxu0
  %v1606 = vsel %vm424, %v1561, -inf
  %1607 = vmax.xlane.f32.xlu0 %v1606
  %v1608 = vpop.xlane.xlu0 %1607
  %v1609 = vsel %vm424, %v1601, -inf
  %1610 = vmax.xlane.f32.xlu0 %v1609
  %v1611 = vpop.xlane.xlu0 %1610
  %v1612 = vsub.f32 %v1561, %v1608
  %v1613 = vsub.f32 %v1601, %v1611
  %v1614 = vmul.f32 %v1612, 1.442695
  %v1615 = vpow.pop %v1614
  %v1616 = vmul.f32 %v1613, 1.442695
  %v1617 = vpow.pop %v1616
  %v1618 = vsel %vm424, %v1615, 0.0
  %1619 = vadd.xlane.f32.xlu0 %v1618
  %v1620 = vpop.xlane.xlu0 %1619
  %v1621 = vsel %vm424, %v1617, 0.0
  %1622 = vadd.xlane.f32.xlu0 %v1621
  %v1623 = vpop.xlane.xlu0 %1622
  %v1624 = vrcp.pop %v1620
  %v1625 = vrcp.pop %v1623
  %v1626 = vmul.f32 %v1615, %v1624
  %v1627 = vmul.f32 %v1617, %v1625
  %v1628 = vpack.c.bf16 %v1626, %v1626
  %v1629 = vpack.c.bf16 %v1627, %v1627
  %v1630 = vmul.bf16 %v1522, %v58
  %v1631 = vmul.bf16 %v1523, %v58
  %v1632 = vmul.bf16 %v1410, %v41
  %v1633 = vmul.bf16 %v1411, %v41
  %1634 = vmatprep.subr.bf16.mxu0 0
  %1635 = vmatpush1.bf16.xpose.msra.mxu0 0
  %1636 = vmatprep.subr.bf16.mxu0 0
  %1637 = vmatpush1.bf16.xpose.msra.mxu0 0
  %1638 = vmatprep.subr.bf16.mxu0 0
  %1639 = vmatpush1.bf16.xpose.msra.mxu0 0
  %1640 = vmatprep.subr.bf16.mxu0 0
  %1641 = vmatpush1.bf16.xpose.msra.mxu0 0
  %1642 = vmatprep.subr.bf16.mxu0 0
  %1643 = vmatpush1.bf16.xpose.msra.mxu0 0
  %1644 = vmatprep.subr.bf16.mxu0 0
  %1645 = vmatpush1.bf16.xpose.msra.mxu0 0
  %1646 = vmatprep.subr.bf16.mxu0 0
  %1647 = vmatpush1.bf16.xpose.msra.mxu0 0
  %1648 = vmatprep.subr.bf16.mxu0 0
  %1649 = vmatpush1.bf16.xpose.msra.mxu0 %v1522
  %1650 = vmatprep.subr.bf16.mxu0 0
  %1651 = vmatpush2.bf16.xpose.msra.mxu0 0
  %1652 = vmatprep.subr.bf16.mxu0 0
  %1653 = vmatpush2.bf16.xpose.msra.mxu0 0
  %1654 = vmatprep.subr.bf16.mxu0 0
  %1655 = vmatpush2.bf16.xpose.msra.mxu0 0
  %1656 = vmatprep.subr.bf16.mxu0 0
  %1657 = vmatpush2.bf16.xpose.msra.mxu0 0
  %1658 = vmatprep.subr.bf16.mxu0 0
  %1659 = vmatpush2.bf16.xpose.msra.mxu0 0
  %1660 = vmatprep.subr.bf16.mxu0 0
  %1661 = vmatpush2.bf16.xpose.msra.mxu0 0
  %1662 = vmatprep.subr.bf16.mxu0 0
  %1663 = vmatpush2.bf16.xpose.msra.mxu0 0
  %1664 = vmatprep.subr.bf16.mxu0 0
  %1665 = vmatpush2.bf16.xpose.msra.mxu0 0
  %1666 = vmatprep.mubr.bf16.mxu0 0
  %1667 = vmatmul.mubr.bf16.gmra.mxu0 %v1632
  %v1668 = vpop.f32.mrf.mxu0
  %v1669 = vadd.f32 0.0, %v1668
  %v1670 = vpop.f32.mrf.mxu0
  %v1671 = vpop.f32.mrf.mxu0
  %v1672 = vpop.f32.mrf.mxu0
  %1673 = vdwg.mxu0
  %1674 = vmatprep.subr.bf16.mxu0 0
  %1675 = vmatpush1.bf16.xpose.msra.mxu0 0
  %1676 = vmatprep.subr.bf16.mxu0 0
  %1677 = vmatpush1.bf16.xpose.msra.mxu0 0
  %1678 = vmatprep.subr.bf16.mxu0 0
  %1679 = vmatpush1.bf16.xpose.msra.mxu0 0
  %1680 = vmatprep.subr.bf16.mxu0 0
  %1681 = vmatpush1.bf16.xpose.msra.mxu0 0
  %1682 = vmatprep.subr.bf16.mxu0 0
  %1683 = vmatpush1.bf16.xpose.msra.mxu0 0
  %1684 = vmatprep.subr.bf16.mxu0 0
  %1685 = vmatpush1.bf16.xpose.msra.mxu0 0
  %1686 = vmatprep.subr.bf16.mxu0 0
  %1687 = vmatpush1.bf16.xpose.msra.mxu0 0
  %1688 = vmatprep.subr.bf16.mxu0 0
  %1689 = vmatpush1.bf16.xpose.msra.mxu0 %v1523
  %1690 = vmatprep.subr.bf16.mxu0 0
  %1691 = vmatpush2.bf16.xpose.msra.mxu0 0
  %1692 = vmatprep.subr.bf16.mxu0 0
  %1693 = vmatpush2.bf16.xpose.msra.mxu0 0
  %1694 = vmatprep.subr.bf16.mxu0 0
  %1695 = vmatpush2.bf16.xpose.msra.mxu0 0
  %1696 = vmatprep.subr.bf16.mxu0 0
  %1697 = vmatpush2.bf16.xpose.msra.mxu0 0
  %1698 = vmatprep.subr.bf16.mxu0 0
  %1699 = vmatpush2.bf16.xpose.msra.mxu0 0
  %1700 = vmatprep.subr.bf16.mxu0 0
  %1701 = vmatpush2.bf16.xpose.msra.mxu0 0
  %1702 = vmatprep.subr.bf16.mxu0 0
  %1703 = vmatpush2.bf16.xpose.msra.mxu0 0
  %1704 = vmatprep.subr.bf16.mxu0 0
  %1705 = vmatpush2.bf16.xpose.msra.mxu0 0
  %1706 = vmatprep.mubr.bf16.mxu0 0
  %1707 = vmatmul.mubr.bf16.gmra.mxu0 %v1633
  %v1708 = vpop.f32.mrf.mxu0
  %v1709 = vadd.f32 0.0, %v1708
  %v1710 = vpop.f32.mrf.mxu0
  %v1711 = vpop.f32.mrf.mxu0
  %v1712 = vpop.f32.mrf.mxu0
  %1713 = vdwg.mxu0
  %v1714 = vsel %vm424, %v1669, -inf
  %1715 = vmax.xlane.f32.xlu0 %v1714
  %v1716 = vpop.xlane.xlu0 %1715
  %v1717 = vsel %vm424, %v1709, -inf
  %1718 = vmax.xlane.f32.xlu0 %v1717
  %v1719 = vpop.xlane.xlu0 %1718
  %v1720 = vsub.f32 %v1669, %v1716
  %v1721 = vsub.f32 %v1709, %v1719
  %v1722 = vmul.f32 %v1720, 1.442695
  %v1723 = vpow.pop %v1722
  %v1724 = vmul.f32 %v1721, 1.442695
  %v1725 = vpow.pop %v1724
  %v1726 = vsel %vm424, %v1723, 0.0
  %1727 = vadd.xlane.f32.xlu0 %v1726
  %v1728 = vpop.xlane.xlu0 %1727
  %v1729 = vsel %vm424, %v1725, 0.0
  %1730 = vadd.xlane.f32.xlu0 %v1729
  %v1731 = vpop.xlane.xlu0 %1730
  %v1732 = vrcp.pop %v1728
  %v1733 = vrcp.pop %v1731
  %v1734 = vmul.f32 %v1723, %v1732
  %v1735 = vmul.f32 %v1725, %v1733
  %v1736 = vpack.c.bf16 %v1734, %v1734
  %v1737 = vpack.c.bf16 %v1735, %v1735
  %v1738 = vmul.bf16 %v1522, %v64
  %v1739 = vmul.bf16 %v1523, %v64
  %v1741 = vsel %vm424, %v1736, 0
  %v1744 = vsel %vm562, %v1738, 0
  %1746 = vmatprep.subr.bf16.mxu0 0
  %1747 = vmatpush1.bf16.msra.mxu0 0
  %1748 = vmatprep.subr.bf16.mxu0 0
  %1749 = vmatpush1.bf16.msra.mxu0 0
  %1750 = vmatprep.subr.bf16.mxu0 0
  %1751 = vmatpush1.bf16.msra.mxu0 0
  %1752 = vmatprep.subr.bf16.mxu0 0
  %1753 = vmatpush1.bf16.msra.mxu0 0
  %1754 = vmatprep.subr.bf16.mxu0 0
  %1755 = vmatpush1.bf16.msra.mxu0 0
  %1756 = vmatprep.subr.bf16.mxu0 0
  %1757 = vmatpush1.bf16.msra.mxu0 0
  %1758 = vmatprep.subr.bf16.mxu0 0
  %1759 = vmatpush1.bf16.msra.mxu0 0
  %1760 = vmatprep.subr.bf16.mxu0 0
  %1761 = vmatpush1.bf16.msra.mxu0 %v1744
  %1762 = vmatprep.subr.bf16.mxu0 0
  %1763 = vmatpush2.bf16.msra.mxu0 0
  %1764 = vmatprep.subr.bf16.mxu0 0
  %1765 = vmatpush2.bf16.msra.mxu0 0
  %1766 = vmatprep.subr.bf16.mxu0 0
  %1767 = vmatpush2.bf16.msra.mxu0 0
  %1768 = vmatprep.subr.bf16.mxu0 0
  %1769 = vmatpush2.bf16.msra.mxu0 0
  %1770 = vmatprep.subr.bf16.mxu0 0
  %1771 = vmatpush2.bf16.msra.mxu0 0
  %1772 = vmatprep.subr.bf16.mxu0 0
  %1773 = vmatpush2.bf16.msra.mxu0 0
  %1774 = vmatprep.subr.bf16.mxu0 0
  %1775 = vmatpush2.bf16.msra.mxu0 0
  %1776 = vmatprep.subr.bf16.mxu0 0
  %1777 = vmatpush2.bf16.msra.mxu0 0
  %1778 = vmatprep.mubr.bf16.mxu0 0
  %1779 = vmatmul.mubr.bf16.gmra.mxu0 %v1741
  %v1780 = vpop.f32.mrf.mxu0
  %v1781 = vadd.f32 0.0, %v1780
  %v1782 = vpop.f32.mrf.mxu0
  %v1783 = vpop.f32.mrf.mxu0
  %v1784 = vpop.f32.mrf.mxu0
  %1785 = vdwg.mxu0
  %v1787 = vsel %vm424, %v1737, 0
  %v1790 = vsel %vm562, %v1739, 0
  %1792 = vmatprep.subr.bf16.mxu0 0
  %1793 = vmatpush1.bf16.msra.mxu0 0
  %1794 = vmatprep.subr.bf16.mxu0 0
  %1795 = vmatpush1.bf16.msra.mxu0 0
  %1796 = vmatprep.subr.bf16.mxu0 0
  %1797 = vmatpush1.bf16.msra.mxu0 0
  %1798 = vmatprep.subr.bf16.mxu0 0
  %1799 = vmatpush1.bf16.msra.mxu0 0
  %1800 = vmatprep.subr.bf16.mxu0 0
  %1801 = vmatpush1.bf16.msra.mxu0 0
  %1802 = vmatprep.subr.bf16.mxu0 0
  %1803 = vmatpush1.bf16.msra.mxu0 0
  %1804 = vmatprep.subr.bf16.mxu0 0
  %1805 = vmatpush1.bf16.msra.mxu0 0
  %1806 = vmatprep.subr.bf16.mxu0 0
  %1807 = vmatpush1.bf16.msra.mxu0 %v1790
  %1808 = vmatprep.subr.bf16.mxu0 0
  %1809 = vmatpush2.bf16.msra.mxu0 0
  %1810 = vmatprep.subr.bf16.mxu0 0
  %1811 = vmatpush2.bf16.msra.mxu0 0
  %1812 = vmatprep.subr.bf16.mxu0 0
  %1813 = vmatpush2.bf16.msra.mxu0 0
  %1814 = vmatprep.subr.bf16.mxu0 0
  %1815 = vmatpush2.bf16.msra.mxu0 0
  %1816 = vmatprep.subr.bf16.mxu0 0
  %1817 = vmatpush2.bf16.msra.mxu0 0
  %1818 = vmatprep.subr.bf16.mxu0 0
  %1819 = vmatpush2.bf16.msra.mxu0 0
  %1820 = vmatprep.subr.bf16.mxu0 0
  %1821 = vmatpush2.bf16.msra.mxu0 0
  %1822 = vmatprep.subr.bf16.mxu0 0
  %1823 = vmatpush2.bf16.msra.mxu0 0
  %1824 = vmatprep.mubr.bf16.mxu0 0
  %1825 = vmatmul.mubr.bf16.gmra.mxu0 %v1787
  %v1826 = vpop.f32.mrf.mxu0
  %v1827 = vadd.f32 0.0, %v1826
  %v1828 = vpop.f32.mrf.mxu0
  %v1829 = vpop.f32.mrf.mxu0
  %v1830 = vpop.f32.mrf.mxu0
  %1831 = vdwg.mxu0
  %v1833 = vsel %vm424, %v1628, 0
  %v1836 = vsel %vm562, %v1630, 0
  %1838 = vmatprep.subr.bf16.mxu0 0
  %1839 = vmatpush1.bf16.msra.mxu0 0
  %1840 = vmatprep.subr.bf16.mxu0 0
  %1841 = vmatpush1.bf16.msra.mxu0 0
  %1842 = vmatprep.subr.bf16.mxu0 0
  %1843 = vmatpush1.bf16.msra.mxu0 0
  %1844 = vmatprep.subr.bf16.mxu0 0
  %1845 = vmatpush1.bf16.msra.mxu0 0
  %1846 = vmatprep.subr.bf16.mxu0 0
  %1847 = vmatpush1.bf16.msra.mxu0 0
  %1848 = vmatprep.subr.bf16.mxu0 0
  %1849 = vmatpush1.bf16.msra.mxu0 0
  %1850 = vmatprep.subr.bf16.mxu0 0
  %1851 = vmatpush1.bf16.msra.mxu0 0
  %1852 = vmatprep.subr.bf16.mxu0 0
  %1853 = vmatpush1.bf16.msra.mxu0 %v1836
  %1854 = vmatprep.subr.bf16.mxu0 0
  %1855 = vmatpush2.bf16.msra.mxu0 0
  %1856 = vmatprep.subr.bf16.mxu0 0
  %1857 = vmatpush2.bf16.msra.mxu0 0
  %1858 = vmatprep.subr.bf16.mxu0 0
  %1859 = vmatpush2.bf16.msra.mxu0 0
  %1860 = vmatprep.subr.bf16.mxu0 0
  %1861 = vmatpush2.bf16.msra.mxu0 0
  %1862 = vmatprep.subr.bf16.mxu0 0
  %1863 = vmatpush2.bf16.msra.mxu0 0
  %1864 = vmatprep.subr.bf16.mxu0 0
  %1865 = vmatpush2.bf16.msra.mxu0 0
  %1866 = vmatprep.subr.bf16.mxu0 0
  %1867 = vmatpush2.bf16.msra.mxu0 0
  %1868 = vmatprep.subr.bf16.mxu0 0
  %1869 = vmatpush2.bf16.msra.mxu0 0
  %1870 = vmatprep.mubr.bf16.mxu0 0
  %1871 = vmatmul.mubr.bf16.gmra.mxu0 %v1833
  %v1872 = vpop.f32.mrf.mxu0
  %v1873 = vadd.f32 %v1781, %v1872
  %v1874 = vpop.f32.mrf.mxu0
  %v1875 = vpop.f32.mrf.mxu0
  %v1876 = vpop.f32.mrf.mxu0
  %1877 = vdwg.mxu0
  %v1879 = vsel %vm424, %v1629, 0
  %v1882 = vsel %vm562, %v1631, 0
  %1884 = vmatprep.subr.bf16.mxu0 0
  %1885 = vmatpush1.bf16.msra.mxu0 0
  %1886 = vmatprep.subr.bf16.mxu0 0
  %1887 = vmatpush1.bf16.msra.mxu0 0
  %1888 = vmatprep.subr.bf16.mxu0 0
  %1889 = vmatpush1.bf16.msra.mxu0 0
  %1890 = vmatprep.subr.bf16.mxu0 0
  %1891 = vmatpush1.bf16.msra.mxu0 0
  %1892 = vmatprep.subr.bf16.mxu0 0
  %1893 = vmatpush1.bf16.msra.mxu0 0
  %1894 = vmatprep.subr.bf16.mxu0 0
  %1895 = vmatpush1.bf16.msra.mxu0 0
  %1896 = vmatprep.subr.bf16.mxu0 0
  %1897 = vmatpush1.bf16.msra.mxu0 0
  %1898 = vmatprep.subr.bf16.mxu0 0
  %1899 = vmatpush1.bf16.msra.mxu0 %v1882
  %1900 = vmatprep.subr.bf16.mxu0 0
  %1901 = vmatpush2.bf16.msra.mxu0 0
  %1902 = vmatprep.subr.bf16.mxu0 0
  %1903 = vmatpush2.bf16.msra.mxu0 0
  %1904 = vmatprep.subr.bf16.mxu0 0
  %1905 = vmatpush2.bf16.msra.mxu0 0
  %1906 = vmatprep.subr.bf16.mxu0 0
  %1907 = vmatpush2.bf16.msra.mxu0 0
  %1908 = vmatprep.subr.bf16.mxu0 0
  %1909 = vmatpush2.bf16.msra.mxu0 0
  %1910 = vmatprep.subr.bf16.mxu0 0
  %1911 = vmatpush2.bf16.msra.mxu0 0
  %1912 = vmatprep.subr.bf16.mxu0 0
  %1913 = vmatpush2.bf16.msra.mxu0 0
  %1914 = vmatprep.subr.bf16.mxu0 0
  %1915 = vmatpush2.bf16.msra.mxu0 0
  %1916 = vmatprep.mubr.bf16.mxu0 0
  %1917 = vmatmul.mubr.bf16.gmra.mxu0 %v1879
  %v1918 = vpop.f32.mrf.mxu0
  %v1919 = vadd.f32 %v1827, %v1918
  %v1920 = vpop.f32.mrf.mxu0
  %v1921 = vpop.f32.mrf.mxu0
  %v1922 = vpop.f32.mrf.mxu0
  %1923 = vdwg.mxu0
  %v1924 = vmul.bf16 %v1410, %v47
  %v1925 = vmul.bf16 %v1411, %v47
  %1926 = vmatprep.subr.bf16.mxu0 0
  %1927 = vmatpush1.bf16.xpose.msra.mxu0 0
  %1928 = vmatprep.subr.bf16.mxu0 0
  %1929 = vmatpush1.bf16.xpose.msra.mxu0 0
  %1930 = vmatprep.subr.bf16.mxu0 0
  %1931 = vmatpush1.bf16.xpose.msra.mxu0 0
  %1932 = vmatprep.subr.bf16.mxu0 0
  %1933 = vmatpush1.bf16.xpose.msra.mxu0 0
  %1934 = vmatprep.subr.bf16.mxu0 0
  %1935 = vmatpush1.bf16.xpose.msra.mxu0 0
  %1936 = vmatprep.subr.bf16.mxu0 0
  %1937 = vmatpush1.bf16.xpose.msra.mxu0 0
  %1938 = vmatprep.subr.bf16.mxu0 0
  %1939 = vmatpush1.bf16.xpose.msra.mxu0 0
  %1940 = vmatprep.subr.bf16.mxu0 0
  %1941 = vmatpush1.bf16.xpose.msra.mxu0 %v1522
  %1942 = vmatprep.subr.bf16.mxu0 0
  %1943 = vmatpush2.bf16.xpose.msra.mxu0 0
  %1944 = vmatprep.subr.bf16.mxu0 0
  %1945 = vmatpush2.bf16.xpose.msra.mxu0 0
  %1946 = vmatprep.subr.bf16.mxu0 0
  %1947 = vmatpush2.bf16.xpose.msra.mxu0 0
  %1948 = vmatprep.subr.bf16.mxu0 0
  %1949 = vmatpush2.bf16.xpose.msra.mxu0 0
  %1950 = vmatprep.subr.bf16.mxu0 0
  %1951 = vmatpush2.bf16.xpose.msra.mxu0 0
  %1952 = vmatprep.subr.bf16.mxu0 0
  %1953 = vmatpush2.bf16.xpose.msra.mxu0 0
  %1954 = vmatprep.subr.bf16.mxu0 0
  %1955 = vmatpush2.bf16.xpose.msra.mxu0 0
  %1956 = vmatprep.subr.bf16.mxu0 0
  %1957 = vmatpush2.bf16.xpose.msra.mxu0 0
  %1958 = vmatprep.mubr.bf16.mxu0 0
  %1959 = vmatmul.mubr.bf16.gmra.mxu0 %v1924
  %v1960 = vpop.f32.mrf.mxu0
  %v1961 = vadd.f32 0.0, %v1960
  %v1962 = vpop.f32.mrf.mxu0
  %v1963 = vpop.f32.mrf.mxu0
  %v1964 = vpop.f32.mrf.mxu0
  %1965 = vdwg.mxu0
  %1966 = vmatprep.subr.bf16.mxu0 0
  %1967 = vmatpush1.bf16.xpose.msra.mxu0 0
  %1968 = vmatprep.subr.bf16.mxu0 0
  %1969 = vmatpush1.bf16.xpose.msra.mxu0 0
  %1970 = vmatprep.subr.bf16.mxu0 0
  %1971 = vmatpush1.bf16.xpose.msra.mxu0 0
  %1972 = vmatprep.subr.bf16.mxu0 0
  %1973 = vmatpush1.bf16.xpose.msra.mxu0 0
  %1974 = vmatprep.subr.bf16.mxu0 0
  %1975 = vmatpush1.bf16.xpose.msra.mxu0 0
  %1976 = vmatprep.subr.bf16.mxu0 0
  %1977 = vmatpush1.bf16.xpose.msra.mxu0 0
  %1978 = vmatprep.subr.bf16.mxu0 0
  %1979 = vmatpush1.bf16.xpose.msra.mxu0 0
  %1980 = vmatprep.subr.bf16.mxu0 0
  %1981 = vmatpush1.bf16.xpose.msra.mxu0 %v1523
  %1982 = vmatprep.subr.bf16.mxu0 0
  %1983 = vmatpush2.bf16.xpose.msra.mxu0 0
  %1984 = vmatprep.subr.bf16.mxu0 0
  %1985 = vmatpush2.bf16.xpose.msra.mxu0 0
  %1986 = vmatprep.subr.bf16.mxu0 0
  %1987 = vmatpush2.bf16.xpose.msra.mxu0 0
  %1988 = vmatprep.subr.bf16.mxu0 0
  %1989 = vmatpush2.bf16.xpose.msra.mxu0 0
  %1990 = vmatprep.subr.bf16.mxu0 0
  %1991 = vmatpush2.bf16.xpose.msra.mxu0 0
  %1992 = vmatprep.subr.bf16.mxu0 0
  %1993 = vmatpush2.bf16.xpose.msra.mxu0 0
  %1994 = vmatprep.subr.bf16.mxu0 0
  %1995 = vmatpush2.bf16.xpose.msra.mxu0 0
  %1996 = vmatprep.subr.bf16.mxu0 0
  %1997 = vmatpush2.bf16.xpose.msra.mxu0 0
  %1998 = vmatprep.mubr.bf16.mxu0 0
  %1999 = vmatmul.mubr.bf16.gmra.mxu0 %v1925
  %v2000 = vpop.f32.mrf.mxu0
  %v2001 = vadd.f32 0.0, %v2000
  %v2002 = vpop.f32.mrf.mxu0
  %v2003 = vpop.f32.mrf.mxu0
  %v2004 = vpop.f32.mrf.mxu0
  %2005 = vdwg.mxu0
  %v2006 = vsel %vm424, %v1961, -inf
  %2007 = vmax.xlane.f32.xlu0 %v2006
  %v2008 = vpop.xlane.xlu0 %2007
  %v2009 = vsel %vm424, %v2001, -inf
  %2010 = vmax.xlane.f32.xlu0 %v2009
  %v2011 = vpop.xlane.xlu0 %2010
  %v2012 = vsub.f32 %v1961, %v2008
  %v2013 = vsub.f32 %v2001, %v2011
  %v2014 = vmul.f32 %v2012, 1.442695
  %v2015 = vpow.pop %v2014
  %v2016 = vmul.f32 %v2013, 1.442695
  %v2017 = vpow.pop %v2016
  %v2018 = vsel %vm424, %v2015, 0.0
  %2019 = vadd.xlane.f32.xlu0 %v2018
  %v2020 = vpop.xlane.xlu0 %2019
  %v2021 = vsel %vm424, %v2017, 0.0
  %2022 = vadd.xlane.f32.xlu0 %v2021
  %v2023 = vpop.xlane.xlu0 %2022
  %v2024 = vrcp.pop %v2020
  %v2025 = vrcp.pop %v2023
  %v2026 = vmul.f32 %v2015, %v2024
  %v2027 = vmul.f32 %v2017, %v2025
  %v2028 = vpack.c.bf16 %v2026, %v2026
  %v2029 = vpack.c.bf16 %v2027, %v2027
  %v2030 = vmul.bf16 %v1522, %v70
  %v2031 = vmul.bf16 %v1523, %v70
  %v2033 = vsel %vm424, %v2028, 0
  %v2036 = vsel %vm562, %v2030, 0
  %2038 = vmatprep.subr.bf16.mxu0 0
  %2039 = vmatpush1.bf16.msra.mxu0 0
  %2040 = vmatprep.subr.bf16.mxu0 0
  %2041 = vmatpush1.bf16.msra.mxu0 0
  %2042 = vmatprep.subr.bf16.mxu0 0
  %2043 = vmatpush1.bf16.msra.mxu0 0
  %2044 = vmatprep.subr.bf16.mxu0 0
  %2045 = vmatpush1.bf16.msra.mxu0 0
  %2046 = vmatprep.subr.bf16.mxu0 0
  %2047 = vmatpush1.bf16.msra.mxu0 0
  %2048 = vmatprep.subr.bf16.mxu0 0
  %2049 = vmatpush1.bf16.msra.mxu0 0
  %2050 = vmatprep.subr.bf16.mxu0 0
  %2051 = vmatpush1.bf16.msra.mxu0 0
  %2052 = vmatprep.subr.bf16.mxu0 0
  %2053 = vmatpush1.bf16.msra.mxu0 %v2036
  %2054 = vmatprep.subr.bf16.mxu0 0
  %2055 = vmatpush2.bf16.msra.mxu0 0
  %2056 = vmatprep.subr.bf16.mxu0 0
  %2057 = vmatpush2.bf16.msra.mxu0 0
  %2058 = vmatprep.subr.bf16.mxu0 0
  %2059 = vmatpush2.bf16.msra.mxu0 0
  %2060 = vmatprep.subr.bf16.mxu0 0
  %2061 = vmatpush2.bf16.msra.mxu0 0
  %2062 = vmatprep.subr.bf16.mxu0 0
  %2063 = vmatpush2.bf16.msra.mxu0 0
  %2064 = vmatprep.subr.bf16.mxu0 0
  %2065 = vmatpush2.bf16.msra.mxu0 0
  %2066 = vmatprep.subr.bf16.mxu0 0
  %2067 = vmatpush2.bf16.msra.mxu0 0
  %2068 = vmatprep.subr.bf16.mxu0 0
  %2069 = vmatpush2.bf16.msra.mxu0 0
  %2070 = vmatprep.mubr.bf16.mxu0 0
  %2071 = vmatmul.mubr.bf16.gmra.mxu0 %v2033
  %v2072 = vpop.f32.mrf.mxu0
  %v2073 = vadd.f32 0.0, %v2072
  %v2074 = vpop.f32.mrf.mxu0
  %v2075 = vpop.f32.mrf.mxu0
  %v2076 = vpop.f32.mrf.mxu0
  %2077 = vdwg.mxu0
  %v2079 = vsel %vm424, %v2029, 0
  %v2082 = vsel %vm562, %v2031, 0
  %2084 = vmatprep.subr.bf16.mxu0 0
  %2085 = vmatpush1.bf16.msra.mxu0 0
  %2086 = vmatprep.subr.bf16.mxu0 0
  %2087 = vmatpush1.bf16.msra.mxu0 0
  %2088 = vmatprep.subr.bf16.mxu0 0
  %2089 = vmatpush1.bf16.msra.mxu0 0
  %2090 = vmatprep.subr.bf16.mxu0 0
  %2091 = vmatpush1.bf16.msra.mxu0 0
  %2092 = vmatprep.subr.bf16.mxu0 0
  %2093 = vmatpush1.bf16.msra.mxu0 0
  %2094 = vmatprep.subr.bf16.mxu0 0
  %2095 = vmatpush1.bf16.msra.mxu0 0
  %2096 = vmatprep.subr.bf16.mxu0 0
  %2097 = vmatpush1.bf16.msra.mxu0 0
  %2098 = vmatprep.subr.bf16.mxu0 0
  %2099 = vmatpush1.bf16.msra.mxu0 %v2082
  %2100 = vmatprep.subr.bf16.mxu0 0
  %2101 = vmatpush2.bf16.msra.mxu0 0
  %2102 = vmatprep.subr.bf16.mxu0 0
  %2103 = vmatpush2.bf16.msra.mxu0 0
  %2104 = vmatprep.subr.bf16.mxu0 0
  %2105 = vmatpush2.bf16.msra.mxu0 0
  %2106 = vmatprep.subr.bf16.mxu0 0
  %2107 = vmatpush2.bf16.msra.mxu0 0
  %2108 = vmatprep.subr.bf16.mxu0 0
  %2109 = vmatpush2.bf16.msra.mxu0 0
  %2110 = vmatprep.subr.bf16.mxu0 0
  %2111 = vmatpush2.bf16.msra.mxu0 0
  %2112 = vmatprep.subr.bf16.mxu0 0
  %2113 = vmatpush2.bf16.msra.mxu0 0
  %2114 = vmatprep.subr.bf16.mxu0 0
  %2115 = vmatpush2.bf16.msra.mxu0 0
  %2116 = vmatprep.mubr.bf16.mxu0 0
  %2117 = vmatmul.mubr.bf16.gmra.mxu0 %v2079
  %v2118 = vpop.f32.mrf.mxu0
  %v2119 = vadd.f32 0.0, %v2118
  %v2120 = vpop.f32.mrf.mxu0
  %v2121 = vpop.f32.mrf.mxu0
  %v2122 = vpop.f32.mrf.mxu0
  %2123 = vdwg.mxu0
  %v2124 = vadd.f32 %v1873, %v2073
  %v2125 = vadd.f32 %v1919, %v2119
  %v2126 = vmul.bf16 %v1410, %v52
  %v2127 = vmul.bf16 %v1411, %v52
  %2128 = vmatprep.subr.bf16.mxu0 0
  %2129 = vmatpush1.bf16.xpose.msra.mxu0 0
  %2130 = vmatprep.subr.bf16.mxu0 0
  %2131 = vmatpush1.bf16.xpose.msra.mxu0 0
  %2132 = vmatprep.subr.bf16.mxu0 0
  %2133 = vmatpush1.bf16.xpose.msra.mxu0 0
  %2134 = vmatprep.subr.bf16.mxu0 0
  %2135 = vmatpush1.bf16.xpose.msra.mxu0 0
  %2136 = vmatprep.subr.bf16.mxu0 0
  %2137 = vmatpush1.bf16.xpose.msra.mxu0 0
  %2138 = vmatprep.subr.bf16.mxu0 0
  %2139 = vmatpush1.bf16.xpose.msra.mxu0 0
  %2140 = vmatprep.subr.bf16.mxu0 0
  %2141 = vmatpush1.bf16.xpose.msra.mxu0 0
  %2142 = vmatprep.subr.bf16.mxu0 0
  %2143 = vmatpush1.bf16.xpose.msra.mxu0 %v1522
  %2144 = vmatprep.subr.bf16.mxu0 0
  %2145 = vmatpush2.bf16.xpose.msra.mxu0 0
  %2146 = vmatprep.subr.bf16.mxu0 0
  %2147 = vmatpush2.bf16.xpose.msra.mxu0 0
  %2148 = vmatprep.subr.bf16.mxu0 0
  %2149 = vmatpush2.bf16.xpose.msra.mxu0 0
  %2150 = vmatprep.subr.bf16.mxu0 0
  %2151 = vmatpush2.bf16.xpose.msra.mxu0 0
  %2152 = vmatprep.subr.bf16.mxu0 0
  %2153 = vmatpush2.bf16.xpose.msra.mxu0 0
  %2154 = vmatprep.subr.bf16.mxu0 0
  %2155 = vmatpush2.bf16.xpose.msra.mxu0 0
  %2156 = vmatprep.subr.bf16.mxu0 0
  %2157 = vmatpush2.bf16.xpose.msra.mxu0 0
  %2158 = vmatprep.subr.bf16.mxu0 0
  %2159 = vmatpush2.bf16.xpose.msra.mxu0 0
  %2160 = vmatprep.mubr.bf16.mxu0 0
  %2161 = vmatmul.mubr.bf16.gmra.mxu0 %v2126
  %v2162 = vpop.f32.mrf.mxu0
  %v2163 = vadd.f32 0.0, %v2162
  %v2164 = vpop.f32.mrf.mxu0
  %v2165 = vpop.f32.mrf.mxu0
  %v2166 = vpop.f32.mrf.mxu0
  %2167 = vdwg.mxu0
  %2168 = vmatprep.subr.bf16.mxu0 0
  %2169 = vmatpush1.bf16.xpose.msra.mxu0 0
  %2170 = vmatprep.subr.bf16.mxu0 0
  %2171 = vmatpush1.bf16.xpose.msra.mxu0 0
  %2172 = vmatprep.subr.bf16.mxu0 0
  %2173 = vmatpush1.bf16.xpose.msra.mxu0 0
  %2174 = vmatprep.subr.bf16.mxu0 0
  %2175 = vmatpush1.bf16.xpose.msra.mxu0 0
  %2176 = vmatprep.subr.bf16.mxu0 0
  %2177 = vmatpush1.bf16.xpose.msra.mxu0 0
  %2178 = vmatprep.subr.bf16.mxu0 0
  %2179 = vmatpush1.bf16.xpose.msra.mxu0 0
  %2180 = vmatprep.subr.bf16.mxu0 0
  %2181 = vmatpush1.bf16.xpose.msra.mxu0 0
  %2182 = vmatprep.subr.bf16.mxu0 0
  %2183 = vmatpush1.bf16.xpose.msra.mxu0 %v1523
  %2184 = vmatprep.subr.bf16.mxu0 0
  %2185 = vmatpush2.bf16.xpose.msra.mxu0 0
  %2186 = vmatprep.subr.bf16.mxu0 0
  %2187 = vmatpush2.bf16.xpose.msra.mxu0 0
  %2188 = vmatprep.subr.bf16.mxu0 0
  %2189 = vmatpush2.bf16.xpose.msra.mxu0 0
  %2190 = vmatprep.subr.bf16.mxu0 0
  %2191 = vmatpush2.bf16.xpose.msra.mxu0 0
  %2192 = vmatprep.subr.bf16.mxu0 0
  %2193 = vmatpush2.bf16.xpose.msra.mxu0 0
  %2194 = vmatprep.subr.bf16.mxu0 0
  %2195 = vmatpush2.bf16.xpose.msra.mxu0 0
  %2196 = vmatprep.subr.bf16.mxu0 0
  %2197 = vmatpush2.bf16.xpose.msra.mxu0 0
  %2198 = vmatprep.subr.bf16.mxu0 0
  %2199 = vmatpush2.bf16.xpose.msra.mxu0 0
  %2200 = vmatprep.mubr.bf16.mxu0 0
  %2201 = vmatmul.mubr.bf16.gmra.mxu0 %v2127
  %v2202 = vpop.f32.mrf.mxu0
  %v2203 = vadd.f32 0.0, %v2202
  %v2204 = vpop.f32.mrf.mxu0
  %v2205 = vpop.f32.mrf.mxu0
  %v2206 = vpop.f32.mrf.mxu0
  %2207 = vdwg.mxu0
  %v2208 = vsel %vm424, %v2163, -inf
  %2209 = vmax.xlane.f32.xlu0 %v2208
  %v2210 = vpop.xlane.xlu0 %2209
  %v2211 = vsel %vm424, %v2203, -inf
  %2212 = vmax.xlane.f32.xlu0 %v2211
  %v2213 = vpop.xlane.xlu0 %2212
  %v2214 = vsub.f32 %v2163, %v2210
  %v2215 = vsub.f32 %v2203, %v2213
  %v2216 = vmul.f32 %v2214, 1.442695
  %v2217 = vpow.pop %v2216
  %v2218 = vmul.f32 %v2215, 1.442695
  %v2219 = vpow.pop %v2218
  %v2220 = vsel %vm424, %v2217, 0.0
  %2221 = vadd.xlane.f32.xlu0 %v2220
  %v2222 = vpop.xlane.xlu0 %2221
  %v2223 = vsel %vm424, %v2219, 0.0
  %2224 = vadd.xlane.f32.xlu0 %v2223
  %v2225 = vpop.xlane.xlu0 %2224
  %v2226 = vrcp.pop %v2222
  %v2227 = vrcp.pop %v2225
  %v2228 = vmul.f32 %v2217, %v2226
  %v2229 = vmul.f32 %v2219, %v2227
  %v2230 = vpack.c.bf16 %v2228, %v2228
  %v2231 = vpack.c.bf16 %v2229, %v2229
  %v2232 = vmul.bf16 %v1522, %v76
  %v2233 = vmul.bf16 %v1523, %v76
  %v2235 = vsel %vm424, %v2230, 0
  %v2238 = vsel %vm562, %v2232, 0
  %2240 = vmatprep.subr.bf16.mxu0 0
  %2241 = vmatpush1.bf16.msra.mxu0 0
  %2242 = vmatprep.subr.bf16.mxu0 0
  %2243 = vmatpush1.bf16.msra.mxu0 0
  %2244 = vmatprep.subr.bf16.mxu0 0
  %2245 = vmatpush1.bf16.msra.mxu0 0
  %2246 = vmatprep.subr.bf16.mxu0 0
  %2247 = vmatpush1.bf16.msra.mxu0 0
  %2248 = vmatprep.subr.bf16.mxu0 0
  %2249 = vmatpush1.bf16.msra.mxu0 0
  %2250 = vmatprep.subr.bf16.mxu0 0
  %2251 = vmatpush1.bf16.msra.mxu0 0
  %2252 = vmatprep.subr.bf16.mxu0 0
  %2253 = vmatpush1.bf16.msra.mxu0 0
  %2254 = vmatprep.subr.bf16.mxu0 0
  %2255 = vmatpush1.bf16.msra.mxu0 %v2238
  %2256 = vmatprep.subr.bf16.mxu0 0
  %2257 = vmatpush2.bf16.msra.mxu0 0
  %2258 = vmatprep.subr.bf16.mxu0 0
  %2259 = vmatpush2.bf16.msra.mxu0 0
  %2260 = vmatprep.subr.bf16.mxu0 0
  %2261 = vmatpush2.bf16.msra.mxu0 0
  %2262 = vmatprep.subr.bf16.mxu0 0
  %2263 = vmatpush2.bf16.msra.mxu0 0
  %2264 = vmatprep.subr.bf16.mxu0 0
  %2265 = vmatpush2.bf16.msra.mxu0 0
  %2266 = vmatprep.subr.bf16.mxu0 0
  %2267 = vmatpush2.bf16.msra.mxu0 0
  %2268 = vmatprep.subr.bf16.mxu0 0
  %2269 = vmatpush2.bf16.msra.mxu0 0
  %2270 = vmatprep.subr.bf16.mxu0 0
  %2271 = vmatpush2.bf16.msra.mxu0 0
  %2272 = vmatprep.mubr.bf16.mxu0 0
  %2273 = vmatmul.mubr.bf16.gmra.mxu0 %v2235
  %v2274 = vpop.f32.mrf.mxu0
  %v2275 = vadd.f32 0.0, %v2274
  %v2276 = vpop.f32.mrf.mxu0
  %v2277 = vpop.f32.mrf.mxu0
  %v2278 = vpop.f32.mrf.mxu0
  %2279 = vdwg.mxu0
  %v2281 = vsel %vm424, %v2231, 0
  %v2284 = vsel %vm562, %v2233, 0
  %2286 = vmatprep.subr.bf16.mxu0 0
  %2287 = vmatpush1.bf16.msra.mxu0 0
  %2288 = vmatprep.subr.bf16.mxu0 0
  %2289 = vmatpush1.bf16.msra.mxu0 0
  %2290 = vmatprep.subr.bf16.mxu0 0
  %2291 = vmatpush1.bf16.msra.mxu0 0
  %2292 = vmatprep.subr.bf16.mxu0 0
  %2293 = vmatpush1.bf16.msra.mxu0 0
  %2294 = vmatprep.subr.bf16.mxu0 0
  %2295 = vmatpush1.bf16.msra.mxu0 0
  %2296 = vmatprep.subr.bf16.mxu0 0
  %2297 = vmatpush1.bf16.msra.mxu0 0
  %2298 = vmatprep.subr.bf16.mxu0 0
  %2299 = vmatpush1.bf16.msra.mxu0 0
  %2300 = vmatprep.subr.bf16.mxu0 0
  %2301 = vmatpush1.bf16.msra.mxu0 %v2284
  %2302 = vmatprep.subr.bf16.mxu0 0
  %2303 = vmatpush2.bf16.msra.mxu0 0
  %2304 = vmatprep.subr.bf16.mxu0 0
  %2305 = vmatpush2.bf16.msra.mxu0 0
  %2306 = vmatprep.subr.bf16.mxu0 0
  %2307 = vmatpush2.bf16.msra.mxu0 0
  %2308 = vmatprep.subr.bf16.mxu0 0
  %2309 = vmatpush2.bf16.msra.mxu0 0
  %2310 = vmatprep.subr.bf16.mxu0 0
  %2311 = vmatpush2.bf16.msra.mxu0 0
  %2312 = vmatprep.subr.bf16.mxu0 0
  %2313 = vmatpush2.bf16.msra.mxu0 0
  %2314 = vmatprep.subr.bf16.mxu0 0
  %2315 = vmatpush2.bf16.msra.mxu0 0
  %2316 = vmatprep.subr.bf16.mxu0 0
  %2317 = vmatpush2.bf16.msra.mxu0 0
  %2318 = vmatprep.mubr.bf16.mxu0 0
  %2319 = vmatmul.mubr.bf16.gmra.mxu0 %v2281
  %v2320 = vpop.f32.mrf.mxu0
  %v2321 = vadd.f32 0.0, %v2320
  %v2322 = vpop.f32.mrf.mxu0
  %v2323 = vpop.f32.mrf.mxu0
  %v2324 = vpop.f32.mrf.mxu0
  %2325 = vdwg.mxu0
  %v2326 = vadd.f32 %v2124, %v2275
  %v2327 = vadd.f32 %v2125, %v2321
  %v2328 = vpack.c.bf16 %v2327, %v2326
  %s2329 = scalar_lea.vmem %s2, 320
  %v2330 = vld [vmem:[%s2329] sm:$0xf]
  %v2331 = vld [vmem:[%s2329 + $0x4] sm:$0xf]
  %v2332 = vld [vmem:[%s2329 + $0x8] sm:$0xf]
  %v2333 = vld [vmem:[%s2329 + $0xc] sm:$0xf]
  %v2334 = vld [vmem:[%s2329 + $0x10] sm:$0xf]
  %v2335 = vld [vmem:[%s2329 + $0x14] sm:$0xf]
  %v2336 = vld [vmem:[%s2329 + $0x18] sm:$0xf]
  %v2337 = vld [vmem:[%s2329 + $0x1c] sm:$0xf]
  %v2338 = vld [vmem:[%s2329 + $0x20] sm:$0xf]
  %v2339 = vld [vmem:[%s2329 + $0x24] sm:$0xf]
  %v2340 = vld [vmem:[%s2329 + $0x28] sm:$0xf]
  %v2341 = vld [vmem:[%s2329 + $0x2c] sm:$0xf]
  %v2342 = vld [vmem:[%s2329 + $0x30] sm:$0xf]
  %v2343 = vld [vmem:[%s2329 + $0x34] sm:$0xf]
  %v2344 = vld [vmem:[%s2329 + $0x38] sm:$0xf]
  %v2345 = vld [vmem:[%s2329 + $0x3c] sm:$0xf]
  %v2346 = vlaneseq
  %v2347 = vshrl.u32 %v2346, 7
  %v2348 = vsub.s32 5, %v2347
  %v2349 = vrot.slane %v18, %v2348
  %v2366 = vunpack.c.l.b16 %v2330
  %v2367 = vunpack.c.l.b16 %v2331
  %v2368 = vunpack.c.l.b16 %v2332
  %v2369 = vunpack.c.l.b16 %v2333
  %v2370 = vunpack.c.l.b16 %v2334
  %v2371 = vunpack.c.l.b16 %v2335
  %v2372 = vunpack.c.l.b16 %v2336
  %v2373 = vunpack.c.l.b16 %v2337
  %v2374 = vunpack.c.l.b16 %v2338
  %v2375 = vunpack.c.l.b16 %v2339
  %v2376 = vunpack.c.l.b16 %v2340
  %v2377 = vunpack.c.l.b16 %v2341
  %v2378 = vunpack.c.l.b16 %v2342
  %v2379 = vunpack.c.l.b16 %v2343
  %v2380 = vunpack.c.l.b16 %v2344
  %v2381 = vunpack.c.l.b16 %v2345
  %v2382 = vpack.c.b16 %v2367, %v2366
  %v2383 = vpack.c.b16 %v2369, %v2368
  %v2384 = vpack.c.b16 %v2371, %v2370
  %v2385 = vpack.c.b16 %v2373, %v2372
  %v2386 = vpack.c.b16 %v2375, %v2374
  %v2387 = vpack.c.b16 %v2377, %v2376
  %v2388 = vpack.c.b16 %v2379, %v2378
  %v2389 = vpack.c.b16 %v2381, %v2380
  %2398 = vmatprep.subr.bf16.mxu0 0
  %2399 = vmatpush1.bf16.msra.mxu0 %v2389
  %2400 = vmatprep.subr.bf16.mxu0 0
  %2401 = vmatpush1.bf16.msra.mxu0 %v2388
  %2402 = vmatprep.subr.bf16.mxu0 0
  %2403 = vmatpush1.bf16.msra.mxu0 %v2387
  %2404 = vmatprep.subr.bf16.mxu0 0
  %2405 = vmatpush1.bf16.msra.mxu0 %v2386
  %2406 = vmatprep.subr.bf16.mxu0 0
  %2407 = vmatpush1.bf16.msra.mxu0 %v2385
  %2408 = vmatprep.subr.bf16.mxu0 0
  %2409 = vmatpush1.bf16.msra.mxu0 %v2384
  %2410 = vmatprep.subr.bf16.mxu0 0
  %2411 = vmatpush1.bf16.msra.mxu0 %v2383
  %2412 = vmatprep.subr.bf16.mxu0 0
  %2413 = vmatpush1.bf16.msra.mxu0 %v2382
  %2414 = vmatprep.subr.bf16.mxu0 0
  %2415 = vmatpush2.bf16.msra.mxu0 0
  %2416 = vmatprep.subr.bf16.mxu0 0
  %2417 = vmatpush2.bf16.msra.mxu0 0
  %2418 = vmatprep.subr.bf16.mxu0 0
  %2419 = vmatpush2.bf16.msra.mxu0 0
  %2420 = vmatprep.subr.bf16.mxu0 0
  %2421 = vmatpush2.bf16.msra.mxu0 0
  %2422 = vmatprep.subr.bf16.mxu0 0
  %2423 = vmatpush2.bf16.msra.mxu0 0
  %2424 = vmatprep.subr.bf16.mxu0 0
  %2425 = vmatpush2.bf16.msra.mxu0 0
  %2426 = vmatprep.subr.bf16.mxu0 0
  %2427 = vmatpush2.bf16.msra.mxu0 0
  %2428 = vmatprep.subr.bf16.mxu0 0
  %2429 = vmatpush2.bf16.msra.mxu0 0
  %2430 = vmatprep.mubr.bf16.mxu0 0
  %2431 = vmatmul.mubr.bf16.gmra.mxu0 %v2328
  %v2432 = vpop.f32.mrf.mxu0
  %v2433 = vadd.f32 %v2349, %v2432
  %v2434 = vpop.f32.mrf.mxu0
  %v2435 = vpop.f32.mrf.mxu0
  %v2436 = vadd.f32 %v2349, %v2435
  %v2437 = vpop.f32.mrf.mxu0
  %2438 = vdwg.mxu0
  %v2439 = vadd.f32 %v1295, %v2433
  %v2440 = vadd.f32 %v1296, %v2436
  %2441 = vadd.xlane.f32.xlu0 %v2439
  %v2442 = vpop.xlane.xlu0 %2441
  %2443 = vadd.xlane.f32.xlu0 %v2440
  %v2444 = vpop.xlane.xlu0 %2443
  %v2445 = vmul.f32 %v2442, 0.03125
  %v2446 = vmul.f32 %v2444, 0.03125
  %v2447 = vsub.f32 %v2439, %v2445
  %v2448 = vsub.f32 %v2440, %v2446
  %v2449 = vmul.f32 %v2447, %v29
  %v2450 = vmul.f32 %v2448, %v29
  %v2451 = vmul.f32 %v2449, %v2449
  %v2452 = vmul.f32 %v2450, %v2450
  %2453 = vadd.xlane.f32.xlu0 %v2451
  %v2454 = vpop.xlane.xlu0 %2453
  %2455 = vadd.xlane.f32.xlu0 %v2452
  %v2456 = vpop.xlane.xlu0 %2455
  %v2457 = vmul.f32 %v2454, 0.03125
  %v2458 = vmul.f32 %v2456, 0.03125
  %v2459 = vadd.f32 %v2457, 1e-05
  %v2460 = vadd.f32 %v2458, 1e-05
  %v2461 = vrsqrt.pop %v2459
  %v2462 = vrsqrt.pop %v2460
  %v2463 = vmul.f32 %v2449, %v2461
  %v2464 = vmul.f32 %v2450, %v2462
  %v2465 = vlaneseq
  %v2466 = vshrl.u32 %v2465, 7
  %v2467 = vsub.s32 2, %v2466
  %v2468 = vrot.slane %v19, %v2467
  %v2469 = vmul.f32 %v2463, %v2468
  %v2470 = vmul.f32 %v2464, %v2468
  %v2471 = vlaneseq
  %v2472 = vshrl.u32 %v2471, 7
  %v2473 = vsub.s32 3, %v2472
  %v2474 = vrot.slane %v19, %v2473
  %v2475 = vadd.f32 %v2469, %v2474
  %v2476 = vadd.f32 %v2470, %v2474
  %v2477 = vpack.c.bf16 %v2476, %v2475
  %s2478 = scalar_lea.vmem %s2, 384
  %v2479 = vld [vmem:[%s2478] sm:$0xf]
  %v2480 = vld [vmem:[%s2478 + $0x4] sm:$0xf]
  %v2481 = vld [vmem:[%s2478 + $0x8] sm:$0xf]
  %v2482 = vld [vmem:[%s2478 + $0xc] sm:$0xf]
  %v2483 = vld [vmem:[%s2478 + $0x10] sm:$0xf]
  %v2484 = vld [vmem:[%s2478 + $0x14] sm:$0xf]
  %v2485 = vld [vmem:[%s2478 + $0x18] sm:$0xf]
  %v2486 = vld [vmem:[%s2478 + $0x1c] sm:$0xf]
  %v2487 = vld [vmem:[%s2478 + $0x20] sm:$0xf]
  %v2488 = vld [vmem:[%s2478 + $0x24] sm:$0xf]
  %v2489 = vld [vmem:[%s2478 + $0x28] sm:$0xf]
  %v2490 = vld [vmem:[%s2478 + $0x2c] sm:$0xf]
  %v2491 = vld [vmem:[%s2478 + $0x30] sm:$0xf]
  %v2492 = vld [vmem:[%s2478 + $0x34] sm:$0xf]
  %v2493 = vld [vmem:[%s2478 + $0x38] sm:$0xf]
  %v2494 = vld [vmem:[%s2478 + $0x3c] sm:$0xf]
  %v2495 = vlaneseq
  %v2496 = vshrl.u32 %v2495, 7
  %v2497 = vsub.s32 6, %v2496
  %v2498 = vrot.slane %v18, %v2497
  %v2515 = vunpack.c.l.b16 %v2479
  %v2516 = vunpack.c.l.b16 %v2480
  %v2517 = vunpack.c.l.b16 %v2481
  %v2518 = vunpack.c.l.b16 %v2482
  %v2519 = vunpack.c.l.b16 %v2483
  %v2520 = vunpack.c.l.b16 %v2484
  %v2521 = vunpack.c.l.b16 %v2485
  %v2522 = vunpack.c.l.b16 %v2486
  %v2523 = vunpack.c.l.b16 %v2487
  %v2524 = vunpack.c.l.b16 %v2488
  %v2525 = vunpack.c.l.b16 %v2489
  %v2526 = vunpack.c.l.b16 %v2490
  %v2527 = vunpack.c.l.b16 %v2491
  %v2528 = vunpack.c.l.b16 %v2492
  %v2529 = vunpack.c.l.b16 %v2493
  %v2530 = vunpack.c.l.b16 %v2494
  %v2531 = vpack.c.b16 %v2516, %v2515
  %v2532 = vpack.c.b16 %v2518, %v2517
  %v2533 = vpack.c.b16 %v2520, %v2519
  %v2534 = vpack.c.b16 %v2522, %v2521
  %v2535 = vpack.c.b16 %v2524, %v2523
  %v2536 = vpack.c.b16 %v2526, %v2525
  %v2537 = vpack.c.b16 %v2528, %v2527
  %v2538 = vpack.c.b16 %v2530, %v2529
  %2547 = vmatprep.subr.bf16.mxu0 0
  %2548 = vmatpush1.bf16.msra.mxu0 %v2538
  %2549 = vmatprep.subr.bf16.mxu0 0
  %2550 = vmatpush1.bf16.msra.mxu0 %v2537
  %2551 = vmatprep.subr.bf16.mxu0 0
  %2552 = vmatpush1.bf16.msra.mxu0 %v2536
  %2553 = vmatprep.subr.bf16.mxu0 0
  %2554 = vmatpush1.bf16.msra.mxu0 %v2535
  %2555 = vmatprep.subr.bf16.mxu0 0
  %2556 = vmatpush1.bf16.msra.mxu0 %v2534
  %2557 = vmatprep.subr.bf16.mxu0 0
  %2558 = vmatpush1.bf16.msra.mxu0 %v2533
  %2559 = vmatprep.subr.bf16.mxu0 0
  %2560 = vmatpush1.bf16.msra.mxu0 %v2532
  %2561 = vmatprep.subr.bf16.mxu0 0
  %2562 = vmatpush1.bf16.msra.mxu0 %v2531
  %2563 = vmatprep.subr.bf16.mxu0 0
  %2564 = vmatpush2.bf16.msra.mxu0 0
  %2565 = vmatprep.subr.bf16.mxu0 0
  %2566 = vmatpush2.bf16.msra.mxu0 0
  %2567 = vmatprep.subr.bf16.mxu0 0
  %2568 = vmatpush2.bf16.msra.mxu0 0
  %2569 = vmatprep.subr.bf16.mxu0 0
  %2570 = vmatpush2.bf16.msra.mxu0 0
  %2571 = vmatprep.subr.bf16.mxu0 0
  %2572 = vmatpush2.bf16.msra.mxu0 0
  %2573 = vmatprep.subr.bf16.mxu0 0
  %2574 = vmatpush2.bf16.msra.mxu0 0
  %2575 = vmatprep.subr.bf16.mxu0 0
  %2576 = vmatpush2.bf16.msra.mxu0 0
  %2577 = vmatprep.subr.bf16.mxu0 0
  %2578 = vmatpush2.bf16.msra.mxu0 0
  %2579 = vmatprep.mubr.bf16.mxu0 0
  %2580 = vmatmul.mubr.bf16.gmra.mxu0 %v2477
  %v2581 = vpop.f32.mrf.mxu0
  %v2582 = vadd.f32 %v2498, %v2581
  %v2583 = vpop.f32.mrf.mxu0
  %v2584 = vpop.f32.mrf.mxu0
  %v2585 = vadd.f32 %v2498, %v2584
  %v2586 = vpop.f32.mrf.mxu0
  %2587 = vdwg.mxu0
  %v2588 = vmax.f32 %v2582, 0.0
  %v2589 = vmax.f32 %v2585, 0.0
  %v2590 = vpack.c.bf16 %v2589, %v2588
  %s2591 = scalar_lea.vmem %s2, 448
  %v2592 = vld [vmem:[%s2591] sm:$0xf]
  %v2593 = vld [vmem:[%s2591 + $0x4] sm:$0xf]
  %v2594 = vld [vmem:[%s2591 + $0x8] sm:$0xf]
  %v2595 = vld [vmem:[%s2591 + $0xc] sm:$0xf]
  %v2596 = vld [vmem:[%s2591 + $0x10] sm:$0xf]
  %v2597 = vld [vmem:[%s2591 + $0x14] sm:$0xf]
  %v2598 = vld [vmem:[%s2591 + $0x18] sm:$0xf]
  %v2599 = vld [vmem:[%s2591 + $0x1c] sm:$0xf]
  %v2600 = vld [vmem:[%s2591 + $0x20] sm:$0xf]
  %v2601 = vld [vmem:[%s2591 + $0x24] sm:$0xf]
  %v2602 = vld [vmem:[%s2591 + $0x28] sm:$0xf]
  %v2603 = vld [vmem:[%s2591 + $0x2c] sm:$0xf]
  %v2604 = vld [vmem:[%s2591 + $0x30] sm:$0xf]
  %v2605 = vld [vmem:[%s2591 + $0x34] sm:$0xf]
  %v2606 = vld [vmem:[%s2591 + $0x38] sm:$0xf]
  %v2607 = vld [vmem:[%s2591 + $0x3c] sm:$0xf]
  %v2608 = vlaneseq
  %v2609 = vshrl.u32 %v2608, 7
  %v2610 = vsub.s32 7, %v2609
  %v2611 = vrot.slane %v18, %v2610
  %v2628 = vunpack.c.l.b16 %v2592
  %v2629 = vunpack.c.l.b16 %v2593
  %v2630 = vunpack.c.l.b16 %v2594
  %v2631 = vunpack.c.l.b16 %v2595
  %v2632 = vunpack.c.l.b16 %v2596
  %v2633 = vunpack.c.l.b16 %v2597
  %v2634 = vunpack.c.l.b16 %v2598
  %v2635 = vunpack.c.l.b16 %v2599
  %v2636 = vunpack.c.l.b16 %v2600
  %v2637 = vunpack.c.l.b16 %v2601
  %v2638 = vunpack.c.l.b16 %v2602
  %v2639 = vunpack.c.l.b16 %v2603
  %v2640 = vunpack.c.l.b16 %v2604
  %v2641 = vunpack.c.l.b16 %v2605
  %v2642 = vunpack.c.l.b16 %v2606
  %v2643 = vunpack.c.l.b16 %v2607
  %v2644 = vpack.c.b16 %v2629, %v2628
  %v2645 = vpack.c.b16 %v2631, %v2630
  %v2646 = vpack.c.b16 %v2633, %v2632
  %v2647 = vpack.c.b16 %v2635, %v2634
  %v2648 = vpack.c.b16 %v2637, %v2636
  %v2649 = vpack.c.b16 %v2639, %v2638
  %v2650 = vpack.c.b16 %v2641, %v2640
  %v2651 = vpack.c.b16 %v2643, %v2642
  %2660 = vmatprep.subr.bf16.mxu0 0
  %2661 = vmatpush1.bf16.msra.mxu0 %v2651
  %2662 = vmatprep.subr.bf16.mxu0 0
  %2663 = vmatpush1.bf16.msra.mxu0 %v2650
  %2664 = vmatprep.subr.bf16.mxu0 0
  %2665 = vmatpush1.bf16.msra.mxu0 %v2649
  %2666 = vmatprep.subr.bf16.mxu0 0
  %2667 = vmatpush1.bf16.msra.mxu0 %v2648
  %2668 = vmatprep.subr.bf16.mxu0 0
  %2669 = vmatpush1.bf16.msra.mxu0 %v2647
  %2670 = vmatprep.subr.bf16.mxu0 0
  %2671 = vmatpush1.bf16.msra.mxu0 %v2646
  %2672 = vmatprep.subr.bf16.mxu0 0
  %2673 = vmatpush1.bf16.msra.mxu0 %v2645
  %2674 = vmatprep.subr.bf16.mxu0 0
  %2675 = vmatpush1.bf16.msra.mxu0 %v2644
  %2676 = vmatprep.subr.bf16.mxu0 0
  %2677 = vmatpush2.bf16.msra.mxu0 0
  %2678 = vmatprep.subr.bf16.mxu0 0
  %2679 = vmatpush2.bf16.msra.mxu0 0
  %2680 = vmatprep.subr.bf16.mxu0 0
  %2681 = vmatpush2.bf16.msra.mxu0 0
  %2682 = vmatprep.subr.bf16.mxu0 0
  %2683 = vmatpush2.bf16.msra.mxu0 0
  %2684 = vmatprep.subr.bf16.mxu0 0
  %2685 = vmatpush2.bf16.msra.mxu0 0
  %2686 = vmatprep.subr.bf16.mxu0 0
  %2687 = vmatpush2.bf16.msra.mxu0 0
  %2688 = vmatprep.subr.bf16.mxu0 0
  %2689 = vmatpush2.bf16.msra.mxu0 0
  %2690 = vmatprep.subr.bf16.mxu0 0
  %2691 = vmatpush2.bf16.msra.mxu0 0
  %2692 = vmatprep.mubr.bf16.mxu0 0
  %2693 = vmatmul.mubr.bf16.gmra.mxu0 %v2590
  %v2694 = vpop.f32.mrf.mxu0
  %v2695 = vadd.f32 %v2611, %v2694
  %v2696 = vpop.f32.mrf.mxu0
  %v2697 = vpop.f32.mrf.mxu0
  %v2698 = vadd.f32 %v2611, %v2697
  %v2699 = vpop.f32.mrf.mxu0
  %2700 = vdwg.mxu0
  %v2701 = vadd.f32 %v2475, %v2695
  %v2702 = vadd.f32 %v2476, %v2698
  %2703 = vadd.xlane.f32.xlu0 %v2701
  %v2704 = vpop.xlane.xlu0 %2703
  %2705 = vadd.xlane.f32.xlu0 %v2702
  %v2706 = vpop.xlane.xlu0 %2705
  %v2707 = vmul.f32 %v2704, 0.03125
  %v2708 = vmul.f32 %v2706, 0.03125
  %v2709 = vsub.f32 %v2701, %v2707
  %v2710 = vsub.f32 %v2702, %v2708
  %v2711 = vmul.f32 %v2709, %v29
  %v2712 = vmul.f32 %v2710, %v29
  %v2713 = vmul.f32 %v2711, %v2711
  %v2714 = vmul.f32 %v2712, %v2712
  %2715 = vadd.xlane.f32.xlu0 %v2713
  %v2716 = vpop.xlane.xlu0 %2715
  %2717 = vadd.xlane.f32.xlu0 %v2714
  %v2718 = vpop.xlane.xlu0 %2717
  %v2719 = vmul.f32 %v2716, 0.03125
  %v2720 = vmul.f32 %v2718, 0.03125
  %v2721 = vadd.f32 %v2719, 1e-05
  %v2722 = vadd.f32 %v2720, 1e-05
  %v2723 = vrsqrt.pop %v2721
  %v2724 = vrsqrt.pop %v2722
  %v2725 = vmul.f32 %v2711, %v2723
  %v2726 = vmul.f32 %v2712, %v2724
  %v2727 = vlaneseq
  %v2728 = vshrl.u32 %v2727, 7
  %v2729 = vsub.s32 4, %v2728
  %v2730 = vrot.slane %v19, %v2729
  %v2731 = vmul.f32 %v2725, %v2730
  %v2732 = vmul.f32 %v2726, %v2730
  %v2733 = vlaneseq
  %v2734 = vshrl.u32 %v2733, 7
  %v2735 = vsub.s32 5, %v2734
  %v2736 = vrot.slane %v19, %v2735
  %v2737 = vadd.f32 %v2731, %v2736
  %v2738 = vadd.f32 %v2732, %v2736
  %v2739 = vpack.c.bf16 %v2738, %v2737
  %s2740 = scalar_lea.vmem %s2, 512
  %v2741 = vld [vmem:[%s2740] sm:$0xf]
  %v2742 = vld [vmem:[%s2740 + $0x4] sm:$0xf]
  %v2743 = vld [vmem:[%s2740 + $0x8] sm:$0xf]
  %v2744 = vld [vmem:[%s2740 + $0xc] sm:$0xf]
  %v2745 = vld [vmem:[%s2740 + $0x10] sm:$0xf]
  %v2746 = vld [vmem:[%s2740 + $0x14] sm:$0xf]
  %v2747 = vld [vmem:[%s2740 + $0x18] sm:$0xf]
  %v2748 = vld [vmem:[%s2740 + $0x1c] sm:$0xf]
  %v2749 = vld [vmem:[%s2740 + $0x20] sm:$0xf]
  %v2750 = vld [vmem:[%s2740 + $0x24] sm:$0xf]
  %v2751 = vld [vmem:[%s2740 + $0x28] sm:$0xf]
  %v2752 = vld [vmem:[%s2740 + $0x2c] sm:$0xf]
  %v2753 = vld [vmem:[%s2740 + $0x30] sm:$0xf]
  %v2754 = vld [vmem:[%s2740 + $0x34] sm:$0xf]
  %v2755 = vld [vmem:[%s2740 + $0x38] sm:$0xf]
  %v2756 = vld [vmem:[%s2740 + $0x3c] sm:$0xf]
  %v2757 = vlaneseq
  %v2758 = vshrl.u32 %v2757, 7
  %v2759 = vsub.s32 6, %v2758
  %v2760 = vrot.slane %v19, %v2759
  %v2777 = vunpack.c.l.b16 %v2741
  %v2778 = vunpack.c.l.b16 %v2742
  %v2779 = vunpack.c.l.b16 %v2743
  %v2780 = vunpack.c.l.b16 %v2744
  %v2781 = vunpack.c.l.b16 %v2745
  %v2782 = vunpack.c.l.b16 %v2746
  %v2783 = vunpack.c.l.b16 %v2747
  %v2784 = vunpack.c.l.b16 %v2748
  %v2785 = vunpack.c.l.b16 %v2749
  %v2786 = vunpack.c.l.b16 %v2750
  %v2787 = vunpack.c.l.b16 %v2751
  %v2788 = vunpack.c.l.b16 %v2752
  %v2789 = vunpack.c.l.b16 %v2753
  %v2790 = vunpack.c.l.b16 %v2754
  %v2791 = vunpack.c.l.b16 %v2755
  %v2792 = vunpack.c.l.b16 %v2756
  %v2793 = vpack.c.b16 %v2778, %v2777
  %v2794 = vpack.c.b16 %v2780, %v2779
  %v2795 = vpack.c.b16 %v2782, %v2781
  %v2796 = vpack.c.b16 %v2784, %v2783
  %v2797 = vpack.c.b16 %v2786, %v2785
  %v2798 = vpack.c.b16 %v2788, %v2787
  %v2799 = vpack.c.b16 %v2790, %v2789
  %v2800 = vpack.c.b16 %v2792, %v2791
  %2809 = vmatprep.subr.bf16.mxu0 0
  %2810 = vmatpush1.bf16.msra.mxu0 %v2800
  %2811 = vmatprep.subr.bf16.mxu0 0
  %2812 = vmatpush1.bf16.msra.mxu0 %v2799
  %2813 = vmatprep.subr.bf16.mxu0 0
  %2814 = vmatpush1.bf16.msra.mxu0 %v2798
  %2815 = vmatprep.subr.bf16.mxu0 0
  %2816 = vmatpush1.bf16.msra.mxu0 %v2797
  %2817 = vmatprep.subr.bf16.mxu0 0
  %2818 = vmatpush1.bf16.msra.mxu0 %v2796
  %2819 = vmatprep.subr.bf16.mxu0 0
  %2820 = vmatpush1.bf16.msra.mxu0 %v2795
  %2821 = vmatprep.subr.bf16.mxu0 0
  %2822 = vmatpush1.bf16.msra.mxu0 %v2794
  %2823 = vmatprep.subr.bf16.mxu0 0
  %2824 = vmatpush1.bf16.msra.mxu0 %v2793
  %2825 = vmatprep.subr.bf16.mxu0 0
  %2826 = vmatpush2.bf16.msra.mxu0 0
  %2827 = vmatprep.subr.bf16.mxu0 0
  %2828 = vmatpush2.bf16.msra.mxu0 0
  %2829 = vmatprep.subr.bf16.mxu0 0
  %2830 = vmatpush2.bf16.msra.mxu0 0
  %2831 = vmatprep.subr.bf16.mxu0 0
  %2832 = vmatpush2.bf16.msra.mxu0 0
  %2833 = vmatprep.subr.bf16.mxu0 0
  %2834 = vmatpush2.bf16.msra.mxu0 0
  %2835 = vmatprep.subr.bf16.mxu0 0
  %2836 = vmatpush2.bf16.msra.mxu0 0
  %2837 = vmatprep.subr.bf16.mxu0 0
  %2838 = vmatpush2.bf16.msra.mxu0 0
  %2839 = vmatprep.subr.bf16.mxu0 0
  %2840 = vmatpush2.bf16.msra.mxu0 0
  %2841 = vmatprep.mubr.bf16.mxu0 0
  %2842 = vmatmul.mubr.bf16.gmra.mxu0 %v2739
  %v2843 = vpop.f32.mrf.mxu0
  %v2844 = vadd.f32 %v2760, %v2843
  %v2845 = vpop.f32.mrf.mxu0
  %v2846 = vpop.f32.mrf.mxu0
  %v2847 = vadd.f32 %v2760, %v2846
  %v2848 = vpop.f32.mrf.mxu0
  %2849 = vdwg.mxu0
  %v2850 = vmul.f32 %v2844, 0.35355338
  %v2851 = vmul.f32 %v2847, 0.35355338
  %v2852 = vpack.c.bf16 %v2850, %v2850
  %v2853 = vpack.c.bf16 %v2851, %v2851
  %s2854 = scalar_lea.vmem %s2, 576
  %v2855 = vld [vmem:[%s2854] sm:$0xf]
  %v2856 = vld [vmem:[%s2854 + $0x4] sm:$0xf]
  %v2857 = vld [vmem:[%s2854 + $0x8] sm:$0xf]
  %v2858 = vld [vmem:[%s2854 + $0xc] sm:$0xf]
  %v2859 = vld [vmem:[%s2854 + $0x10] sm:$0xf]
  %v2860 = vld [vmem:[%s2854 + $0x14] sm:$0xf]
  %v2861 = vld [vmem:[%s2854 + $0x18] sm:$0xf]
  %v2862 = vld [vmem:[%s2854 + $0x1c] sm:$0xf]
  %v2863 = vld [vmem:[%s2854 + $0x20] sm:$0xf]
  %v2864 = vld [vmem:[%s2854 + $0x24] sm:$0xf]
  %v2865 = vld [vmem:[%s2854 + $0x28] sm:$0xf]
  %v2866 = vld [vmem:[%s2854 + $0x2c] sm:$0xf]
  %v2867 = vld [vmem:[%s2854 + $0x30] sm:$0xf]
  %v2868 = vld [vmem:[%s2854 + $0x34] sm:$0xf]
  %v2869 = vld [vmem:[%s2854 + $0x38] sm:$0xf]
  %v2870 = vld [vmem:[%s2854 + $0x3c] sm:$0xf]
  %v2871 = vlaneseq
  %v2872 = vshrl.u32 %v2871, 7
  %v2873 = vsub.s32 7, %v2872
  %v2874 = vrot.slane %v19, %v2873
  %v2891 = vunpack.c.l.b16 %v2855
  %v2892 = vunpack.c.l.b16 %v2856
  %v2893 = vunpack.c.l.b16 %v2857
  %v2894 = vunpack.c.l.b16 %v2858
  %v2895 = vunpack.c.l.b16 %v2859
  %v2896 = vunpack.c.l.b16 %v2860
  %v2897 = vunpack.c.l.b16 %v2861
  %v2898 = vunpack.c.l.b16 %v2862
  %v2899 = vunpack.c.l.b16 %v2863
  %v2900 = vunpack.c.l.b16 %v2864
  %v2901 = vunpack.c.l.b16 %v2865
  %v2902 = vunpack.c.l.b16 %v2866
  %v2903 = vunpack.c.l.b16 %v2867
  %v2904 = vunpack.c.l.b16 %v2868
  %v2905 = vunpack.c.l.b16 %v2869
  %v2906 = vunpack.c.l.b16 %v2870
  %v2907 = vpack.c.b16 %v2892, %v2891
  %v2908 = vpack.c.b16 %v2894, %v2893
  %v2909 = vpack.c.b16 %v2896, %v2895
  %v2910 = vpack.c.b16 %v2898, %v2897
  %v2911 = vpack.c.b16 %v2900, %v2899
  %v2912 = vpack.c.b16 %v2902, %v2901
  %v2913 = vpack.c.b16 %v2904, %v2903
  %v2914 = vpack.c.b16 %v2906, %v2905
  %2923 = vmatprep.subr.bf16.mxu0 0
  %2924 = vmatpush1.bf16.msra.mxu0 %v2914
  %2925 = vmatprep.subr.bf16.mxu0 0
  %2926 = vmatpush1.bf16.msra.mxu0 %v2913
  %2927 = vmatprep.subr.bf16.mxu0 0
  %2928 = vmatpush1.bf16.msra.mxu0 %v2912
  %2929 = vmatprep.subr.bf16.mxu0 0
  %2930 = vmatpush1.bf16.msra.mxu0 %v2911
  %2931 = vmatprep.subr.bf16.mxu0 0
  %2932 = vmatpush1.bf16.msra.mxu0 %v2910
  %2933 = vmatprep.subr.bf16.mxu0 0
  %2934 = vmatpush1.bf16.msra.mxu0 %v2909
  %2935 = vmatprep.subr.bf16.mxu0 0
  %2936 = vmatpush1.bf16.msra.mxu0 %v2908
  %2937 = vmatprep.subr.bf16.mxu0 0
  %2938 = vmatpush1.bf16.msra.mxu0 %v2907
  %2939 = vmatprep.subr.bf16.mxu0 0
  %2940 = vmatpush2.bf16.msra.mxu0 0
  %2941 = vmatprep.subr.bf16.mxu0 0
  %2942 = vmatpush2.bf16.msra.mxu0 0
  %2943 = vmatprep.subr.bf16.mxu0 0
  %2944 = vmatpush2.bf16.msra.mxu0 0
  %2945 = vmatprep.subr.bf16.mxu0 0
  %2946 = vmatpush2.bf16.msra.mxu0 0
  %2947 = vmatprep.subr.bf16.mxu0 0
  %2948 = vmatpush2.bf16.msra.mxu0 0
  %2949 = vmatprep.subr.bf16.mxu0 0
  %2950 = vmatpush2.bf16.msra.mxu0 0
  %2951 = vmatprep.subr.bf16.mxu0 0
  %2952 = vmatpush2.bf16.msra.mxu0 0
  %2953 = vmatprep.subr.bf16.mxu0 0
  %2954 = vmatpush2.bf16.msra.mxu0 0
  %2955 = vmatprep.mubr.bf16.mxu0 0
  %2956 = vmatmul.mubr.bf16.gmra.mxu0 %v2739
  %v2957 = vpop.f32.mrf.mxu0
  %v2958 = vadd.f32 %v2874, %v2957
  %v2959 = vpop.f32.mrf.mxu0
  %v2960 = vpop.f32.mrf.mxu0
  %v2961 = vadd.f32 %v2874, %v2960
  %v2962 = vpop.f32.mrf.mxu0
  %2963 = vdwg.mxu0
  %v2964 = vpack.c.bf16 %v2958, %v2958
  %v2965 = vpack.c.bf16 %v2961, %v2961
  %v2966 = vmul.bf16 %v2852, %v35
  %v2967 = vmul.bf16 %v2853, %v35
  %2968 = vmatprep.subr.bf16.mxu0 0
  %2969 = vmatpush1.bf16.xpose.msra.mxu0 0
  %2970 = vmatprep.subr.bf16.mxu0 0
  %2971 = vmatpush1.bf16.xpose.msra.mxu0 0
  %2972 = vmatprep.subr.bf16.mxu0 0
  %2973 = vmatpush1.bf16.xpose.msra.mxu0 0
  %2974 = vmatprep.subr.bf16.mxu0 0
  %2975 = vmatpush1.bf16.xpose.msra.mxu0 0
  %2976 = vmatprep.subr.bf16.mxu0 0
  %2977 = vmatpush1.bf16.xpose.msra.mxu0 0
  %2978 = vmatprep.subr.bf16.mxu0 0
  %2979 = vmatpush1.bf16.xpose.msra.mxu0 0
  %2980 = vmatprep.subr.bf16.mxu0 0
  %2981 = vmatpush1.bf16.xpose.msra.mxu0 0
  %2982 = vmatprep.subr.bf16.mxu0 0
  %2983 = vmatpush1.bf16.xpose.msra.mxu0 %v2964
  %2984 = vmatprep.subr.bf16.mxu0 0
  %2985 = vmatpush2.bf16.xpose.msra.mxu0 0
  %2986 = vmatprep.subr.bf16.mxu0 0
  %2987 = vmatpush2.bf16.xpose.msra.mxu0 0
  %2988 = vmatprep.subr.bf16.mxu0 0
  %2989 = vmatpush2.bf16.xpose.msra.mxu0 0
  %2990 = vmatprep.subr.bf16.mxu0 0
  %2991 = vmatpush2.bf16.xpose.msra.mxu0 0
  %2992 = vmatprep.subr.bf16.mxu0 0
  %2993 = vmatpush2.bf16.xpose.msra.mxu0 0
  %2994 = vmatprep.subr.bf16.mxu0 0
  %2995 = vmatpush2.bf16.xpose.msra.mxu0 0
  %2996 = vmatprep.subr.bf16.mxu0 0
  %2997 = vmatpush2.bf16.xpose.msra.mxu0 0
  %2998 = vmatprep.subr.bf16.mxu0 0
  %2999 = vmatpush2.bf16.xpose.msra.mxu0 0
  %3000 = vmatprep.mubr.bf16.mxu0 0
  %3001 = vmatmul.mubr.bf16.gmra.mxu0 %v2966
  %v3002 = vpop.f32.mrf.mxu0
  %v3003 = vadd.f32 %v114, %v3002
  %v3004 = vpop.f32.mrf.mxu0
  %v3005 = vpop.f32.mrf.mxu0
  %v3006 = vpop.f32.mrf.mxu0
  %3007 = vdwg.mxu0
  %3008 = vmatprep.subr.bf16.mxu0 0
  %3009 = vmatpush1.bf16.xpose.msra.mxu0 0
  %3010 = vmatprep.subr.bf16.mxu0 0
  %3011 = vmatpush1.bf16.xpose.msra.mxu0 0
  %3012 = vmatprep.subr.bf16.mxu0 0
  %3013 = vmatpush1.bf16.xpose.msra.mxu0 0
  %3014 = vmatprep.subr.bf16.mxu0 0
  %3015 = vmatpush1.bf16.xpose.msra.mxu0 0
  %3016 = vmatprep.subr.bf16.mxu0 0
  %3017 = vmatpush1.bf16.xpose.msra.mxu0 0
  %3018 = vmatprep.subr.bf16.mxu0 0
  %3019 = vmatpush1.bf16.xpose.msra.mxu0 0
  %3020 = vmatprep.subr.bf16.mxu0 0
  %3021 = vmatpush1.bf16.xpose.msra.mxu0 0
  %3022 = vmatprep.subr.bf16.mxu0 0
  %3023 = vmatpush1.bf16.xpose.msra.mxu0 %v2965
  %3024 = vmatprep.subr.bf16.mxu0 0
  %3025 = vmatpush2.bf16.xpose.msra.mxu0 0
  %3026 = vmatprep.subr.bf16.mxu0 0
  %3027 = vmatpush2.bf16.xpose.msra.mxu0 0
  %3028 = vmatprep.subr.bf16.mxu0 0
  %3029 = vmatpush2.bf16.xpose.msra.mxu0 0
  %3030 = vmatprep.subr.bf16.mxu0 0
  %3031 = vmatpush2.bf16.xpose.msra.mxu0 0
  %3032 = vmatprep.subr.bf16.mxu0 0
  %3033 = vmatpush2.bf16.xpose.msra.mxu0 0
  %3034 = vmatprep.subr.bf16.mxu0 0
  %3035 = vmatpush2.bf16.xpose.msra.mxu0 0
  %3036 = vmatprep.subr.bf16.mxu0 0
  %3037 = vmatpush2.bf16.xpose.msra.mxu0 0
  %3038 = vmatprep.subr.bf16.mxu0 0
  %3039 = vmatpush2.bf16.xpose.msra.mxu0 0
  %3040 = vmatprep.mubr.bf16.mxu0 0
  %3041 = vmatmul.mubr.bf16.gmra.mxu0 %v2967
  %v3042 = vpop.f32.mrf.mxu0
  %v3043 = vadd.f32 %v115, %v3042
  %v3044 = vpop.f32.mrf.mxu0
  %v3045 = vpop.f32.mrf.mxu0
  %v3046 = vpop.f32.mrf.mxu0
  %3047 = vdwg.mxu0
  %v3048 = vsel %vm424, %v3003, -inf
  %3049 = vmax.xlane.f32.xlu0 %v3048
  %v3050 = vpop.xlane.xlu0 %3049
  %v3051 = vsel %vm424, %v3043, -inf
  %3052 = vmax.xlane.f32.xlu0 %v3051
  %v3053 = vpop.xlane.xlu0 %3052
  %v3054 = vsub.f32 %v3003, %v3050
  %v3055 = vsub.f32 %v3043, %v3053
  %v3056 = vmul.f32 %v3054, 1.442695
  %v3057 = vpow.pop %v3056
  %v3058 = vmul.f32 %v3055, 1.442695
  %v3059 = vpow.pop %v3058
  %v3060 = vsel %vm424, %v3057, 0.0
  %3061 = vadd.xlane.f32.xlu0 %v3060
  %v3062 = vpop.xlane.xlu0 %3061
  %v3063 = vsel %vm424, %v3059, 0.0
  %3064 = vadd.xlane.f32.xlu0 %v3063
  %v3065 = vpop.xlane.xlu0 %3064
  %v3066 = vrcp.pop %v3062
  %v3067 = vrcp.pop %v3065
  %v3068 = vmul.f32 %v3057, %v3066
  %v3069 = vmul.f32 %v3059, %v3067
  %v3070 = vpack.c.bf16 %v3068, %v3068
  %v3071 = vpack.c.bf16 %v3069, %v3069
  %v3072 = vmul.bf16 %v2964, %v58
  %v3073 = vmul.bf16 %v2965, %v58
  %v3074 = vmul.bf16 %v2852, %v41
  %v3075 = vmul.bf16 %v2853, %v41
  %3076 = vmatprep.subr.bf16.mxu0 0
  %3077 = vmatpush1.bf16.xpose.msra.mxu0 0
  %3078 = vmatprep.subr.bf16.mxu0 0
  %3079 = vmatpush1.bf16.xpose.msra.mxu0 0
  %3080 = vmatprep.subr.bf16.mxu0 0
  %3081 = vmatpush1.bf16.xpose.msra.mxu0 0
  %3082 = vmatprep.subr.bf16.mxu0 0
  %3083 = vmatpush1.bf16.xpose.msra.mxu0 0
  %3084 = vmatprep.subr.bf16.mxu0 0
  %3085 = vmatpush1.bf16.xpose.msra.mxu0 0
  %3086 = vmatprep.subr.bf16.mxu0 0
  %3087 = vmatpush1.bf16.xpose.msra.mxu0 0
  %3088 = vmatprep.subr.bf16.mxu0 0
  %3089 = vmatpush1.bf16.xpose.msra.mxu0 0
  %3090 = vmatprep.subr.bf16.mxu0 0
  %3091 = vmatpush1.bf16.xpose.msra.mxu0 %v2964
  %3092 = vmatprep.subr.bf16.mxu0 0
  %3093 = vmatpush2.bf16.xpose.msra.mxu0 0
  %3094 = vmatprep.subr.bf16.mxu0 0
  %3095 = vmatpush2.bf16.xpose.msra.mxu0 0
  %3096 = vmatprep.subr.bf16.mxu0 0
  %3097 = vmatpush2.bf16.xpose.msra.mxu0 0
  %3098 = vmatprep.subr.bf16.mxu0 0
  %3099 = vmatpush2.bf16.xpose.msra.mxu0 0
  %3100 = vmatprep.subr.bf16.mxu0 0
  %3101 = vmatpush2.bf16.xpose.msra.mxu0 0
  %3102 = vmatprep.subr.bf16.mxu0 0
  %3103 = vmatpush2.bf16.xpose.msra.mxu0 0
  %3104 = vmatprep.subr.bf16.mxu0 0
  %3105 = vmatpush2.bf16.xpose.msra.mxu0 0
  %3106 = vmatprep.subr.bf16.mxu0 0
  %3107 = vmatpush2.bf16.xpose.msra.mxu0 0
  %3108 = vmatprep.mubr.bf16.mxu0 0
  %3109 = vmatmul.mubr.bf16.gmra.mxu0 %v3074
  %v3110 = vpop.f32.mrf.mxu0
  %v3111 = vadd.f32 %v114, %v3110
  %v3112 = vpop.f32.mrf.mxu0
  %v3113 = vpop.f32.mrf.mxu0
  %v3114 = vpop.f32.mrf.mxu0
  %3115 = vdwg.mxu0
  %3116 = vmatprep.subr.bf16.mxu0 0
  %3117 = vmatpush1.bf16.xpose.msra.mxu0 0
  %3118 = vmatprep.subr.bf16.mxu0 0
  %3119 = vmatpush1.bf16.xpose.msra.mxu0 0
  %3120 = vmatprep.subr.bf16.mxu0 0
  %3121 = vmatpush1.bf16.xpose.msra.mxu0 0
  %3122 = vmatprep.subr.bf16.mxu0 0
  %3123 = vmatpush1.bf16.xpose.msra.mxu0 0
  %3124 = vmatprep.subr.bf16.mxu0 0
  %3125 = vmatpush1.bf16.xpose.msra.mxu0 0
  %3126 = vmatprep.subr.bf16.mxu0 0
  %3127 = vmatpush1.bf16.xpose.msra.mxu0 0
  %3128 = vmatprep.subr.bf16.mxu0 0
  %3129 = vmatpush1.bf16.xpose.msra.mxu0 0
  %3130 = vmatprep.subr.bf16.mxu0 0
  %3131 = vmatpush1.bf16.xpose.msra.mxu0 %v2965
  %3132 = vmatprep.subr.bf16.mxu0 0
  %3133 = vmatpush2.bf16.xpose.msra.mxu0 0
  %3134 = vmatprep.subr.bf16.mxu0 0
  %3135 = vmatpush2.bf16.xpose.msra.mxu0 0
  %3136 = vmatprep.subr.bf16.mxu0 0
  %3137 = vmatpush2.bf16.xpose.msra.mxu0 0
  %3138 = vmatprep.subr.bf16.mxu0 0
  %3139 = vmatpush2.bf16.xpose.msra.mxu0 0
  %3140 = vmatprep.subr.bf16.mxu0 0
  %3141 = vmatpush2.bf16.xpose.msra.mxu0 0
  %3142 = vmatprep.subr.bf16.mxu0 0
  %3143 = vmatpush2.bf16.xpose.msra.mxu0 0
  %3144 = vmatprep.subr.bf16.mxu0 0
  %3145 = vmatpush2.bf16.xpose.msra.mxu0 0
  %3146 = vmatprep.subr.bf16.mxu0 0
  %3147 = vmatpush2.bf16.xpose.msra.mxu0 0
  %3148 = vmatprep.mubr.bf16.mxu0 0
  %3149 = vmatmul.mubr.bf16.gmra.mxu0 %v3075
  %v3150 = vpop.f32.mrf.mxu0
  %v3151 = vadd.f32 %v115, %v3150
  %v3152 = vpop.f32.mrf.mxu0
  %v3153 = vpop.f32.mrf.mxu0
  %v3154 = vpop.f32.mrf.mxu0
  %3155 = vdwg.mxu0
  %v3156 = vsel %vm424, %v3111, -inf
  %3157 = vmax.xlane.f32.xlu0 %v3156
  %v3158 = vpop.xlane.xlu0 %3157
  %v3159 = vsel %vm424, %v3151, -inf
  %3160 = vmax.xlane.f32.xlu0 %v3159
  %v3161 = vpop.xlane.xlu0 %3160
  %v3162 = vsub.f32 %v3111, %v3158
  %v3163 = vsub.f32 %v3151, %v3161
  %v3164 = vmul.f32 %v3162, 1.442695
  %v3165 = vpow.pop %v3164
  %v3166 = vmul.f32 %v3163, 1.442695
  %v3167 = vpow.pop %v3166
  %v3168 = vsel %vm424, %v3165, 0.0
  %3169 = vadd.xlane.f32.xlu0 %v3168
  %v3170 = vpop.xlane.xlu0 %3169
  %v3171 = vsel %vm424, %v3167, 0.0
  %3172 = vadd.xlane.f32.xlu0 %v3171
  %v3173 = vpop.xlane.xlu0 %3172
  %v3174 = vrcp.pop %v3170
  %v3175 = vrcp.pop %v3173
  %v3176 = vmul.f32 %v3165, %v3174
  %v3177 = vmul.f32 %v3167, %v3175
  %v3178 = vpack.c.bf16 %v3176, %v3176
  %v3179 = vpack.c.bf16 %v3177, %v3177
  %v3180 = vmul.bf16 %v2964, %v64
  %v3181 = vmul.bf16 %v2965, %v64
  %v3183 = vsel %vm424, %v3178, 0
  %v3186 = vsel %vm562, %v3180, 0
  %3188 = vmatprep.subr.bf16.mxu0 0
  %3189 = vmatpush1.bf16.msra.mxu0 0
  %3190 = vmatprep.subr.bf16.mxu0 0
  %3191 = vmatpush1.bf16.msra.mxu0 0
  %3192 = vmatprep.subr.bf16.mxu0 0
  %3193 = vmatpush1.bf16.msra.mxu0 0
  %3194 = vmatprep.subr.bf16.mxu0 0
  %3195 = vmatpush1.bf16.msra.mxu0 0
  %3196 = vmatprep.subr.bf16.mxu0 0
  %3197 = vmatpush1.bf16.msra.mxu0 0
  %3198 = vmatprep.subr.bf16.mxu0 0
  %3199 = vmatpush1.bf16.msra.mxu0 0
  %3200 = vmatprep.subr.bf16.mxu0 0
  %3201 = vmatpush1.bf16.msra.mxu0 0
  %3202 = vmatprep.subr.bf16.mxu0 0
  %3203 = vmatpush1.bf16.msra.mxu0 %v3186
  %3204 = vmatprep.subr.bf16.mxu0 0
  %3205 = vmatpush2.bf16.msra.mxu0 0
  %3206 = vmatprep.subr.bf16.mxu0 0
  %3207 = vmatpush2.bf16.msra.mxu0 0
  %3208 = vmatprep.subr.bf16.mxu0 0
  %3209 = vmatpush2.bf16.msra.mxu0 0
  %3210 = vmatprep.subr.bf16.mxu0 0
  %3211 = vmatpush2.bf16.msra.mxu0 0
  %3212 = vmatprep.subr.bf16.mxu0 0
  %3213 = vmatpush2.bf16.msra.mxu0 0
  %3214 = vmatprep.subr.bf16.mxu0 0
  %3215 = vmatpush2.bf16.msra.mxu0 0
  %3216 = vmatprep.subr.bf16.mxu0 0
  %3217 = vmatpush2.bf16.msra.mxu0 0
  %3218 = vmatprep.subr.bf16.mxu0 0
  %3219 = vmatpush2.bf16.msra.mxu0 0
  %3220 = vmatprep.mubr.bf16.mxu0 0
  %3221 = vmatmul.mubr.bf16.gmra.mxu0 %v3183
  %v3222 = vpop.f32.mrf.mxu0
  %v3223 = vadd.f32 0.0, %v3222
  %v3224 = vpop.f32.mrf.mxu0
  %v3225 = vpop.f32.mrf.mxu0
  %v3226 = vpop.f32.mrf.mxu0
  %3227 = vdwg.mxu0
  %v3229 = vsel %vm424, %v3179, 0
  %v3232 = vsel %vm562, %v3181, 0
  %3234 = vmatprep.subr.bf16.mxu0 0
  %3235 = vmatpush1.bf16.msra.mxu0 0
  %3236 = vmatprep.subr.bf16.mxu0 0
  %3237 = vmatpush1.bf16.msra.mxu0 0
  %3238 = vmatprep.subr.bf16.mxu0 0
  %3239 = vmatpush1.bf16.msra.mxu0 0
  %3240 = vmatprep.subr.bf16.mxu0 0
  %3241 = vmatpush1.bf16.msra.mxu0 0
  %3242 = vmatprep.subr.bf16.mxu0 0
  %3243 = vmatpush1.bf16.msra.mxu0 0
  %3244 = vmatprep.subr.bf16.mxu0 0
  %3245 = vmatpush1.bf16.msra.mxu0 0
  %3246 = vmatprep.subr.bf16.mxu0 0
  %3247 = vmatpush1.bf16.msra.mxu0 0
  %3248 = vmatprep.subr.bf16.mxu0 0
  %3249 = vmatpush1.bf16.msra.mxu0 %v3232
  %3250 = vmatprep.subr.bf16.mxu0 0
  %3251 = vmatpush2.bf16.msra.mxu0 0
  %3252 = vmatprep.subr.bf16.mxu0 0
  %3253 = vmatpush2.bf16.msra.mxu0 0
  %3254 = vmatprep.subr.bf16.mxu0 0
  %3255 = vmatpush2.bf16.msra.mxu0 0
  %3256 = vmatprep.subr.bf16.mxu0 0
  %3257 = vmatpush2.bf16.msra.mxu0 0
  %3258 = vmatprep.subr.bf16.mxu0 0
  %3259 = vmatpush2.bf16.msra.mxu0 0
  %3260 = vmatprep.subr.bf16.mxu0 0
  %3261 = vmatpush2.bf16.msra.mxu0 0
  %3262 = vmatprep.subr.bf16.mxu0 0
  %3263 = vmatpush2.bf16.msra.mxu0 0
  %3264 = vmatprep.subr.bf16.mxu0 0
  %3265 = vmatpush2.bf16.msra.mxu0 0
  %3266 = vmatprep.mubr.bf16.mxu0 0
  %3267 = vmatmul.mubr.bf16.gmra.mxu0 %v3229
  %v3268 = vpop.f32.mrf.mxu0
  %v3269 = vadd.f32 0.0, %v3268
  %v3270 = vpop.f32.mrf.mxu0
  %v3271 = vpop.f32.mrf.mxu0
  %v3272 = vpop.f32.mrf.mxu0
  %3273 = vdwg.mxu0
  %v3275 = vsel %vm424, %v3070, 0
  %v3278 = vsel %vm562, %v3072, 0
  %3280 = vmatprep.subr.bf16.mxu0 0
  %3281 = vmatpush1.bf16.msra.mxu0 0
  %3282 = vmatprep.subr.bf16.mxu0 0
  %3283 = vmatpush1.bf16.msra.mxu0 0
  %3284 = vmatprep.subr.bf16.mxu0 0
  %3285 = vmatpush1.bf16.msra.mxu0 0
  %3286 = vmatprep.subr.bf16.mxu0 0
  %3287 = vmatpush1.bf16.msra.mxu0 0
  %3288 = vmatprep.subr.bf16.mxu0 0
  %3289 = vmatpush1.bf16.msra.mxu0 0
  %3290 = vmatprep.subr.bf16.mxu0 0
  %3291 = vmatpush1.bf16.msra.mxu0 0
  %3292 = vmatprep.subr.bf16.mxu0 0
  %3293 = vmatpush1.bf16.msra.mxu0 0
  %3294 = vmatprep.subr.bf16.mxu0 0
  %3295 = vmatpush1.bf16.msra.mxu0 %v3278
  %3296 = vmatprep.subr.bf16.mxu0 0
  %3297 = vmatpush2.bf16.msra.mxu0 0
  %3298 = vmatprep.subr.bf16.mxu0 0
  %3299 = vmatpush2.bf16.msra.mxu0 0
  %3300 = vmatprep.subr.bf16.mxu0 0
  %3301 = vmatpush2.bf16.msra.mxu0 0
  %3302 = vmatprep.subr.bf16.mxu0 0
  %3303 = vmatpush2.bf16.msra.mxu0 0
  %3304 = vmatprep.subr.bf16.mxu0 0
  %3305 = vmatpush2.bf16.msra.mxu0 0
  %3306 = vmatprep.subr.bf16.mxu0 0
  %3307 = vmatpush2.bf16.msra.mxu0 0
  %3308 = vmatprep.subr.bf16.mxu0 0
  %3309 = vmatpush2.bf16.msra.mxu0 0
  %3310 = vmatprep.subr.bf16.mxu0 0
  %3311 = vmatpush2.bf16.msra.mxu0 0
  %3312 = vmatprep.mubr.bf16.mxu0 0
  %3313 = vmatmul.mubr.bf16.gmra.mxu0 %v3275
  %v3314 = vpop.f32.mrf.mxu0
  %v3315 = vadd.f32 %v3223, %v3314
  %v3316 = vpop.f32.mrf.mxu0
  %v3317 = vpop.f32.mrf.mxu0
  %v3318 = vpop.f32.mrf.mxu0
  %3319 = vdwg.mxu0
  %v3321 = vsel %vm424, %v3071, 0
  %v3324 = vsel %vm562, %v3073, 0
  %3326 = vmatprep.subr.bf16.mxu0 0
  %3327 = vmatpush1.bf16.msra.mxu0 0
  %3328 = vmatprep.subr.bf16.mxu0 0
  %3329 = vmatpush1.bf16.msra.mxu0 0
  %3330 = vmatprep.subr.bf16.mxu0 0
  %3331 = vmatpush1.bf16.msra.mxu0 0
  %3332 = vmatprep.subr.bf16.mxu0 0
  %3333 = vmatpush1.bf16.msra.mxu0 0
  %3334 = vmatprep.subr.bf16.mxu0 0
  %3335 = vmatpush1.bf16.msra.mxu0 0
  %3336 = vmatprep.subr.bf16.mxu0 0
  %3337 = vmatpush1.bf16.msra.mxu0 0
  %3338 = vmatprep.subr.bf16.mxu0 0
  %3339 = vmatpush1.bf16.msra.mxu0 0
  %3340 = vmatprep.subr.bf16.mxu0 0
  %3341 = vmatpush1.bf16.msra.mxu0 %v3324
  %3342 = vmatprep.subr.bf16.mxu0 0
  %3343 = vmatpush2.bf16.msra.mxu0 0
  %3344 = vmatprep.subr.bf16.mxu0 0
  %3345 = vmatpush2.bf16.msra.mxu0 0
  %3346 = vmatprep.subr.bf16.mxu0 0
  %3347 = vmatpush2.bf16.msra.mxu0 0
  %3348 = vmatprep.subr.bf16.mxu0 0
  %3349 = vmatpush2.bf16.msra.mxu0 0
  %3350 = vmatprep.subr.bf16.mxu0 0
  %3351 = vmatpush2.bf16.msra.mxu0 0
  %3352 = vmatprep.subr.bf16.mxu0 0
  %3353 = vmatpush2.bf16.msra.mxu0 0
  %3354 = vmatprep.subr.bf16.mxu0 0
  %3355 = vmatpush2.bf16.msra.mxu0 0
  %3356 = vmatprep.subr.bf16.mxu0 0
  %3357 = vmatpush2.bf16.msra.mxu0 0
  %3358 = vmatprep.mubr.bf16.mxu0 0
  %3359 = vmatmul.mubr.bf16.gmra.mxu0 %v3321
  %v3360 = vpop.f32.mrf.mxu0
  %v3361 = vadd.f32 %v3269, %v3360
  %v3362 = vpop.f32.mrf.mxu0
  %v3363 = vpop.f32.mrf.mxu0
  %v3364 = vpop.f32.mrf.mxu0
  %3365 = vdwg.mxu0
  %v3366 = vmul.bf16 %v2852, %v47
  %v3367 = vmul.bf16 %v2853, %v47
  %3368 = vmatprep.subr.bf16.mxu0 0
  %3369 = vmatpush1.bf16.xpose.msra.mxu0 0
  %3370 = vmatprep.subr.bf16.mxu0 0
  %3371 = vmatpush1.bf16.xpose.msra.mxu0 0
  %3372 = vmatprep.subr.bf16.mxu0 0
  %3373 = vmatpush1.bf16.xpose.msra.mxu0 0
  %3374 = vmatprep.subr.bf16.mxu0 0
  %3375 = vmatpush1.bf16.xpose.msra.mxu0 0
  %3376 = vmatprep.subr.bf16.mxu0 0
  %3377 = vmatpush1.bf16.xpose.msra.mxu0 0
  %3378 = vmatprep.subr.bf16.mxu0 0
  %3379 = vmatpush1.bf16.xpose.msra.mxu0 0
  %3380 = vmatprep.subr.bf16.mxu0 0
  %3381 = vmatpush1.bf16.xpose.msra.mxu0 0
  %3382 = vmatprep.subr.bf16.mxu0 0
  %3383 = vmatpush1.bf16.xpose.msra.mxu0 %v2964
  %3384 = vmatprep.subr.bf16.mxu0 0
  %3385 = vmatpush2.bf16.xpose.msra.mxu0 0
  %3386 = vmatprep.subr.bf16.mxu0 0
  %3387 = vmatpush2.bf16.xpose.msra.mxu0 0
  %3388 = vmatprep.subr.bf16.mxu0 0
  %3389 = vmatpush2.bf16.xpose.msra.mxu0 0
  %3390 = vmatprep.subr.bf16.mxu0 0
  %3391 = vmatpush2.bf16.xpose.msra.mxu0 0
  %3392 = vmatprep.subr.bf16.mxu0 0
  %3393 = vmatpush2.bf16.xpose.msra.mxu0 0
  %3394 = vmatprep.subr.bf16.mxu0 0
  %3395 = vmatpush2.bf16.xpose.msra.mxu0 0
  %3396 = vmatprep.subr.bf16.mxu0 0
  %3397 = vmatpush2.bf16.xpose.msra.mxu0 0
  %3398 = vmatprep.subr.bf16.mxu0 0
  %3399 = vmatpush2.bf16.xpose.msra.mxu0 0
  %3400 = vmatprep.mubr.bf16.mxu0 0
  %3401 = vmatmul.mubr.bf16.gmra.mxu0 %v3366
  %v3402 = vpop.f32.mrf.mxu0
  %v3403 = vadd.f32 %v114, %v3402
  %v3404 = vpop.f32.mrf.mxu0
  %v3405 = vpop.f32.mrf.mxu0
  %v3406 = vpop.f32.mrf.mxu0
  %3407 = vdwg.mxu0
  %3408 = vmatprep.subr.bf16.mxu0 0
  %3409 = vmatpush1.bf16.xpose.msra.mxu0 0
  %3410 = vmatprep.subr.bf16.mxu0 0
  %3411 = vmatpush1.bf16.xpose.msra.mxu0 0
  %3412 = vmatprep.subr.bf16.mxu0 0
  %3413 = vmatpush1.bf16.xpose.msra.mxu0 0
  %3414 = vmatprep.subr.bf16.mxu0 0
  %3415 = vmatpush1.bf16.xpose.msra.mxu0 0
  %3416 = vmatprep.subr.bf16.mxu0 0
  %3417 = vmatpush1.bf16.xpose.msra.mxu0 0
  %3418 = vmatprep.subr.bf16.mxu0 0
  %3419 = vmatpush1.bf16.xpose.msra.mxu0 0
  %3420 = vmatprep.subr.bf16.mxu0 0
  %3421 = vmatpush1.bf16.xpose.msra.mxu0 0
  %3422 = vmatprep.subr.bf16.mxu0 0
  %3423 = vmatpush1.bf16.xpose.msra.mxu0 %v2965
  %3424 = vmatprep.subr.bf16.mxu0 0
  %3425 = vmatpush2.bf16.xpose.msra.mxu0 0
  %3426 = vmatprep.subr.bf16.mxu0 0
  %3427 = vmatpush2.bf16.xpose.msra.mxu0 0
  %3428 = vmatprep.subr.bf16.mxu0 0
  %3429 = vmatpush2.bf16.xpose.msra.mxu0 0
  %3430 = vmatprep.subr.bf16.mxu0 0
  %3431 = vmatpush2.bf16.xpose.msra.mxu0 0
  %3432 = vmatprep.subr.bf16.mxu0 0
  %3433 = vmatpush2.bf16.xpose.msra.mxu0 0
  %3434 = vmatprep.subr.bf16.mxu0 0
  %3435 = vmatpush2.bf16.xpose.msra.mxu0 0
  %3436 = vmatprep.subr.bf16.mxu0 0
  %3437 = vmatpush2.bf16.xpose.msra.mxu0 0
  %3438 = vmatprep.subr.bf16.mxu0 0
  %3439 = vmatpush2.bf16.xpose.msra.mxu0 0
  %3440 = vmatprep.mubr.bf16.mxu0 0
  %3441 = vmatmul.mubr.bf16.gmra.mxu0 %v3367
  %v3442 = vpop.f32.mrf.mxu0
  %v3443 = vadd.f32 %v115, %v3442
  %v3444 = vpop.f32.mrf.mxu0
  %v3445 = vpop.f32.mrf.mxu0
  %v3446 = vpop.f32.mrf.mxu0
  %3447 = vdwg.mxu0
  %v3448 = vsel %vm424, %v3403, -inf
  %3449 = vmax.xlane.f32.xlu0 %v3448
  %v3450 = vpop.xlane.xlu0 %3449
  %v3451 = vsel %vm424, %v3443, -inf
  %3452 = vmax.xlane.f32.xlu0 %v3451
  %v3453 = vpop.xlane.xlu0 %3452
  %v3454 = vsub.f32 %v3403, %v3450
  %v3455 = vsub.f32 %v3443, %v3453
  %v3456 = vmul.f32 %v3454, 1.442695
  %v3457 = vpow.pop %v3456
  %v3458 = vmul.f32 %v3455, 1.442695
  %v3459 = vpow.pop %v3458
  %v3460 = vsel %vm424, %v3457, 0.0
  %3461 = vadd.xlane.f32.xlu0 %v3460
  %v3462 = vpop.xlane.xlu0 %3461
  %v3463 = vsel %vm424, %v3459, 0.0
  %3464 = vadd.xlane.f32.xlu0 %v3463
  %v3465 = vpop.xlane.xlu0 %3464
  %v3466 = vrcp.pop %v3462
  %v3467 = vrcp.pop %v3465
  %v3468 = vmul.f32 %v3457, %v3466
  %v3469 = vmul.f32 %v3459, %v3467
  %v3470 = vpack.c.bf16 %v3468, %v3468
  %v3471 = vpack.c.bf16 %v3469, %v3469
  %v3472 = vmul.bf16 %v2964, %v70
  %v3473 = vmul.bf16 %v2965, %v70
  %v3475 = vsel %vm424, %v3470, 0
  %v3478 = vsel %vm562, %v3472, 0
  %3480 = vmatprep.subr.bf16.mxu0 0
  %3481 = vmatpush1.bf16.msra.mxu0 0
  %3482 = vmatprep.subr.bf16.mxu0 0
  %3483 = vmatpush1.bf16.msra.mxu0 0
  %3484 = vmatprep.subr.bf16.mxu0 0
  %3485 = vmatpush1.bf16.msra.mxu0 0
  %3486 = vmatprep.subr.bf16.mxu0 0
  %3487 = vmatpush1.bf16.msra.mxu0 0
  %3488 = vmatprep.subr.bf16.mxu0 0
  %3489 = vmatpush1.bf16.msra.mxu0 0
  %3490 = vmatprep.subr.bf16.mxu0 0
  %3491 = vmatpush1.bf16.msra.mxu0 0
  %3492 = vmatprep.subr.bf16.mxu0 0
  %3493 = vmatpush1.bf16.msra.mxu0 0
  %3494 = vmatprep.subr.bf16.mxu0 0
  %3495 = vmatpush1.bf16.msra.mxu0 %v3478
  %3496 = vmatprep.subr.bf16.mxu0 0
  %3497 = vmatpush2.bf16.msra.mxu0 0
  %3498 = vmatprep.subr.bf16.mxu0 0
  %3499 = vmatpush2.bf16.msra.mxu0 0
  %3500 = vmatprep.subr.bf16.mxu0 0
  %3501 = vmatpush2.bf16.msra.mxu0 0
  %3502 = vmatprep.subr.bf16.mxu0 0
  %3503 = vmatpush2.bf16.msra.mxu0 0
  %3504 = vmatprep.subr.bf16.mxu0 0
  %3505 = vmatpush2.bf16.msra.mxu0 0
  %3506 = vmatprep.subr.bf16.mxu0 0
  %3507 = vmatpush2.bf16.msra.mxu0 0
  %3508 = vmatprep.subr.bf16.mxu0 0
  %3509 = vmatpush2.bf16.msra.mxu0 0
  %3510 = vmatprep.subr.bf16.mxu0 0
  %3511 = vmatpush2.bf16.msra.mxu0 0
  %3512 = vmatprep.mubr.bf16.mxu0 0
  %3513 = vmatmul.mubr.bf16.gmra.mxu0 %v3475
  %v3514 = vpop.f32.mrf.mxu0
  %v3515 = vadd.f32 0.0, %v3514
  %v3516 = vpop.f32.mrf.mxu0
  %v3517 = vpop.f32.mrf.mxu0
  %v3518 = vpop.f32.mrf.mxu0
  %3519 = vdwg.mxu0
  %v3521 = vsel %vm424, %v3471, 0
  %v3524 = vsel %vm562, %v3473, 0
  %3526 = vmatprep.subr.bf16.mxu0 0
  %3527 = vmatpush1.bf16.msra.mxu0 0
  %3528 = vmatprep.subr.bf16.mxu0 0
  %3529 = vmatpush1.bf16.msra.mxu0 0
  %3530 = vmatprep.subr.bf16.mxu0 0
  %3531 = vmatpush1.bf16.msra.mxu0 0
  %3532 = vmatprep.subr.bf16.mxu0 0
  %3533 = vmatpush1.bf16.msra.mxu0 0
  %3534 = vmatprep.subr.bf16.mxu0 0
  %3535 = vmatpush1.bf16.msra.mxu0 0
  %3536 = vmatprep.subr.bf16.mxu0 0
  %3537 = vmatpush1.bf16.msra.mxu0 0
  %3538 = vmatprep.subr.bf16.mxu0 0
  %3539 = vmatpush1.bf16.msra.mxu0 0
  %3540 = vmatprep.subr.bf16.mxu0 0
  %3541 = vmatpush1.bf16.msra.mxu0 %v3524
  %3542 = vmatprep.subr.bf16.mxu0 0
  %3543 = vmatpush2.bf16.msra.mxu0 0
  %3544 = vmatprep.subr.bf16.mxu0 0
  %3545 = vmatpush2.bf16.msra.mxu0 0
  %3546 = vmatprep.subr.bf16.mxu0 0
  %3547 = vmatpush2.bf16.msra.mxu0 0
  %3548 = vmatprep.subr.bf16.mxu0 0
  %3549 = vmatpush2.bf16.msra.mxu0 0
  %3550 = vmatprep.subr.bf16.mxu0 0
  %3551 = vmatpush2.bf16.msra.mxu0 0
  %3552 = vmatprep.subr.bf16.mxu0 0
  %3553 = vmatpush2.bf16.msra.mxu0 0
  %3554 = vmatprep.subr.bf16.mxu0 0
  %3555 = vmatpush2.bf16.msra.mxu0 0
  %3556 = vmatprep.subr.bf16.mxu0 0
  %3557 = vmatpush2.bf16.msra.mxu0 0
  %3558 = vmatprep.mubr.bf16.mxu0 0
  %3559 = vmatmul.mubr.bf16.gmra.mxu0 %v3521
  %v3560 = vpop.f32.mrf.mxu0
  %v3561 = vadd.f32 0.0, %v3560
  %v3562 = vpop.f32.mrf.mxu0
  %v3563 = vpop.f32.mrf.mxu0
  %v3564 = vpop.f32.mrf.mxu0
  %3565 = vdwg.mxu0
  %v3566 = vadd.f32 %v3315, %v3515
  %v3567 = vadd.f32 %v3361, %v3561
  %v3568 = vmul.bf16 %v2852, %v52
  %v3569 = vmul.bf16 %v2853, %v52
  %3570 = vmatprep.subr.bf16.mxu0 0
  %3571 = vmatpush1.bf16.xpose.msra.mxu0 0
  %3572 = vmatprep.subr.bf16.mxu0 0
  %3573 = vmatpush1.bf16.xpose.msra.mxu0 0
  %3574 = vmatprep.subr.bf16.mxu0 0
  %3575 = vmatpush1.bf16.xpose.msra.mxu0 0
  %3576 = vmatprep.subr.bf16.mxu0 0
  %3577 = vmatpush1.bf16.xpose.msra.mxu0 0
  %3578 = vmatprep.subr.bf16.mxu0 0
  %3579 = vmatpush1.bf16.xpose.msra.mxu0 0
  %3580 = vmatprep.subr.bf16.mxu0 0
  %3581 = vmatpush1.bf16.xpose.msra.mxu0 0
  %3582 = vmatprep.subr.bf16.mxu0 0
  %3583 = vmatpush1.bf16.xpose.msra.mxu0 0
  %3584 = vmatprep.subr.bf16.mxu0 0
  %3585 = vmatpush1.bf16.xpose.msra.mxu0 %v2964
  %3586 = vmatprep.subr.bf16.mxu0 0
  %3587 = vmatpush2.bf16.xpose.msra.mxu0 0
  %3588 = vmatprep.subr.bf16.mxu0 0
  %3589 = vmatpush2.bf16.xpose.msra.mxu0 0
  %3590 = vmatprep.subr.bf16.mxu0 0
  %3591 = vmatpush2.bf16.xpose.msra.mxu0 0
  %3592 = vmatprep.subr.bf16.mxu0 0
  %3593 = vmatpush2.bf16.xpose.msra.mxu0 0
  %3594 = vmatprep.subr.bf16.mxu0 0
  %3595 = vmatpush2.bf16.xpose.msra.mxu0 0
  %3596 = vmatprep.subr.bf16.mxu0 0
  %3597 = vmatpush2.bf16.xpose.msra.mxu0 0
  %3598 = vmatprep.subr.bf16.mxu0 0
  %3599 = vmatpush2.bf16.xpose.msra.mxu0 0
  %3600 = vmatprep.subr.bf16.mxu0 0
  %3601 = vmatpush2.bf16.xpose.msra.mxu0 0
  %3602 = vmatprep.mubr.bf16.mxu0 0
  %3603 = vmatmul.mubr.bf16.gmra.mxu0 %v3568
  %v3604 = vpop.f32.mrf.mxu0
  %v3605 = vadd.f32 %v114, %v3604
  %v3606 = vpop.f32.mrf.mxu0
  %v3607 = vpop.f32.mrf.mxu0
  %v3608 = vpop.f32.mrf.mxu0
  %3609 = vdwg.mxu0
  %3610 = vmatprep.subr.bf16.mxu0 0
  %3611 = vmatpush1.bf16.xpose.msra.mxu0 0
  %3612 = vmatprep.subr.bf16.mxu0 0
  %3613 = vmatpush1.bf16.xpose.msra.mxu0 0
  %3614 = vmatprep.subr.bf16.mxu0 0
  %3615 = vmatpush1.bf16.xpose.msra.mxu0 0
  %3616 = vmatprep.subr.bf16.mxu0 0
  %3617 = vmatpush1.bf16.xpose.msra.mxu0 0
  %3618 = vmatprep.subr.bf16.mxu0 0
  %3619 = vmatpush1.bf16.xpose.msra.mxu0 0
  %3620 = vmatprep.subr.bf16.mxu0 0
  %3621 = vmatpush1.bf16.xpose.msra.mxu0 0
  %3622 = vmatprep.subr.bf16.mxu0 0
  %3623 = vmatpush1.bf16.xpose.msra.mxu0 0
  %3624 = vmatprep.subr.bf16.mxu0 0
  %3625 = vmatpush1.bf16.xpose.msra.mxu0 %v2965
  %3626 = vmatprep.subr.bf16.mxu0 0
  %3627 = vmatpush2.bf16.xpose.msra.mxu0 0
  %3628 = vmatprep.subr.bf16.mxu0 0
  %3629 = vmatpush2.bf16.xpose.msra.mxu0 0
  %3630 = vmatprep.subr.bf16.mxu0 0
  %3631 = vmatpush2.bf16.xpose.msra.mxu0 0
  %3632 = vmatprep.subr.bf16.mxu0 0
  %3633 = vmatpush2.bf16.xpose.msra.mxu0 0
  %3634 = vmatprep.subr.bf16.mxu0 0
  %3635 = vmatpush2.bf16.xpose.msra.mxu0 0
  %3636 = vmatprep.subr.bf16.mxu0 0
  %3637 = vmatpush2.bf16.xpose.msra.mxu0 0
  %3638 = vmatprep.subr.bf16.mxu0 0
  %3639 = vmatpush2.bf16.xpose.msra.mxu0 0
  %3640 = vmatprep.subr.bf16.mxu0 0
  %3641 = vmatpush2.bf16.xpose.msra.mxu0 0
  %3642 = vmatprep.mubr.bf16.mxu0 0
  %3643 = vmatmul.mubr.bf16.gmra.mxu0 %v3569
  %v3644 = vpop.f32.mrf.mxu0
  %v3645 = vadd.f32 %v115, %v3644
  %v3646 = vpop.f32.mrf.mxu0
  %v3647 = vpop.f32.mrf.mxu0
  %v3648 = vpop.f32.mrf.mxu0
  %3649 = vdwg.mxu0
  %v3650 = vsel %vm424, %v3605, -inf
  %3651 = vmax.xlane.f32.xlu0 %v3650
  %v3652 = vpop.xlane.xlu0 %3651
  %v3653 = vsel %vm424, %v3645, -inf
  %3654 = vmax.xlane.f32.xlu0 %v3653
  %v3655 = vpop.xlane.xlu0 %3654
  %v3656 = vsub.f32 %v3605, %v3652
  %v3657 = vsub.f32 %v3645, %v3655
  %v3658 = vmul.f32 %v3656, 1.442695
  %v3659 = vpow.pop %v3658
  %v3660 = vmul.f32 %v3657, 1.442695
  %v3661 = vpow.pop %v3660
  %v3662 = vsel %vm424, %v3659, 0.0
  %3663 = vadd.xlane.f32.xlu0 %v3662
  %v3664 = vpop.xlane.xlu0 %3663
  %v3665 = vsel %vm424, %v3661, 0.0
  %3666 = vadd.xlane.f32.xlu0 %v3665
  %v3667 = vpop.xlane.xlu0 %3666
  %v3668 = vrcp.pop %v3664
  %v3669 = vrcp.pop %v3667
  %v3670 = vmul.f32 %v3659, %v3668
  %v3671 = vmul.f32 %v3661, %v3669
  %v3672 = vpack.c.bf16 %v3670, %v3670
  %v3673 = vpack.c.bf16 %v3671, %v3671
  %v3674 = vmul.bf16 %v2964, %v76
  %v3675 = vmul.bf16 %v2965, %v76
  %v3677 = vsel %vm424, %v3672, 0
  %v3680 = vsel %vm562, %v3674, 0
  %3682 = vmatprep.subr.bf16.mxu0 0
  %3683 = vmatpush1.bf16.msra.mxu0 0
  %3684 = vmatprep.subr.bf16.mxu0 0
  %3685 = vmatpush1.bf16.msra.mxu0 0
  %3686 = vmatprep.subr.bf16.mxu0 0
  %3687 = vmatpush1.bf16.msra.mxu0 0
  %3688 = vmatprep.subr.bf16.mxu0 0
  %3689 = vmatpush1.bf16.msra.mxu0 0
  %3690 = vmatprep.subr.bf16.mxu0 0
  %3691 = vmatpush1.bf16.msra.mxu0 0
  %3692 = vmatprep.subr.bf16.mxu0 0
  %3693 = vmatpush1.bf16.msra.mxu0 0
  %3694 = vmatprep.subr.bf16.mxu0 0
  %3695 = vmatpush1.bf16.msra.mxu0 0
  %3696 = vmatprep.subr.bf16.mxu0 0
  %3697 = vmatpush1.bf16.msra.mxu0 %v3680
  %3698 = vmatprep.subr.bf16.mxu0 0
  %3699 = vmatpush2.bf16.msra.mxu0 0
  %3700 = vmatprep.subr.bf16.mxu0 0
  %3701 = vmatpush2.bf16.msra.mxu0 0
  %3702 = vmatprep.subr.bf16.mxu0 0
  %3703 = vmatpush2.bf16.msra.mxu0 0
  %3704 = vmatprep.subr.bf16.mxu0 0
  %3705 = vmatpush2.bf16.msra.mxu0 0
  %3706 = vmatprep.subr.bf16.mxu0 0
  %3707 = vmatpush2.bf16.msra.mxu0 0
  %3708 = vmatprep.subr.bf16.mxu0 0
  %3709 = vmatpush2.bf16.msra.mxu0 0
  %3710 = vmatprep.subr.bf16.mxu0 0
  %3711 = vmatpush2.bf16.msra.mxu0 0
  %3712 = vmatprep.subr.bf16.mxu0 0
  %3713 = vmatpush2.bf16.msra.mxu0 0
  %3714 = vmatprep.mubr.bf16.mxu0 0
  %3715 = vmatmul.mubr.bf16.gmra.mxu0 %v3677
  %v3716 = vpop.f32.mrf.mxu0
  %v3717 = vadd.f32 0.0, %v3716
  %v3718 = vpop.f32.mrf.mxu0
  %v3719 = vpop.f32.mrf.mxu0
  %v3720 = vpop.f32.mrf.mxu0
  %3721 = vdwg.mxu0
  %v3723 = vsel %vm424, %v3673, 0
  %v3726 = vsel %vm562, %v3675, 0
  %3728 = vmatprep.subr.bf16.mxu0 0
  %3729 = vmatpush1.bf16.msra.mxu0 0
  %3730 = vmatprep.subr.bf16.mxu0 0
  %3731 = vmatpush1.bf16.msra.mxu0 0
  %3732 = vmatprep.subr.bf16.mxu0 0
  %3733 = vmatpush1.bf16.msra.mxu0 0
  %3734 = vmatprep.subr.bf16.mxu0 0
  %3735 = vmatpush1.bf16.msra.mxu0 0
  %3736 = vmatprep.subr.bf16.mxu0 0
  %3737 = vmatpush1.bf16.msra.mxu0 0
  %3738 = vmatprep.subr.bf16.mxu0 0
  %3739 = vmatpush1.bf16.msra.mxu0 0
  %3740 = vmatprep.subr.bf16.mxu0 0
  %3741 = vmatpush1.bf16.msra.mxu0 0
  %3742 = vmatprep.subr.bf16.mxu0 0
  %3743 = vmatpush1.bf16.msra.mxu0 %v3726
  %3744 = vmatprep.subr.bf16.mxu0 0
  %3745 = vmatpush2.bf16.msra.mxu0 0
  %3746 = vmatprep.subr.bf16.mxu0 0
  %3747 = vmatpush2.bf16.msra.mxu0 0
  %3748 = vmatprep.subr.bf16.mxu0 0
  %3749 = vmatpush2.bf16.msra.mxu0 0
  %3750 = vmatprep.subr.bf16.mxu0 0
  %3751 = vmatpush2.bf16.msra.mxu0 0
  %3752 = vmatprep.subr.bf16.mxu0 0
  %3753 = vmatpush2.bf16.msra.mxu0 0
  %3754 = vmatprep.subr.bf16.mxu0 0
  %3755 = vmatpush2.bf16.msra.mxu0 0
  %3756 = vmatprep.subr.bf16.mxu0 0
  %3757 = vmatpush2.bf16.msra.mxu0 0
  %3758 = vmatprep.subr.bf16.mxu0 0
  %3759 = vmatpush2.bf16.msra.mxu0 0
  %3760 = vmatprep.mubr.bf16.mxu0 0
  %3761 = vmatmul.mubr.bf16.gmra.mxu0 %v3723
  %v3762 = vpop.f32.mrf.mxu0
  %v3763 = vadd.f32 0.0, %v3762
  %v3764 = vpop.f32.mrf.mxu0
  %v3765 = vpop.f32.mrf.mxu0
  %v3766 = vpop.f32.mrf.mxu0
  %3767 = vdwg.mxu0
  %v3768 = vadd.f32 %v3566, %v3717
  %v3769 = vadd.f32 %v3567, %v3763
  %v3770 = vpack.c.bf16 %v3769, %v3768
  %s3771 = scalar_lea.vmem %s2, 640
  %v3772 = vld [vmem:[%s3771] sm:$0xf]
  %v3773 = vld [vmem:[%s3771 + $0x4] sm:$0xf]
  %v3774 = vld [vmem:[%s3771 + $0x8] sm:$0xf]
  %v3775 = vld [vmem:[%s3771 + $0xc] sm:$0xf]
  %v3776 = vld [vmem:[%s3771 + $0x10] sm:$0xf]
  %v3777 = vld [vmem:[%s3771 + $0x14] sm:$0xf]
  %v3778 = vld [vmem:[%s3771 + $0x18] sm:$0xf]
  %v3779 = vld [vmem:[%s3771 + $0x1c] sm:$0xf]
  %v3780 = vld [vmem:[%s3771 + $0x20] sm:$0xf]
  %v3781 = vld [vmem:[%s3771 + $0x24] sm:$0xf]
  %v3782 = vld [vmem:[%s3771 + $0x28] sm:$0xf]
  %v3783 = vld [vmem:[%s3771 + $0x2c] sm:$0xf]
  %v3784 = vld [vmem:[%s3771 + $0x30] sm:$0xf]
  %v3785 = vld [vmem:[%s3771 + $0x34] sm:$0xf]
  %v3786 = vld [vmem:[%s3771 + $0x38] sm:$0xf]
  %v3787 = vld [vmem:[%s3771 + $0x3c] sm:$0xf]
  %v3788 = vlaneseq
  %v3789 = vshrl.u32 %v3788, 7
  %v3790 = vsub.s32 0, %v3789
  %v3791 = vrot.slane %v20, %v3790
  %v3808 = vunpack.c.l.b16 %v3772
  %v3809 = vunpack.c.l.b16 %v3773
  %v3810 = vunpack.c.l.b16 %v3774
  %v3811 = vunpack.c.l.b16 %v3775
  %v3812 = vunpack.c.l.b16 %v3776
  %v3813 = vunpack.c.l.b16 %v3777
  %v3814 = vunpack.c.l.b16 %v3778
  %v3815 = vunpack.c.l.b16 %v3779
  %v3816 = vunpack.c.l.b16 %v3780
  %v3817 = vunpack.c.l.b16 %v3781
  %v3818 = vunpack.c.l.b16 %v3782
  %v3819 = vunpack.c.l.b16 %v3783
  %v3820 = vunpack.c.l.b16 %v3784
  %v3821 = vunpack.c.l.b16 %v3785
  %v3822 = vunpack.c.l.b16 %v3786
  %v3823 = vunpack.c.l.b16 %v3787
  %v3824 = vpack.c.b16 %v3809, %v3808
  %v3825 = vpack.c.b16 %v3811, %v3810
  %v3826 = vpack.c.b16 %v3813, %v3812
  %v3827 = vpack.c.b16 %v3815, %v3814
  %v3828 = vpack.c.b16 %v3817, %v3816
  %v3829 = vpack.c.b16 %v3819, %v3818
  %v3830 = vpack.c.b16 %v3821, %v3820
  %v3831 = vpack.c.b16 %v3823, %v3822
  %3840 = vmatprep.subr.bf16.mxu0 0
  %3841 = vmatpush1.bf16.msra.mxu0 %v3831
  %3842 = vmatprep.subr.bf16.mxu0 0
  %3843 = vmatpush1.bf16.msra.mxu0 %v3830
  %3844 = vmatprep.subr.bf16.mxu0 0
  %3845 = vmatpush1.bf16.msra.mxu0 %v3829
  %3846 = vmatprep.subr.bf16.mxu0 0
  %3847 = vmatpush1.bf16.msra.mxu0 %v3828
  %3848 = vmatprep.subr.bf16.mxu0 0
  %3849 = vmatpush1.bf16.msra.mxu0 %v3827
  %3850 = vmatprep.subr.bf16.mxu0 0
  %3851 = vmatpush1.bf16.msra.mxu0 %v3826
  %3852 = vmatprep.subr.bf16.mxu0 0
  %3853 = vmatpush1.bf16.msra.mxu0 %v3825
  %3854 = vmatprep.subr.bf16.mxu0 0
  %3855 = vmatpush1.bf16.msra.mxu0 %v3824
  %3856 = vmatprep.subr.bf16.mxu0 0
  %3857 = vmatpush2.bf16.msra.mxu0 0
  %3858 = vmatprep.subr.bf16.mxu0 0
  %3859 = vmatpush2.bf16.msra.mxu0 0
  %3860 = vmatprep.subr.bf16.mxu0 0
  %3861 = vmatpush2.bf16.msra.mxu0 0
  %3862 = vmatprep.subr.bf16.mxu0 0
  %3863 = vmatpush2.bf16.msra.mxu0 0
  %3864 = vmatprep.subr.bf16.mxu0 0
  %3865 = vmatpush2.bf16.msra.mxu0 0
  %3866 = vmatprep.subr.bf16.mxu0 0
  %3867 = vmatpush2.bf16.msra.mxu0 0
  %3868 = vmatprep.subr.bf16.mxu0 0
  %3869 = vmatpush2.bf16.msra.mxu0 0
  %3870 = vmatprep.subr.bf16.mxu0 0
  %3871 = vmatpush2.bf16.msra.mxu0 0
  %3872 = vmatprep.mubr.bf16.mxu0 0
  %3873 = vmatmul.mubr.bf16.gmra.mxu0 %v3770
  %v3874 = vpop.f32.mrf.mxu0
  %v3875 = vadd.f32 %v3791, %v3874
  %v3876 = vpop.f32.mrf.mxu0
  %v3877 = vpop.f32.mrf.mxu0
  %v3878 = vadd.f32 %v3791, %v3877
  %v3879 = vpop.f32.mrf.mxu0
  %3880 = vdwg.mxu0
  %v3881 = vadd.f32 %v2737, %v3875
  %v3882 = vadd.f32 %v2738, %v3878
  %3883 = vadd.xlane.f32.xlu0 %v3881
  %v3884 = vpop.xlane.xlu0 %3883
  %3885 = vadd.xlane.f32.xlu0 %v3882
  %v3886 = vpop.xlane.xlu0 %3885
  %v3887 = vmul.f32 %v3884, 0.03125
  %v3888 = vmul.f32 %v3886, 0.03125
  %v3889 = vsub.f32 %v3881, %v3887
  %v3890 = vsub.f32 %v3882, %v3888
  %v3891 = vmul.f32 %v3889, %v29
  %v3892 = vmul.f32 %v3890, %v29
  %v3893 = vmul.f32 %v3891, %v3891
  %v3894 = vmul.f32 %v3892, %v3892
  %3895 = vadd.xlane.f32.xlu0 %v3893
  %v3896 = vpop.xlane.xlu0 %3895
  %3897 = vadd.xlane.f32.xlu0 %v3894
  %v3898 = vpop.xlane.xlu0 %3897
  %v3899 = vmul.f32 %v3896, 0.03125
  %v3900 = vmul.f32 %v3898, 0.03125
  %v3901 = vadd.f32 %v3899, 1e-05
  %v3902 = vadd.f32 %v3900, 1e-05
  %v3903 = vrsqrt.pop %v3901
  %v3904 = vrsqrt.pop %v3902
  %v3905 = vmul.f32 %v3891, %v3903
  %v3906 = vmul.f32 %v3892, %v3904
  %v3907 = vlaneseq
  %v3908 = vshrl.u32 %v3907, 7
  %v3909 = vsub.s32 6, %v3908
  %v3910 = vrot.slane %v20, %v3909
  %v3911 = vmul.f32 %v3905, %v3910
  %v3912 = vmul.f32 %v3906, %v3910
  %v3913 = vlaneseq
  %v3914 = vshrl.u32 %v3913, 7
  %v3915 = vsub.s32 7, %v3914
  %v3916 = vrot.slane %v20, %v3915
  %v3917 = vadd.f32 %v3911, %v3916
  %v3918 = vadd.f32 %v3912, %v3916
  %v3919 = vpack.c.bf16 %v3918, %v3917
  %s3920 = scalar_lea.vmem %s2, 704
  %v3921 = vld [vmem:[%s3920] sm:$0xf]
  %v3922 = vld [vmem:[%s3920 + $0x4] sm:$0xf]
  %v3923 = vld [vmem:[%s3920 + $0x8] sm:$0xf]
  %v3924 = vld [vmem:[%s3920 + $0xc] sm:$0xf]
  %v3925 = vld [vmem:[%s3920 + $0x10] sm:$0xf]
  %v3926 = vld [vmem:[%s3920 + $0x14] sm:$0xf]
  %v3927 = vld [vmem:[%s3920 + $0x18] sm:$0xf]
  %v3928 = vld [vmem:[%s3920 + $0x1c] sm:$0xf]
  %v3929 = vld [vmem:[%s3920 + $0x20] sm:$0xf]
  %v3930 = vld [vmem:[%s3920 + $0x24] sm:$0xf]
  %v3931 = vld [vmem:[%s3920 + $0x28] sm:$0xf]
  %v3932 = vld [vmem:[%s3920 + $0x2c] sm:$0xf]
  %v3933 = vld [vmem:[%s3920 + $0x30] sm:$0xf]
  %v3934 = vld [vmem:[%s3920 + $0x34] sm:$0xf]
  %v3935 = vld [vmem:[%s3920 + $0x38] sm:$0xf]
  %v3936 = vld [vmem:[%s3920 + $0x3c] sm:$0xf]
  %v3937 = vlaneseq
  %v3938 = vshrl.u32 %v3937, 7
  %v3939 = vsub.s32 1, %v3938
  %v3940 = vrot.slane %v20, %v3939
  %v3957 = vunpack.c.l.b16 %v3921
  %v3958 = vunpack.c.l.b16 %v3922
  %v3959 = vunpack.c.l.b16 %v3923
  %v3960 = vunpack.c.l.b16 %v3924
  %v3961 = vunpack.c.l.b16 %v3925
  %v3962 = vunpack.c.l.b16 %v3926
  %v3963 = vunpack.c.l.b16 %v3927
  %v3964 = vunpack.c.l.b16 %v3928
  %v3965 = vunpack.c.l.b16 %v3929
  %v3966 = vunpack.c.l.b16 %v3930
  %v3967 = vunpack.c.l.b16 %v3931
  %v3968 = vunpack.c.l.b16 %v3932
  %v3969 = vunpack.c.l.b16 %v3933
  %v3970 = vunpack.c.l.b16 %v3934
  %v3971 = vunpack.c.l.b16 %v3935
  %v3972 = vunpack.c.l.b16 %v3936
  %v3973 = vpack.c.b16 %v3958, %v3957
  %v3974 = vpack.c.b16 %v3960, %v3959
  %v3975 = vpack.c.b16 %v3962, %v3961
  %v3976 = vpack.c.b16 %v3964, %v3963
  %v3977 = vpack.c.b16 %v3966, %v3965
  %v3978 = vpack.c.b16 %v3968, %v3967
  %v3979 = vpack.c.b16 %v3970, %v3969
  %v3980 = vpack.c.b16 %v3972, %v3971
  %3989 = vmatprep.subr.bf16.mxu0 0
  %3990 = vmatpush1.bf16.msra.mxu0 %v3980
  %3991 = vmatprep.subr.bf16.mxu0 0
  %3992 = vmatpush1.bf16.msra.mxu0 %v3979
  %3993 = vmatprep.subr.bf16.mxu0 0
  %3994 = vmatpush1.bf16.msra.mxu0 %v3978
  %3995 = vmatprep.subr.bf16.mxu0 0
  %3996 = vmatpush1.bf16.msra.mxu0 %v3977
  %3997 = vmatprep.subr.bf16.mxu0 0
  %3998 = vmatpush1.bf16.msra.mxu0 %v3976
  %3999 = vmatprep.subr.bf16.mxu0 0
  %4000 = vmatpush1.bf16.msra.mxu0 %v3975
  %4001 = vmatprep.subr.bf16.mxu0 0
  %4002 = vmatpush1.bf16.msra.mxu0 %v3974
  %4003 = vmatprep.subr.bf16.mxu0 0
  %4004 = vmatpush1.bf16.msra.mxu0 %v3973
  %4005 = vmatprep.subr.bf16.mxu0 0
  %4006 = vmatpush2.bf16.msra.mxu0 0
  %4007 = vmatprep.subr.bf16.mxu0 0
  %4008 = vmatpush2.bf16.msra.mxu0 0
  %4009 = vmatprep.subr.bf16.mxu0 0
  %4010 = vmatpush2.bf16.msra.mxu0 0
  %4011 = vmatprep.subr.bf16.mxu0 0
  %4012 = vmatpush2.bf16.msra.mxu0 0
  %4013 = vmatprep.subr.bf16.mxu0 0
  %4014 = vmatpush2.bf16.msra.mxu0 0
  %4015 = vmatprep.subr.bf16.mxu0 0
  %4016 = vmatpush2.bf16.msra.mxu0 0
  %4017 = vmatprep.subr.bf16.mxu0 0
  %4018 = vmatpush2.bf16.msra.mxu0 0
  %4019 = vmatprep.subr.bf16.mxu0 0
  %4020 = vmatpush2.bf16.msra.mxu0 0
  %4021 = vmatprep.mubr.bf16.mxu0 0
  %4022 = vmatmul.mubr.bf16.gmra.mxu0 %v3919
  %v4023 = vpop.f32.mrf.mxu0
  %v4024 = vadd.f32 %v3940, %v4023
  %v4025 = vpop.f32.mrf.mxu0
  %v4026 = vpop.f32.mrf.mxu0
  %v4027 = vadd.f32 %v3940, %v4026
  %v4028 = vpop.f32.mrf.mxu0
  %4029 = vdwg.mxu0
  %v4030 = vmul.f32 %v4024, 0.35355338
  %v4031 = vmul.f32 %v4027, 0.35355338
  %v4032 = vpack.c.bf16 %v4030, %v4030
  %v4033 = vpack.c.bf16 %v4031, %v4031
  %s4034 = scalar_lea.vmem %s2, 768
  %v4035 = vld [vmem:[%s4034] sm:$0xf]
  %v4036 = vld [vmem:[%s4034 + $0x4] sm:$0xf]
  %v4037 = vld [vmem:[%s4034 + $0x8] sm:$0xf]
  %v4038 = vld [vmem:[%s4034 + $0xc] sm:$0xf]
  %v4039 = vld [vmem:[%s4034 + $0x10] sm:$0xf]
  %v4040 = vld [vmem:[%s4034 + $0x14] sm:$0xf]
  %v4041 = vld [vmem:[%s4034 + $0x18] sm:$0xf]
  %v4042 = vld [vmem:[%s4034 + $0x1c] sm:$0xf]
  %v4043 = vld [vmem:[%s4034 + $0x20] sm:$0xf]
  %v4044 = vld [vmem:[%s4034 + $0x24] sm:$0xf]
  %v4045 = vld [vmem:[%s4034 + $0x28] sm:$0xf]
  %v4046 = vld [vmem:[%s4034 + $0x2c] sm:$0xf]
  %v4047 = vld [vmem:[%s4034 + $0x30] sm:$0xf]
  %v4048 = vld [vmem:[%s4034 + $0x34] sm:$0xf]
  %v4049 = vld [vmem:[%s4034 + $0x38] sm:$0xf]
  %v4050 = vld [vmem:[%s4034 + $0x3c] sm:$0xf]
  %v4051 = vlaneseq
  %v4052 = vshrl.u32 %v4051, 7
  %v4053 = vsub.s32 2, %v4052
  %v4054 = vrot.slane %v20, %v4053
  %v4071 = vunpack.c.l.b16 %v4035
  %v4072 = vunpack.c.l.b16 %v4036
  %v4073 = vunpack.c.l.b16 %v4037
  %v4074 = vunpack.c.l.b16 %v4038
  %v4075 = vunpack.c.l.b16 %v4039
  %v4076 = vunpack.c.l.b16 %v4040
  %v4077 = vunpack.c.l.b16 %v4041
  %v4078 = vunpack.c.l.b16 %v4042
  %v4079 = vunpack.c.l.b16 %v4043
  %v4080 = vunpack.c.l.b16 %v4044
  %v4081 = vunpack.c.l.b16 %v4045
  %v4082 = vunpack.c.l.b16 %v4046
  %v4083 = vunpack.c.l.b16 %v4047
  %v4084 = vunpack.c.l.b16 %v4048
  %v4085 = vunpack.c.l.b16 %v4049
  %v4086 = vunpack.c.l.b16 %v4050
  %v4087 = vpack.c.b16 %v4072, %v4071
  %v4088 = vpack.c.b16 %v4074, %v4073
  %v4089 = vpack.c.b16 %v4076, %v4075
  %v4090 = vpack.c.b16 %v4078, %v4077
  %v4091 = vpack.c.b16 %v4080, %v4079
  %v4092 = vpack.c.b16 %v4082, %v4081
  %v4093 = vpack.c.b16 %v4084, %v4083
  %v4094 = vpack.c.b16 %v4086, %v4085
  %4103 = vmatprep.subr.bf16.mxu0 0
  %4104 = vmatpush1.bf16.msra.mxu0 %v4094
  %4105 = vmatprep.subr.bf16.mxu0 0
  %4106 = vmatpush1.bf16.msra.mxu0 %v4093
  %4107 = vmatprep.subr.bf16.mxu0 0
  %4108 = vmatpush1.bf16.msra.mxu0 %v4092
  %4109 = vmatprep.subr.bf16.mxu0 0
  %4110 = vmatpush1.bf16.msra.mxu0 %v4091
  %4111 = vmatprep.subr.bf16.mxu0 0
  %4112 = vmatpush1.bf16.msra.mxu0 %v4090
  %4113 = vmatprep.subr.bf16.mxu0 0
  %4114 = vmatpush1.bf16.msra.mxu0 %v4089
  %4115 = vmatprep.subr.bf16.mxu0 0
  %4116 = vmatpush1.bf16.msra.mxu0 %v4088
  %4117 = vmatprep.subr.bf16.mxu0 0
  %4118 = vmatpush1.bf16.msra.mxu0 %v4087
  %4119 = vmatprep.subr.bf16.mxu0 0
  %4120 = vmatpush2.bf16.msra.mxu0 0
  %4121 = vmatprep.subr.bf16.mxu0 0
  %4122 = vmatpush2.bf16.msra.mxu0 0
  %4123 = vmatprep.subr.bf16.mxu0 0
  %4124 = vmatpush2.bf16.msra.mxu0 0
  %4125 = vmatprep.subr.bf16.mxu0 0
  %4126 = vmatpush2.bf16.msra.mxu0 0
  %4127 = vmatprep.subr.bf16.mxu0 0
  %4128 = vmatpush2.bf16.msra.mxu0 0
  %4129 = vmatprep.subr.bf16.mxu0 0
  %4130 = vmatpush2.bf16.msra.mxu0 0
  %4131 = vmatprep.subr.bf16.mxu0 0
  %4132 = vmatpush2.bf16.msra.mxu0 0
  %4133 = vmatprep.subr.bf16.mxu0 0
  %4134 = vmatpush2.bf16.msra.mxu0 0
  %4135 = vmatprep.mubr.bf16.mxu0 0
  %4136 = vmatmul.mubr.bf16.gmra.mxu0 %v116
  %v4137 = vpop.f32.mrf.mxu0
  %v4138 = vadd.f32 %v4054, %v4137
  %v4139 = vpop.f32.mrf.mxu0
  %v4140 = vpop.f32.mrf.mxu0
  %v4141 = vadd.f32 %v4054, %v4140
  %v4142 = vpop.f32.mrf.mxu0
  %4143 = vdwg.mxu0
  %v4144 = vpack.c.bf16 %v4138, %v4138
  %v4145 = vpack.c.bf16 %v4141, %v4141
  %v4146 = vmul.bf16 %v4032, %v35
  %v4147 = vmul.bf16 %v4033, %v35
  %4148 = vmatprep.subr.bf16.mxu0 0
  %4149 = vmatpush1.bf16.xpose.msra.mxu0 0
  %4150 = vmatprep.subr.bf16.mxu0 0
  %4151 = vmatpush1.bf16.xpose.msra.mxu0 0
  %4152 = vmatprep.subr.bf16.mxu0 0
  %4153 = vmatpush1.bf16.xpose.msra.mxu0 0
  %4154 = vmatprep.subr.bf16.mxu0 0
  %4155 = vmatpush1.bf16.xpose.msra.mxu0 0
  %4156 = vmatprep.subr.bf16.mxu0 0
  %4157 = vmatpush1.bf16.xpose.msra.mxu0 0
  %4158 = vmatprep.subr.bf16.mxu0 0
  %4159 = vmatpush1.bf16.xpose.msra.mxu0 0
  %4160 = vmatprep.subr.bf16.mxu0 0
  %4161 = vmatpush1.bf16.xpose.msra.mxu0 0
  %4162 = vmatprep.subr.bf16.mxu0 0
  %4163 = vmatpush1.bf16.xpose.msra.mxu0 %v4144
  %4164 = vmatprep.subr.bf16.mxu0 0
  %4165 = vmatpush2.bf16.xpose.msra.mxu0 0
  %4166 = vmatprep.subr.bf16.mxu0 0
  %4167 = vmatpush2.bf16.xpose.msra.mxu0 0
  %4168 = vmatprep.subr.bf16.mxu0 0
  %4169 = vmatpush2.bf16.xpose.msra.mxu0 0
  %4170 = vmatprep.subr.bf16.mxu0 0
  %4171 = vmatpush2.bf16.xpose.msra.mxu0 0
  %4172 = vmatprep.subr.bf16.mxu0 0
  %4173 = vmatpush2.bf16.xpose.msra.mxu0 0
  %4174 = vmatprep.subr.bf16.mxu0 0
  %4175 = vmatpush2.bf16.xpose.msra.mxu0 0
  %4176 = vmatprep.subr.bf16.mxu0 0
  %4177 = vmatpush2.bf16.xpose.msra.mxu0 0
  %4178 = vmatprep.subr.bf16.mxu0 0
  %4179 = vmatpush2.bf16.xpose.msra.mxu0 0
  %4180 = vmatprep.mubr.bf16.mxu0 0
  %4181 = vmatmul.mubr.bf16.gmra.mxu0 %v4146
  %v4182 = vpop.f32.mrf.mxu0
  %v4183 = vadd.f32 0.0, %v4182
  %v4184 = vpop.f32.mrf.mxu0
  %v4185 = vpop.f32.mrf.mxu0
  %v4186 = vpop.f32.mrf.mxu0
  %4187 = vdwg.mxu0
  %4188 = vmatprep.subr.bf16.mxu0 0
  %4189 = vmatpush1.bf16.xpose.msra.mxu0 0
  %4190 = vmatprep.subr.bf16.mxu0 0
  %4191 = vmatpush1.bf16.xpose.msra.mxu0 0
  %4192 = vmatprep.subr.bf16.mxu0 0
  %4193 = vmatpush1.bf16.xpose.msra.mxu0 0
  %4194 = vmatprep.subr.bf16.mxu0 0
  %4195 = vmatpush1.bf16.xpose.msra.mxu0 0
  %4196 = vmatprep.subr.bf16.mxu0 0
  %4197 = vmatpush1.bf16.xpose.msra.mxu0 0
  %4198 = vmatprep.subr.bf16.mxu0 0
  %4199 = vmatpush1.bf16.xpose.msra.mxu0 0
  %4200 = vmatprep.subr.bf16.mxu0 0
  %4201 = vmatpush1.bf16.xpose.msra.mxu0 0
  %4202 = vmatprep.subr.bf16.mxu0 0
  %4203 = vmatpush1.bf16.xpose.msra.mxu0 %v4145
  %4204 = vmatprep.subr.bf16.mxu0 0
  %4205 = vmatpush2.bf16.xpose.msra.mxu0 0
  %4206 = vmatprep.subr.bf16.mxu0 0
  %4207 = vmatpush2.bf16.xpose.msra.mxu0 0
  %4208 = vmatprep.subr.bf16.mxu0 0
  %4209 = vmatpush2.bf16.xpose.msra.mxu0 0
  %4210 = vmatprep.subr.bf16.mxu0 0
  %4211 = vmatpush2.bf16.xpose.msra.mxu0 0
  %4212 = vmatprep.subr.bf16.mxu0 0
  %4213 = vmatpush2.bf16.xpose.msra.mxu0 0
  %4214 = vmatprep.subr.bf16.mxu0 0
  %4215 = vmatpush2.bf16.xpose.msra.mxu0 0
  %4216 = vmatprep.subr.bf16.mxu0 0
  %4217 = vmatpush2.bf16.xpose.msra.mxu0 0
  %4218 = vmatprep.subr.bf16.mxu0 0
  %4219 = vmatpush2.bf16.xpose.msra.mxu0 0
  %4220 = vmatprep.mubr.bf16.mxu0 0
  %4221 = vmatmul.mubr.bf16.gmra.mxu0 %v4147
  %v4222 = vpop.f32.mrf.mxu0
  %v4223 = vadd.f32 0.0, %v4222
  %v4224 = vpop.f32.mrf.mxu0
  %v4225 = vpop.f32.mrf.mxu0
  %v4226 = vpop.f32.mrf.mxu0
  %4227 = vdwg.mxu0
  %v4228 = vsel %vm424, %v4183, -inf
  %4229 = vmax.xlane.f32.xlu0 %v4228
  %v4230 = vpop.xlane.xlu0 %4229
  %v4231 = vsel %vm424, %v4223, -inf
  %4232 = vmax.xlane.f32.xlu0 %v4231
  %v4233 = vpop.xlane.xlu0 %4232
  %v4234 = vsub.f32 %v4183, %v4230
  %v4235 = vsub.f32 %v4223, %v4233
  %v4236 = vmul.f32 %v4234, 1.442695
  %v4237 = vpow.pop %v4236
  %v4238 = vmul.f32 %v4235, 1.442695
  %v4239 = vpow.pop %v4238
  %v4240 = vsel %vm424, %v4237, 0.0
  %4241 = vadd.xlane.f32.xlu0 %v4240
  %v4242 = vpop.xlane.xlu0 %4241
  %v4243 = vsel %vm424, %v4239, 0.0
  %4244 = vadd.xlane.f32.xlu0 %v4243
  %v4245 = vpop.xlane.xlu0 %4244
  %v4246 = vrcp.pop %v4242
  %v4247 = vrcp.pop %v4245
  %v4248 = vmul.f32 %v4237, %v4246
  %v4249 = vmul.f32 %v4239, %v4247
  %v4250 = vpack.c.bf16 %v4248, %v4248
  %v4251 = vpack.c.bf16 %v4249, %v4249
  %v4252 = vmul.bf16 %v4144, %v58
  %v4253 = vmul.bf16 %v4145, %v58
  %v4254 = vmul.bf16 %v4032, %v41
  %v4255 = vmul.bf16 %v4033, %v41
  %4256 = vmatprep.subr.bf16.mxu0 0
  %4257 = vmatpush1.bf16.xpose.msra.mxu0 0
  %4258 = vmatprep.subr.bf16.mxu0 0
  %4259 = vmatpush1.bf16.xpose.msra.mxu0 0
  %4260 = vmatprep.subr.bf16.mxu0 0
  %4261 = vmatpush1.bf16.xpose.msra.mxu0 0
  %4262 = vmatprep.subr.bf16.mxu0 0
  %4263 = vmatpush1.bf16.xpose.msra.mxu0 0
  %4264 = vmatprep.subr.bf16.mxu0 0
  %4265 = vmatpush1.bf16.xpose.msra.mxu0 0
  %4266 = vmatprep.subr.bf16.mxu0 0
  %4267 = vmatpush1.bf16.xpose.msra.mxu0 0
  %4268 = vmatprep.subr.bf16.mxu0 0
  %4269 = vmatpush1.bf16.xpose.msra.mxu0 0
  %4270 = vmatprep.subr.bf16.mxu0 0
  %4271 = vmatpush1.bf16.xpose.msra.mxu0 %v4144
  %4272 = vmatprep.subr.bf16.mxu0 0
  %4273 = vmatpush2.bf16.xpose.msra.mxu0 0
  %4274 = vmatprep.subr.bf16.mxu0 0
  %4275 = vmatpush2.bf16.xpose.msra.mxu0 0
  %4276 = vmatprep.subr.bf16.mxu0 0
  %4277 = vmatpush2.bf16.xpose.msra.mxu0 0
  %4278 = vmatprep.subr.bf16.mxu0 0
  %4279 = vmatpush2.bf16.xpose.msra.mxu0 0
  %4280 = vmatprep.subr.bf16.mxu0 0
  %4281 = vmatpush2.bf16.xpose.msra.mxu0 0
  %4282 = vmatprep.subr.bf16.mxu0 0
  %4283 = vmatpush2.bf16.xpose.msra.mxu0 0
  %4284 = vmatprep.subr.bf16.mxu0 0
  %4285 = vmatpush2.bf16.xpose.msra.mxu0 0
  %4286 = vmatprep.subr.bf16.mxu0 0
  %4287 = vmatpush2.bf16.xpose.msra.mxu0 0
  %4288 = vmatprep.mubr.bf16.mxu0 0
  %4289 = vmatmul.mubr.bf16.gmra.mxu0 %v4254
  %v4290 = vpop.f32.mrf.mxu0
  %v4291 = vadd.f32 0.0, %v4290
  %v4292 = vpop.f32.mrf.mxu0
  %v4293 = vpop.f32.mrf.mxu0
  %v4294 = vpop.f32.mrf.mxu0
  %4295 = vdwg.mxu0
  %4296 = vmatprep.subr.bf16.mxu0 0
  %4297 = vmatpush1.bf16.xpose.msra.mxu0 0
  %4298 = vmatprep.subr.bf16.mxu0 0
  %4299 = vmatpush1.bf16.xpose.msra.mxu0 0
  %4300 = vmatprep.subr.bf16.mxu0 0
  %4301 = vmatpush1.bf16.xpose.msra.mxu0 0
  %4302 = vmatprep.subr.bf16.mxu0 0
  %4303 = vmatpush1.bf16.xpose.msra.mxu0 0
  %4304 = vmatprep.subr.bf16.mxu0 0
  %4305 = vmatpush1.bf16.xpose.msra.mxu0 0
  %4306 = vmatprep.subr.bf16.mxu0 0
  %4307 = vmatpush1.bf16.xpose.msra.mxu0 0
  %4308 = vmatprep.subr.bf16.mxu0 0
  %4309 = vmatpush1.bf16.xpose.msra.mxu0 0
  %4310 = vmatprep.subr.bf16.mxu0 0
  %4311 = vmatpush1.bf16.xpose.msra.mxu0 %v4145
  %4312 = vmatprep.subr.bf16.mxu0 0
  %4313 = vmatpush2.bf16.xpose.msra.mxu0 0
  %4314 = vmatprep.subr.bf16.mxu0 0
  %4315 = vmatpush2.bf16.xpose.msra.mxu0 0
  %4316 = vmatprep.subr.bf16.mxu0 0
  %4317 = vmatpush2.bf16.xpose.msra.mxu0 0
  %4318 = vmatprep.subr.bf16.mxu0 0
  %4319 = vmatpush2.bf16.xpose.msra.mxu0 0
  %4320 = vmatprep.subr.bf16.mxu0 0
  %4321 = vmatpush2.bf16.xpose.msra.mxu0 0
  %4322 = vmatprep.subr.bf16.mxu0 0
  %4323 = vmatpush2.bf16.xpose.msra.mxu0 0
  %4324 = vmatprep.subr.bf16.mxu0 0
  %4325 = vmatpush2.bf16.xpose.msra.mxu0 0
  %4326 = vmatprep.subr.bf16.mxu0 0
  %4327 = vmatpush2.bf16.xpose.msra.mxu0 0
  %4328 = vmatprep.mubr.bf16.mxu0 0
  %4329 = vmatmul.mubr.bf16.gmra.mxu0 %v4255
  %v4330 = vpop.f32.mrf.mxu0
  %v4331 = vadd.f32 0.0, %v4330
  %v4332 = vpop.f32.mrf.mxu0
  %v4333 = vpop.f32.mrf.mxu0
  %v4334 = vpop.f32.mrf.mxu0
  %4335 = vdwg.mxu0
  %v4336 = vsel %vm424, %v4291, -inf
  %4337 = vmax.xlane.f32.xlu0 %v4336
  %v4338 = vpop.xlane.xlu0 %4337
  %v4339 = vsel %vm424, %v4331, -inf
  %4340 = vmax.xlane.f32.xlu0 %v4339
  %v4341 = vpop.xlane.xlu0 %4340
  %v4342 = vsub.f32 %v4291, %v4338
  %v4343 = vsub.f32 %v4331, %v4341
  %v4344 = vmul.f32 %v4342, 1.442695
  %v4345 = vpow.pop %v4344
  %v4346 = vmul.f32 %v4343, 1.442695
  %v4347 = vpow.pop %v4346
  %v4348 = vsel %vm424, %v4345, 0.0
  %4349 = vadd.xlane.f32.xlu0 %v4348
  %v4350 = vpop.xlane.xlu0 %4349
  %v4351 = vsel %vm424, %v4347, 0.0
  %4352 = vadd.xlane.f32.xlu0 %v4351
  %v4353 = vpop.xlane.xlu0 %4352
  %v4354 = vrcp.pop %v4350
  %v4355 = vrcp.pop %v4353
  %v4356 = vmul.f32 %v4345, %v4354
  %v4357 = vmul.f32 %v4347, %v4355
  %v4358 = vpack.c.bf16 %v4356, %v4356
  %v4359 = vpack.c.bf16 %v4357, %v4357
  %v4360 = vmul.bf16 %v4144, %v64
  %v4361 = vmul.bf16 %v4145, %v64
  %v4363 = vsel %vm424, %v4358, 0
  %v4366 = vsel %vm562, %v4360, 0
  %4368 = vmatprep.subr.bf16.mxu0 0
  %4369 = vmatpush1.bf16.msra.mxu0 0
  %4370 = vmatprep.subr.bf16.mxu0 0
  %4371 = vmatpush1.bf16.msra.mxu0 0
  %4372 = vmatprep.subr.bf16.mxu0 0
  %4373 = vmatpush1.bf16.msra.mxu0 0
  %4374 = vmatprep.subr.bf16.mxu0 0
  %4375 = vmatpush1.bf16.msra.mxu0 0
  %4376 = vmatprep.subr.bf16.mxu0 0
  %4377 = vmatpush1.bf16.msra.mxu0 0
  %4378 = vmatprep.subr.bf16.mxu0 0
  %4379 = vmatpush1.bf16.msra.mxu0 0
  %4380 = vmatprep.subr.bf16.mxu0 0
  %4381 = vmatpush1.bf16.msra.mxu0 0
  %4382 = vmatprep.subr.bf16.mxu0 0
  %4383 = vmatpush1.bf16.msra.mxu0 %v4366
  %4384 = vmatprep.subr.bf16.mxu0 0
  %4385 = vmatpush2.bf16.msra.mxu0 0
  %4386 = vmatprep.subr.bf16.mxu0 0
  %4387 = vmatpush2.bf16.msra.mxu0 0
  %4388 = vmatprep.subr.bf16.mxu0 0
  %4389 = vmatpush2.bf16.msra.mxu0 0
  %4390 = vmatprep.subr.bf16.mxu0 0
  %4391 = vmatpush2.bf16.msra.mxu0 0
  %4392 = vmatprep.subr.bf16.mxu0 0
  %4393 = vmatpush2.bf16.msra.mxu0 0
  %4394 = vmatprep.subr.bf16.mxu0 0
  %4395 = vmatpush2.bf16.msra.mxu0 0
  %4396 = vmatprep.subr.bf16.mxu0 0
  %4397 = vmatpush2.bf16.msra.mxu0 0
  %4398 = vmatprep.subr.bf16.mxu0 0
  %4399 = vmatpush2.bf16.msra.mxu0 0
  %4400 = vmatprep.mubr.bf16.mxu0 0
  %4401 = vmatmul.mubr.bf16.gmra.mxu0 %v4363
  %v4402 = vpop.f32.mrf.mxu0
  %v4403 = vadd.f32 0.0, %v4402
  %v4404 = vpop.f32.mrf.mxu0
  %v4405 = vpop.f32.mrf.mxu0
  %v4406 = vpop.f32.mrf.mxu0
  %4407 = vdwg.mxu0
  %v4409 = vsel %vm424, %v4359, 0
  %v4412 = vsel %vm562, %v4361, 0
  %4414 = vmatprep.subr.bf16.mxu0 0
  %4415 = vmatpush1.bf16.msra.mxu0 0
  %4416 = vmatprep.subr.bf16.mxu0 0
  %4417 = vmatpush1.bf16.msra.mxu0 0
  %4418 = vmatprep.subr.bf16.mxu0 0
  %4419 = vmatpush1.bf16.msra.mxu0 0
  %4420 = vmatprep.subr.bf16.mxu0 0
  %4421 = vmatpush1.bf16.msra.mxu0 0
  %4422 = vmatprep.subr.bf16.mxu0 0
  %4423 = vmatpush1.bf16.msra.mxu0 0
  %4424 = vmatprep.subr.bf16.mxu0 0
  %4425 = vmatpush1.bf16.msra.mxu0 0
  %4426 = vmatprep.subr.bf16.mxu0 0
  %4427 = vmatpush1.bf16.msra.mxu0 0
  %4428 = vmatprep.subr.bf16.mxu0 0
  %4429 = vmatpush1.bf16.msra.mxu0 %v4412
  %4430 = vmatprep.subr.bf16.mxu0 0
  %4431 = vmatpush2.bf16.msra.mxu0 0
  %4432 = vmatprep.subr.bf16.mxu0 0
  %4433 = vmatpush2.bf16.msra.mxu0 0
  %4434 = vmatprep.subr.bf16.mxu0 0
  %4435 = vmatpush2.bf16.msra.mxu0 0
  %4436 = vmatprep.subr.bf16.mxu0 0
  %4437 = vmatpush2.bf16.msra.mxu0 0
  %4438 = vmatprep.subr.bf16.mxu0 0
  %4439 = vmatpush2.bf16.msra.mxu0 0
  %4440 = vmatprep.subr.bf16.mxu0 0
  %4441 = vmatpush2.bf16.msra.mxu0 0
  %4442 = vmatprep.subr.bf16.mxu0 0
  %4443 = vmatpush2.bf16.msra.mxu0 0
  %4444 = vmatprep.subr.bf16.mxu0 0
  %4445 = vmatpush2.bf16.msra.mxu0 0
  %4446 = vmatprep.mubr.bf16.mxu0 0
  %4447 = vmatmul.mubr.bf16.gmra.mxu0 %v4409
  %v4448 = vpop.f32.mrf.mxu0
  %v4449 = vadd.f32 0.0, %v4448
  %v4450 = vpop.f32.mrf.mxu0
  %v4451 = vpop.f32.mrf.mxu0
  %v4452 = vpop.f32.mrf.mxu0
  %4453 = vdwg.mxu0
  %v4455 = vsel %vm424, %v4250, 0
  %v4458 = vsel %vm562, %v4252, 0
  %4460 = vmatprep.subr.bf16.mxu0 0
  %4461 = vmatpush1.bf16.msra.mxu0 0
  %4462 = vmatprep.subr.bf16.mxu0 0
  %4463 = vmatpush1.bf16.msra.mxu0 0
  %4464 = vmatprep.subr.bf16.mxu0 0
  %4465 = vmatpush1.bf16.msra.mxu0 0
  %4466 = vmatprep.subr.bf16.mxu0 0
  %4467 = vmatpush1.bf16.msra.mxu0 0
  %4468 = vmatprep.subr.bf16.mxu0 0
  %4469 = vmatpush1.bf16.msra.mxu0 0
  %4470 = vmatprep.subr.bf16.mxu0 0
  %4471 = vmatpush1.bf16.msra.mxu0 0
  %4472 = vmatprep.subr.bf16.mxu0 0
  %4473 = vmatpush1.bf16.msra.mxu0 0
  %4474 = vmatprep.subr.bf16.mxu0 0
  %4475 = vmatpush1.bf16.msra.mxu0 %v4458
  %4476 = vmatprep.subr.bf16.mxu0 0
  %4477 = vmatpush2.bf16.msra.mxu0 0
  %4478 = vmatprep.subr.bf16.mxu0 0
  %4479 = vmatpush2.bf16.msra.mxu0 0
  %4480 = vmatprep.subr.bf16.mxu0 0
  %4481 = vmatpush2.bf16.msra.mxu0 0
  %4482 = vmatprep.subr.bf16.mxu0 0
  %4483 = vmatpush2.bf16.msra.mxu0 0
  %4484 = vmatprep.subr.bf16.mxu0 0
  %4485 = vmatpush2.bf16.msra.mxu0 0
  %4486 = vmatprep.subr.bf16.mxu0 0
  %4487 = vmatpush2.bf16.msra.mxu0 0
  %4488 = vmatprep.subr.bf16.mxu0 0
  %4489 = vmatpush2.bf16.msra.mxu0 0
  %4490 = vmatprep.subr.bf16.mxu0 0
  %4491 = vmatpush2.bf16.msra.mxu0 0
  %4492 = vmatprep.mubr.bf16.mxu0 0
  %4493 = vmatmul.mubr.bf16.gmra.mxu0 %v4455
  %v4494 = vpop.f32.mrf.mxu0
  %v4495 = vadd.f32 %v4403, %v4494
  %v4496 = vpop.f32.mrf.mxu0
  %v4497 = vpop.f32.mrf.mxu0
  %v4498 = vpop.f32.mrf.mxu0
  %4499 = vdwg.mxu0
  %v4501 = vsel %vm424, %v4251, 0
  %v4504 = vsel %vm562, %v4253, 0
  %4506 = vmatprep.subr.bf16.mxu0 0
  %4507 = vmatpush1.bf16.msra.mxu0 0
  %4508 = vmatprep.subr.bf16.mxu0 0
  %4509 = vmatpush1.bf16.msra.mxu0 0
  %4510 = vmatprep.subr.bf16.mxu0 0
  %4511 = vmatpush1.bf16.msra.mxu0 0
  %4512 = vmatprep.subr.bf16.mxu0 0
  %4513 = vmatpush1.bf16.msra.mxu0 0
  %4514 = vmatprep.subr.bf16.mxu0 0
  %4515 = vmatpush1.bf16.msra.mxu0 0
  %4516 = vmatprep.subr.bf16.mxu0 0
  %4517 = vmatpush1.bf16.msra.mxu0 0
  %4518 = vmatprep.subr.bf16.mxu0 0
  %4519 = vmatpush1.bf16.msra.mxu0 0
  %4520 = vmatprep.subr.bf16.mxu0 0
  %4521 = vmatpush1.bf16.msra.mxu0 %v4504
  %4522 = vmatprep.subr.bf16.mxu0 0
  %4523 = vmatpush2.bf16.msra.mxu0 0
  %4524 = vmatprep.subr.bf16.mxu0 0
  %4525 = vmatpush2.bf16.msra.mxu0 0
  %4526 = vmatprep.subr.bf16.mxu0 0
  %4527 = vmatpush2.bf16.msra.mxu0 0
  %4528 = vmatprep.subr.bf16.mxu0 0
  %4529 = vmatpush2.bf16.msra.mxu0 0
  %4530 = vmatprep.subr.bf16.mxu0 0
  %4531 = vmatpush2.bf16.msra.mxu0 0
  %4532 = vmatprep.subr.bf16.mxu0 0
  %4533 = vmatpush2.bf16.msra.mxu0 0
  %4534 = vmatprep.subr.bf16.mxu0 0
  %4535 = vmatpush2.bf16.msra.mxu0 0
  %4536 = vmatprep.subr.bf16.mxu0 0
  %4537 = vmatpush2.bf16.msra.mxu0 0
  %4538 = vmatprep.mubr.bf16.mxu0 0
  %4539 = vmatmul.mubr.bf16.gmra.mxu0 %v4501
  %v4540 = vpop.f32.mrf.mxu0
  %v4541 = vadd.f32 %v4449, %v4540
  %v4542 = vpop.f32.mrf.mxu0
  %v4543 = vpop.f32.mrf.mxu0
  %v4544 = vpop.f32.mrf.mxu0
  %4545 = vdwg.mxu0
  %v4546 = vmul.bf16 %v4032, %v47
  %v4547 = vmul.bf16 %v4033, %v47
  %4548 = vmatprep.subr.bf16.mxu0 0
  %4549 = vmatpush1.bf16.xpose.msra.mxu0 0
  %4550 = vmatprep.subr.bf16.mxu0 0
  %4551 = vmatpush1.bf16.xpose.msra.mxu0 0
  %4552 = vmatprep.subr.bf16.mxu0 0
  %4553 = vmatpush1.bf16.xpose.msra.mxu0 0
  %4554 = vmatprep.subr.bf16.mxu0 0
  %4555 = vmatpush1.bf16.xpose.msra.mxu0 0
  %4556 = vmatprep.subr.bf16.mxu0 0
  %4557 = vmatpush1.bf16.xpose.msra.mxu0 0
  %4558 = vmatprep.subr.bf16.mxu0 0
  %4559 = vmatpush1.bf16.xpose.msra.mxu0 0
  %4560 = vmatprep.subr.bf16.mxu0 0
  %4561 = vmatpush1.bf16.xpose.msra.mxu0 0
  %4562 = vmatprep.subr.bf16.mxu0 0
  %4563 = vmatpush1.bf16.xpose.msra.mxu0 %v4144
  %4564 = vmatprep.subr.bf16.mxu0 0
  %4565 = vmatpush2.bf16.xpose.msra.mxu0 0
  %4566 = vmatprep.subr.bf16.mxu0 0
  %4567 = vmatpush2.bf16.xpose.msra.mxu0 0
  %4568 = vmatprep.subr.bf16.mxu0 0
  %4569 = vmatpush2.bf16.xpose.msra.mxu0 0
  %4570 = vmatprep.subr.bf16.mxu0 0
  %4571 = vmatpush2.bf16.xpose.msra.mxu0 0
  %4572 = vmatprep.subr.bf16.mxu0 0
  %4573 = vmatpush2.bf16.xpose.msra.mxu0 0
  %4574 = vmatprep.subr.bf16.mxu0 0
  %4575 = vmatpush2.bf16.xpose.msra.mxu0 0
  %4576 = vmatprep.subr.bf16.mxu0 0
  %4577 = vmatpush2.bf16.xpose.msra.mxu0 0
  %4578 = vmatprep.subr.bf16.mxu0 0
  %4579 = vmatpush2.bf16.xpose.msra.mxu0 0
  %4580 = vmatprep.mubr.bf16.mxu0 0
  %4581 = vmatmul.mubr.bf16.gmra.mxu0 %v4546
  %v4582 = vpop.f32.mrf.mxu0
  %v4583 = vadd.f32 0.0, %v4582
  %v4584 = vpop.f32.mrf.mxu0
  %v4585 = vpop.f32.mrf.mxu0
  %v4586 = vpop.f32.mrf.mxu0
  %4587 = vdwg.mxu0
  %4588 = vmatprep.subr.bf16.mxu0 0
  %4589 = vmatpush1.bf16.xpose.msra.mxu0 0
  %4590 = vmatprep.subr.bf16.mxu0 0
  %4591 = vmatpush1.bf16.xpose.msra.mxu0 0
  %4592 = vmatprep.subr.bf16.mxu0 0
  %4593 = vmatpush1.bf16.xpose.msra.mxu0 0
  %4594 = vmatprep.subr.bf16.mxu0 0
  %4595 = vmatpush1.bf16.xpose.msra.mxu0 0
  %4596 = vmatprep.subr.bf16.mxu0 0
  %4597 = vmatpush1.bf16.xpose.msra.mxu0 0
  %4598 = vmatprep.subr.bf16.mxu0 0
  %4599 = vmatpush1.bf16.xpose.msra.mxu0 0
  %4600 = vmatprep.subr.bf16.mxu0 0
  %4601 = vmatpush1.bf16.xpose.msra.mxu0 0
  %4602 = vmatprep.subr.bf16.mxu0 0
  %4603 = vmatpush1.bf16.xpose.msra.mxu0 %v4145
  %4604 = vmatprep.subr.bf16.mxu0 0
  %4605 = vmatpush2.bf16.xpose.msra.mxu0 0
  %4606 = vmatprep.subr.bf16.mxu0 0
  %4607 = vmatpush2.bf16.xpose.msra.mxu0 0
  %4608 = vmatprep.subr.bf16.mxu0 0
  %4609 = vmatpush2.bf16.xpose.msra.mxu0 0
  %4610 = vmatprep.subr.bf16.mxu0 0
  %4611 = vmatpush2.bf16.xpose.msra.mxu0 0
  %4612 = vmatprep.subr.bf16.mxu0 0
  %4613 = vmatpush2.bf16.xpose.msra.mxu0 0
  %4614 = vmatprep.subr.bf16.mxu0 0
  %4615 = vmatpush2.bf16.xpose.msra.mxu0 0
  %4616 = vmatprep.subr.bf16.mxu0 0
  %4617 = vmatpush2.bf16.xpose.msra.mxu0 0
  %4618 = vmatprep.subr.bf16.mxu0 0
  %4619 = vmatpush2.bf16.xpose.msra.mxu0 0
  %4620 = vmatprep.mubr.bf16.mxu0 0
  %4621 = vmatmul.mubr.bf16.gmra.mxu0 %v4547
  %v4622 = vpop.f32.mrf.mxu0
  %v4623 = vadd.f32 0.0, %v4622
  %v4624 = vpop.f32.mrf.mxu0
  %v4625 = vpop.f32.mrf.mxu0
  %v4626 = vpop.f32.mrf.mxu0
  %4627 = vdwg.mxu0
  %v4628 = vsel %vm424, %v4583, -inf
  %4629 = vmax.xlane.f32.xlu0 %v4628
  %v4630 = vpop.xlane.xlu0 %4629
  %v4631 = vsel %vm424, %v4623, -inf
  %4632 = vmax.xlane.f32.xlu0 %v4631
  %v4633 = vpop.xlane.xlu0 %4632
  %v4634 = vsub.f32 %v4583, %v4630
  %v4635 = vsub.f32 %v4623, %v4633
  %v4636 = vmul.f32 %v4634, 1.442695
  %v4637 = vpow.pop %v4636
  %v4638 = vmul.f32 %v4635, 1.442695
  %v4639 = vpow.pop %v4638
  %v4640 = vsel %vm424, %v4637, 0.0
  %4641 = vadd.xlane.f32.xlu0 %v4640
  %v4642 = vpop.xlane.xlu0 %4641
  %v4643 = vsel %vm424, %v4639, 0.0
  %4644 = vadd.xlane.f32.xlu0 %v4643
  %v4645 = vpop.xlane.xlu0 %4644
  %v4646 = vrcp.pop %v4642
  %v4647 = vrcp.pop %v4645
  %v4648 = vmul.f32 %v4637, %v4646
  %v4649 = vmul.f32 %v4639, %v4647
  %v4650 = vpack.c.bf16 %v4648, %v4648
  %v4651 = vpack.c.bf16 %v4649, %v4649
  %v4652 = vmul.bf16 %v4144, %v70
  %v4653 = vmul.bf16 %v4145, %v70
  %v4655 = vsel %vm424, %v4650, 0
  %v4658 = vsel %vm562, %v4652, 0
  %4660 = vmatprep.subr.bf16.mxu0 0
  %4661 = vmatpush1.bf16.msra.mxu0 0
  %4662 = vmatprep.subr.bf16.mxu0 0
  %4663 = vmatpush1.bf16.msra.mxu0 0
  %4664 = vmatprep.subr.bf16.mxu0 0
  %4665 = vmatpush1.bf16.msra.mxu0 0
  %4666 = vmatprep.subr.bf16.mxu0 0
  %4667 = vmatpush1.bf16.msra.mxu0 0
  %4668 = vmatprep.subr.bf16.mxu0 0
  %4669 = vmatpush1.bf16.msra.mxu0 0
  %4670 = vmatprep.subr.bf16.mxu0 0
  %4671 = vmatpush1.bf16.msra.mxu0 0
  %4672 = vmatprep.subr.bf16.mxu0 0
  %4673 = vmatpush1.bf16.msra.mxu0 0
  %4674 = vmatprep.subr.bf16.mxu0 0
  %4675 = vmatpush1.bf16.msra.mxu0 %v4658
  %4676 = vmatprep.subr.bf16.mxu0 0
  %4677 = vmatpush2.bf16.msra.mxu0 0
  %4678 = vmatprep.subr.bf16.mxu0 0
  %4679 = vmatpush2.bf16.msra.mxu0 0
  %4680 = vmatprep.subr.bf16.mxu0 0
  %4681 = vmatpush2.bf16.msra.mxu0 0
  %4682 = vmatprep.subr.bf16.mxu0 0
  %4683 = vmatpush2.bf16.msra.mxu0 0
  %4684 = vmatprep.subr.bf16.mxu0 0
  %4685 = vmatpush2.bf16.msra.mxu0 0
  %4686 = vmatprep.subr.bf16.mxu0 0
  %4687 = vmatpush2.bf16.msra.mxu0 0
  %4688 = vmatprep.subr.bf16.mxu0 0
  %4689 = vmatpush2.bf16.msra.mxu0 0
  %4690 = vmatprep.subr.bf16.mxu0 0
  %4691 = vmatpush2.bf16.msra.mxu0 0
  %4692 = vmatprep.mubr.bf16.mxu0 0
  %4693 = vmatmul.mubr.bf16.gmra.mxu0 %v4655
  %v4694 = vpop.f32.mrf.mxu0
  %v4695 = vadd.f32 0.0, %v4694
  %v4696 = vpop.f32.mrf.mxu0
  %v4697 = vpop.f32.mrf.mxu0
  %v4698 = vpop.f32.mrf.mxu0
  %4699 = vdwg.mxu0
  %v4701 = vsel %vm424, %v4651, 0
  %v4704 = vsel %vm562, %v4653, 0
  %4706 = vmatprep.subr.bf16.mxu0 0
  %4707 = vmatpush1.bf16.msra.mxu0 0
  %4708 = vmatprep.subr.bf16.mxu0 0
  %4709 = vmatpush1.bf16.msra.mxu0 0
  %4710 = vmatprep.subr.bf16.mxu0 0
  %4711 = vmatpush1.bf16.msra.mxu0 0
  %4712 = vmatprep.subr.bf16.mxu0 0
  %4713 = vmatpush1.bf16.msra.mxu0 0
  %4714 = vmatprep.subr.bf16.mxu0 0
  %4715 = vmatpush1.bf16.msra.mxu0 0
  %4716 = vmatprep.subr.bf16.mxu0 0
  %4717 = vmatpush1.bf16.msra.mxu0 0
  %4718 = vmatprep.subr.bf16.mxu0 0
  %4719 = vmatpush1.bf16.msra.mxu0 0
  %4720 = vmatprep.subr.bf16.mxu0 0
  %4721 = vmatpush1.bf16.msra.mxu0 %v4704
  %4722 = vmatprep.subr.bf16.mxu0 0
  %4723 = vmatpush2.bf16.msra.mxu0 0
  %4724 = vmatprep.subr.bf16.mxu0 0
  %4725 = vmatpush2.bf16.msra.mxu0 0
  %4726 = vmatprep.subr.bf16.mxu0 0
  %4727 = vmatpush2.bf16.msra.mxu0 0
  %4728 = vmatprep.subr.bf16.mxu0 0
  %4729 = vmatpush2.bf16.msra.mxu0 0
  %4730 = vmatprep.subr.bf16.mxu0 0
  %4731 = vmatpush2.bf16.msra.mxu0 0
  %4732 = vmatprep.subr.bf16.mxu0 0
  %4733 = vmatpush2.bf16.msra.mxu0 0
  %4734 = vmatprep.subr.bf16.mxu0 0
  %4735 = vmatpush2.bf16.msra.mxu0 0
  %4736 = vmatprep.subr.bf16.mxu0 0
  %4737 = vmatpush2.bf16.msra.mxu0 0
  %4738 = vmatprep.mubr.bf16.mxu0 0
  %4739 = vmatmul.mubr.bf16.gmra.mxu0 %v4701
  %v4740 = vpop.f32.mrf.mxu0
  %v4741 = vadd.f32 0.0, %v4740
  %v4742 = vpop.f32.mrf.mxu0
  %v4743 = vpop.f32.mrf.mxu0
  %v4744 = vpop.f32.mrf.mxu0
  %4745 = vdwg.mxu0
  %v4746 = vadd.f32 %v4495, %v4695
  %v4747 = vadd.f32 %v4541, %v4741
  %v4748 = vmul.bf16 %v4032, %v52
  %v4749 = vmul.bf16 %v4033, %v52
  %4750 = vmatprep.subr.bf16.mxu0 0
  %4751 = vmatpush1.bf16.xpose.msra.mxu0 0
  %4752 = vmatprep.subr.bf16.mxu0 0
  %4753 = vmatpush1.bf16.xpose.msra.mxu0 0
  %4754 = vmatprep.subr.bf16.mxu0 0
  %4755 = vmatpush1.bf16.xpose.msra.mxu0 0
  %4756 = vmatprep.subr.bf16.mxu0 0
  %4757 = vmatpush1.bf16.xpose.msra.mxu0 0
  %4758 = vmatprep.subr.bf16.mxu0 0
  %4759 = vmatpush1.bf16.xpose.msra.mxu0 0
  %4760 = vmatprep.subr.bf16.mxu0 0
  %4761 = vmatpush1.bf16.xpose.msra.mxu0 0
  %4762 = vmatprep.subr.bf16.mxu0 0
  %4763 = vmatpush1.bf16.xpose.msra.mxu0 0
  %4764 = vmatprep.subr.bf16.mxu0 0
  %4765 = vmatpush1.bf16.xpose.msra.mxu0 %v4144
  %4766 = vmatprep.subr.bf16.mxu0 0
  %4767 = vmatpush2.bf16.xpose.msra.mxu0 0
  %4768 = vmatprep.subr.bf16.mxu0 0
  %4769 = vmatpush2.bf16.xpose.msra.mxu0 0
  %4770 = vmatprep.subr.bf16.mxu0 0
  %4771 = vmatpush2.bf16.xpose.msra.mxu0 0
  %4772 = vmatprep.subr.bf16.mxu0 0
  %4773 = vmatpush2.bf16.xpose.msra.mxu0 0
  %4774 = vmatprep.subr.bf16.mxu0 0
  %4775 = vmatpush2.bf16.xpose.msra.mxu0 0
  %4776 = vmatprep.subr.bf16.mxu0 0
  %4777 = vmatpush2.bf16.xpose.msra.mxu0 0
  %4778 = vmatprep.subr.bf16.mxu0 0
  %4779 = vmatpush2.bf16.xpose.msra.mxu0 0
  %4780 = vmatprep.subr.bf16.mxu0 0
  %4781 = vmatpush2.bf16.xpose.msra.mxu0 0
  %4782 = vmatprep.mubr.bf16.mxu0 0
  %4783 = vmatmul.mubr.bf16.gmra.mxu0 %v4748
  %v4784 = vpop.f32.mrf.mxu0
  %v4785 = vadd.f32 0.0, %v4784
  %v4786 = vpop.f32.mrf.mxu0
  %v4787 = vpop.f32.mrf.mxu0
  %v4788 = vpop.f32.mrf.mxu0
  %4789 = vdwg.mxu0
  %4790 = vmatprep.subr.bf16.mxu0 0
  %4791 = vmatpush1.bf16.xpose.msra.mxu0 0
  %4792 = vmatprep.subr.bf16.mxu0 0
  %4793 = vmatpush1.bf16.xpose.msra.mxu0 0
  %4794 = vmatprep.subr.bf16.mxu0 0
  %4795 = vmatpush1.bf16.xpose.msra.mxu0 0
  %4796 = vmatprep.subr.bf16.mxu0 0
  %4797 = vmatpush1.bf16.xpose.msra.mxu0 0
  %4798 = vmatprep.subr.bf16.mxu0 0
  %4799 = vmatpush1.bf16.xpose.msra.mxu0 0
  %4800 = vmatprep.subr.bf16.mxu0 0
  %4801 = vmatpush1.bf16.xpose.msra.mxu0 0
  %4802 = vmatprep.subr.bf16.mxu0 0
  %4803 = vmatpush1.bf16.xpose.msra.mxu0 0
  %4804 = vmatprep.subr.bf16.mxu0 0
  %4805 = vmatpush1.bf16.xpose.msra.mxu0 %v4145
  %4806 = vmatprep.subr.bf16.mxu0 0
  %4807 = vmatpush2.bf16.xpose.msra.mxu0 0
  %4808 = vmatprep.subr.bf16.mxu0 0
  %4809 = vmatpush2.bf16.xpose.msra.mxu0 0
  %4810 = vmatprep.subr.bf16.mxu0 0
  %4811 = vmatpush2.bf16.xpose.msra.mxu0 0
  %4812 = vmatprep.subr.bf16.mxu0 0
  %4813 = vmatpush2.bf16.xpose.msra.mxu0 0
  %4814 = vmatprep.subr.bf16.mxu0 0
  %4815 = vmatpush2.bf16.xpose.msra.mxu0 0
  %4816 = vmatprep.subr.bf16.mxu0 0
  %4817 = vmatpush2.bf16.xpose.msra.mxu0 0
  %4818 = vmatprep.subr.bf16.mxu0 0
  %4819 = vmatpush2.bf16.xpose.msra.mxu0 0
  %4820 = vmatprep.subr.bf16.mxu0 0
  %4821 = vmatpush2.bf16.xpose.msra.mxu0 0
  %4822 = vmatprep.mubr.bf16.mxu0 0
  %4823 = vmatmul.mubr.bf16.gmra.mxu0 %v4749
  %v4824 = vpop.f32.mrf.mxu0
  %v4825 = vadd.f32 0.0, %v4824
  %v4826 = vpop.f32.mrf.mxu0
  %v4827 = vpop.f32.mrf.mxu0
  %v4828 = vpop.f32.mrf.mxu0
  %4829 = vdwg.mxu0
  %v4830 = vsel %vm424, %v4785, -inf
  %4831 = vmax.xlane.f32.xlu0 %v4830
  %v4832 = vpop.xlane.xlu0 %4831
  %v4833 = vsel %vm424, %v4825, -inf
  %4834 = vmax.xlane.f32.xlu0 %v4833
  %v4835 = vpop.xlane.xlu0 %4834
  %v4836 = vsub.f32 %v4785, %v4832
  %v4837 = vsub.f32 %v4825, %v4835
  %v4838 = vmul.f32 %v4836, 1.442695
  %v4839 = vpow.pop %v4838
  %v4840 = vmul.f32 %v4837, 1.442695
  %v4841 = vpow.pop %v4840
  %v4842 = vsel %vm424, %v4839, 0.0
  %4843 = vadd.xlane.f32.xlu0 %v4842
  %v4844 = vpop.xlane.xlu0 %4843
  %v4845 = vsel %vm424, %v4841, 0.0
  %4846 = vadd.xlane.f32.xlu0 %v4845
  %v4847 = vpop.xlane.xlu0 %4846
  %v4848 = vrcp.pop %v4844
  %v4849 = vrcp.pop %v4847
  %v4850 = vmul.f32 %v4839, %v4848
  %v4851 = vmul.f32 %v4841, %v4849
  %v4852 = vpack.c.bf16 %v4850, %v4850
  %v4853 = vpack.c.bf16 %v4851, %v4851
  %v4854 = vmul.bf16 %v4144, %v76
  %v4855 = vmul.bf16 %v4145, %v76
  %v4857 = vsel %vm424, %v4852, 0
  %v4860 = vsel %vm562, %v4854, 0
  %4862 = vmatprep.subr.bf16.mxu0 0
  %4863 = vmatpush1.bf16.msra.mxu0 0
  %4864 = vmatprep.subr.bf16.mxu0 0
  %4865 = vmatpush1.bf16.msra.mxu0 0
  %4866 = vmatprep.subr.bf16.mxu0 0
  %4867 = vmatpush1.bf16.msra.mxu0 0
  %4868 = vmatprep.subr.bf16.mxu0 0
  %4869 = vmatpush1.bf16.msra.mxu0 0
  %4870 = vmatprep.subr.bf16.mxu0 0
  %4871 = vmatpush1.bf16.msra.mxu0 0
  %4872 = vmatprep.subr.bf16.mxu0 0
  %4873 = vmatpush1.bf16.msra.mxu0 0
  %4874 = vmatprep.subr.bf16.mxu0 0
  %4875 = vmatpush1.bf16.msra.mxu0 0
  %4876 = vmatprep.subr.bf16.mxu0 0
  %4877 = vmatpush1.bf16.msra.mxu0 %v4860
  %4878 = vmatprep.subr.bf16.mxu0 0
  %4879 = vmatpush2.bf16.msra.mxu0 0
  %4880 = vmatprep.subr.bf16.mxu0 0
  %4881 = vmatpush2.bf16.msra.mxu0 0
  %4882 = vmatprep.subr.bf16.mxu0 0
  %4883 = vmatpush2.bf16.msra.mxu0 0
  %4884 = vmatprep.subr.bf16.mxu0 0
  %4885 = vmatpush2.bf16.msra.mxu0 0
  %4886 = vmatprep.subr.bf16.mxu0 0
  %4887 = vmatpush2.bf16.msra.mxu0 0
  %4888 = vmatprep.subr.bf16.mxu0 0
  %4889 = vmatpush2.bf16.msra.mxu0 0
  %4890 = vmatprep.subr.bf16.mxu0 0
  %4891 = vmatpush2.bf16.msra.mxu0 0
  %4892 = vmatprep.subr.bf16.mxu0 0
  %4893 = vmatpush2.bf16.msra.mxu0 0
  %4894 = vmatprep.mubr.bf16.mxu0 0
  %4895 = vmatmul.mubr.bf16.gmra.mxu0 %v4857
  %v4896 = vpop.f32.mrf.mxu0
  %v4897 = vadd.f32 0.0, %v4896
  %v4898 = vpop.f32.mrf.mxu0
  %v4899 = vpop.f32.mrf.mxu0
  %v4900 = vpop.f32.mrf.mxu0
  %4901 = vdwg.mxu0
  %v4903 = vsel %vm424, %v4853, 0
  %v4906 = vsel %vm562, %v4855, 0
  %4908 = vmatprep.subr.bf16.mxu0 0
  %4909 = vmatpush1.bf16.msra.mxu0 0
  %4910 = vmatprep.subr.bf16.mxu0 0
  %4911 = vmatpush1.bf16.msra.mxu0 0
  %4912 = vmatprep.subr.bf16.mxu0 0
  %4913 = vmatpush1.bf16.msra.mxu0 0
  %4914 = vmatprep.subr.bf16.mxu0 0
  %4915 = vmatpush1.bf16.msra.mxu0 0
  %4916 = vmatprep.subr.bf16.mxu0 0
  %4917 = vmatpush1.bf16.msra.mxu0 0
  %4918 = vmatprep.subr.bf16.mxu0 0
  %4919 = vmatpush1.bf16.msra.mxu0 0
  %4920 = vmatprep.subr.bf16.mxu0 0
  %4921 = vmatpush1.bf16.msra.mxu0 0
  %4922 = vmatprep.subr.bf16.mxu0 0
  %4923 = vmatpush1.bf16.msra.mxu0 %v4906
  %4924 = vmatprep.subr.bf16.mxu0 0
  %4925 = vmatpush2.bf16.msra.mxu0 0
  %4926 = vmatprep.subr.bf16.mxu0 0
  %4927 = vmatpush2.bf16.msra.mxu0 0
  %4928 = vmatprep.subr.bf16.mxu0 0
  %4929 = vmatpush2.bf16.msra.mxu0 0
  %4930 = vmatprep.subr.bf16.mxu0 0
  %4931 = vmatpush2.bf16.msra.mxu0 0
  %4932 = vmatprep.subr.bf16.mxu0 0
  %4933 = vmatpush2.bf16.msra.mxu0 0
  %4934 = vmatprep.subr.bf16.mxu0 0
  %4935 = vmatpush2.bf16.msra.mxu0 0
  %4936 = vmatprep.subr.bf16.mxu0 0
  %4937 = vmatpush2.bf16.msra.mxu0 0
  %4938 = vmatprep.subr.bf16.mxu0 0
  %4939 = vmatpush2.bf16.msra.mxu0 0
  %4940 = vmatprep.mubr.bf16.mxu0 0
  %4941 = vmatmul.mubr.bf16.gmra.mxu0 %v4903
  %v4942 = vpop.f32.mrf.mxu0
  %v4943 = vadd.f32 0.0, %v4942
  %v4944 = vpop.f32.mrf.mxu0
  %v4945 = vpop.f32.mrf.mxu0
  %v4946 = vpop.f32.mrf.mxu0
  %4947 = vdwg.mxu0
  %v4948 = vadd.f32 %v4746, %v4897
  %v4949 = vadd.f32 %v4747, %v4943
  %v4950 = vpack.c.bf16 %v4949, %v4948
  %s4951 = scalar_lea.vmem %s2, 832
  %v4952 = vld [vmem:[%s4951] sm:$0xf]
  %v4953 = vld [vmem:[%s4951 + $0x4] sm:$0xf]
  %v4954 = vld [vmem:[%s4951 + $0x8] sm:$0xf]
  %v4955 = vld [vmem:[%s4951 + $0xc] sm:$0xf]
  %v4956 = vld [vmem:[%s4951 + $0x10] sm:$0xf]
  %v4957 = vld [vmem:[%s4951 + $0x14] sm:$0xf]
  %v4958 = vld [vmem:[%s4951 + $0x18] sm:$0xf]
  %v4959 = vld [vmem:[%s4951 + $0x1c] sm:$0xf]
  %v4960 = vld [vmem:[%s4951 + $0x20] sm:$0xf]
  %v4961 = vld [vmem:[%s4951 + $0x24] sm:$0xf]
  %v4962 = vld [vmem:[%s4951 + $0x28] sm:$0xf]
  %v4963 = vld [vmem:[%s4951 + $0x2c] sm:$0xf]
  %v4964 = vld [vmem:[%s4951 + $0x30] sm:$0xf]
  %v4965 = vld [vmem:[%s4951 + $0x34] sm:$0xf]
  %v4966 = vld [vmem:[%s4951 + $0x38] sm:$0xf]
  %v4967 = vld [vmem:[%s4951 + $0x3c] sm:$0xf]
  %v4968 = vlaneseq
  %v4969 = vshrl.u32 %v4968, 7
  %v4970 = vsub.s32 3, %v4969
  %v4971 = vrot.slane %v20, %v4970
  %v4988 = vunpack.c.l.b16 %v4952
  %v4989 = vunpack.c.l.b16 %v4953
  %v4990 = vunpack.c.l.b16 %v4954
  %v4991 = vunpack.c.l.b16 %v4955
  %v4992 = vunpack.c.l.b16 %v4956
  %v4993 = vunpack.c.l.b16 %v4957
  %v4994 = vunpack.c.l.b16 %v4958
  %v4995 = vunpack.c.l.b16 %v4959
  %v4996 = vunpack.c.l.b16 %v4960
  %v4997 = vunpack.c.l.b16 %v4961
  %v4998 = vunpack.c.l.b16 %v4962
  %v4999 = vunpack.c.l.b16 %v4963
  %v5000 = vunpack.c.l.b16 %v4964
  %v5001 = vunpack.c.l.b16 %v4965
  %v5002 = vunpack.c.l.b16 %v4966
  %v5003 = vunpack.c.l.b16 %v4967
  %v5004 = vpack.c.b16 %v4989, %v4988
  %v5005 = vpack.c.b16 %v4991, %v4990
  %v5006 = vpack.c.b16 %v4993, %v4992
  %v5007 = vpack.c.b16 %v4995, %v4994
  %v5008 = vpack.c.b16 %v4997, %v4996
  %v5009 = vpack.c.b16 %v4999, %v4998
  %v5010 = vpack.c.b16 %v5001, %v5000
  %v5011 = vpack.c.b16 %v5003, %v5002
  %5020 = vmatprep.subr.bf16.mxu0 0
  %5021 = vmatpush1.bf16.msra.mxu0 %v5011
  %5022 = vmatprep.subr.bf16.mxu0 0
  %5023 = vmatpush1.bf16.msra.mxu0 %v5010
  %5024 = vmatprep.subr.bf16.mxu0 0
  %5025 = vmatpush1.bf16.msra.mxu0 %v5009
  %5026 = vmatprep.subr.bf16.mxu0 0
  %5027 = vmatpush1.bf16.msra.mxu0 %v5008
  %5028 = vmatprep.subr.bf16.mxu0 0
  %5029 = vmatpush1.bf16.msra.mxu0 %v5007
  %5030 = vmatprep.subr.bf16.mxu0 0
  %5031 = vmatpush1.bf16.msra.mxu0 %v5006
  %5032 = vmatprep.subr.bf16.mxu0 0
  %5033 = vmatpush1.bf16.msra.mxu0 %v5005
  %5034 = vmatprep.subr.bf16.mxu0 0
  %5035 = vmatpush1.bf16.msra.mxu0 %v5004
  %5036 = vmatprep.subr.bf16.mxu0 0
  %5037 = vmatpush2.bf16.msra.mxu0 0
  %5038 = vmatprep.subr.bf16.mxu0 0
  %5039 = vmatpush2.bf16.msra.mxu0 0
  %5040 = vmatprep.subr.bf16.mxu0 0
  %5041 = vmatpush2.bf16.msra.mxu0 0
  %5042 = vmatprep.subr.bf16.mxu0 0
  %5043 = vmatpush2.bf16.msra.mxu0 0
  %5044 = vmatprep.subr.bf16.mxu0 0
  %5045 = vmatpush2.bf16.msra.mxu0 0
  %5046 = vmatprep.subr.bf16.mxu0 0
  %5047 = vmatpush2.bf16.msra.mxu0 0
  %5048 = vmatprep.subr.bf16.mxu0 0
  %5049 = vmatpush2.bf16.msra.mxu0 0
  %5050 = vmatprep.subr.bf16.mxu0 0
  %5051 = vmatpush2.bf16.msra.mxu0 0
  %5052 = vmatprep.mubr.bf16.mxu0 0
  %5053 = vmatmul.mubr.bf16.gmra.mxu0 %v4950
  %v5054 = vpop.f32.mrf.mxu0
  %v5055 = vadd.f32 %v4971, %v5054
  %v5056 = vpop.f32.mrf.mxu0
  %v5057 = vpop.f32.mrf.mxu0
  %v5058 = vadd.f32 %v4971, %v5057
  %v5059 = vpop.f32.mrf.mxu0
  %5060 = vdwg.mxu0
  %v5061 = vadd.f32 %v3917, %v5055
  %v5062 = vadd.f32 %v3918, %v5058
  %5063 = vadd.xlane.f32.xlu0 %v5061
  %v5064 = vpop.xlane.xlu0 %5063
  %5065 = vadd.xlane.f32.xlu0 %v5062
  %v5066 = vpop.xlane.xlu0 %5065
  %v5067 = vmul.f32 %v5064, 0.03125
  %v5068 = vmul.f32 %v5066, 0.03125
  %v5069 = vsub.f32 %v5061, %v5067
  %v5070 = vsub.f32 %v5062, %v5068
  %v5071 = vmul.f32 %v5069, %v29
  %v5072 = vmul.f32 %v5070, %v29
  %v5073 = vmul.f32 %v5071, %v5071
  %v5074 = vmul.f32 %v5072, %v5072
  %5075 = vadd.xlane.f32.xlu0 %v5073
  %v5076 = vpop.xlane.xlu0 %5075
  %5077 = vadd.xlane.f32.xlu0 %v5074
  %v5078 = vpop.xlane.xlu0 %5077
  %v5079 = vmul.f32 %v5076, 0.03125
  %v5080 = vmul.f32 %v5078, 0.03125
  %v5081 = vadd.f32 %v5079, 1e-05
  %v5082 = vadd.f32 %v5080, 1e-05
  %v5083 = vrsqrt.pop %v5081
  %v5084 = vrsqrt.pop %v5082
  %v5085 = vmul.f32 %v5071, %v5083
  %v5086 = vmul.f32 %v5072, %v5084
  %v5087 = vlaneseq
  %v5088 = vshrl.u32 %v5087, 7
  %v5089 = vsub.s32 0, %v5088
  %v5090 = vrot.slane %v21, %v5089
  %v5091 = vmul.f32 %v5085, %v5090
  %v5092 = vmul.f32 %v5086, %v5090
  %v5093 = vlaneseq
  %v5094 = vshrl.u32 %v5093, 7
  %v5095 = vsub.s32 1, %v5094
  %v5096 = vrot.slane %v21, %v5095
  %v5097 = vadd.f32 %v5091, %v5096
  %v5098 = vadd.f32 %v5092, %v5096
  %v5099 = vpack.c.bf16 %v5098, %v5097
  %s5100 = scalar_lea.vmem %s2, 896
  %v5101 = vld [vmem:[%s5100] sm:$0xf]
  %v5102 = vld [vmem:[%s5100 + $0x4] sm:$0xf]
  %v5103 = vld [vmem:[%s5100 + $0x8] sm:$0xf]
  %v5104 = vld [vmem:[%s5100 + $0xc] sm:$0xf]
  %v5105 = vld [vmem:[%s5100 + $0x10] sm:$0xf]
  %v5106 = vld [vmem:[%s5100 + $0x14] sm:$0xf]
  %v5107 = vld [vmem:[%s5100 + $0x18] sm:$0xf]
  %v5108 = vld [vmem:[%s5100 + $0x1c] sm:$0xf]
  %v5109 = vld [vmem:[%s5100 + $0x20] sm:$0xf]
  %v5110 = vld [vmem:[%s5100 + $0x24] sm:$0xf]
  %v5111 = vld [vmem:[%s5100 + $0x28] sm:$0xf]
  %v5112 = vld [vmem:[%s5100 + $0x2c] sm:$0xf]
  %v5113 = vld [vmem:[%s5100 + $0x30] sm:$0xf]
  %v5114 = vld [vmem:[%s5100 + $0x34] sm:$0xf]
  %v5115 = vld [vmem:[%s5100 + $0x38] sm:$0xf]
  %v5116 = vld [vmem:[%s5100 + $0x3c] sm:$0xf]
  %v5117 = vlaneseq
  %v5118 = vshrl.u32 %v5117, 7
  %v5119 = vsub.s32 4, %v5118
  %v5120 = vrot.slane %v20, %v5119
  %v5137 = vunpack.c.l.b16 %v5101
  %v5138 = vunpack.c.l.b16 %v5102
  %v5139 = vunpack.c.l.b16 %v5103
  %v5140 = vunpack.c.l.b16 %v5104
  %v5141 = vunpack.c.l.b16 %v5105
  %v5142 = vunpack.c.l.b16 %v5106
  %v5143 = vunpack.c.l.b16 %v5107
  %v5144 = vunpack.c.l.b16 %v5108
  %v5145 = vunpack.c.l.b16 %v5109
  %v5146 = vunpack.c.l.b16 %v5110
  %v5147 = vunpack.c.l.b16 %v5111
  %v5148 = vunpack.c.l.b16 %v5112
  %v5149 = vunpack.c.l.b16 %v5113
  %v5150 = vunpack.c.l.b16 %v5114
  %v5151 = vunpack.c.l.b16 %v5115
  %v5152 = vunpack.c.l.b16 %v5116
  %v5153 = vpack.c.b16 %v5138, %v5137
  %v5154 = vpack.c.b16 %v5140, %v5139
  %v5155 = vpack.c.b16 %v5142, %v5141
  %v5156 = vpack.c.b16 %v5144, %v5143
  %v5157 = vpack.c.b16 %v5146, %v5145
  %v5158 = vpack.c.b16 %v5148, %v5147
  %v5159 = vpack.c.b16 %v5150, %v5149
  %v5160 = vpack.c.b16 %v5152, %v5151
  %5169 = vmatprep.subr.bf16.mxu0 0
  %5170 = vmatpush1.bf16.msra.mxu0 %v5160
  %5171 = vmatprep.subr.bf16.mxu0 0
  %5172 = vmatpush1.bf16.msra.mxu0 %v5159
  %5173 = vmatprep.subr.bf16.mxu0 0
  %5174 = vmatpush1.bf16.msra.mxu0 %v5158
  %5175 = vmatprep.subr.bf16.mxu0 0
  %5176 = vmatpush1.bf16.msra.mxu0 %v5157
  %5177 = vmatprep.subr.bf16.mxu0 0
  %5178 = vmatpush1.bf16.msra.mxu0 %v5156
  %5179 = vmatprep.subr.bf16.mxu0 0
  %5180 = vmatpush1.bf16.msra.mxu0 %v5155
  %5181 = vmatprep.subr.bf16.mxu0 0
  %5182 = vmatpush1.bf16.msra.mxu0 %v5154
  %5183 = vmatprep.subr.bf16.mxu0 0
  %5184 = vmatpush1.bf16.msra.mxu0 %v5153
  %5185 = vmatprep.subr.bf16.mxu0 0
  %5186 = vmatpush2.bf16.msra.mxu0 0
  %5187 = vmatprep.subr.bf16.mxu0 0
  %5188 = vmatpush2.bf16.msra.mxu0 0
  %5189 = vmatprep.subr.bf16.mxu0 0
  %5190 = vmatpush2.bf16.msra.mxu0 0
  %5191 = vmatprep.subr.bf16.mxu0 0
  %5192 = vmatpush2.bf16.msra.mxu0 0
  %5193 = vmatprep.subr.bf16.mxu0 0
  %5194 = vmatpush2.bf16.msra.mxu0 0
  %5195 = vmatprep.subr.bf16.mxu0 0
  %5196 = vmatpush2.bf16.msra.mxu0 0
  %5197 = vmatprep.subr.bf16.mxu0 0
  %5198 = vmatpush2.bf16.msra.mxu0 0
  %5199 = vmatprep.subr.bf16.mxu0 0
  %5200 = vmatpush2.bf16.msra.mxu0 0
  %5201 = vmatprep.mubr.bf16.mxu0 0
  %5202 = vmatmul.mubr.bf16.gmra.mxu0 %v5099
  %v5203 = vpop.f32.mrf.mxu0
  %v5204 = vadd.f32 %v5120, %v5203
  %v5205 = vpop.f32.mrf.mxu0
  %v5206 = vpop.f32.mrf.mxu0
  %v5207 = vadd.f32 %v5120, %v5206
  %v5208 = vpop.f32.mrf.mxu0
  %5209 = vdwg.mxu0
  %v5210 = vmax.f32 %v5204, 0.0
  %v5211 = vmax.f32 %v5207, 0.0
  %v5212 = vpack.c.bf16 %v5211, %v5210
  %s5213 = scalar_lea.vmem %s2, 960
  %v5214 = vld [vmem:[%s5213] sm:$0xf]
  %v5215 = vld [vmem:[%s5213 + $0x4] sm:$0xf]
  %v5216 = vld [vmem:[%s5213 + $0x8] sm:$0xf]
  %v5217 = vld [vmem:[%s5213 + $0xc] sm:$0xf]
  %v5218 = vld [vmem:[%s5213 + $0x10] sm:$0xf]
  %v5219 = vld [vmem:[%s5213 + $0x14] sm:$0xf]
  %v5220 = vld [vmem:[%s5213 + $0x18] sm:$0xf]
  %v5221 = vld [vmem:[%s5213 + $0x1c] sm:$0xf]
  %v5222 = vld [vmem:[%s5213 + $0x20] sm:$0xf]
  %v5223 = vld [vmem:[%s5213 + $0x24] sm:$0xf]
  %v5224 = vld [vmem:[%s5213 + $0x28] sm:$0xf]
  %v5225 = vld [vmem:[%s5213 + $0x2c] sm:$0xf]
  %v5226 = vld [vmem:[%s5213 + $0x30] sm:$0xf]
  %v5227 = vld [vmem:[%s5213 + $0x34] sm:$0xf]
  %v5228 = vld [vmem:[%s5213 + $0x38] sm:$0xf]
  %v5229 = vld [vmem:[%s5213 + $0x3c] sm:$0xf]
  %v5230 = vlaneseq
  %v5231 = vshrl.u32 %v5230, 7
  %v5232 = vsub.s32 5, %v5231
  %v5233 = vrot.slane %v20, %v5232
  %v5250 = vunpack.c.l.b16 %v5214
  %v5251 = vunpack.c.l.b16 %v5215
  %v5252 = vunpack.c.l.b16 %v5216
  %v5253 = vunpack.c.l.b16 %v5217
  %v5254 = vunpack.c.l.b16 %v5218
  %v5255 = vunpack.c.l.b16 %v5219
  %v5256 = vunpack.c.l.b16 %v5220
  %v5257 = vunpack.c.l.b16 %v5221
  %v5258 = vunpack.c.l.b16 %v5222
  %v5259 = vunpack.c.l.b16 %v5223
  %v5260 = vunpack.c.l.b16 %v5224
  %v5261 = vunpack.c.l.b16 %v5225
  %v5262 = vunpack.c.l.b16 %v5226
  %v5263 = vunpack.c.l.b16 %v5227
  %v5264 = vunpack.c.l.b16 %v5228
  %v5265 = vunpack.c.l.b16 %v5229
  %v5266 = vpack.c.b16 %v5251, %v5250
  %v5267 = vpack.c.b16 %v5253, %v5252
  %v5268 = vpack.c.b16 %v5255, %v5254
  %v5269 = vpack.c.b16 %v5257, %v5256
  %v5270 = vpack.c.b16 %v5259, %v5258
  %v5271 = vpack.c.b16 %v5261, %v5260
  %v5272 = vpack.c.b16 %v5263, %v5262
  %v5273 = vpack.c.b16 %v5265, %v5264
  %5282 = vmatprep.subr.bf16.mxu0 0
  %5283 = vmatpush1.bf16.msra.mxu0 %v5273
  %5284 = vmatprep.subr.bf16.mxu0 0
  %5285 = vmatpush1.bf16.msra.mxu0 %v5272
  %5286 = vmatprep.subr.bf16.mxu0 0
  %5287 = vmatpush1.bf16.msra.mxu0 %v5271
  %5288 = vmatprep.subr.bf16.mxu0 0
  %5289 = vmatpush1.bf16.msra.mxu0 %v5270
  %5290 = vmatprep.subr.bf16.mxu0 0
  %5291 = vmatpush1.bf16.msra.mxu0 %v5269
  %5292 = vmatprep.subr.bf16.mxu0 0
  %5293 = vmatpush1.bf16.msra.mxu0 %v5268
  %5294 = vmatprep.subr.bf16.mxu0 0
  %5295 = vmatpush1.bf16.msra.mxu0 %v5267
  %5296 = vmatprep.subr.bf16.mxu0 0
  %5297 = vmatpush1.bf16.msra.mxu0 %v5266
  %5298 = vmatprep.subr.bf16.mxu0 0
  %5299 = vmatpush2.bf16.msra.mxu0 0
  %5300 = vmatprep.subr.bf16.mxu0 0
  %5301 = vmatpush2.bf16.msra.mxu0 0
  %5302 = vmatprep.subr.bf16.mxu0 0
  %5303 = vmatpush2.bf16.msra.mxu0 0
  %5304 = vmatprep.subr.bf16.mxu0 0
  %5305 = vmatpush2.bf16.msra.mxu0 0
  %5306 = vmatprep.subr.bf16.mxu0 0
  %5307 = vmatpush2.bf16.msra.mxu0 0
  %5308 = vmatprep.subr.bf16.mxu0 0
  %5309 = vmatpush2.bf16.msra.mxu0 0
  %5310 = vmatprep.subr.bf16.mxu0 0
  %5311 = vmatpush2.bf16.msra.mxu0 0
  %5312 = vmatprep.subr.bf16.mxu0 0
  %5313 = vmatpush2.bf16.msra.mxu0 0
  %5314 = vmatprep.mubr.bf16.mxu0 0
  %5315 = vmatmul.mubr.bf16.gmra.mxu0 %v5212
  %v5316 = vpop.f32.mrf.mxu0
  %v5317 = vadd.f32 %v5233, %v5316
  %v5318 = vpop.f32.mrf.mxu0
  %v5319 = vpop.f32.mrf.mxu0
  %v5320 = vadd.f32 %v5233, %v5319
  %v5321 = vpop.f32.mrf.mxu0
  %5322 = vdwg.mxu0
  %v5323 = vadd.f32 %v5097, %v5317
  %v5324 = vadd.f32 %v5098, %v5320
  %5325 = vadd.xlane.f32.xlu0 %v5323
  %v5326 = vpop.xlane.xlu0 %5325
  %5327 = vadd.xlane.f32.xlu0 %v5324
  %v5328 = vpop.xlane.xlu0 %5327
  %v5329 = vmul.f32 %v5326, 0.03125
  %v5330 = vmul.f32 %v5328, 0.03125
  %v5331 = vsub.f32 %v5323, %v5329
  %v5332 = vsub.f32 %v5324, %v5330
  %v5333 = vmul.f32 %v5331, %v29
  %v5334 = vmul.f32 %v5332, %v29
  %v5335 = vmul.f32 %v5333, %v5333
  %v5336 = vmul.f32 %v5334, %v5334
  %5337 = vadd.xlane.f32.xlu0 %v5335
  %v5338 = vpop.xlane.xlu0 %5337
  %5339 = vadd.xlane.f32.xlu0 %v5336
  %v5340 = vpop.xlane.xlu0 %5339
  %v5341 = vmul.f32 %v5338, 0.03125
  %v5342 = vmul.f32 %v5340, 0.03125
  %v5343 = vadd.f32 %v5341, 1e-05
  %v5344 = vadd.f32 %v5342, 1e-05
  %v5345 = vrsqrt.pop %v5343
  %v5346 = vrsqrt.pop %v5344
  %v5347 = vmul.f32 %v5333, %v5345
  %v5348 = vmul.f32 %v5334, %v5346
  %v5349 = vlaneseq
  %v5350 = vshrl.u32 %v5349, 7
  %v5351 = vsub.s32 2, %v5350
  %v5352 = vrot.slane %v21, %v5351
  %v5353 = vmul.f32 %v5347, %v5352
  %v5354 = vmul.f32 %v5348, %v5352
  %v5355 = vlaneseq
  %v5356 = vshrl.u32 %v5355, 7
  %v5357 = vsub.s32 3, %v5356
  %v5358 = vrot.slane %v21, %v5357
  %v5359 = vadd.f32 %v5353, %v5358
  %v5360 = vadd.f32 %v5354, %v5358
  %v5361 = vpack.c.bf16 %v5360, %v5359
  %s5362 = scalar_lea.vmem %s2, 1024
  %v5363 = vld [vmem:[%s5362] sm:$0xf]
  %v5364 = vld [vmem:[%s5362 + $0x4] sm:$0xf]
  %v5365 = vld [vmem:[%s5362 + $0x8] sm:$0xf]
  %v5366 = vld [vmem:[%s5362 + $0xc] sm:$0xf]
  %v5367 = vld [vmem:[%s5362 + $0x10] sm:$0xf]
  %v5368 = vld [vmem:[%s5362 + $0x14] sm:$0xf]
  %v5369 = vld [vmem:[%s5362 + $0x18] sm:$0xf]
  %v5370 = vld [vmem:[%s5362 + $0x1c] sm:$0xf]
  %v5371 = vld [vmem:[%s5362 + $0x20] sm:$0xf]
  %v5372 = vld [vmem:[%s5362 + $0x24] sm:$0xf]
  %v5373 = vld [vmem:[%s5362 + $0x28] sm:$0xf]
  %v5374 = vld [vmem:[%s5362 + $0x2c] sm:$0xf]
  %v5375 = vld [vmem:[%s5362 + $0x30] sm:$0xf]
  %v5376 = vld [vmem:[%s5362 + $0x34] sm:$0xf]
  %v5377 = vld [vmem:[%s5362 + $0x38] sm:$0xf]
  %v5378 = vld [vmem:[%s5362 + $0x3c] sm:$0xf]
  %v5379 = vlaneseq
  %v5380 = vshrl.u32 %v5379, 7
  %v5381 = vsub.s32 4, %v5380
  %v5382 = vrot.slane %v21, %v5381
  %v5399 = vunpack.c.l.b16 %v5363
  %v5400 = vunpack.c.l.b16 %v5364
  %v5401 = vunpack.c.l.b16 %v5365
  %v5402 = vunpack.c.l.b16 %v5366
  %v5403 = vunpack.c.l.b16 %v5367
  %v5404 = vunpack.c.l.b16 %v5368
  %v5405 = vunpack.c.l.b16 %v5369
  %v5406 = vunpack.c.l.b16 %v5370
  %v5407 = vunpack.c.l.b16 %v5371
  %v5408 = vunpack.c.l.b16 %v5372
  %v5409 = vunpack.c.l.b16 %v5373
  %v5410 = vunpack.c.l.b16 %v5374
  %v5411 = vunpack.c.l.b16 %v5375
  %v5412 = vunpack.c.l.b16 %v5376
  %v5413 = vunpack.c.l.b16 %v5377
  %v5414 = vunpack.c.l.b16 %v5378
  %v5415 = vpack.c.b16 %v5400, %v5399
  %v5416 = vpack.c.b16 %v5402, %v5401
  %v5417 = vpack.c.b16 %v5404, %v5403
  %v5418 = vpack.c.b16 %v5406, %v5405
  %v5419 = vpack.c.b16 %v5408, %v5407
  %v5420 = vpack.c.b16 %v5410, %v5409
  %v5421 = vpack.c.b16 %v5412, %v5411
  %v5422 = vpack.c.b16 %v5414, %v5413
  %5431 = vmatprep.subr.bf16.mxu0 0
  %5432 = vmatpush1.bf16.msra.mxu0 %v5422
  %5433 = vmatprep.subr.bf16.mxu0 0
  %5434 = vmatpush1.bf16.msra.mxu0 %v5421
  %5435 = vmatprep.subr.bf16.mxu0 0
  %5436 = vmatpush1.bf16.msra.mxu0 %v5420
  %5437 = vmatprep.subr.bf16.mxu0 0
  %5438 = vmatpush1.bf16.msra.mxu0 %v5419
  %5439 = vmatprep.subr.bf16.mxu0 0
  %5440 = vmatpush1.bf16.msra.mxu0 %v5418
  %5441 = vmatprep.subr.bf16.mxu0 0
  %5442 = vmatpush1.bf16.msra.mxu0 %v5417
  %5443 = vmatprep.subr.bf16.mxu0 0
  %5444 = vmatpush1.bf16.msra.mxu0 %v5416
  %5445 = vmatprep.subr.bf16.mxu0 0
  %5446 = vmatpush1.bf16.msra.mxu0 %v5415
  %5447 = vmatprep.subr.bf16.mxu0 0
  %5448 = vmatpush2.bf16.msra.mxu0 0
  %5449 = vmatprep.subr.bf16.mxu0 0
  %5450 = vmatpush2.bf16.msra.mxu0 0
  %5451 = vmatprep.subr.bf16.mxu0 0
  %5452 = vmatpush2.bf16.msra.mxu0 0
  %5453 = vmatprep.subr.bf16.mxu0 0
  %5454 = vmatpush2.bf16.msra.mxu0 0
  %5455 = vmatprep.subr.bf16.mxu0 0
  %5456 = vmatpush2.bf16.msra.mxu0 0
  %5457 = vmatprep.subr.bf16.mxu0 0
  %5458 = vmatpush2.bf16.msra.mxu0 0
  %5459 = vmatprep.subr.bf16.mxu0 0
  %5460 = vmatpush2.bf16.msra.mxu0 0
  %5461 = vmatprep.subr.bf16.mxu0 0
  %5462 = vmatpush2.bf16.msra.mxu0 0
  %5463 = vmatprep.mubr.bf16.mxu0 0
  %5464 = vmatmul.mubr.bf16.gmra.mxu0 %v5361
  %v5465 = vpop.f32.mrf.mxu0
  %v5466 = vadd.f32 %v5382, %v5465
  %v5467 = vpop.f32.mrf.mxu0
  %v5468 = vpop.f32.mrf.mxu0
  %v5469 = vadd.f32 %v5382, %v5468
  %v5470 = vpop.f32.mrf.mxu0
  %5471 = vdwg.mxu0
  %5472 = vst [vmem:[%s4] sm:$0xff] %v5466
  %5473 = vst [vmem:[%s4 + $0x8] sm:$0xff] %v5469
  // Predicated region
  $region18: #{transformer_lm_forward.1} parent=0 // pred_check
    _
  $region19: #{transformer_lm_forward.1} parent=0 // pred_check_branch
    %5475 = sbr.rel (0) target = $region21
  $region20: #{transformer_lm_forward.1} parent=0 // pred_region
    _
  $region21: #{transformer_lm_forward.1} parent=0 // pred_fallthru
    _
  // Predicated region
  $region22: #{transformer_lm_forward.1} parent=0 // pred_check
    _
  $region23: #{transformer_lm_forward.1} parent=0 // pred_check_branch
    %5477 = sbr.rel (0) target = $region25
  $region24: #{transformer_lm_forward.1} parent=0 // pred_region
    _
  $region25: #{transformer_lm_forward.1} parent=0 // pred_fallthru
    _

</llo_original>
